<compile_context>
chip_gen: v5e
topology: v5e:2x2
jax: 0.10.0
libtpu: 0.0.40
codegen_flags: <defaults>
</compile_context>

<pallas_src>
import jax
import jax.numpy as jnp
from jax.experimental import pallas as pl
from jax.experimental.pallas import tpu as pltpu

INPUT_SIZE = 784
HIDDEN_SIZE = 400
OUT_SIZE = 10

HIDDEN_PAD = 512   # 400 -> 512: lane-dense hidden dim (multiple of 128)
OUT_PAD = 128      # 10  -> 128: lane-dense output store (sliced back to 10)


def mlp_kernel(x_ref, w1_ref, b1_ref, w2_ref, b2_ref, w3_ref, b3_ref, o_ref):
    # x arrives as f32; cast to bf16 in-kernel (VPU work hidden under the MXU).
    x = x_ref[...].astype(jnp.bfloat16)

    h1 = jnp.dot(x, w1_ref[...], preferred_element_type=jnp.float32) + b1_ref[...]
    h1 = jnp.maximum(h1, 0.0).astype(jnp.bfloat16)   # ReLU in f32, bf16 for next MXU pass

    h2 = jnp.dot(h1, w2_ref[...], preferred_element_type=jnp.float32) + b2_ref[...]
    h2 = jnp.maximum(h2, 0.0).astype(jnp.bfloat16)

    out = jnp.dot(h2, w3_ref[...], preferred_element_type=jnp.float32) + b3_ref[...]
    o_ref[...] = out.astype(o_ref.dtype)              # bf16 store (lane-dense, 128 wide)


def _pick_tile_b(B):
    """Batch tile: round_up(cdiv(B, 8), 256), clamped to [256, 1024].

    Keeps >= 8 grid steps on large batches (>= 4 per TC on v7x's 2 cores) and
    grows the tile toward 1024 so per-step MXU compute dominates the ~0.35 us
    per-grid-step pipeline overhead. Always a multiple of 256 (and thus of the
    bf16 sublane packing factor 16).
    """
    target = pl.cdiv(B, 8)
    t = pl.cdiv(target, 256) * 256
    return max(256, min(1024, t))


def net_forward(x, packed_params, *, tile_b=None):
    """x: [B, 784] float32 -> [B, 10] bfloat16 logits."""
    w1, b1, w2, b2, w3, b3 = packed_params
    B = x.shape[0]
    if tile_b is None:
        tile_b = _pick_tile_b(B)

    # Full-block specs with constant index_maps: weights/biases stay resident
    # in VMEM across all batch tiles; only the x tile and output tile stream.
    def resident(a):
        return pl.BlockSpec(a.shape, lambda i: (0,) * a.ndim)

    out_padded = pl.pallas_call(
        mlp_kernel,
        out_shape=jax.ShapeDtypeStruct((B, OUT_PAD), jnp.bfloat16),
        grid=(pl.cdiv(B, tile_b),),                    # partial last block masked by Pallas
        in_specs=[
            pl.BlockSpec((tile_b, INPUT_SIZE), lambda i: (i, 0)),  # streamed f32 x tile
            resident(w1), resident(b1),
            resident(w2), resident(b2),
            resident(w3), resident(b3),
        ],
        out_specs=pl.BlockSpec((tile_b, OUT_PAD), lambda i: (i, 0)),
        compiler_params=pltpu.CompilerParams(
            dimension_semantics=("parallel",),         # batch axis shards across v7x's 2 TCs
            vmem_limit_bytes=32 << 20,                 # ~16 MB peak at tile_b=1024 << 32 MiB
        ),
    )(x, w1, b1, w2, b2, w3, b3)

    # Batch dim is already exact (no batch padding); only drop the padded lanes.
    # TODO(synk): in a real model, fuse this lane slice into the consumer op.
    return out_padded[:, :OUT_SIZE]


def init_params(key):
    """Logical (unpadded, f32) params; weights stored as [in, out]."""
    ks = jax.random.split(key, 6)

    def linear_init(kw, kb, fan_in, fan_out):
        # nn.Linear-style default init: U(-1/sqrt(fan_in), +1/sqrt(fan_in))
        bound = 1.0 / jnp.sqrt(float(fan_in))
        w = jax.random.uniform(kw, (fan_in, fan_out), jnp.float32, -bound, bound)
        b = jax.random.uniform(kb, (fan_out,), jnp.float32, -bound, bound)
        return w, b

    w1, b1 = linear_init(ks[0], ks[1], INPUT_SIZE, HIDDEN_SIZE)
    w2, b2 = linear_init(ks[2], ks[3], HIDDEN_SIZE, HIDDEN_SIZE)
    w3, b3 = linear_init(ks[4], ks[5], HIDDEN_SIZE, OUT_SIZE)
    return (w1, b1, w2, b2, w3, b3)


def pack_params(params):
    """Zero-pad hidden 400->512 and out 10->128; weights -> bf16, biases -> f32 rows."""
    w1, b1, w2, b2, w3, b3 = params
    dh = HIDDEN_PAD - HIDDEN_SIZE
    do = OUT_PAD - OUT_SIZE

    w1p = jnp.pad(w1, ((0, 0), (0, dh))).astype(jnp.bfloat16)
    b1p = jnp.pad(b1, ((0, dh),)).reshape(1, HIDDEN_PAD).astype(jnp.float32)
    w2p = jnp.pad(w2, ((0, dh), (0, dh))).astype(jnp.bfloat16)
    b2p = jnp.pad(b2, ((0, dh),)).reshape(1, HIDDEN_PAD).astype(jnp.float32)
    w3p = jnp.pad(w3, ((0, dh), (0, do))).astype(jnp.bfloat16)
    b3p = jnp.pad(b3, ((0, do),)).reshape(1, OUT_PAD).astype(jnp.float32)
    return (w1p, b1p, w2p, b2p, w3p, b3p)


def reference_forward_f32(x, params):
    w1, b1, w2, b2, w3, b3 = params
    h1 = jnp.maximum(x @ w1 + b1, 0.0)
    h2 = jnp.maximum(h1 @ w2 + b2, 0.0)
    return h2 @ w3 + b3


def reference_forward_bf16(x, params):
    """Precision-matched reference: bf16 inputs/weights, f32 accumulation."""
    w1, b1, w2, b2, w3, b3 = params
    dot = lambda a, b: jnp.dot(a, b.astype(jnp.bfloat16),
                               preferred_element_type=jnp.float32)
    xb = x.astype(jnp.bfloat16)
    h1 = jnp.maximum(dot(xb, w1) + b1, 0.0).astype(jnp.bfloat16)
    h2 = jnp.maximum(dot(h1, w2) + b2, 0.0).astype(jnp.bfloat16)
    return dot(h2, w3) + b3


def _check(x, params, packed):
    out = jax.block_until_ready(net_forward(x, packed)).astype(jnp.float32)
    assert out.shape == (x.shape[0], OUT_SIZE)

    # Tight check against a precision-matched (bf16-in, f32-acc) reference;
    # kernel additionally rounds the final logits to bf16.
    ref_bf16 = reference_forward_bf16(x, params)
    assert jnp.allclose(out, ref_bf16, atol=3e-2, rtol=3e-2), "mismatch vs bf16 reference"

    # Loose sanity check against the full-f32 reference (bf16 quantization noise).
    ref_f32 = reference_forward_f32(x, params)
    assert jnp.allclose(out, ref_f32, atol=2e-1, rtol=2e-1), "mismatch vs f32 reference"
    return out


if __name__ == "__main__":
    key = jax.random.PRNGKey(0)
    kx, kx2, kp = jax.random.split(key, 3)

    params = init_params(kp)          # logical f32 params
    packed = pack_params(params)      # padded bf16 weights / f32 bias rows

    # Small batch (single partial block).
    x_small = jax.random.normal(kx, (8, INPUT_SIZE), dtype=jnp.float32)
    _check(x_small, params, packed)

    # Ragged batch: exercises the non-divisible grid (cdiv) + masked last block.
    x_ragged = jax.random.normal(kx2, (300, INPUT_SIZE), dtype=jnp.float32)
    _check(x_ragged, params, packed)

    print("KERNEL_OK")
</pallas_src>

<mosaic_0001>
module attributes {stable_mosaic.version = 11 : i64} {
  func.func @mlp_kernel(%arg0: i32, %arg1: memref<256x784xf32, #tpu.memory_space<vmem>>, %arg2: memref<784x512xbf16, #tpu.memory_space<vmem>>, %arg3: memref<1x512xf32, #tpu.memory_space<vmem>>, %arg4: memref<512x512xbf16, #tpu.memory_space<vmem>>, %arg5: memref<1x512xf32, #tpu.memory_space<vmem>>, %arg6: memref<512x128xbf16, #tpu.memory_space<vmem>>, %arg7: memref<1x128xf32, #tpu.memory_space<vmem>>, %arg8: memref<256x128xbf16, #tpu.memory_space<vmem>>) attributes {dimension_semantics = [#tpu.dimension_semantics<parallel>], iteration_bounds = array<i64: 1>, scalar_prefetch = 0 : i64, scratch_operands = 0 : i64, tpu.core_type = #tpu.core_type<tc>, window_params = [{transform_indices = @transform_0, window_bounds = array<i64: 256, 784>}, {pipeline_mode = #tpu.pipeline_mode<synchronous>, transform_indices = @transform_1, window_bounds = array<i64: 784, 512>}, {pipeline_mode = #tpu.pipeline_mode<synchronous>, transform_indices = @transform_2, window_bounds = array<i64: 1, 512>}, {pipeline_mode = #tpu.pipeline_mode<synchronous>, transform_indices = @transform_3, window_bounds = array<i64: 512, 512>}, {pipeline_mode = #tpu.pipeline_mode<synchronous>, transform_indices = @transform_4, window_bounds = array<i64: 1, 512>}, {pipeline_mode = #tpu.pipeline_mode<synchronous>, transform_indices = @transform_5, window_bounds = array<i64: 512, 128>}, {pipeline_mode = #tpu.pipeline_mode<synchronous>, transform_indices = @transform_6, window_bounds = array<i64: 1, 128>}, {transform_indices = @transform_7, window_bounds = array<i64: 256, 128>}]} {
    %c0 = arith.constant 0 : index
    %c0_0 = arith.constant 0 : index
    %0 = vector.load %arg1[%c0, %c0_0] : memref<256x784xf32, #tpu.memory_space<vmem>>, vector<256x784xf32>
    %1 = arith.truncf %0 : vector<256x784xf32> to vector<256x784xbf16>
    %c0_1 = arith.constant 0 : index
    %c0_2 = arith.constant 0 : index
    %2 = vector.load %arg2[%c0_1, %c0_2] : memref<784x512xbf16, #tpu.memory_space<vmem>>, vector<784x512xbf16>
    %cst = arith.constant dense<0.000000e+00> : vector<256x512xf32>
    %3 = tpu.matmul %1, %2, %cst {dimension_numbers = #tpu.dot_dimension_numbers<[1], [0], [0], [1], [0, 0, 1, 1], [], []>} : vector<256x784xbf16>, vector<784x512xbf16>, vector<256x512xf32> -> vector<256x512xf32>
    %c0_3 = arith.constant 0 : index
    %c0_4 = arith.constant 0 : index
    %4 = vector.load %arg3[%c0_3, %c0_4] : memref<1x512xf32, #tpu.memory_space<vmem>>, vector<1x512xf32>
    %5 = vector.broadcast %4 : vector<1x512xf32> to vector<256x512xf32>
    %6 = arith.addf %3, %5 : vector<256x512xf32>
    %cst_5 = arith.constant 0.000000e+00 : f32
    %7 = vector.broadcast %cst_5 : f32 to vector<256x512xf32>
    %8 = arith.maximumf %6, %7 : vector<256x512xf32>
    %9 = arith.truncf %8 : vector<256x512xf32> to vector<256x512xbf16>
    %c0_6 = arith.constant 0 : index
    %c0_7 = arith.constant 0 : index
    %10 = vector.load %arg4[%c0_6, %c0_7] : memref<512x512xbf16, #tpu.memory_space<vmem>>, vector<512x512xbf16>
    %cst_8 = arith.constant dense<0.000000e+00> : vector<256x512xf32>
    %11 = tpu.matmul %9, %10, %cst_8 {dimension_numbers = #tpu.dot_dimension_numbers<[1], [0], [0], [1], [0, 0, 1, 1], [], []>} : vector<256x512xbf16>, vector<512x512xbf16>, vector<256x512xf32> -> vector<256x512xf32>
    %c0_9 = arith.constant 0 : index
    %c0_10 = arith.constant 0 : index
    %12 = vector.load %arg5[%c0_9, %c0_10] : memref<1x512xf32, #tpu.memory_space<vmem>>, vector<1x512xf32>
    %13 = vector.broadcast %12 : vector<1x512xf32> to vector<256x512xf32>
    %14 = arith.addf %11, %13 : vector<256x512xf32>
    %cst_11 = arith.constant 0.000000e+00 : f32
    %15 = vector.broadcast %cst_11 : f32 to vector<256x512xf32>
    %16 = arith.maximumf %14, %15 : vector<256x512xf32>
    %17 = arith.truncf %16 : vector<256x512xf32> to vector<256x512xbf16>
    %c0_12 = arith.constant 0 : index
    %c0_13 = arith.constant 0 : index
    %18 = vector.load %arg6[%c0_12, %c0_13] : memref<512x128xbf16, #tpu.memory_space<vmem>>, vector<512x128xbf16>
    %cst_14 = arith.constant dense<0.000000e+00> : vector<256x128xf32>
    %19 = tpu.matmul %17, %18, %cst_14 {dimension_numbers = #tpu.dot_dimension_numbers<[1], [0], [0], [1], [0, 0, 1, 1], [], []>} : vector<256x512xbf16>, vector<512x128xbf16>, vector<256x128xf32> -> vector<256x128xf32>
    %c0_15 = arith.constant 0 : index
    %c0_16 = arith.constant 0 : index
    %20 = vector.load %arg7[%c0_15, %c0_16] : memref<1x128xf32, #tpu.memory_space<vmem>>, vector<1x128xf32>
    %21 = vector.broadcast %20 : vector<1x128xf32> to vector<256x128xf32>
    %22 = arith.addf %19, %21 : vector<256x128xf32>
    %23 = arith.truncf %22 : vector<256x128xf32> to vector<256x128xbf16>
    %c0_17 = arith.constant 0 : index
    %c0_18 = arith.constant 0 : index
    %24 = vector.load %arg8[%c0_17, %c0_18] : memref<256x128xbf16, #tpu.memory_space<vmem>>, vector<256x128xbf16>
    tpu.vector_store %arg8[%c0_17, %c0_18], %23 {strides = array<i32>} : memref<256x128xbf16, #tpu.memory_space<vmem>>, vector<256x128xbf16>,
    return
  }
  func.func @transform_0(%arg0: i32) -> (i32, i32) {
    %c0_i32 = arith.constant 0 : i32
    %c0_i32_0 = arith.constant 0 : i32
    return %arg0, %c0_i32 : i32, i32
  }
  func.func @transform_1(%arg0: i32) -> (i32, i32) {
    %c0_i32 = arith.constant 0 : i32
    %c0_i32_0 = arith.constant 0 : i32
    %c0_i32_1 = arith.constant 0 : i32
    return %c0_i32, %c0_i32_0 : i32, i32
  }
  func.func @transform_2(%arg0: i32) -> (i32, i32) {
    %c0_i32 = arith.constant 0 : i32
    %c0_i32_0 = arith.constant 0 : i32
    %c0_i32_1 = arith.constant 0 : i32
    return %c0_i32, %c0_i32_0 : i32, i32
  }
  func.func @transform_3(%arg0: i32) -> (i32, i32) {
    %c0_i32 = arith.constant 0 : i32
    %c0_i32_0 = arith.constant 0 : i32
    %c0_i32_1 = arith.constant 0 : i32
    return %c0_i32, %c0_i32_0 : i32, i32
  }
  func.func @transform_4(%arg0: i32) -> (i32, i32) {
    %c0_i32 = arith.constant 0 : i32
    %c0_i32_0 = arith.constant 0 : i32
    %c0_i32_1 = arith.constant 0 : i32
    return %c0_i32, %c0_i32_0 : i32, i32
  }
  func.func @transform_5(%arg0: i32) -> (i32, i32) {
    %c0_i32 = arith.constant 0 : i32
    %c0_i32_0 = arith.constant 0 : i32
    %c0_i32_1 = arith.constant 0 : i32
    return %c0_i32, %c0_i32_0 : i32, i32
  }
  func.func @transform_6(%arg0: i32) -> (i32, i32) {
    %c0_i32 = arith.constant 0 : i32
    %c0_i32_0 = arith.constant 0 : i32
    %c0_i32_1 = arith.constant 0 : i32
    return %c0_i32, %c0_i32_0 : i32, i32
  }
  func.func @transform_7(%arg0: i32) -> (i32, i32) {
    %c0_i32 = arith.constant 0 : i32
    %c0_i32_0 = arith.constant 0 : i32
    return %arg0, %c0_i32 : i32, i32
  }
}

</mosaic_0001>

<llo_original>
// kernel: tpu_custom_call.1
$region0: #{tpu_custom_call.1}
  #allocation0 [shape = 'u32[]', space=smem, size = 0x4, offset = 0x4, fixed_abs, tag = 'smem constant byte address 0x4 - core index']
  #allocation1 [shape = 'u32[72,128]{1,0:T(1,128)}', space=vmem, size = 0x9000, scoped, tag = 'internal scratch']
  %s0 = inlined_call_operand.hbm [shape: f32[8,784], index: 0, kind: input, shape index: {}]
  %s1 = inlined_call_operand.hbm [shape: bf16[784,512], index: 1, kind: input, shape index: {}]
  %s2 = inlined_call_operand.hbm [shape: f32[1,512], index: 2, kind: input, shape index: {}]
  %s3 = inlined_call_operand.hbm [shape: bf16[512,512], index: 3, kind: input, shape index: {}]
  %s4 = inlined_call_operand.hbm [shape: f32[1,512], index: 4, kind: input, shape index: {}]
  %s5 = inlined_call_operand.hbm [shape: bf16[512,128], index: 5, kind: input, shape index: {}]
  %s6 = inlined_call_operand.vmem [shape: f32[1,128], index: 6, kind: input, shape index: {}]
  %s7 = inlined_call_operand.hbm [shape: bf16[8,128], index: 7, kind: output, shape index: {}]
  %s8 = sld [smem:[#allocation0]]
  $region62: #{tpu_custom_call.1} parent=0
    _
  %s10 = ssub.s32 1, %s8
  %s11 = scalar_select 0, %s10, %s8
  $region1: #{tpu_custom_call.1} parent=0
    #allocation2 [shape = 'u8[917504]{0}', space=vmem, size = 0xe0000, scoped, tag = 'input window, operand 0, single buffered']
    #allocation3 [shape = 's32[1]{0}', space=sflag, size = 0x4, scoped, tag = 'scoped memory for tpu_custom_call.1']
    #allocation4 [shape = 's32[1]{0}', space=sflag, size = 0x4, scoped, tag = 'scoped memory for tpu_custom_call.1']
    #allocation5 [shape = 'u8[802816]{0}', space=vmem, size = 0xc4000, scoped, tag = 'input window, operand 1, single buffered']
    #allocation6 [shape = 's32[1]{0}', space=sflag, size = 0x4, scoped, tag = 'scoped memory for tpu_custom_call.1']
    #allocation7 [shape = 'u8[2048]{0}', space=vmem, size = 0x800, scoped, tag = 'input window, operand 2, single buffered']
    #allocation8 [shape = 'u8[524288]{0}', space=vmem, size = 0x80000, scoped, tag = 'input window, operand 3, single buffered']
    #allocation9 [shape = 's32[1]{0}', space=sflag, size = 0x4, scoped, tag = 'scoped memory for tpu_custom_call.1']
    #allocation10 [shape = 'u8[2048]{0}', space=vmem, size = 0x800, scoped, tag = 'input window, operand 4, single buffered']
    #allocation11 [shape = 'u8[131072]{0}', space=vmem, size = 0x20000, scoped, tag = 'input window, operand 5, single buffered']
    #allocation12 [shape = 's32[1]{0}', space=sflag, size = 0x4, scoped, tag = 'scoped memory for tpu_custom_call.1']
    #allocation13 [shape = 'u8[65536]{0}', space=vmem, size = 0x10000, scoped, tag = 'output window, operand 0, single buffered']
    %12 = vsyncpa [#allocation3], 0
    %13 = vsyncpa [#allocation6], 0
    %14 = vsyncpa [#allocation9], 0
    %15 = vsyncpa [#allocation12], 0
    %16 = vsyncpa [#allocation4], 0
    // Predicated region
    $region2: #{tpu_custom_call.1} parent=1 // pred_check
      _
    $region3: #{tpu_custom_call.1} parent=1 // pred_check_branch
      %18 = sbr.rel (0) target = $region5
    $region4: #{tpu_custom_call.1} parent=1 // pred_region
      %20 = vsyncadd [#allocation3], 27776
      %s21 = sshll.u32 %s0, 4
      %s22 = int_to_ptr.hbm [resolvable:$true] %s21
      %s23 = sshll.u32 [#allocation2], 4
      %s24 = int_to_ptr.vmem [resolvable:$true] %s23
      %29 = dma.hbm_to_vmem [thread:$0]  %s22, 896, %s24, [#allocation3], 896, 896, 56
    $region5: #{tpu_custom_call.1} parent=1 // pred_fallthru
      _
    // Predicated region
    $region6: #{tpu_custom_call.1} parent=1 // pred_check
      _
    $region7: #{tpu_custom_call.1} parent=1 // pred_check_branch
      %31 = sbr.rel (0) target = $region9
    $region8: #{tpu_custom_call.1} parent=1 // pred_region
      %33 = vsyncadd [#allocation6], 0
      %s34 = sshll.u32 %s1, 4
      %s35 = int_to_ptr.hbm [resolvable:$true] %s34
      %s36 = sshll.u32 [#allocation5], 4
      %s37 = int_to_ptr.vmem [resolvable:$true] %s36
      %42 = dma.hbm_to_vmem [thread:$0]  %s35, 25088, %s37, [#allocation6], 256, 256, 16
    $region9: #{tpu_custom_call.1} parent=1 // pred_fallthru
      _
    // Predicated region
    $region10: #{tpu_custom_call.1} parent=1 // pred_check
      _
    $region11: #{tpu_custom_call.1} parent=1 // pred_check_branch
      %44 = sbr.rel (0) target = $region13
    $region12: #{tpu_custom_call.1} parent=1 // pred_region
      %46 = vsyncadd [#allocation6], 0
      %s48 = sshll.u32 %s2, 4
      %s49 = int_to_ptr.hbm [resolvable:$true] %s48
      %s50 = sshll.u32 [#allocation7], 4
      %s51 = int_to_ptr.vmem [resolvable:$true] %s50
      %53 = dma.hbm_to_vmem [thread:$0]  %s49, 64, %s51, [#allocation6]
    $region13: #{tpu_custom_call.1} parent=1 // pred_fallthru
      _
    // Predicated region
    $region14: #{tpu_custom_call.1} parent=1 // pred_check
      _
    $region15: #{tpu_custom_call.1} parent=1 // pred_check_branch
      %55 = sbr.rel (0) target = $region17
    $region16: #{tpu_custom_call.1} parent=1 // pred_region
      %57 = vsyncadd [#allocation9], 0
      %s58 = sshll.u32 %s3, 4
      %s59 = int_to_ptr.hbm [resolvable:$true] %s58
      %s60 = sshll.u32 [#allocation8], 4
      %s61 = int_to_ptr.vmem [resolvable:$true] %s60
      %66 = dma.hbm_to_vmem [thread:$0]  %s59, 16384, %s61, [#allocation9], 256, 256, 16
    $region17: #{tpu_custom_call.1} parent=1 // pred_fallthru
      _
    // Predicated region
    $region18: #{tpu_custom_call.1} parent=1 // pred_check
      _
    $region19: #{tpu_custom_call.1} parent=1 // pred_check_branch
      %68 = sbr.rel (0) target = $region21
    $region20: #{tpu_custom_call.1} parent=1 // pred_region
      %70 = vsyncadd [#allocation9], 0
      %s72 = sshll.u32 %s4, 4
      %s73 = int_to_ptr.hbm [resolvable:$true] %s72
      %s74 = sshll.u32 [#allocation10], 4
      %s75 = int_to_ptr.vmem [resolvable:$true] %s74
      %77 = dma.hbm_to_vmem [thread:$0]  %s73, 64, %s75, [#allocation9]
    $region21: #{tpu_custom_call.1} parent=1 // pred_fallthru
      _
    // Predicated region
    $region22: #{tpu_custom_call.1} parent=1 // pred_check
      _
    $region23: #{tpu_custom_call.1} parent=1 // pred_check_branch
      %79 = sbr.rel (0) target = $region25
    $region24: #{tpu_custom_call.1} parent=1 // pred_region
      %81 = vsyncadd [#allocation12], 0
      %s82 = sshll.u32 %s5, 4
      %s83 = int_to_ptr.hbm [resolvable:$true] %s82
      %s84 = sshll.u32 [#allocation11], 4
      %s85 = int_to_ptr.vmem [resolvable:$true] %s84
      %90 = dma.hbm_to_vmem [thread:$0]  %s83, 4096, %s85, [#allocation12], 64, 64, 4
    $region25: #{tpu_custom_call.1} parent=1 // pred_fallthru
      _
    // Predicated region
    $region26: #{tpu_custom_call.1} parent=1 // pred_check
      _
    $region27: #{tpu_custom_call.1} parent=1 // pred_check_branch
      %92 = sbr.rel (0) target = $region29
    $region28: #{tpu_custom_call.1} parent=1 // pred_region
      _
    $region29: #{tpu_custom_call.1} parent=1 // pred_fallthru
      _
    // Predicated region
    $region30: #{tpu_custom_call.1} parent=1 // pred_check
      _
    $region31: #{tpu_custom_call.1} parent=1 // pred_check_branch
      %94 = sbr.rel (0) target = $region33
    $region32: #{tpu_custom_call.1} parent=1 // pred_region
      %96 = dma.done [#allocation3], 28672
    $region33: #{tpu_custom_call.1} parent=1 // pred_fallthru
      _
    // Predicated region
    $region34: #{tpu_custom_call.1} parent=1 // pred_check
      _
    $region35: #{tpu_custom_call.1} parent=1 // pred_check_branch
      %98 = sbr.rel (0) target = $region37
    $region36: #{tpu_custom_call.1} parent=1 // pred_region
      %100 = dma.done [#allocation6], 25088
    $region37: #{tpu_custom_call.1} parent=1 // pred_fallthru
      _
    // Predicated region
    $region38: #{tpu_custom_call.1} parent=1 // pred_check
      _
    $region39: #{tpu_custom_call.1} parent=1 // pred_check_branch
      %102 = sbr.rel (0) target = $region41
    $region40: #{tpu_custom_call.1} parent=1 // pred_region
      %104 = dma.done [#allocation6], 64
    $region41: #{tpu_custom_call.1} parent=1 // pred_fallthru
      _
    // Predicated region
    $region42: #{tpu_custom_call.1} parent=1 // pred_check
      _
    $region43: #{tpu_custom_call.1} parent=1 // pred_check_branch
      %106 = sbr.rel (0) target = $region45
    $region44: #{tpu_custom_call.1} parent=1 // pred_region
      %108 = dma.done [#allocation9], 16384
    $region45: #{tpu_custom_call.1} parent=1 // pred_fallthru
      _
    // Predicated region
    $region46: #{tpu_custom_call.1} parent=1 // pred_check
      _
    $region47: #{tpu_custom_call.1} parent=1 // pred_check_branch
      %110 = sbr.rel (0) target = $region49
    $region48: #{tpu_custom_call.1} parent=1 // pred_region
      %112 = dma.done [#allocation9], 64
    $region49: #{tpu_custom_call.1} parent=1 // pred_fallthru
      _
    // Predicated region
    $region50: #{tpu_custom_call.1} parent=1 // pred_check
      _
    $region51: #{tpu_custom_call.1} parent=1 // pred_check_branch
      %114 = sbr.rel (0) target = $region53
    $region52: #{tpu_custom_call.1} parent=1 // pred_region
      %116 = dma.done [#allocation12], 4096
    $region53: #{tpu_custom_call.1} parent=1 // pred_fallthru
      _
    %v118 = vld [vmem:[#allocation2] sm:$0xff]
    %v119 = vld [vmem:[#allocation2 + $0x8] sm:$0xff]
    %v120 = vld [vmem:[#allocation2 + $0x10] sm:$0xff]
    %v121 = vld [vmem:[#allocation2 + $0x18] sm:$0xff]
    %v122 = vld [vmem:[#allocation2 + $0x20] sm:$0xff]
    %v123 = vld [vmem:[#allocation2 + $0x28] sm:$0xff]
    %v124 = vld [vmem:[#allocation2 + $0x30] sm:$0xff]
    %v125 = vld [vmem:[#allocation2 + $0x38] sm:$0xff]
    %v126 = vld [vmem:[#allocation2 + $0x40] sm:$0xff]
    %v127 = vld [vmem:[#allocation2 + $0x48] sm:$0xff]
    %v128 = vld [vmem:[#allocation2 + $0x50] sm:$0xff]
    %v129 = vld [vmem:[#allocation2 + $0x58] sm:$0xff]
    %v130 = vld [vmem:[#allocation2 + $0x60] sm:$0xff]
    %v131 = vld [vmem:[#allocation2 + $0x68] sm:$0xff]
    %v132 = vld [vmem:[#allocation2 + $0x70] sm:$0xff]
    %v133 = vld [vmem:[#allocation2 + $0x78] sm:$0xff]
    %v134 = vld [vmem:[#allocation2 + $0x80] sm:$0xff]
    %v135 = vld [vmem:[#allocation2 + $0x88] sm:$0xff]
    %v136 = vld [vmem:[#allocation2 + $0x90] sm:$0xff]
    %v137 = vld [vmem:[#allocation2 + $0x98] sm:$0xff]
    %v138 = vld [vmem:[#allocation2 + $0xa0] sm:$0xff]
    %v139 = vld [vmem:[#allocation2 + $0xa8] sm:$0xff]
    %v140 = vld [vmem:[#allocation2 + $0xb0] sm:$0xff]
    %v141 = vld [vmem:[#allocation2 + $0xb8] sm:$0xff]
    %v142 = vld [vmem:[#allocation2 + $0xc0] sm:$0xff]
    %v143 = vld [vmem:[#allocation2 + $0xc8] sm:$0xff]
    %v144 = vld [vmem:[#allocation2 + $0xd0] sm:$0xff]
    %v145 = vld [vmem:[#allocation2 + $0xd8] sm:$0xff]
    %v146 = vld [vmem:[#allocation2 + $0xe0] sm:$0xff]
    %v147 = vld [vmem:[#allocation2 + $0xe8] sm:$0xff]
    %v148 = vld [vmem:[#allocation2 + $0xf0] sm:$0xff]
    %v149 = vld [vmem:[#allocation2 + $0xf8] sm:$0xff]
    %v150 = vld [vmem:[#allocation2 + $0x100] sm:$0xff]
    %v151 = vld [vmem:[#allocation2 + $0x108] sm:$0xff]
    %v152 = vld [vmem:[#allocation2 + $0x110] sm:$0xff]
    %v153 = vld [vmem:[#allocation2 + $0x118] sm:$0xff]
    %v154 = vld [vmem:[#allocation2 + $0x120] sm:$0xff]
    %v155 = vld [vmem:[#allocation2 + $0x128] sm:$0xff]
    %v156 = vld [vmem:[#allocation2 + $0x130] sm:$0xff]
    %v157 = vld [vmem:[#allocation2 + $0x138] sm:$0xff]
    %v158 = vld [vmem:[#allocation2 + $0x140] sm:$0xff]
    %v159 = vld [vmem:[#allocation2 + $0x148] sm:$0xff]
    %v160 = vld [vmem:[#allocation2 + $0x150] sm:$0xff]
    %v161 = vld [vmem:[#allocation2 + $0x158] sm:$0xff]
    %v162 = vld [vmem:[#allocation2 + $0x160] sm:$0xff]
    %v163 = vld [vmem:[#allocation2 + $0x168] sm:$0xff]
    %v164 = vld [vmem:[#allocation2 + $0x170] sm:$0xff]
    %v165 = vld [vmem:[#allocation2 + $0x178] sm:$0xff]
    %v166 = vld [vmem:[#allocation2 + $0x180] sm:$0xff]
    %v167 = vld [vmem:[#allocation2 + $0x188] sm:$0xff]
    %v168 = vld [vmem:[#allocation2 + $0x190] sm:$0xff]
    %v169 = vld [vmem:[#allocation2 + $0x198] sm:$0xff]
    %v170 = vld [vmem:[#allocation2 + $0x1a0] sm:$0xff]
    %v171 = vld [vmem:[#allocation2 + $0x1a8] sm:$0xff]
    %v172 = vld [vmem:[#allocation2 + $0x1b0] sm:$0xff]
    %v173 = vld [vmem:[#allocation2 + $0x1b8] sm:$0xff]
    %v174 = vld [vmem:[#allocation2 + $0x1c0] sm:$0xff]
    %v175 = vld [vmem:[#allocation2 + $0x1c8] sm:$0xff]
    %v176 = vld [vmem:[#allocation2 + $0x1d0] sm:$0xff]
    %v177 = vld [vmem:[#allocation2 + $0x1d8] sm:$0xff]
    %v178 = vld [vmem:[#allocation2 + $0x1e0] sm:$0xff]
    %v179 = vld [vmem:[#allocation2 + $0x1e8] sm:$0xff]
    %v180 = vld [vmem:[#allocation2 + $0x1f0] sm:$0xff]
    %v181 = vld [vmem:[#allocation2 + $0x1f8] sm:$0xff]
    %v182 = vld [vmem:[#allocation2 + $0x200] sm:$0xff]
    %v183 = vld [vmem:[#allocation2 + $0x208] sm:$0xff]
    %v184 = vld [vmem:[#allocation2 + $0x210] sm:$0xff]
    %v185 = vld [vmem:[#allocation2 + $0x218] sm:$0xff]
    %v186 = vld [vmem:[#allocation2 + $0x220] sm:$0xff]
    %v187 = vld [vmem:[#allocation2 + $0x228] sm:$0xff]
    %v188 = vld [vmem:[#allocation2 + $0x230] sm:$0xff]
    %v189 = vld [vmem:[#allocation2 + $0x238] sm:$0xff]
    %v190 = vld [vmem:[#allocation2 + $0x240] sm:$0xff]
    %v191 = vld [vmem:[#allocation2 + $0x248] sm:$0xff]
    %v192 = vld [vmem:[#allocation2 + $0x250] sm:$0xff]
    %v193 = vld [vmem:[#allocation2 + $0x258] sm:$0xff]
    %v194 = vld [vmem:[#allocation2 + $0x260] sm:$0xff]
    %v195 = vld [vmem:[#allocation2 + $0x268] sm:$0xff]
    %v196 = vld [vmem:[#allocation2 + $0x270] sm:$0xff]
    %v197 = vld [vmem:[#allocation2 + $0x278] sm:$0xff]
    %v198 = vld [vmem:[#allocation2 + $0x280] sm:$0xff]
    %v199 = vld [vmem:[#allocation2 + $0x288] sm:$0xff]
    %v200 = vld [vmem:[#allocation2 + $0x290] sm:$0xff]
    %v201 = vld [vmem:[#allocation2 + $0x298] sm:$0xff]
    %v202 = vld [vmem:[#allocation2 + $0x2a0] sm:$0xff]
    %v203 = vld [vmem:[#allocation2 + $0x2a8] sm:$0xff]
    %v204 = vld [vmem:[#allocation2 + $0x2b0] sm:$0xff]
    %v205 = vld [vmem:[#allocation2 + $0x2b8] sm:$0xff]
    %v206 = vld [vmem:[#allocation2 + $0x2c0] sm:$0xff]
    %v207 = vld [vmem:[#allocation2 + $0x2c8] sm:$0xff]
    %v208 = vld [vmem:[#allocation2 + $0x2d0] sm:$0xff]
    %v209 = vld [vmem:[#allocation2 + $0x2d8] sm:$0xff]
    %v210 = vld [vmem:[#allocation2 + $0x2e0] sm:$0xff]
    %v211 = vld [vmem:[#allocation2 + $0x2e8] sm:$0xff]
    %v212 = vld [vmem:[#allocation2 + $0x2f0] sm:$0xff]
    %v213 = vld [vmem:[#allocation2 + $0x2f8] sm:$0xff]
    %v214 = vld [vmem:[#allocation2 + $0x300] sm:$0xff]
    %v215 = vld [vmem:[#allocation2 + $0x308] sm:$0xff]
    %v216 = vld [vmem:[#allocation2 + $0x310] sm:$0xff]
    %v217 = vld [vmem:[#allocation2 + $0x318] sm:$0xff]
    %v218 = vld [vmem:[#allocation2 + $0x320] sm:$0xff]
    %v219 = vld [vmem:[#allocation2 + $0x328] sm:$0xff]
    %v220 = vld [vmem:[#allocation2 + $0x330] sm:$0xff]
    %v221 = vld [vmem:[#allocation2 + $0x338] sm:$0xff]
    %v222 = vld [vmem:[#allocation2 + $0x340] sm:$0xff]
    %v223 = vld [vmem:[#allocation2 + $0x348] sm:$0xff]
    %v224 = vld [vmem:[#allocation2 + $0x350] sm:$0xff]
    %v225 = vld [vmem:[#allocation2 + $0x358] sm:$0xff]
    %v226 = vld [vmem:[#allocation2 + $0x360] sm:$0xff]
    %v227 = vld [vmem:[#allocation2 + $0x368] sm:$0xff]
    %v228 = vld [vmem:[#allocation2 + $0x370] sm:$0xff]
    %v229 = vld [vmem:[#allocation2 + $0x378] sm:$0xff]
    %v230 = vld [vmem:[#allocation2 + $0x380] sm:$0xff]
    %v231 = vld [vmem:[#allocation2 + $0x388] sm:$0xff]
    %v232 = vld [vmem:[#allocation2 + $0x390] sm:$0xff]
    %v233 = vld [vmem:[#allocation2 + $0x398] sm:$0xff]
    %v234 = vld [vmem:[#allocation2 + $0x3a0] sm:$0xff]
    %v235 = vld [vmem:[#allocation2 + $0x3a8] sm:$0xff]
    %v236 = vld [vmem:[#allocation2 + $0x3b0] sm:$0xff]
    %v237 = vld [vmem:[#allocation2 + $0x3b8] sm:$0xff]
    %v238 = vld [vmem:[#allocation2 + $0x3c0] sm:$0xff]
    %v239 = vld [vmem:[#allocation2 + $0x3c8] sm:$0xff]
    %v240 = vld [vmem:[#allocation2 + $0x3d0] sm:$0xff]
    %v241 = vld [vmem:[#allocation2 + $0x3d8] sm:$0xff]
    %v242 = vld [vmem:[#allocation2 + $0x3e0] sm:$0xff]
    %v243 = vld [vmem:[#allocation2 + $0x3e8] sm:$0xff]
    %v244 = vld [vmem:[#allocation2 + $0x3f0] sm:$0xff]
    %v245 = vld [vmem:[#allocation2 + $0x3f8] sm:$0xff]
    %v246 = vld [vmem:[#allocation2 + $0x400] sm:$0xff]
    %v247 = vld [vmem:[#allocation2 + $0x408] sm:$0xff]
    %v248 = vld [vmem:[#allocation2 + $0x410] sm:$0xff]
    %v249 = vld [vmem:[#allocation2 + $0x418] sm:$0xff]
    %v250 = vld [vmem:[#allocation2 + $0x420] sm:$0xff]
    %v251 = vld [vmem:[#allocation2 + $0x428] sm:$0xff]
    %v252 = vld [vmem:[#allocation2 + $0x430] sm:$0xff]
    %v253 = vld [vmem:[#allocation2 + $0x438] sm:$0xff]
    %v254 = vld [vmem:[#allocation2 + $0x440] sm:$0xff]
    %v255 = vld [vmem:[#allocation2 + $0x448] sm:$0xff]
    %v256 = vld [vmem:[#allocation2 + $0x450] sm:$0xff]
    %v257 = vld [vmem:[#allocation2 + $0x458] sm:$0xff]
    %v258 = vld [vmem:[#allocation2 + $0x460] sm:$0xff]
    %v259 = vld [vmem:[#allocation2 + $0x468] sm:$0xff]
    %v260 = vld [vmem:[#allocation2 + $0x470] sm:$0xff]
    %v261 = vld [vmem:[#allocation2 + $0x478] sm:$0xff]
    %v262 = vld [vmem:[#allocation2 + $0x480] sm:$0xff]
    %v263 = vld [vmem:[#allocation2 + $0x488] sm:$0xff]
    %v264 = vld [vmem:[#allocation2 + $0x490] sm:$0xff]
    %v265 = vld [vmem:[#allocation2 + $0x498] sm:$0xff]
    %v266 = vld [vmem:[#allocation2 + $0x4a0] sm:$0xff]
    %v267 = vld [vmem:[#allocation2 + $0x4a8] sm:$0xff]
    %v268 = vld [vmem:[#allocation2 + $0x4b0] sm:$0xff]
    %v269 = vld [vmem:[#allocation2 + $0x4b8] sm:$0xff]
    %v270 = vld [vmem:[#allocation2 + $0x4c0] sm:$0xff]
    %v271 = vld [vmem:[#allocation2 + $0x4c8] sm:$0xff]
    %v272 = vld [vmem:[#allocation2 + $0x4d0] sm:$0xff]
    %v273 = vld [vmem:[#allocation2 + $0x4d8] sm:$0xff]
    %v274 = vld [vmem:[#allocation2 + $0x4e0] sm:$0xff]
    %v275 = vld [vmem:[#allocation2 + $0x4e8] sm:$0xff]
    %v276 = vld [vmem:[#allocation2 + $0x4f0] sm:$0xff]
    %v277 = vld [vmem:[#allocation2 + $0x4f8] sm:$0xff]
    %v278 = vld [vmem:[#allocation2 + $0x500] sm:$0xff]
    %v279 = vld [vmem:[#allocation2 + $0x508] sm:$0xff]
    %v280 = vld [vmem:[#allocation2 + $0x510] sm:$0xff]
    %v281 = vld [vmem:[#allocation2 + $0x518] sm:$0xff]
    %v282 = vld [vmem:[#allocation2 + $0x520] sm:$0xff]
    %v283 = vld [vmem:[#allocation2 + $0x528] sm:$0xff]
    %v284 = vld [vmem:[#allocation2 + $0x530] sm:$0xff]
    %v285 = vld [vmem:[#allocation2 + $0x538] sm:$0xff]
    %v286 = vld [vmem:[#allocation2 + $0x540] sm:$0xff]
    %v287 = vld [vmem:[#allocation2 + $0x548] sm:$0xff]
    %v288 = vld [vmem:[#allocation2 + $0x550] sm:$0xff]
    %v289 = vld [vmem:[#allocation2 + $0x558] sm:$0xff]
    %v290 = vld [vmem:[#allocation2 + $0x560] sm:$0xff]
    %v291 = vld [vmem:[#allocation2 + $0x568] sm:$0xff]
    %v292 = vld [vmem:[#allocation2 + $0x570] sm:$0xff]
    %v293 = vld [vmem:[#allocation2 + $0x578] sm:$0xff]
    %v294 = vld [vmem:[#allocation2 + $0x580] sm:$0xff]
    %v295 = vld [vmem:[#allocation2 + $0x588] sm:$0xff]
    %v296 = vld [vmem:[#allocation2 + $0x590] sm:$0xff]
    %v297 = vld [vmem:[#allocation2 + $0x598] sm:$0xff]
    %v298 = vld [vmem:[#allocation2 + $0x5a0] sm:$0xff]
    %v299 = vld [vmem:[#allocation2 + $0x5a8] sm:$0xff]
    %v300 = vld [vmem:[#allocation2 + $0x5b0] sm:$0xff]
    %v301 = vld [vmem:[#allocation2 + $0x5b8] sm:$0xff]
    %v302 = vld [vmem:[#allocation2 + $0x5c0] sm:$0xff]
    %v303 = vld [vmem:[#allocation2 + $0x5c8] sm:$0xff]
    %v304 = vld [vmem:[#allocation2 + $0x5d0] sm:$0xff]
    %v305 = vld [vmem:[#allocation2 + $0x5d8] sm:$0xff]
    %v306 = vld [vmem:[#allocation2 + $0x5e0] sm:$0xff]
    %v307 = vld [vmem:[#allocation2 + $0x5e8] sm:$0xff]
    %v308 = vld [vmem:[#allocation2 + $0x5f0] sm:$0xff]
    %v309 = vld [vmem:[#allocation2 + $0x5f8] sm:$0xff]
    %v310 = vld [vmem:[#allocation2 + $0x600] sm:$0xff]
    %v311 = vld [vmem:[#allocation2 + $0x608] sm:$0xff]
    %v312 = vld [vmem:[#allocation2 + $0x610] sm:$0xff]
    %v313 = vld [vmem:[#allocation2 + $0x618] sm:$0xff]
    %v314 = vld [vmem:[#allocation2 + $0x620] sm:$0xff]
    %v315 = vld [vmem:[#allocation2 + $0x628] sm:$0xff]
    %v316 = vld [vmem:[#allocation2 + $0x630] sm:$0xff]
    %v317 = vld [vmem:[#allocation2 + $0x638] sm:$0xff]
    %v318 = vld [vmem:[#allocation2 + $0x640] sm:$0xff]
    %v319 = vld [vmem:[#allocation2 + $0x648] sm:$0xff]
    %v320 = vld [vmem:[#allocation2 + $0x650] sm:$0xff]
    %v321 = vld [vmem:[#allocation2 + $0x658] sm:$0xff]
    %v322 = vld [vmem:[#allocation2 + $0x660] sm:$0xff]
    %v323 = vld [vmem:[#allocation2 + $0x668] sm:$0xff]
    %v324 = vld [vmem:[#allocation2 + $0x670] sm:$0xff]
    %v325 = vld [vmem:[#allocation2 + $0x678] sm:$0xff]
    %v326 = vld [vmem:[#allocation2 + $0x680] sm:$0xff]
    %v327 = vld [vmem:[#allocation2 + $0x688] sm:$0xff]
    %v328 = vld [vmem:[#allocation2 + $0x690] sm:$0xff]
    %v329 = vld [vmem:[#allocation2 + $0x698] sm:$0xff]
    %v330 = vld [vmem:[#allocation2 + $0x6a0] sm:$0xff]
    %v331 = vld [vmem:[#allocation2 + $0x6a8] sm:$0xff]
    %v332 = vld [vmem:[#allocation2 + $0x6b0] sm:$0xff]
    %v333 = vld [vmem:[#allocation2 + $0x6b8] sm:$0xff]
    %v334 = vld [vmem:[#allocation2 + $0x6c0] sm:$0xff]
    %v335 = vld [vmem:[#allocation2 + $0x6c8] sm:$0xff]
    %v336 = vld [vmem:[#allocation2 + $0x6d0] sm:$0xff]
    %v337 = vld [vmem:[#allocation2 + $0x6d8] sm:$0xff]
    %v338 = vld [vmem:[#allocation2 + $0x6e0] sm:$0xff]
    %v339 = vld [vmem:[#allocation2 + $0x6e8] sm:$0xff]
    %v340 = vld [vmem:[#allocation2 + $0x6f0] sm:$0xff]
    %v341 = vld [vmem:[#allocation2 + $0x6f8] sm:$0xff]
    %v342 = vpack.c.bf16 %v125, %v118
    %v343 = vpack.c.bf16 %v126, %v119
    %v344 = vpack.c.bf16 %v127, %v120
    %v345 = vpack.c.bf16 %v128, %v121
    %v346 = vpack.c.bf16 %v129, %v122
    %v347 = vpack.c.bf16 %v130, %v123
    %v348 = vpack.c.bf16 %v131, %v124
    %v349 = vpack.c.bf16 %v139, %v132
    %v350 = vpack.c.bf16 %v140, %v133
    %v351 = vpack.c.bf16 %v141, %v134
    %v352 = vpack.c.bf16 %v142, %v135
    %v353 = vpack.c.bf16 %v143, %v136
    %v354 = vpack.c.bf16 %v144, %v137
    %v355 = vpack.c.bf16 %v145, %v138
    %v356 = vpack.c.bf16 %v153, %v146
    %v357 = vpack.c.bf16 %v154, %v147
    %v358 = vpack.c.bf16 %v155, %v148
    %v359 = vpack.c.bf16 %v156, %v149
    %v360 = vpack.c.bf16 %v157, %v150
    %v361 = vpack.c.bf16 %v158, %v151
    %v362 = vpack.c.bf16 %v159, %v152
    %v363 = vpack.c.bf16 %v167, %v160
    %v364 = vpack.c.bf16 %v168, %v161
    %v365 = vpack.c.bf16 %v169, %v162
    %v366 = vpack.c.bf16 %v170, %v163
    %v367 = vpack.c.bf16 %v171, %v164
    %v368 = vpack.c.bf16 %v172, %v165
    %v369 = vpack.c.bf16 %v173, %v166
    %v370 = vpack.c.bf16 %v181, %v174
    %v371 = vpack.c.bf16 %v182, %v175
    %v372 = vpack.c.bf16 %v183, %v176
    %v373 = vpack.c.bf16 %v184, %v177
    %v374 = vpack.c.bf16 %v185, %v178
    %v375 = vpack.c.bf16 %v186, %v179
    %v376 = vpack.c.bf16 %v187, %v180
    %v377 = vpack.c.bf16 %v195, %v188
    %v378 = vpack.c.bf16 %v196, %v189
    %v379 = vpack.c.bf16 %v197, %v190
    %v380 = vpack.c.bf16 %v198, %v191
    %v381 = vpack.c.bf16 %v199, %v192
    %v382 = vpack.c.bf16 %v200, %v193
    %v383 = vpack.c.bf16 %v201, %v194
    %v384 = vpack.c.bf16 %v209, %v202
    %v385 = vpack.c.bf16 %v210, %v203
    %v386 = vpack.c.bf16 %v211, %v204
    %v387 = vpack.c.bf16 %v212, %v205
    %v388 = vpack.c.bf16 %v213, %v206
    %v389 = vpack.c.bf16 %v214, %v207
    %v390 = vpack.c.bf16 %v215, %v208
    %v391 = vpack.c.bf16 %v223, %v216
    %v392 = vpack.c.bf16 %v224, %v217
    %v393 = vpack.c.bf16 %v225, %v218
    %v394 = vpack.c.bf16 %v226, %v219
    %v395 = vpack.c.bf16 %v227, %v220
    %v396 = vpack.c.bf16 %v228, %v221
    %v397 = vpack.c.bf16 %v229, %v222
    %v398 = vpack.c.bf16 %v237, %v230
    %v399 = vpack.c.bf16 %v238, %v231
    %v400 = vpack.c.bf16 %v239, %v232
    %v401 = vpack.c.bf16 %v240, %v233
    %v402 = vpack.c.bf16 %v241, %v234
    %v403 = vpack.c.bf16 %v242, %v235
    %v404 = vpack.c.bf16 %v243, %v236
    %v405 = vpack.c.bf16 %v251, %v244
    %v406 = vpack.c.bf16 %v252, %v245
    %v407 = vpack.c.bf16 %v253, %v246
    %v408 = vpack.c.bf16 %v254, %v247
    %v409 = vpack.c.bf16 %v255, %v248
    %v410 = vpack.c.bf16 %v256, %v249
    %v411 = vpack.c.bf16 %v257, %v250
    %v412 = vpack.c.bf16 %v265, %v258
    %v413 = vpack.c.bf16 %v266, %v259
    %v414 = vpack.c.bf16 %v267, %v260
    %v415 = vpack.c.bf16 %v268, %v261
    %v416 = vpack.c.bf16 %v269, %v262
    %v417 = vpack.c.bf16 %v270, %v263
    %v418 = vpack.c.bf16 %v271, %v264
    %v419 = vpack.c.bf16 %v279, %v272
    %v420 = vpack.c.bf16 %v280, %v273
    %v421 = vpack.c.bf16 %v281, %v274
    %v422 = vpack.c.bf16 %v282, %v275
    %v423 = vpack.c.bf16 %v283, %v276
    %v424 = vpack.c.bf16 %v284, %v277
    %v425 = vpack.c.bf16 %v285, %v278
    %v426 = vpack.c.bf16 %v293, %v286
    %v427 = vpack.c.bf16 %v294, %v287
    %v428 = vpack.c.bf16 %v295, %v288
    %v429 = vpack.c.bf16 %v296, %v289
    %v430 = vpack.c.bf16 %v297, %v290
    %v431 = vpack.c.bf16 %v298, %v291
    %v432 = vpack.c.bf16 %v299, %v292
    %v433 = vpack.c.bf16 %v307, %v300
    %v434 = vpack.c.bf16 %v308, %v301
    %v435 = vpack.c.bf16 %v309, %v302
    %v436 = vpack.c.bf16 %v310, %v303
    %v437 = vpack.c.bf16 %v311, %v304
    %v438 = vpack.c.bf16 %v312, %v305
    %v439 = vpack.c.bf16 %v313, %v306
    %v440 = vpack.c.bf16 %v321, %v314
    %v441 = vpack.c.bf16 %v322, %v315
    %v442 = vpack.c.bf16 %v323, %v316
    %v443 = vpack.c.bf16 %v324, %v317
    %v444 = vpack.c.bf16 %v325, %v318
    %v445 = vpack.c.bf16 %v326, %v319
    %v446 = vpack.c.bf16 %v327, %v320
    %v447 = vpack.c.bf16 %v335, %v328
    %v448 = vpack.c.bf16 %v336, %v329
    %v449 = vpack.c.bf16 %v337, %v330
    %v450 = vpack.c.bf16 %v338, %v331
    %v451 = vpack.c.bf16 %v339, %v332
    %v452 = vpack.c.bf16 %v340, %v333
    %v453 = vpack.c.bf16 %v341, %v334
    %v454 = vld [vmem:[#allocation5] sm:$0xff]
    %v455 = vld [vmem:[#allocation5 + $0x8] sm:$0xff]
    %v456 = vld [vmem:[#allocation5 + $0x10] sm:$0xff]
    %v457 = vld [vmem:[#allocation5 + $0x18] sm:$0xff]
    %v458 = vld [vmem:[#allocation5 + $0x20] sm:$0xff]
    %v459 = vld [vmem:[#allocation5 + $0x28] sm:$0xff]
    %v460 = vld [vmem:[#allocation5 + $0x30] sm:$0xff]
    %v461 = vld [vmem:[#allocation5 + $0x38] sm:$0xff]
    %v462 = vld [vmem:[#allocation5 + $0x40] sm:$0xff]
    %v463 = vld [vmem:[#allocation5 + $0x48] sm:$0xff]
    %v464 = vld [vmem:[#allocation5 + $0x50] sm:$0xff]
    %v465 = vld [vmem:[#allocation5 + $0x58] sm:$0xff]
    %v466 = vld [vmem:[#allocation5 + $0x60] sm:$0xff]
    %v467 = vld [vmem:[#allocation5 + $0x68] sm:$0xff]
    %v468 = vld [vmem:[#allocation5 + $0x70] sm:$0xff]
    %v469 = vld [vmem:[#allocation5 + $0x78] sm:$0xff]
    %v470 = vld [vmem:[#allocation5 + $0x80] sm:$0xff]
    %v471 = vld [vmem:[#allocation5 + $0x88] sm:$0xff]
    %v472 = vld [vmem:[#allocation5 + $0x90] sm:$0xff]
    %v473 = vld [vmem:[#allocation5 + $0x98] sm:$0xff]
    %v474 = vld [vmem:[#allocation5 + $0xa0] sm:$0xff]
    %v475 = vld [vmem:[#allocation5 + $0xa8] sm:$0xff]
    %v476 = vld [vmem:[#allocation5 + $0xb0] sm:$0xff]
    %v477 = vld [vmem:[#allocation5 + $0xb8] sm:$0xff]
    %v478 = vld [vmem:[#allocation5 + $0xc0] sm:$0xff]
    %v479 = vld [vmem:[#allocation5 + $0xc8] sm:$0xff]
    %v480 = vld [vmem:[#allocation5 + $0xd0] sm:$0xff]
    %v481 = vld [vmem:[#allocation5 + $0xd8] sm:$0xff]
    %v482 = vld [vmem:[#allocation5 + $0xe0] sm:$0xff]
    %v483 = vld [vmem:[#allocation5 + $0xe8] sm:$0xff]
    %v484 = vld [vmem:[#allocation5 + $0xf0] sm:$0xff]
    %v485 = vld [vmem:[#allocation5 + $0xf8] sm:$0xff]
    %v486 = vld [vmem:[#allocation5 + $0x100] sm:$0xff]
    %v487 = vld [vmem:[#allocation5 + $0x108] sm:$0xff]
    %v488 = vld [vmem:[#allocation5 + $0x110] sm:$0xff]
    %v489 = vld [vmem:[#allocation5 + $0x118] sm:$0xff]
    %v490 = vld [vmem:[#allocation5 + $0x120] sm:$0xff]
    %v491 = vld [vmem:[#allocation5 + $0x128] sm:$0xff]
    %v492 = vld [vmem:[#allocation5 + $0x130] sm:$0xff]
    %v493 = vld [vmem:[#allocation5 + $0x138] sm:$0xff]
    %v494 = vld [vmem:[#allocation5 + $0x140] sm:$0xff]
    %v495 = vld [vmem:[#allocation5 + $0x148] sm:$0xff]
    %v496 = vld [vmem:[#allocation5 + $0x150] sm:$0xff]
    %v497 = vld [vmem:[#allocation5 + $0x158] sm:$0xff]
    %v498 = vld [vmem:[#allocation5 + $0x160] sm:$0xff]
    %v499 = vld [vmem:[#allocation5 + $0x168] sm:$0xff]
    %v500 = vld [vmem:[#allocation5 + $0x170] sm:$0xff]
    %v501 = vld [vmem:[#allocation5 + $0x178] sm:$0xff]
    %v502 = vld [vmem:[#allocation5 + $0x180] sm:$0xff]
    %v503 = vld [vmem:[#allocation5 + $0x188] sm:$0xff]
    %v504 = vld [vmem:[#allocation5 + $0x190] sm:$0xff]
    %v505 = vld [vmem:[#allocation5 + $0x198] sm:$0xff]
    %v506 = vld [vmem:[#allocation5 + $0x1a0] sm:$0xff]
    %v507 = vld [vmem:[#allocation5 + $0x1a8] sm:$0xff]
    %v508 = vld [vmem:[#allocation5 + $0x1b0] sm:$0xff]
    %v509 = vld [vmem:[#allocation5 + $0x1b8] sm:$0xff]
    %v510 = vld [vmem:[#allocation5 + $0x1c0] sm:$0xff]
    %v511 = vld [vmem:[#allocation5 + $0x1c8] sm:$0xff]
    %v512 = vld [vmem:[#allocation5 + $0x1d0] sm:$0xff]
    %v513 = vld [vmem:[#allocation5 + $0x1d8] sm:$0xff]
    %v514 = vld [vmem:[#allocation5 + $0x1e0] sm:$0xff]
    %v515 = vld [vmem:[#allocation5 + $0x1e8] sm:$0xff]
    %v516 = vld [vmem:[#allocation5 + $0x1f0] sm:$0xff]
    %v517 = vld [vmem:[#allocation5 + $0x1f8] sm:$0xff]
    %v518 = vld [vmem:[#allocation5 + $0x200] sm:$0xff]
    %v519 = vld [vmem:[#allocation5 + $0x208] sm:$0xff]
    %v520 = vld [vmem:[#allocation5 + $0x210] sm:$0xff]
    %v521 = vld [vmem:[#allocation5 + $0x218] sm:$0xff]
    %v522 = vld [vmem:[#allocation5 + $0x220] sm:$0xff]
    %v523 = vld [vmem:[#allocation5 + $0x228] sm:$0xff]
    %v524 = vld [vmem:[#allocation5 + $0x230] sm:$0xff]
    %v525 = vld [vmem:[#allocation5 + $0x238] sm:$0xff]
    %v526 = vld [vmem:[#allocation5 + $0x240] sm:$0xff]
    %v527 = vld [vmem:[#allocation5 + $0x248] sm:$0xff]
    %v528 = vld [vmem:[#allocation5 + $0x250] sm:$0xff]
    %v529 = vld [vmem:[#allocation5 + $0x258] sm:$0xff]
    %v530 = vld [vmem:[#allocation5 + $0x260] sm:$0xff]
    %v531 = vld [vmem:[#allocation5 + $0x268] sm:$0xff]
    %v532 = vld [vmem:[#allocation5 + $0x270] sm:$0xff]
    %v533 = vld [vmem:[#allocation5 + $0x278] sm:$0xff]
    %v534 = vld [vmem:[#allocation5 + $0x280] sm:$0xff]
    %v535 = vld [vmem:[#allocation5 + $0x288] sm:$0xff]
    %v536 = vld [vmem:[#allocation5 + $0x290] sm:$0xff]
    %v537 = vld [vmem:[#allocation5 + $0x298] sm:$0xff]
    %v538 = vld [vmem:[#allocation5 + $0x2a0] sm:$0xff]
    %v539 = vld [vmem:[#allocation5 + $0x2a8] sm:$0xff]
    %v540 = vld [vmem:[#allocation5 + $0x2b0] sm:$0xff]
    %v541 = vld [vmem:[#allocation5 + $0x2b8] sm:$0xff]
    %v542 = vld [vmem:[#allocation5 + $0x2c0] sm:$0xff]
    %v543 = vld [vmem:[#allocation5 + $0x2c8] sm:$0xff]
    %v544 = vld [vmem:[#allocation5 + $0x2d0] sm:$0xff]
    %v545 = vld [vmem:[#allocation5 + $0x2d8] sm:$0xff]
    %v546 = vld [vmem:[#allocation5 + $0x2e0] sm:$0xff]
    %v547 = vld [vmem:[#allocation5 + $0x2e8] sm:$0xff]
    %v548 = vld [vmem:[#allocation5 + $0x2f0] sm:$0xff]
    %v549 = vld [vmem:[#allocation5 + $0x2f8] sm:$0xff]
    %v550 = vld [vmem:[#allocation5 + $0x300] sm:$0xff]
    %v551 = vld [vmem:[#allocation5 + $0x308] sm:$0xff]
    %v552 = vld [vmem:[#allocation5 + $0x310] sm:$0xff]
    %v553 = vld [vmem:[#allocation5 + $0x318] sm:$0xff]
    %v554 = vld [vmem:[#allocation5 + $0x320] sm:$0xff]
    %v555 = vld [vmem:[#allocation5 + $0x328] sm:$0xff]
    %v556 = vld [vmem:[#allocation5 + $0x330] sm:$0xff]
    %v557 = vld [vmem:[#allocation5 + $0x338] sm:$0xff]
    %v558 = vld [vmem:[#allocation5 + $0x340] sm:$0xff]
    %v559 = vld [vmem:[#allocation5 + $0x348] sm:$0xff]
    %v560 = vld [vmem:[#allocation5 + $0x350] sm:$0xff]
    %v561 = vld [vmem:[#allocation5 + $0x358] sm:$0xff]
    %v562 = vld [vmem:[#allocation5 + $0x360] sm:$0xff]
    %v563 = vld [vmem:[#allocation5 + $0x368] sm:$0xff]
    %v564 = vld [vmem:[#allocation5 + $0x370] sm:$0xff]
    %v565 = vld [vmem:[#allocation5 + $0x378] sm:$0xff]
    %v566 = vld [vmem:[#allocation5 + $0x380] sm:$0xff]
    %v567 = vld [vmem:[#allocation5 + $0x388] sm:$0xff]
    %v568 = vld [vmem:[#allocation5 + $0x390] sm:$0xff]
    %v569 = vld [vmem:[#allocation5 + $0x398] sm:$0xff]
    %v570 = vld [vmem:[#allocation5 + $0x3a0] sm:$0xff]
    %v571 = vld [vmem:[#allocation5 + $0x3a8] sm:$0xff]
    %v572 = vld [vmem:[#allocation5 + $0x3b0] sm:$0xff]
    %v573 = vld [vmem:[#allocation5 + $0x3b8] sm:$0xff]
    %v574 = vld [vmem:[#allocation5 + $0x3c0] sm:$0xff]
    %v575 = vld [vmem:[#allocation5 + $0x3c8] sm:$0xff]
    %v576 = vld [vmem:[#allocation5 + $0x3d0] sm:$0xff]
    %v577 = vld [vmem:[#allocation5 + $0x3d8] sm:$0xff]
    %v578 = vld [vmem:[#allocation5 + $0x3e0] sm:$0xff]
    %v579 = vld [vmem:[#allocation5 + $0x3e8] sm:$0xff]
    %v580 = vld [vmem:[#allocation5 + $0x3f0] sm:$0xff]
    %v581 = vld [vmem:[#allocation5 + $0x3f8] sm:$0xff]
    %v582 = vld [vmem:[#allocation5 + $0x400] sm:$0xff]
    %v583 = vld [vmem:[#allocation5 + $0x408] sm:$0xff]
    %v584 = vld [vmem:[#allocation5 + $0x410] sm:$0xff]
    %v585 = vld [vmem:[#allocation5 + $0x418] sm:$0xff]
    %v586 = vld [vmem:[#allocation5 + $0x420] sm:$0xff]
    %v587 = vld [vmem:[#allocation5 + $0x428] sm:$0xff]
    %v588 = vld [vmem:[#allocation5 + $0x430] sm:$0xff]
    %v589 = vld [vmem:[#allocation5 + $0x438] sm:$0xff]
    %v590 = vld [vmem:[#allocation5 + $0x440] sm:$0xff]
    %v591 = vld [vmem:[#allocation5 + $0x448] sm:$0xff]
    %v592 = vld [vmem:[#allocation5 + $0x450] sm:$0xff]
    %v593 = vld [vmem:[#allocation5 + $0x458] sm:$0xff]
    %v594 = vld [vmem:[#allocation5 + $0x460] sm:$0xff]
    %v595 = vld [vmem:[#allocation5 + $0x468] sm:$0xff]
    %v596 = vld [vmem:[#allocation5 + $0x470] sm:$0xff]
    %v597 = vld [vmem:[#allocation5 + $0x478] sm:$0xff]
    %v598 = vld [vmem:[#allocation5 + $0x480] sm:$0xff]
    %v599 = vld [vmem:[#allocation5 + $0x488] sm:$0xff]
    %v600 = vld [vmem:[#allocation5 + $0x490] sm:$0xff]
    %v601 = vld [vmem:[#allocation5 + $0x498] sm:$0xff]
    %v602 = vld [vmem:[#allocation5 + $0x4a0] sm:$0xff]
    %v603 = vld [vmem:[#allocation5 + $0x4a8] sm:$0xff]
    %v604 = vld [vmem:[#allocation5 + $0x4b0] sm:$0xff]
    %v605 = vld [vmem:[#allocation5 + $0x4b8] sm:$0xff]
    %v606 = vld [vmem:[#allocation5 + $0x4c0] sm:$0xff]
    %v607 = vld [vmem:[#allocation5 + $0x4c8] sm:$0xff]
    %v608 = vld [vmem:[#allocation5 + $0x4d0] sm:$0xff]
    %v609 = vld [vmem:[#allocation5 + $0x4d8] sm:$0xff]
    %v610 = vld [vmem:[#allocation5 + $0x4e0] sm:$0xff]
    %v611 = vld [vmem:[#allocation5 + $0x4e8] sm:$0xff]
    %v612 = vld [vmem:[#allocation5 + $0x4f0] sm:$0xff]
    %v613 = vld [vmem:[#allocation5 + $0x4f8] sm:$0xff]
    %v614 = vld [vmem:[#allocation5 + $0x500] sm:$0xff]
    %v615 = vld [vmem:[#allocation5 + $0x508] sm:$0xff]
    %v616 = vld [vmem:[#allocation5 + $0x510] sm:$0xff]
    %v617 = vld [vmem:[#allocation5 + $0x518] sm:$0xff]
    %v618 = vld [vmem:[#allocation5 + $0x520] sm:$0xff]
    %v619 = vld [vmem:[#allocation5 + $0x528] sm:$0xff]
    %v620 = vld [vmem:[#allocation5 + $0x530] sm:$0xff]
    %v621 = vld [vmem:[#allocation5 + $0x538] sm:$0xff]
    %v622 = vld [vmem:[#allocation5 + $0x540] sm:$0xff]
    %v623 = vld [vmem:[#allocation5 + $0x548] sm:$0xff]
    %v624 = vld [vmem:[#allocation5 + $0x550] sm:$0xff]
    %v625 = vld [vmem:[#allocation5 + $0x558] sm:$0xff]
    %v626 = vld [vmem:[#allocation5 + $0x560] sm:$0xff]
    %v627 = vld [vmem:[#allocation5 + $0x568] sm:$0xff]
    %v628 = vld [vmem:[#allocation5 + $0x570] sm:$0xff]
    %v629 = vld [vmem:[#allocation5 + $0x578] sm:$0xff]
    %v630 = vld [vmem:[#allocation5 + $0x580] sm:$0xff]
    %v631 = vld [vmem:[#allocation5 + $0x588] sm:$0xff]
    %v632 = vld [vmem:[#allocation5 + $0x590] sm:$0xff]
    %v633 = vld [vmem:[#allocation5 + $0x598] sm:$0xff]
    %v634 = vld [vmem:[#allocation5 + $0x5a0] sm:$0xff]
    %v635 = vld [vmem:[#allocation5 + $0x5a8] sm:$0xff]
    %v636 = vld [vmem:[#allocation5 + $0x5b0] sm:$0xff]
    %v637 = vld [vmem:[#allocation5 + $0x5b8] sm:$0xff]
    %v638 = vld [vmem:[#allocation5 + $0x5c0] sm:$0xff]
    %v639 = vld [vmem:[#allocation5 + $0x5c8] sm:$0xff]
    %v640 = vld [vmem:[#allocation5 + $0x5d0] sm:$0xff]
    %v641 = vld [vmem:[#allocation5 + $0x5d8] sm:$0xff]
    %v642 = vld [vmem:[#allocation5 + $0x5e0] sm:$0xff]
    %v643 = vld [vmem:[#allocation5 + $0x5e8] sm:$0xff]
    %v644 = vld [vmem:[#allocation5 + $0x5f0] sm:$0xff]
    %v645 = vld [vmem:[#allocation5 + $0x5f8] sm:$0xff]
    %v646 = vld [vmem:[#allocation5 + $0x600] sm:$0xff]
    %v647 = vld [vmem:[#allocation5 + $0x608] sm:$0xff]
    %v648 = vld [vmem:[#allocation5 + $0x610] sm:$0xff]
    %v649 = vld [vmem:[#allocation5 + $0x618] sm:$0xff]
    %v650 = vld [vmem:[#allocation7] sm:$0xf]
    %v652 = vperm.slane %v650, 0
    %v653 = vperm.slane %v650, 1
    %v654 = vperm.slane %v650, 2
    %v655 = vperm.slane %v650, 3
    %v856 = vunpack.c.l.b16 %v454
    %v857 = vunpack.c.h.b16 %v454
    %v858 = vunpack.c.l.b16 %v455
    %v859 = vunpack.c.h.b16 %v455
    %v860 = vunpack.c.l.b16 %v456
    %v861 = vunpack.c.h.b16 %v456
    %v862 = vunpack.c.l.b16 %v457
    %v863 = vunpack.c.h.b16 %v457
    %v864 = vunpack.c.l.b16 %v458
    %v865 = vunpack.c.h.b16 %v458
    %v866 = vunpack.c.l.b16 %v459
    %v867 = vunpack.c.h.b16 %v459
    %v868 = vunpack.c.l.b16 %v460
    %v869 = vunpack.c.h.b16 %v460
    %v870 = vunpack.c.l.b16 %v461
    %v871 = vunpack.c.h.b16 %v461
    %v872 = vunpack.c.l.b16 %v462
    %v873 = vunpack.c.h.b16 %v462
    %v874 = vunpack.c.l.b16 %v463
    %v875 = vunpack.c.h.b16 %v463
    %v876 = vunpack.c.l.b16 %v464
    %v877 = vunpack.c.h.b16 %v464
    %v878 = vunpack.c.l.b16 %v465
    %v879 = vunpack.c.h.b16 %v465
    %v880 = vunpack.c.l.b16 %v466
    %v881 = vunpack.c.h.b16 %v466
    %v882 = vunpack.c.l.b16 %v467
    %v883 = vunpack.c.h.b16 %v467
    %v884 = vunpack.c.l.b16 %v468
    %v885 = vunpack.c.h.b16 %v468
    %v886 = vunpack.c.l.b16 %v469
    %v887 = vunpack.c.h.b16 %v469
    %v888 = vunpack.c.l.b16 %v470
    %v889 = vunpack.c.h.b16 %v470
    %v890 = vunpack.c.l.b16 %v471
    %v891 = vunpack.c.h.b16 %v471
    %v892 = vunpack.c.l.b16 %v472
    %v893 = vunpack.c.h.b16 %v472
    %v894 = vunpack.c.l.b16 %v473
    %v895 = vunpack.c.h.b16 %v473
    %v896 = vunpack.c.l.b16 %v474
    %v897 = vunpack.c.h.b16 %v474
    %v898 = vunpack.c.l.b16 %v475
    %v899 = vunpack.c.h.b16 %v475
    %v900 = vunpack.c.l.b16 %v476
    %v901 = vunpack.c.h.b16 %v476
    %v902 = vunpack.c.l.b16 %v477
    %v903 = vunpack.c.h.b16 %v477
    %v904 = vunpack.c.l.b16 %v478
    %v905 = vunpack.c.h.b16 %v478
    %v906 = vunpack.c.l.b16 %v479
    %v907 = vunpack.c.h.b16 %v479
    %v908 = vunpack.c.l.b16 %v480
    %v909 = vunpack.c.h.b16 %v480
    %v910 = vunpack.c.l.b16 %v481
    %v911 = vunpack.c.h.b16 %v481
    %v912 = vunpack.c.l.b16 %v482
    %v913 = vunpack.c.h.b16 %v482
    %v914 = vunpack.c.l.b16 %v483
    %v915 = vunpack.c.h.b16 %v483
    %v916 = vunpack.c.l.b16 %v484
    %v917 = vunpack.c.h.b16 %v484
    %v918 = vunpack.c.l.b16 %v485
    %v919 = vunpack.c.h.b16 %v485
    %v920 = vunpack.c.l.b16 %v486
    %v921 = vunpack.c.h.b16 %v486
    %v922 = vunpack.c.l.b16 %v487
    %v923 = vunpack.c.h.b16 %v487
    %v924 = vunpack.c.l.b16 %v488
    %v925 = vunpack.c.h.b16 %v488
    %v926 = vunpack.c.l.b16 %v489
    %v927 = vunpack.c.h.b16 %v489
    %v928 = vunpack.c.l.b16 %v490
    %v929 = vunpack.c.h.b16 %v490
    %v930 = vunpack.c.l.b16 %v491
    %v931 = vunpack.c.h.b16 %v491
    %v932 = vunpack.c.l.b16 %v492
    %v933 = vunpack.c.h.b16 %v492
    %v934 = vunpack.c.l.b16 %v493
    %v935 = vunpack.c.h.b16 %v493
    %v936 = vunpack.c.l.b16 %v494
    %v937 = vunpack.c.h.b16 %v494
    %v938 = vunpack.c.l.b16 %v495
    %v939 = vunpack.c.h.b16 %v495
    %v940 = vunpack.c.l.b16 %v496
    %v941 = vunpack.c.h.b16 %v496
    %v942 = vunpack.c.l.b16 %v497
    %v943 = vunpack.c.h.b16 %v497
    %v944 = vunpack.c.l.b16 %v498
    %v945 = vunpack.c.h.b16 %v498
    %v946 = vunpack.c.l.b16 %v499
    %v947 = vunpack.c.h.b16 %v499
    %v948 = vunpack.c.l.b16 %v500
    %v949 = vunpack.c.h.b16 %v500
    %v950 = vunpack.c.l.b16 %v501
    %v951 = vunpack.c.h.b16 %v501
    %v952 = vunpack.c.l.b16 %v502
    %v953 = vunpack.c.h.b16 %v502
    %v954 = vunpack.c.l.b16 %v503
    %v955 = vunpack.c.h.b16 %v503
    %v956 = vunpack.c.l.b16 %v504
    %v957 = vunpack.c.h.b16 %v504
    %v958 = vunpack.c.l.b16 %v505
    %v959 = vunpack.c.h.b16 %v505
    %v960 = vunpack.c.l.b16 %v506
    %v961 = vunpack.c.h.b16 %v506
    %v962 = vunpack.c.l.b16 %v507
    %v963 = vunpack.c.h.b16 %v507
    %v964 = vunpack.c.l.b16 %v508
    %v965 = vunpack.c.h.b16 %v508
    %v966 = vunpack.c.l.b16 %v509
    %v967 = vunpack.c.h.b16 %v509
    %v968 = vunpack.c.l.b16 %v510
    %v969 = vunpack.c.h.b16 %v510
    %v970 = vunpack.c.l.b16 %v511
    %v971 = vunpack.c.h.b16 %v511
    %v972 = vunpack.c.l.b16 %v512
    %v973 = vunpack.c.h.b16 %v512
    %v974 = vunpack.c.l.b16 %v513
    %v975 = vunpack.c.h.b16 %v513
    %v976 = vunpack.c.l.b16 %v514
    %v977 = vunpack.c.h.b16 %v514
    %v978 = vunpack.c.l.b16 %v515
    %v979 = vunpack.c.h.b16 %v515
    %v980 = vunpack.c.l.b16 %v516
    %v981 = vunpack.c.h.b16 %v516
    %v982 = vunpack.c.l.b16 %v517
    %v983 = vunpack.c.h.b16 %v517
    %v984 = vunpack.c.l.b16 %v518
    %v985 = vunpack.c.h.b16 %v518
    %v986 = vunpack.c.l.b16 %v519
    %v987 = vunpack.c.h.b16 %v519
    %v988 = vunpack.c.l.b16 %v520
    %v989 = vunpack.c.h.b16 %v520
    %v990 = vunpack.c.l.b16 %v521
    %v991 = vunpack.c.h.b16 %v521
    %v992 = vunpack.c.l.b16 %v522
    %v993 = vunpack.c.h.b16 %v522
    %v994 = vunpack.c.l.b16 %v523
    %v995 = vunpack.c.h.b16 %v523
    %v996 = vunpack.c.l.b16 %v524
    %v997 = vunpack.c.h.b16 %v524
    %v998 = vunpack.c.l.b16 %v525
    %v999 = vunpack.c.h.b16 %v525
    %v1000 = vunpack.c.l.b16 %v526
    %v1001 = vunpack.c.h.b16 %v526
    %v1002 = vunpack.c.l.b16 %v527
    %v1003 = vunpack.c.h.b16 %v527
    %v1004 = vunpack.c.l.b16 %v528
    %v1005 = vunpack.c.h.b16 %v528
    %v1006 = vunpack.c.l.b16 %v529
    %v1007 = vunpack.c.h.b16 %v529
    %v1008 = vunpack.c.l.b16 %v530
    %v1009 = vunpack.c.h.b16 %v530
    %v1010 = vunpack.c.l.b16 %v531
    %v1011 = vunpack.c.h.b16 %v531
    %v1012 = vunpack.c.l.b16 %v532
    %v1013 = vunpack.c.h.b16 %v532
    %v1014 = vunpack.c.l.b16 %v533
    %v1015 = vunpack.c.h.b16 %v533
    %v1016 = vunpack.c.l.b16 %v534
    %v1017 = vunpack.c.h.b16 %v534
    %v1018 = vunpack.c.l.b16 %v535
    %v1019 = vunpack.c.h.b16 %v535
    %v1020 = vunpack.c.l.b16 %v536
    %v1021 = vunpack.c.h.b16 %v536
    %v1022 = vunpack.c.l.b16 %v537
    %v1023 = vunpack.c.h.b16 %v537
    %v1024 = vunpack.c.l.b16 %v538
    %v1025 = vunpack.c.h.b16 %v538
    %v1026 = vunpack.c.l.b16 %v539
    %v1027 = vunpack.c.h.b16 %v539
    %v1028 = vunpack.c.l.b16 %v540
    %v1029 = vunpack.c.h.b16 %v540
    %v1030 = vunpack.c.l.b16 %v541
    %v1031 = vunpack.c.h.b16 %v541
    %v1032 = vunpack.c.l.b16 %v542
    %v1033 = vunpack.c.h.b16 %v542
    %v1034 = vunpack.c.l.b16 %v543
    %v1035 = vunpack.c.h.b16 %v543
    %v1036 = vunpack.c.l.b16 %v544
    %v1037 = vunpack.c.h.b16 %v544
    %v1038 = vunpack.c.l.b16 %v545
    %v1039 = vunpack.c.h.b16 %v545
    %v1040 = vunpack.c.l.b16 %v546
    %v1041 = vunpack.c.h.b16 %v546
    %v1042 = vunpack.c.l.b16 %v547
    %v1043 = vunpack.c.h.b16 %v547
    %v1044 = vunpack.c.l.b16 %v548
    %v1045 = vunpack.c.h.b16 %v548
    %v1046 = vunpack.c.l.b16 %v549
    %v1047 = vunpack.c.h.b16 %v549
    %v1048 = vunpack.c.l.b16 %v550
    %v1049 = vunpack.c.h.b16 %v550
    %v1050 = vunpack.c.l.b16 %v551
    %v1051 = vunpack.c.h.b16 %v551
    %v1052 = vunpack.c.l.b16 %v552
    %v1053 = vunpack.c.h.b16 %v552
    %v1054 = vunpack.c.l.b16 %v553
    %v1055 = vunpack.c.h.b16 %v553
    %v1056 = vunpack.c.l.b16 %v554
    %v1057 = vunpack.c.h.b16 %v554
    %v1058 = vunpack.c.l.b16 %v555
    %v1059 = vunpack.c.h.b16 %v555
    %v1060 = vunpack.c.l.b16 %v556
    %v1061 = vunpack.c.h.b16 %v556
    %v1062 = vunpack.c.l.b16 %v557
    %v1063 = vunpack.c.h.b16 %v557
    %v1064 = vunpack.c.l.b16 %v558
    %v1065 = vunpack.c.h.b16 %v558
    %v1066 = vunpack.c.l.b16 %v559
    %v1067 = vunpack.c.h.b16 %v559
    %v1068 = vunpack.c.l.b16 %v560
    %v1069 = vunpack.c.h.b16 %v560
    %v1070 = vunpack.c.l.b16 %v561
    %v1071 = vunpack.c.h.b16 %v561
    %v1072 = vunpack.c.l.b16 %v562
    %v1073 = vunpack.c.h.b16 %v562
    %v1074 = vunpack.c.l.b16 %v563
    %v1075 = vunpack.c.h.b16 %v563
    %v1076 = vunpack.c.l.b16 %v564
    %v1077 = vunpack.c.h.b16 %v564
    %v1078 = vunpack.c.l.b16 %v565
    %v1079 = vunpack.c.h.b16 %v565
    %v1080 = vunpack.c.l.b16 %v566
    %v1081 = vunpack.c.h.b16 %v566
    %v1082 = vunpack.c.l.b16 %v567
    %v1083 = vunpack.c.h.b16 %v567
    %v1084 = vunpack.c.l.b16 %v568
    %v1085 = vunpack.c.h.b16 %v568
    %v1086 = vunpack.c.l.b16 %v569
    %v1087 = vunpack.c.h.b16 %v569
    %v1088 = vunpack.c.l.b16 %v570
    %v1089 = vunpack.c.h.b16 %v570
    %v1090 = vunpack.c.l.b16 %v571
    %v1091 = vunpack.c.h.b16 %v571
    %v1092 = vunpack.c.l.b16 %v572
    %v1093 = vunpack.c.h.b16 %v572
    %v1094 = vunpack.c.l.b16 %v573
    %v1095 = vunpack.c.h.b16 %v573
    %v1096 = vunpack.c.l.b16 %v574
    %v1097 = vunpack.c.h.b16 %v574
    %v1098 = vunpack.c.l.b16 %v575
    %v1099 = vunpack.c.h.b16 %v575
    %v1100 = vunpack.c.l.b16 %v576
    %v1101 = vunpack.c.h.b16 %v576
    %v1102 = vunpack.c.l.b16 %v577
    %v1103 = vunpack.c.h.b16 %v577
    %v1104 = vunpack.c.l.b16 %v578
    %v1105 = vunpack.c.h.b16 %v578
    %v1106 = vunpack.c.l.b16 %v579
    %v1107 = vunpack.c.h.b16 %v579
    %v1108 = vunpack.c.l.b16 %v580
    %v1109 = vunpack.c.h.b16 %v580
    %v1110 = vunpack.c.l.b16 %v581
    %v1111 = vunpack.c.h.b16 %v581
    %v1112 = vunpack.c.l.b16 %v582
    %v1113 = vunpack.c.h.b16 %v582
    %v1114 = vunpack.c.l.b16 %v583
    %v1115 = vunpack.c.h.b16 %v583
    %v1116 = vunpack.c.l.b16 %v584
    %v1117 = vunpack.c.h.b16 %v584
    %v1118 = vunpack.c.l.b16 %v585
    %v1119 = vunpack.c.h.b16 %v585
    %v1120 = vunpack.c.l.b16 %v586
    %v1121 = vunpack.c.h.b16 %v586
    %v1122 = vunpack.c.l.b16 %v587
    %v1123 = vunpack.c.h.b16 %v587
    %v1124 = vunpack.c.l.b16 %v588
    %v1125 = vunpack.c.h.b16 %v588
    %v1126 = vunpack.c.l.b16 %v589
    %v1127 = vunpack.c.h.b16 %v589
    %v1128 = vunpack.c.l.b16 %v590
    %v1129 = vunpack.c.h.b16 %v590
    %v1130 = vunpack.c.l.b16 %v591
    %v1131 = vunpack.c.h.b16 %v591
    %v1132 = vunpack.c.l.b16 %v592
    %v1133 = vunpack.c.h.b16 %v592
    %v1134 = vunpack.c.l.b16 %v593
    %v1135 = vunpack.c.h.b16 %v593
    %v1136 = vunpack.c.l.b16 %v594
    %v1137 = vunpack.c.h.b16 %v594
    %v1138 = vunpack.c.l.b16 %v595
    %v1139 = vunpack.c.h.b16 %v595
    %v1140 = vunpack.c.l.b16 %v596
    %v1141 = vunpack.c.h.b16 %v596
    %v1142 = vunpack.c.l.b16 %v597
    %v1143 = vunpack.c.h.b16 %v597
    %v1144 = vunpack.c.l.b16 %v598
    %v1145 = vunpack.c.h.b16 %v598
    %v1146 = vunpack.c.l.b16 %v599
    %v1147 = vunpack.c.h.b16 %v599
    %v1148 = vunpack.c.l.b16 %v600
    %v1149 = vunpack.c.h.b16 %v600
    %v1150 = vunpack.c.l.b16 %v601
    %v1151 = vunpack.c.h.b16 %v601
    %v1152 = vunpack.c.l.b16 %v602
    %v1153 = vunpack.c.h.b16 %v602
    %v1154 = vunpack.c.l.b16 %v603
    %v1155 = vunpack.c.h.b16 %v603
    %v1156 = vunpack.c.l.b16 %v604
    %v1157 = vunpack.c.h.b16 %v604
    %v1158 = vunpack.c.l.b16 %v605
    %v1159 = vunpack.c.h.b16 %v605
    %v1160 = vunpack.c.l.b16 %v606
    %v1161 = vunpack.c.h.b16 %v606
    %v1162 = vunpack.c.l.b16 %v607
    %v1163 = vunpack.c.h.b16 %v607
    %v1164 = vunpack.c.l.b16 %v608
    %v1165 = vunpack.c.h.b16 %v608
    %v1166 = vunpack.c.l.b16 %v609
    %v1167 = vunpack.c.h.b16 %v609
    %v1168 = vunpack.c.l.b16 %v610
    %v1169 = vunpack.c.h.b16 %v610
    %v1170 = vunpack.c.l.b16 %v611
    %v1171 = vunpack.c.h.b16 %v611
    %v1172 = vunpack.c.l.b16 %v612
    %v1173 = vunpack.c.h.b16 %v612
    %v1174 = vunpack.c.l.b16 %v613
    %v1175 = vunpack.c.h.b16 %v613
    %v1176 = vunpack.c.l.b16 %v614
    %v1177 = vunpack.c.h.b16 %v614
    %v1178 = vunpack.c.l.b16 %v615
    %v1179 = vunpack.c.h.b16 %v615
    %v1180 = vunpack.c.l.b16 %v616
    %v1181 = vunpack.c.h.b16 %v616
    %v1182 = vunpack.c.l.b16 %v617
    %v1183 = vunpack.c.h.b16 %v617
    %v1184 = vunpack.c.l.b16 %v618
    %v1185 = vunpack.c.h.b16 %v618
    %v1186 = vunpack.c.l.b16 %v619
    %v1187 = vunpack.c.h.b16 %v619
    %v1188 = vunpack.c.l.b16 %v620
    %v1189 = vunpack.c.h.b16 %v620
    %v1190 = vunpack.c.l.b16 %v621
    %v1191 = vunpack.c.h.b16 %v621
    %v1192 = vunpack.c.l.b16 %v622
    %v1193 = vunpack.c.h.b16 %v622
    %v1194 = vunpack.c.l.b16 %v623
    %v1195 = vunpack.c.h.b16 %v623
    %v1196 = vunpack.c.l.b16 %v624
    %v1197 = vunpack.c.h.b16 %v624
    %v1198 = vunpack.c.l.b16 %v625
    %v1199 = vunpack.c.h.b16 %v625
    %v1200 = vunpack.c.l.b16 %v626
    %v1201 = vunpack.c.h.b16 %v626
    %v1202 = vunpack.c.l.b16 %v627
    %v1203 = vunpack.c.h.b16 %v627
    %v1204 = vunpack.c.l.b16 %v628
    %v1205 = vunpack.c.h.b16 %v628
    %v1206 = vunpack.c.l.b16 %v629
    %v1207 = vunpack.c.h.b16 %v629
    %v1208 = vunpack.c.l.b16 %v630
    %v1209 = vunpack.c.h.b16 %v630
    %v1210 = vunpack.c.l.b16 %v631
    %v1211 = vunpack.c.h.b16 %v631
    %v1212 = vunpack.c.l.b16 %v632
    %v1213 = vunpack.c.h.b16 %v632
    %v1214 = vunpack.c.l.b16 %v633
    %v1215 = vunpack.c.h.b16 %v633
    %v1216 = vunpack.c.l.b16 %v634
    %v1217 = vunpack.c.h.b16 %v634
    %v1218 = vunpack.c.l.b16 %v635
    %v1219 = vunpack.c.h.b16 %v635
    %v1220 = vunpack.c.l.b16 %v636
    %v1221 = vunpack.c.h.b16 %v636
    %v1222 = vunpack.c.l.b16 %v637
    %v1223 = vunpack.c.h.b16 %v637
    %v1224 = vunpack.c.l.b16 %v638
    %v1225 = vunpack.c.h.b16 %v638
    %v1226 = vunpack.c.l.b16 %v639
    %v1227 = vunpack.c.h.b16 %v639
    %v1228 = vunpack.c.l.b16 %v640
    %v1229 = vunpack.c.h.b16 %v640
    %v1230 = vunpack.c.l.b16 %v641
    %v1231 = vunpack.c.h.b16 %v641
    %v1232 = vunpack.c.l.b16 %v642
    %v1233 = vunpack.c.h.b16 %v642
    %v1234 = vunpack.c.l.b16 %v643
    %v1235 = vunpack.c.h.b16 %v643
    %v1236 = vunpack.c.l.b16 %v644
    %v1237 = vunpack.c.h.b16 %v644
    %v1238 = vunpack.c.l.b16 %v645
    %v1239 = vunpack.c.h.b16 %v645
    %v1240 = vunpack.c.l.b16 %v646
    %v1241 = vunpack.c.h.b16 %v646
    %v1242 = vunpack.c.l.b16 %v647
    %v1243 = vunpack.c.h.b16 %v647
    %v1244 = vunpack.c.l.b16 %v648
    %v1245 = vunpack.c.h.b16 %v648
    %v1246 = vunpack.c.l.b16 %v649
    %v1247 = vunpack.c.h.b16 %v649
    %v1248 = vpack.c.b16 %v860, %v856
    %v1249 = vpack.c.b16 %v861, %v857
    %v1250 = vpack.c.b16 %v862, %v858
    %v1251 = vpack.c.b16 %v863, %v859
    %v1252 = vpack.c.b16 %v868, %v864
    %v1253 = vpack.c.b16 %v869, %v865
    %v1254 = vpack.c.b16 %v870, %v866
    %v1255 = vpack.c.b16 %v871, %v867
    %v1256 = vpack.c.b16 %v876, %v872
    %v1257 = vpack.c.b16 %v877, %v873
    %v1258 = vpack.c.b16 %v878, %v874
    %v1259 = vpack.c.b16 %v879, %v875
    %v1260 = vpack.c.b16 %v884, %v880
    %v1261 = vpack.c.b16 %v885, %v881
    %v1262 = vpack.c.b16 %v886, %v882
    %v1263 = vpack.c.b16 %v887, %v883
    %v1264 = vpack.c.b16 %v892, %v888
    %v1265 = vpack.c.b16 %v893, %v889
    %v1266 = vpack.c.b16 %v894, %v890
    %v1267 = vpack.c.b16 %v895, %v891
    %v1268 = vpack.c.b16 %v900, %v896
    %v1269 = vpack.c.b16 %v901, %v897
    %v1270 = vpack.c.b16 %v902, %v898
    %v1271 = vpack.c.b16 %v903, %v899
    %v1272 = vpack.c.b16 %v908, %v904
    %v1273 = vpack.c.b16 %v909, %v905
    %v1274 = vpack.c.b16 %v910, %v906
    %v1275 = vpack.c.b16 %v911, %v907
    %v1276 = vpack.c.b16 %v916, %v912
    %v1277 = vpack.c.b16 %v917, %v913
    %v1278 = vpack.c.b16 %v918, %v914
    %v1279 = vpack.c.b16 %v919, %v915
    %v1280 = vpack.c.b16 %v924, %v920
    %v1281 = vpack.c.b16 %v925, %v921
    %v1282 = vpack.c.b16 %v926, %v922
    %v1283 = vpack.c.b16 %v927, %v923
    %v1284 = vpack.c.b16 %v932, %v928
    %v1285 = vpack.c.b16 %v933, %v929
    %v1286 = vpack.c.b16 %v934, %v930
    %v1287 = vpack.c.b16 %v935, %v931
    %v1288 = vpack.c.b16 %v940, %v936
    %v1289 = vpack.c.b16 %v941, %v937
    %v1290 = vpack.c.b16 %v942, %v938
    %v1291 = vpack.c.b16 %v943, %v939
    %v1292 = vpack.c.b16 %v948, %v944
    %v1293 = vpack.c.b16 %v949, %v945
    %v1294 = vpack.c.b16 %v950, %v946
    %v1295 = vpack.c.b16 %v951, %v947
    %v1296 = vpack.c.b16 %v956, %v952
    %v1297 = vpack.c.b16 %v957, %v953
    %v1298 = vpack.c.b16 %v958, %v954
    %v1299 = vpack.c.b16 %v959, %v955
    %v1300 = vpack.c.b16 %v964, %v960
    %v1301 = vpack.c.b16 %v965, %v961
    %v1302 = vpack.c.b16 %v966, %v962
    %v1303 = vpack.c.b16 %v967, %v963
    %v1304 = vpack.c.b16 %v972, %v968
    %v1305 = vpack.c.b16 %v973, %v969
    %v1306 = vpack.c.b16 %v974, %v970
    %v1307 = vpack.c.b16 %v975, %v971
    %v1308 = vpack.c.b16 %v980, %v976
    %v1309 = vpack.c.b16 %v981, %v977
    %v1310 = vpack.c.b16 %v982, %v978
    %v1311 = vpack.c.b16 %v983, %v979
    %v1312 = vpack.c.b16 %v988, %v984
    %v1313 = vpack.c.b16 %v989, %v985
    %v1314 = vpack.c.b16 %v990, %v986
    %v1315 = vpack.c.b16 %v991, %v987
    %v1316 = vpack.c.b16 %v996, %v992
    %v1317 = vpack.c.b16 %v997, %v993
    %v1318 = vpack.c.b16 %v998, %v994
    %v1319 = vpack.c.b16 %v999, %v995
    %v1320 = vpack.c.b16 %v1004, %v1000
    %v1321 = vpack.c.b16 %v1005, %v1001
    %v1322 = vpack.c.b16 %v1006, %v1002
    %v1323 = vpack.c.b16 %v1007, %v1003
    %v1324 = vpack.c.b16 %v1012, %v1008
    %v1325 = vpack.c.b16 %v1013, %v1009
    %v1326 = vpack.c.b16 %v1014, %v1010
    %v1327 = vpack.c.b16 %v1015, %v1011
    %v1328 = vpack.c.b16 %v1020, %v1016
    %v1329 = vpack.c.b16 %v1021, %v1017
    %v1330 = vpack.c.b16 %v1022, %v1018
    %v1331 = vpack.c.b16 %v1023, %v1019
    %v1332 = vpack.c.b16 %v1028, %v1024
    %v1333 = vpack.c.b16 %v1029, %v1025
    %v1334 = vpack.c.b16 %v1030, %v1026
    %v1335 = vpack.c.b16 %v1031, %v1027
    %v1336 = vpack.c.b16 %v1036, %v1032
    %v1337 = vpack.c.b16 %v1037, %v1033
    %v1338 = vpack.c.b16 %v1038, %v1034
    %v1339 = vpack.c.b16 %v1039, %v1035
    %v1340 = vpack.c.b16 %v1044, %v1040
    %v1341 = vpack.c.b16 %v1045, %v1041
    %v1342 = vpack.c.b16 %v1046, %v1042
    %v1343 = vpack.c.b16 %v1047, %v1043
    %v1344 = vpack.c.b16 %v1052, %v1048
    %v1345 = vpack.c.b16 %v1053, %v1049
    %v1346 = vpack.c.b16 %v1054, %v1050
    %v1347 = vpack.c.b16 %v1055, %v1051
    %v1348 = vpack.c.b16 %v1060, %v1056
    %v1349 = vpack.c.b16 %v1061, %v1057
    %v1350 = vpack.c.b16 %v1062, %v1058
    %v1351 = vpack.c.b16 %v1063, %v1059
    %v1352 = vpack.c.b16 %v1068, %v1064
    %v1353 = vpack.c.b16 %v1069, %v1065
    %v1354 = vpack.c.b16 %v1070, %v1066
    %v1355 = vpack.c.b16 %v1071, %v1067
    %v1356 = vpack.c.b16 %v1076, %v1072
    %v1357 = vpack.c.b16 %v1077, %v1073
    %v1358 = vpack.c.b16 %v1078, %v1074
    %v1359 = vpack.c.b16 %v1079, %v1075
    %v1360 = vpack.c.b16 %v1084, %v1080
    %v1361 = vpack.c.b16 %v1085, %v1081
    %v1362 = vpack.c.b16 %v1086, %v1082
    %v1363 = vpack.c.b16 %v1087, %v1083
    %v1364 = vpack.c.b16 %v1092, %v1088
    %v1365 = vpack.c.b16 %v1093, %v1089
    %v1366 = vpack.c.b16 %v1094, %v1090
    %v1367 = vpack.c.b16 %v1095, %v1091
    %v1368 = vpack.c.b16 %v1100, %v1096
    %v1369 = vpack.c.b16 %v1101, %v1097
    %v1370 = vpack.c.b16 %v1102, %v1098
    %v1371 = vpack.c.b16 %v1103, %v1099
    %v1372 = vpack.c.b16 %v1108, %v1104
    %v1373 = vpack.c.b16 %v1109, %v1105
    %v1374 = vpack.c.b16 %v1110, %v1106
    %v1375 = vpack.c.b16 %v1111, %v1107
    %v1376 = vpack.c.b16 %v1116, %v1112
    %v1377 = vpack.c.b16 %v1117, %v1113
    %v1378 = vpack.c.b16 %v1118, %v1114
    %v1379 = vpack.c.b16 %v1119, %v1115
    %v1380 = vpack.c.b16 %v1124, %v1120
    %v1381 = vpack.c.b16 %v1125, %v1121
    %v1382 = vpack.c.b16 %v1126, %v1122
    %v1383 = vpack.c.b16 %v1127, %v1123
    %v1384 = vpack.c.b16 %v1132, %v1128
    %v1385 = vpack.c.b16 %v1133, %v1129
    %v1386 = vpack.c.b16 %v1134, %v1130
    %v1387 = vpack.c.b16 %v1135, %v1131
    %v1388 = vpack.c.b16 %v1140, %v1136
    %v1389 = vpack.c.b16 %v1141, %v1137
    %v1390 = vpack.c.b16 %v1142, %v1138
    %v1391 = vpack.c.b16 %v1143, %v1139
    %v1392 = vpack.c.b16 %v1148, %v1144
    %v1393 = vpack.c.b16 %v1149, %v1145
    %v1394 = vpack.c.b16 %v1150, %v1146
    %v1395 = vpack.c.b16 %v1151, %v1147
    %v1396 = vpack.c.b16 %v1156, %v1152
    %v1397 = vpack.c.b16 %v1157, %v1153
    %v1398 = vpack.c.b16 %v1158, %v1154
    %v1399 = vpack.c.b16 %v1159, %v1155
    %v1400 = vpack.c.b16 %v1164, %v1160
    %v1401 = vpack.c.b16 %v1165, %v1161
    %v1402 = vpack.c.b16 %v1166, %v1162
    %v1403 = vpack.c.b16 %v1167, %v1163
    %v1404 = vpack.c.b16 %v1172, %v1168
    %v1405 = vpack.c.b16 %v1173, %v1169
    %v1406 = vpack.c.b16 %v1174, %v1170
    %v1407 = vpack.c.b16 %v1175, %v1171
    %v1408 = vpack.c.b16 %v1180, %v1176
    %v1409 = vpack.c.b16 %v1181, %v1177
    %v1410 = vpack.c.b16 %v1182, %v1178
    %v1411 = vpack.c.b16 %v1183, %v1179
    %v1412 = vpack.c.b16 %v1188, %v1184
    %v1413 = vpack.c.b16 %v1189, %v1185
    %v1414 = vpack.c.b16 %v1190, %v1186
    %v1415 = vpack.c.b16 %v1191, %v1187
    %v1416 = vpack.c.b16 %v1196, %v1192
    %v1417 = vpack.c.b16 %v1197, %v1193
    %v1418 = vpack.c.b16 %v1198, %v1194
    %v1419 = vpack.c.b16 %v1199, %v1195
    %v1420 = vpack.c.b16 %v1204, %v1200
    %v1421 = vpack.c.b16 %v1205, %v1201
    %v1422 = vpack.c.b16 %v1206, %v1202
    %v1423 = vpack.c.b16 %v1207, %v1203
    %v1424 = vpack.c.b16 %v1212, %v1208
    %v1425 = vpack.c.b16 %v1213, %v1209
    %v1426 = vpack.c.b16 %v1214, %v1210
    %v1427 = vpack.c.b16 %v1215, %v1211
    %v1428 = vpack.c.b16 %v1220, %v1216
    %v1429 = vpack.c.b16 %v1221, %v1217
    %v1430 = vpack.c.b16 %v1222, %v1218
    %v1431 = vpack.c.b16 %v1223, %v1219
    %v1432 = vpack.c.b16 %v1228, %v1224
    %v1433 = vpack.c.b16 %v1229, %v1225
    %v1434 = vpack.c.b16 %v1230, %v1226
    %v1435 = vpack.c.b16 %v1231, %v1227
    %v1436 = vpack.c.b16 %v1236, %v1232
    %v1437 = vpack.c.b16 %v1237, %v1233
    %v1438 = vpack.c.b16 %v1238, %v1234
    %v1439 = vpack.c.b16 %v1239, %v1235
    %v1440 = vpack.c.b16 %v1244, %v1240
    %v1441 = vpack.c.b16 %v1245, %v1241
    %v1442 = vpack.c.b16 %v1246, %v1242
    %v1443 = vpack.c.b16 %v1247, %v1243
    %vm1640 = vcmask 130048
    %v1642 = vsel %vm1640, %v348, 0
    %v1645 = vsel %vm1640, %v355, 0
    %v1648 = vsel %vm1640, %v362, 0
    %v1651 = vsel %vm1640, %v369, 0
    %v1654 = vsel %vm1640, %v376, 0
    %v1657 = vsel %vm1640, %v383, 0
    %v1660 = vsel %vm1640, %v390, 0
    %v1663 = vsel %vm1640, %v397, 0
    %v1666 = vsel %vm1640, %v404, 0
    %v1669 = vsel %vm1640, %v411, 0
    %v1672 = vsel %vm1640, %v418, 0
    %v1675 = vsel %vm1640, %v425, 0
    %v1678 = vsel %vm1640, %v432, 0
    %v1681 = vsel %vm1640, %v439, 0
    %v1684 = vsel %vm1640, %v446, 0
    %v1687 = vsel %vm1640, %v453, 0
    %1689 = vmatpush.bf16.msra.mxu0 %v1276
    %1690 = vmatpush.bf16.msra.mxu0 %v1272
    %1691 = vmatpush.bf16.msra.mxu0 %v1268
    %1692 = vmatpush.bf16.msra.mxu0 %v1264
    %1693 = vmatpush.bf16.msra.mxu0 %v1260
    %1694 = vmatpush.bf16.msra.mxu0 %v1256
    %1695 = vmatpush.bf16.msra.mxu0 %v1252
    %1696 = vmatpush.bf16.msra.mxu0 %v1248
    %1697 = vmatmul.bf16.gmra.mxu0 %v342
    %v1698 = vpop.f32.mrf.mxu0
    %v1699 = vadd.f32 %v652, %v1698
    %v1700 = vpop.f32.mrf.mxu0
    %v1701 = vadd.f32 %v652, %v1700
    %1702 = vmatmul.bf16.gmra.mxu0 %v349
    %v1703 = vpop.f32.mrf.mxu0
    %v1704 = vadd.f32 %v652, %v1703
    %v1705 = vpop.f32.mrf.mxu0
    %v1706 = vadd.f32 %v652, %v1705
    %1707 = vmatmul.bf16.gmra.mxu0 %v356
    %v1708 = vpop.f32.mrf.mxu0
    %v1709 = vadd.f32 %v652, %v1708
    %v1710 = vpop.f32.mrf.mxu0
    %v1711 = vadd.f32 %v652, %v1710
    %1712 = vmatmul.bf16.gmra.mxu0 %v363
    %v1713 = vpop.f32.mrf.mxu0
    %v1714 = vadd.f32 %v652, %v1713
    %v1715 = vpop.f32.mrf.mxu0
    %v1716 = vadd.f32 %v652, %v1715
    %1717 = vmatmul.bf16.gmra.mxu0 %v370
    %v1718 = vpop.f32.mrf.mxu0
    %v1719 = vadd.f32 %v652, %v1718
    %v1720 = vpop.f32.mrf.mxu0
    %v1721 = vadd.f32 %v652, %v1720
    %1722 = vmatmul.bf16.gmra.mxu0 %v377
    %v1723 = vpop.f32.mrf.mxu0
    %v1724 = vadd.f32 %v652, %v1723
    %v1725 = vpop.f32.mrf.mxu0
    %v1726 = vadd.f32 %v652, %v1725
    %1727 = vmatmul.bf16.gmra.mxu0 %v384
    %v1728 = vpop.f32.mrf.mxu0
    %v1729 = vadd.f32 %v652, %v1728
    %v1730 = vpop.f32.mrf.mxu0
    %v1731 = vadd.f32 %v652, %v1730
    %1732 = vmatmul.bf16.gmra.mxu0 %v391
    %v1733 = vpop.f32.mrf.mxu0
    %v1734 = vadd.f32 %v652, %v1733
    %v1735 = vpop.f32.mrf.mxu0
    %v1736 = vadd.f32 %v652, %v1735
    %1737 = vmatmul.bf16.gmra.mxu0 %v398
    %v1738 = vpop.f32.mrf.mxu0
    %v1739 = vadd.f32 %v652, %v1738
    %v1740 = vpop.f32.mrf.mxu0
    %v1741 = vadd.f32 %v652, %v1740
    %1742 = vmatmul.bf16.gmra.mxu0 %v405
    %v1743 = vpop.f32.mrf.mxu0
    %v1744 = vadd.f32 %v652, %v1743
    %v1745 = vpop.f32.mrf.mxu0
    %v1746 = vadd.f32 %v652, %v1745
    %1747 = vmatmul.bf16.gmra.mxu0 %v412
    %v1748 = vpop.f32.mrf.mxu0
    %v1749 = vadd.f32 %v652, %v1748
    %v1750 = vpop.f32.mrf.mxu0
    %v1751 = vadd.f32 %v652, %v1750
    %1752 = vmatmul.bf16.gmra.mxu0 %v419
    %v1753 = vpop.f32.mrf.mxu0
    %v1754 = vadd.f32 %v652, %v1753
    %v1755 = vpop.f32.mrf.mxu0
    %v1756 = vadd.f32 %v652, %v1755
    %1757 = vmatmul.bf16.gmra.mxu0 %v426
    %v1758 = vpop.f32.mrf.mxu0
    %v1759 = vadd.f32 %v652, %v1758
    %v1760 = vpop.f32.mrf.mxu0
    %v1761 = vadd.f32 %v652, %v1760
    %1762 = vmatmul.bf16.gmra.mxu0 %v433
    %v1763 = vpop.f32.mrf.mxu0
    %v1764 = vadd.f32 %v652, %v1763
    %v1765 = vpop.f32.mrf.mxu0
    %v1766 = vadd.f32 %v652, %v1765
    %1767 = vmatmul.bf16.gmra.mxu0 %v440
    %v1768 = vpop.f32.mrf.mxu0
    %v1769 = vadd.f32 %v652, %v1768
    %v1770 = vpop.f32.mrf.mxu0
    %v1771 = vadd.f32 %v652, %v1770
    %1772 = vmatmul.bf16.gmra.mxu0 %v447
    %v1773 = vpop.f32.mrf.mxu0
    %v1774 = vadd.f32 %v652, %v1773
    %v1775 = vpop.f32.mrf.mxu0
    %v1776 = vadd.f32 %v652, %v1775
    %1777 = vdwg.mxu0
    %1778 = vmatpush.bf16.msra.mxu0 %v1308
    %1779 = vmatpush.bf16.msra.mxu0 %v1304
    %1780 = vmatpush.bf16.msra.mxu0 %v1300
    %1781 = vmatpush.bf16.msra.mxu0 %v1296
    %1782 = vmatpush.bf16.msra.mxu0 %v1292
    %1783 = vmatpush.bf16.msra.mxu0 %v1288
    %1784 = vmatpush.bf16.msra.mxu0 %v1284
    %1785 = vmatpush.bf16.msra.mxu0 %v1280
    %1786 = vmatmul.bf16.gmra.mxu0 %v343
    %v1787 = vpop.f32.mrf.mxu0
    %v1788 = vadd.f32 %v1699, %v1787
    %v1789 = vpop.f32.mrf.mxu0
    %v1790 = vadd.f32 %v1701, %v1789
    %1791 = vmatmul.bf16.gmra.mxu0 %v350
    %v1792 = vpop.f32.mrf.mxu0
    %v1793 = vadd.f32 %v1704, %v1792
    %v1794 = vpop.f32.mrf.mxu0
    %v1795 = vadd.f32 %v1706, %v1794
    %1796 = vmatmul.bf16.gmra.mxu0 %v357
    %v1797 = vpop.f32.mrf.mxu0
    %v1798 = vadd.f32 %v1709, %v1797
    %v1799 = vpop.f32.mrf.mxu0
    %v1800 = vadd.f32 %v1711, %v1799
    %1801 = vmatmul.bf16.gmra.mxu0 %v364
    %v1802 = vpop.f32.mrf.mxu0
    %v1803 = vadd.f32 %v1714, %v1802
    %v1804 = vpop.f32.mrf.mxu0
    %v1805 = vadd.f32 %v1716, %v1804
    %1806 = vmatmul.bf16.gmra.mxu0 %v371
    %v1807 = vpop.f32.mrf.mxu0
    %v1808 = vadd.f32 %v1719, %v1807
    %v1809 = vpop.f32.mrf.mxu0
    %v1810 = vadd.f32 %v1721, %v1809
    %1811 = vmatmul.bf16.gmra.mxu0 %v378
    %v1812 = vpop.f32.mrf.mxu0
    %v1813 = vadd.f32 %v1724, %v1812
    %v1814 = vpop.f32.mrf.mxu0
    %v1815 = vadd.f32 %v1726, %v1814
    %1816 = vmatmul.bf16.gmra.mxu0 %v385
    %v1817 = vpop.f32.mrf.mxu0
    %v1818 = vadd.f32 %v1729, %v1817
    %v1819 = vpop.f32.mrf.mxu0
    %v1820 = vadd.f32 %v1731, %v1819
    %1821 = vmatmul.bf16.gmra.mxu0 %v392
    %v1822 = vpop.f32.mrf.mxu0
    %v1823 = vadd.f32 %v1734, %v1822
    %v1824 = vpop.f32.mrf.mxu0
    %v1825 = vadd.f32 %v1736, %v1824
    %1826 = vmatmul.bf16.gmra.mxu0 %v399
    %v1827 = vpop.f32.mrf.mxu0
    %v1828 = vadd.f32 %v1739, %v1827
    %v1829 = vpop.f32.mrf.mxu0
    %v1830 = vadd.f32 %v1741, %v1829
    %1831 = vmatmul.bf16.gmra.mxu0 %v406
    %v1832 = vpop.f32.mrf.mxu0
    %v1833 = vadd.f32 %v1744, %v1832
    %v1834 = vpop.f32.mrf.mxu0
    %v1835 = vadd.f32 %v1746, %v1834
    %1836 = vmatmul.bf16.gmra.mxu0 %v413
    %v1837 = vpop.f32.mrf.mxu0
    %v1838 = vadd.f32 %v1749, %v1837
    %v1839 = vpop.f32.mrf.mxu0
    %v1840 = vadd.f32 %v1751, %v1839
    %1841 = vmatmul.bf16.gmra.mxu0 %v420
    %v1842 = vpop.f32.mrf.mxu0
    %v1843 = vadd.f32 %v1754, %v1842
    %v1844 = vpop.f32.mrf.mxu0
    %v1845 = vadd.f32 %v1756, %v1844
    %1846 = vmatmul.bf16.gmra.mxu0 %v427
    %v1847 = vpop.f32.mrf.mxu0
    %v1848 = vadd.f32 %v1759, %v1847
    %v1849 = vpop.f32.mrf.mxu0
    %v1850 = vadd.f32 %v1761, %v1849
    %1851 = vmatmul.bf16.gmra.mxu0 %v434
    %v1852 = vpop.f32.mrf.mxu0
    %v1853 = vadd.f32 %v1764, %v1852
    %v1854 = vpop.f32.mrf.mxu0
    %v1855 = vadd.f32 %v1766, %v1854
    %1856 = vmatmul.bf16.gmra.mxu0 %v441
    %v1857 = vpop.f32.mrf.mxu0
    %v1858 = vadd.f32 %v1769, %v1857
    %v1859 = vpop.f32.mrf.mxu0
    %v1860 = vadd.f32 %v1771, %v1859
    %1861 = vmatmul.bf16.gmra.mxu0 %v448
    %v1862 = vpop.f32.mrf.mxu0
    %v1863 = vadd.f32 %v1774, %v1862
    %v1864 = vpop.f32.mrf.mxu0
    %v1865 = vadd.f32 %v1776, %v1864
    %1866 = vdwg.mxu0
    %1867 = vmatpush.bf16.msra.mxu0 %v1340
    %1868 = vmatpush.bf16.msra.mxu0 %v1336
    %1869 = vmatpush.bf16.msra.mxu0 %v1332
    %1870 = vmatpush.bf16.msra.mxu0 %v1328
    %1871 = vmatpush.bf16.msra.mxu0 %v1324
    %1872 = vmatpush.bf16.msra.mxu0 %v1320
    %1873 = vmatpush.bf16.msra.mxu0 %v1316
    %1874 = vmatpush.bf16.msra.mxu0 %v1312
    %1875 = vmatmul.bf16.gmra.mxu0 %v344
    %v1876 = vpop.f32.mrf.mxu0
    %v1877 = vadd.f32 %v1788, %v1876
    %v1878 = vpop.f32.mrf.mxu0
    %v1879 = vadd.f32 %v1790, %v1878
    %1880 = vmatmul.bf16.gmra.mxu0 %v351
    %v1881 = vpop.f32.mrf.mxu0
    %v1882 = vadd.f32 %v1793, %v1881
    %v1883 = vpop.f32.mrf.mxu0
    %v1884 = vadd.f32 %v1795, %v1883
    %1885 = vmatmul.bf16.gmra.mxu0 %v358
    %v1886 = vpop.f32.mrf.mxu0
    %v1887 = vadd.f32 %v1798, %v1886
    %v1888 = vpop.f32.mrf.mxu0
    %v1889 = vadd.f32 %v1800, %v1888
    %1890 = vmatmul.bf16.gmra.mxu0 %v365
    %v1891 = vpop.f32.mrf.mxu0
    %v1892 = vadd.f32 %v1803, %v1891
    %v1893 = vpop.f32.mrf.mxu0
    %v1894 = vadd.f32 %v1805, %v1893
    %1895 = vmatmul.bf16.gmra.mxu0 %v372
    %v1896 = vpop.f32.mrf.mxu0
    %v1897 = vadd.f32 %v1808, %v1896
    %v1898 = vpop.f32.mrf.mxu0
    %v1899 = vadd.f32 %v1810, %v1898
    %1900 = vmatmul.bf16.gmra.mxu0 %v379
    %v1901 = vpop.f32.mrf.mxu0
    %v1902 = vadd.f32 %v1813, %v1901
    %v1903 = vpop.f32.mrf.mxu0
    %v1904 = vadd.f32 %v1815, %v1903
    %1905 = vmatmul.bf16.gmra.mxu0 %v386
    %v1906 = vpop.f32.mrf.mxu0
    %v1907 = vadd.f32 %v1818, %v1906
    %v1908 = vpop.f32.mrf.mxu0
    %v1909 = vadd.f32 %v1820, %v1908
    %1910 = vmatmul.bf16.gmra.mxu0 %v393
    %v1911 = vpop.f32.mrf.mxu0
    %v1912 = vadd.f32 %v1823, %v1911
    %v1913 = vpop.f32.mrf.mxu0
    %v1914 = vadd.f32 %v1825, %v1913
    %1915 = vmatmul.bf16.gmra.mxu0 %v400
    %v1916 = vpop.f32.mrf.mxu0
    %v1917 = vadd.f32 %v1828, %v1916
    %v1918 = vpop.f32.mrf.mxu0
    %v1919 = vadd.f32 %v1830, %v1918
    %1920 = vmatmul.bf16.gmra.mxu0 %v407
    %v1921 = vpop.f32.mrf.mxu0
    %v1922 = vadd.f32 %v1833, %v1921
    %v1923 = vpop.f32.mrf.mxu0
    %v1924 = vadd.f32 %v1835, %v1923
    %1925 = vmatmul.bf16.gmra.mxu0 %v414
    %v1926 = vpop.f32.mrf.mxu0
    %v1927 = vadd.f32 %v1838, %v1926
    %v1928 = vpop.f32.mrf.mxu0
    %v1929 = vadd.f32 %v1840, %v1928
    %1930 = vmatmul.bf16.gmra.mxu0 %v421
    %v1931 = vpop.f32.mrf.mxu0
    %v1932 = vadd.f32 %v1843, %v1931
    %v1933 = vpop.f32.mrf.mxu0
    %v1934 = vadd.f32 %v1845, %v1933
    %1935 = vmatmul.bf16.gmra.mxu0 %v428
    %v1936 = vpop.f32.mrf.mxu0
    %v1937 = vadd.f32 %v1848, %v1936
    %v1938 = vpop.f32.mrf.mxu0
    %v1939 = vadd.f32 %v1850, %v1938
    %1940 = vmatmul.bf16.gmra.mxu0 %v435
    %v1941 = vpop.f32.mrf.mxu0
    %v1942 = vadd.f32 %v1853, %v1941
    %v1943 = vpop.f32.mrf.mxu0
    %v1944 = vadd.f32 %v1855, %v1943
    %1945 = vmatmul.bf16.gmra.mxu0 %v442
    %v1946 = vpop.f32.mrf.mxu0
    %v1947 = vadd.f32 %v1858, %v1946
    %v1948 = vpop.f32.mrf.mxu0
    %v1949 = vadd.f32 %v1860, %v1948
    %1950 = vmatmul.bf16.gmra.mxu0 %v449
    %v1951 = vpop.f32.mrf.mxu0
    %v1952 = vadd.f32 %v1863, %v1951
    %v1953 = vpop.f32.mrf.mxu0
    %v1954 = vadd.f32 %v1865, %v1953
    %1955 = vdwg.mxu0
    %1956 = vmatpush.bf16.msra.mxu0 %v1372
    %1957 = vmatpush.bf16.msra.mxu0 %v1368
    %1958 = vmatpush.bf16.msra.mxu0 %v1364
    %1959 = vmatpush.bf16.msra.mxu0 %v1360
    %1960 = vmatpush.bf16.msra.mxu0 %v1356
    %1961 = vmatpush.bf16.msra.mxu0 %v1352
    %1962 = vmatpush.bf16.msra.mxu0 %v1348
    %1963 = vmatpush.bf16.msra.mxu0 %v1344
    %1964 = vmatmul.bf16.gmra.mxu0 %v345
    %v1965 = vpop.f32.mrf.mxu0
    %v1966 = vadd.f32 %v1877, %v1965
    %v1967 = vpop.f32.mrf.mxu0
    %v1968 = vadd.f32 %v1879, %v1967
    %1969 = vmatmul.bf16.gmra.mxu0 %v352
    %v1970 = vpop.f32.mrf.mxu0
    %v1971 = vadd.f32 %v1882, %v1970
    %v1972 = vpop.f32.mrf.mxu0
    %v1973 = vadd.f32 %v1884, %v1972
    %1974 = vmatmul.bf16.gmra.mxu0 %v359
    %v1975 = vpop.f32.mrf.mxu0
    %v1976 = vadd.f32 %v1887, %v1975
    %v1977 = vpop.f32.mrf.mxu0
    %v1978 = vadd.f32 %v1889, %v1977
    %1979 = vmatmul.bf16.gmra.mxu0 %v366
    %v1980 = vpop.f32.mrf.mxu0
    %v1981 = vadd.f32 %v1892, %v1980
    %v1982 = vpop.f32.mrf.mxu0
    %v1983 = vadd.f32 %v1894, %v1982
    %1984 = vmatmul.bf16.gmra.mxu0 %v373
    %v1985 = vpop.f32.mrf.mxu0
    %v1986 = vadd.f32 %v1897, %v1985
    %v1987 = vpop.f32.mrf.mxu0
    %v1988 = vadd.f32 %v1899, %v1987
    %1989 = vmatmul.bf16.gmra.mxu0 %v380
    %v1990 = vpop.f32.mrf.mxu0
    %v1991 = vadd.f32 %v1902, %v1990
    %v1992 = vpop.f32.mrf.mxu0
    %v1993 = vadd.f32 %v1904, %v1992
    %1994 = vmatmul.bf16.gmra.mxu0 %v387
    %v1995 = vpop.f32.mrf.mxu0
    %v1996 = vadd.f32 %v1907, %v1995
    %v1997 = vpop.f32.mrf.mxu0
    %v1998 = vadd.f32 %v1909, %v1997
    %1999 = vmatmul.bf16.gmra.mxu0 %v394
    %v2000 = vpop.f32.mrf.mxu0
    %v2001 = vadd.f32 %v1912, %v2000
    %v2002 = vpop.f32.mrf.mxu0
    %v2003 = vadd.f32 %v1914, %v2002
    %2004 = vmatmul.bf16.gmra.mxu0 %v401
    %v2005 = vpop.f32.mrf.mxu0
    %v2006 = vadd.f32 %v1917, %v2005
    %v2007 = vpop.f32.mrf.mxu0
    %v2008 = vadd.f32 %v1919, %v2007
    %2009 = vmatmul.bf16.gmra.mxu0 %v408
    %v2010 = vpop.f32.mrf.mxu0
    %v2011 = vadd.f32 %v1922, %v2010
    %v2012 = vpop.f32.mrf.mxu0
    %v2013 = vadd.f32 %v1924, %v2012
    %2014 = vmatmul.bf16.gmra.mxu0 %v415
    %v2015 = vpop.f32.mrf.mxu0
    %v2016 = vadd.f32 %v1927, %v2015
    %v2017 = vpop.f32.mrf.mxu0
    %v2018 = vadd.f32 %v1929, %v2017
    %2019 = vmatmul.bf16.gmra.mxu0 %v422
    %v2020 = vpop.f32.mrf.mxu0
    %v2021 = vadd.f32 %v1932, %v2020
    %v2022 = vpop.f32.mrf.mxu0
    %v2023 = vadd.f32 %v1934, %v2022
    %2024 = vmatmul.bf16.gmra.mxu0 %v429
    %v2025 = vpop.f32.mrf.mxu0
    %v2026 = vadd.f32 %v1937, %v2025
    %v2027 = vpop.f32.mrf.mxu0
    %v2028 = vadd.f32 %v1939, %v2027
    %2029 = vmatmul.bf16.gmra.mxu0 %v436
    %v2030 = vpop.f32.mrf.mxu0
    %v2031 = vadd.f32 %v1942, %v2030
    %v2032 = vpop.f32.mrf.mxu0
    %v2033 = vadd.f32 %v1944, %v2032
    %2034 = vmatmul.bf16.gmra.mxu0 %v443
    %v2035 = vpop.f32.mrf.mxu0
    %v2036 = vadd.f32 %v1947, %v2035
    %v2037 = vpop.f32.mrf.mxu0
    %v2038 = vadd.f32 %v1949, %v2037
    %2039 = vmatmul.bf16.gmra.mxu0 %v450
    %v2040 = vpop.f32.mrf.mxu0
    %v2041 = vadd.f32 %v1952, %v2040
    %v2042 = vpop.f32.mrf.mxu0
    %v2043 = vadd.f32 %v1954, %v2042
    %2044 = vdwg.mxu0
    %2045 = vmatpush.bf16.msra.mxu0 %v1404
    %2046 = vmatpush.bf16.msra.mxu0 %v1400
    %2047 = vmatpush.bf16.msra.mxu0 %v1396
    %2048 = vmatpush.bf16.msra.mxu0 %v1392
    %2049 = vmatpush.bf16.msra.mxu0 %v1388
    %2050 = vmatpush.bf16.msra.mxu0 %v1384
    %2051 = vmatpush.bf16.msra.mxu0 %v1380
    %2052 = vmatpush.bf16.msra.mxu0 %v1376
    %2053 = vmatmul.bf16.gmra.mxu0 %v346
    %v2054 = vpop.f32.mrf.mxu0
    %v2055 = vadd.f32 %v1966, %v2054
    %v2056 = vpop.f32.mrf.mxu0
    %v2057 = vadd.f32 %v1968, %v2056
    %2058 = vmatmul.bf16.gmra.mxu0 %v353
    %v2059 = vpop.f32.mrf.mxu0
    %v2060 = vadd.f32 %v1971, %v2059
    %v2061 = vpop.f32.mrf.mxu0
    %v2062 = vadd.f32 %v1973, %v2061
    %2063 = vmatmul.bf16.gmra.mxu0 %v360
    %v2064 = vpop.f32.mrf.mxu0
    %v2065 = vadd.f32 %v1976, %v2064
    %v2066 = vpop.f32.mrf.mxu0
    %v2067 = vadd.f32 %v1978, %v2066
    %2068 = vmatmul.bf16.gmra.mxu0 %v367
    %v2069 = vpop.f32.mrf.mxu0
    %v2070 = vadd.f32 %v1981, %v2069
    %v2071 = vpop.f32.mrf.mxu0
    %v2072 = vadd.f32 %v1983, %v2071
    %2073 = vmatmul.bf16.gmra.mxu0 %v374
    %v2074 = vpop.f32.mrf.mxu0
    %v2075 = vadd.f32 %v1986, %v2074
    %v2076 = vpop.f32.mrf.mxu0
    %v2077 = vadd.f32 %v1988, %v2076
    %2078 = vmatmul.bf16.gmra.mxu0 %v381
    %v2079 = vpop.f32.mrf.mxu0
    %v2080 = vadd.f32 %v1991, %v2079
    %v2081 = vpop.f32.mrf.mxu0
    %v2082 = vadd.f32 %v1993, %v2081
    %2083 = vmatmul.bf16.gmra.mxu0 %v388
    %v2084 = vpop.f32.mrf.mxu0
    %v2085 = vadd.f32 %v1996, %v2084
    %v2086 = vpop.f32.mrf.mxu0
    %v2087 = vadd.f32 %v1998, %v2086
    %2088 = vmatmul.bf16.gmra.mxu0 %v395
    %v2089 = vpop.f32.mrf.mxu0
    %v2090 = vadd.f32 %v2001, %v2089
    %v2091 = vpop.f32.mrf.mxu0
    %v2092 = vadd.f32 %v2003, %v2091
    %2093 = vmatmul.bf16.gmra.mxu0 %v402
    %v2094 = vpop.f32.mrf.mxu0
    %v2095 = vadd.f32 %v2006, %v2094
    %v2096 = vpop.f32.mrf.mxu0
    %v2097 = vadd.f32 %v2008, %v2096
    %2098 = vmatmul.bf16.gmra.mxu0 %v409
    %v2099 = vpop.f32.mrf.mxu0
    %v2100 = vadd.f32 %v2011, %v2099
    %v2101 = vpop.f32.mrf.mxu0
    %v2102 = vadd.f32 %v2013, %v2101
    %2103 = vmatmul.bf16.gmra.mxu0 %v416
    %v2104 = vpop.f32.mrf.mxu0
    %v2105 = vadd.f32 %v2016, %v2104
    %v2106 = vpop.f32.mrf.mxu0
    %v2107 = vadd.f32 %v2018, %v2106
    %2108 = vmatmul.bf16.gmra.mxu0 %v423
    %v2109 = vpop.f32.mrf.mxu0
    %v2110 = vadd.f32 %v2021, %v2109
    %v2111 = vpop.f32.mrf.mxu0
    %v2112 = vadd.f32 %v2023, %v2111
    %2113 = vmatmul.bf16.gmra.mxu0 %v430
    %v2114 = vpop.f32.mrf.mxu0
    %v2115 = vadd.f32 %v2026, %v2114
    %v2116 = vpop.f32.mrf.mxu0
    %v2117 = vadd.f32 %v2028, %v2116
    %2118 = vmatmul.bf16.gmra.mxu0 %v437
    %v2119 = vpop.f32.mrf.mxu0
    %v2120 = vadd.f32 %v2031, %v2119
    %v2121 = vpop.f32.mrf.mxu0
    %v2122 = vadd.f32 %v2033, %v2121
    %2123 = vmatmul.bf16.gmra.mxu0 %v444
    %v2124 = vpop.f32.mrf.mxu0
    %v2125 = vadd.f32 %v2036, %v2124
    %v2126 = vpop.f32.mrf.mxu0
    %v2127 = vadd.f32 %v2038, %v2126
    %2128 = vmatmul.bf16.gmra.mxu0 %v451
    %v2129 = vpop.f32.mrf.mxu0
    %v2130 = vadd.f32 %v2041, %v2129
    %v2131 = vpop.f32.mrf.mxu0
    %v2132 = vadd.f32 %v2043, %v2131
    %2133 = vdwg.mxu0
    %2134 = vmatpush.bf16.msra.mxu0 %v1436
    %2135 = vmatpush.bf16.msra.mxu0 %v1432
    %2136 = vmatpush.bf16.msra.mxu0 %v1428
    %2137 = vmatpush.bf16.msra.mxu0 %v1424
    %2138 = vmatpush.bf16.msra.mxu0 %v1420
    %2139 = vmatpush.bf16.msra.mxu0 %v1416
    %2140 = vmatpush.bf16.msra.mxu0 %v1412
    %2141 = vmatpush.bf16.msra.mxu0 %v1408
    %2142 = vmatmul.bf16.gmra.mxu0 %v347
    %v2143 = vpop.f32.mrf.mxu0
    %v2144 = vadd.f32 %v2055, %v2143
    %v2145 = vpop.f32.mrf.mxu0
    %v2146 = vadd.f32 %v2057, %v2145
    %2147 = vmatmul.bf16.gmra.mxu0 %v354
    %v2148 = vpop.f32.mrf.mxu0
    %v2149 = vadd.f32 %v2060, %v2148
    %v2150 = vpop.f32.mrf.mxu0
    %v2151 = vadd.f32 %v2062, %v2150
    %2152 = vmatmul.bf16.gmra.mxu0 %v361
    %v2153 = vpop.f32.mrf.mxu0
    %v2154 = vadd.f32 %v2065, %v2153
    %v2155 = vpop.f32.mrf.mxu0
    %v2156 = vadd.f32 %v2067, %v2155
    %2157 = vmatmul.bf16.gmra.mxu0 %v368
    %v2158 = vpop.f32.mrf.mxu0
    %v2159 = vadd.f32 %v2070, %v2158
    %v2160 = vpop.f32.mrf.mxu0
    %v2161 = vadd.f32 %v2072, %v2160
    %2162 = vmatmul.bf16.gmra.mxu0 %v375
    %v2163 = vpop.f32.mrf.mxu0
    %v2164 = vadd.f32 %v2075, %v2163
    %v2165 = vpop.f32.mrf.mxu0
    %v2166 = vadd.f32 %v2077, %v2165
    %2167 = vmatmul.bf16.gmra.mxu0 %v382
    %v2168 = vpop.f32.mrf.mxu0
    %v2169 = vadd.f32 %v2080, %v2168
    %v2170 = vpop.f32.mrf.mxu0
    %v2171 = vadd.f32 %v2082, %v2170
    %2172 = vmatmul.bf16.gmra.mxu0 %v389
    %v2173 = vpop.f32.mrf.mxu0
    %v2174 = vadd.f32 %v2085, %v2173
    %v2175 = vpop.f32.mrf.mxu0
    %v2176 = vadd.f32 %v2087, %v2175
    %2177 = vmatmul.bf16.gmra.mxu0 %v396
    %v2178 = vpop.f32.mrf.mxu0
    %v2179 = vadd.f32 %v2090, %v2178
    %v2180 = vpop.f32.mrf.mxu0
    %v2181 = vadd.f32 %v2092, %v2180
    %2182 = vmatmul.bf16.gmra.mxu0 %v403
    %v2183 = vpop.f32.mrf.mxu0
    %v2184 = vadd.f32 %v2095, %v2183
    %v2185 = vpop.f32.mrf.mxu0
    %v2186 = vadd.f32 %v2097, %v2185
    %2187 = vmatmul.bf16.gmra.mxu0 %v410
    %v2188 = vpop.f32.mrf.mxu0
    %v2189 = vadd.f32 %v2100, %v2188
    %v2190 = vpop.f32.mrf.mxu0
    %v2191 = vadd.f32 %v2102, %v2190
    %2192 = vmatmul.bf16.gmra.mxu0 %v417
    %v2193 = vpop.f32.mrf.mxu0
    %v2194 = vadd.f32 %v2105, %v2193
    %v2195 = vpop.f32.mrf.mxu0
    %v2196 = vadd.f32 %v2107, %v2195
    %2197 = vmatmul.bf16.gmra.mxu0 %v424
    %v2198 = vpop.f32.mrf.mxu0
    %v2199 = vadd.f32 %v2110, %v2198
    %v2200 = vpop.f32.mrf.mxu0
    %v2201 = vadd.f32 %v2112, %v2200
    %2202 = vmatmul.bf16.gmra.mxu0 %v431
    %v2203 = vpop.f32.mrf.mxu0
    %v2204 = vadd.f32 %v2115, %v2203
    %v2205 = vpop.f32.mrf.mxu0
    %v2206 = vadd.f32 %v2117, %v2205
    %2207 = vmatmul.bf16.gmra.mxu0 %v438
    %v2208 = vpop.f32.mrf.mxu0
    %v2209 = vadd.f32 %v2120, %v2208
    %v2210 = vpop.f32.mrf.mxu0
    %v2211 = vadd.f32 %v2122, %v2210
    %2212 = vmatmul.bf16.gmra.mxu0 %v445
    %v2213 = vpop.f32.mrf.mxu0
    %v2214 = vadd.f32 %v2125, %v2213
    %v2215 = vpop.f32.mrf.mxu0
    %v2216 = vadd.f32 %v2127, %v2215
    %2217 = vmatmul.bf16.gmra.mxu0 %v452
    %v2218 = vpop.f32.mrf.mxu0
    %v2219 = vadd.f32 %v2130, %v2218
    %v2220 = vpop.f32.mrf.mxu0
    %v2221 = vadd.f32 %v2132, %v2220
    %2222 = vdwg.mxu0
    %2223 = vmatpush.bf16.msra.mxu0 0
    %2224 = vmatpush.bf16.msra.mxu0 0
    %2225 = vmatpush.bf16.msra.mxu0 0
    %2226 = vmatpush.bf16.msra.mxu0 0
    %2227 = vmatpush.bf16.msra.mxu0 0
    %2228 = vmatpush.bf16.msra.mxu0 0
    %2229 = vmatpush.bf16.msra.mxu0 0
    %2230 = vmatpush.bf16.msra.mxu0 %v1440
    %2231 = vmatmul.bf16.gmra.mxu0 %v1642
    %v2232 = vpop.f32.mrf.mxu0
    %v2233 = vadd.f32 %v2144, %v2232
    %v2234 = vpop.f32.mrf.mxu0
    %v2235 = vadd.f32 %v2146, %v2234
    %2236 = vmatmul.bf16.gmra.mxu0 %v1645
    %v2237 = vpop.f32.mrf.mxu0
    %v2238 = vadd.f32 %v2149, %v2237
    %v2239 = vpop.f32.mrf.mxu0
    %v2240 = vadd.f32 %v2151, %v2239
    %2241 = vmatmul.bf16.gmra.mxu0 %v1648
    %v2242 = vpop.f32.mrf.mxu0
    %v2243 = vadd.f32 %v2154, %v2242
    %v2244 = vpop.f32.mrf.mxu0
    %v2245 = vadd.f32 %v2156, %v2244
    %2246 = vmatmul.bf16.gmra.mxu0 %v1651
    %v2247 = vpop.f32.mrf.mxu0
    %v2248 = vadd.f32 %v2159, %v2247
    %v2249 = vpop.f32.mrf.mxu0
    %v2250 = vadd.f32 %v2161, %v2249
    %2251 = vmatmul.bf16.gmra.mxu0 %v1654
    %v2252 = vpop.f32.mrf.mxu0
    %v2253 = vadd.f32 %v2164, %v2252
    %v2254 = vpop.f32.mrf.mxu0
    %v2255 = vadd.f32 %v2166, %v2254
    %2256 = vmatmul.bf16.gmra.mxu0 %v1657
    %v2257 = vpop.f32.mrf.mxu0
    %v2258 = vadd.f32 %v2169, %v2257
    %v2259 = vpop.f32.mrf.mxu0
    %v2260 = vadd.f32 %v2171, %v2259
    %2261 = vmatmul.bf16.gmra.mxu0 %v1660
    %v2262 = vpop.f32.mrf.mxu0
    %v2263 = vadd.f32 %v2174, %v2262
    %v2264 = vpop.f32.mrf.mxu0
    %v2265 = vadd.f32 %v2176, %v2264
    %2266 = vmatmul.bf16.gmra.mxu0 %v1663
    %v2267 = vpop.f32.mrf.mxu0
    %v2268 = vadd.f32 %v2179, %v2267
    %v2269 = vpop.f32.mrf.mxu0
    %v2270 = vadd.f32 %v2181, %v2269
    %2271 = vmatmul.bf16.gmra.mxu0 %v1666
    %v2272 = vpop.f32.mrf.mxu0
    %v2273 = vadd.f32 %v2184, %v2272
    %v2274 = vpop.f32.mrf.mxu0
    %v2275 = vadd.f32 %v2186, %v2274
    %2276 = vmatmul.bf16.gmra.mxu0 %v1669
    %v2277 = vpop.f32.mrf.mxu0
    %v2278 = vadd.f32 %v2189, %v2277
    %v2279 = vpop.f32.mrf.mxu0
    %v2280 = vadd.f32 %v2191, %v2279
    %2281 = vmatmul.bf16.gmra.mxu0 %v1672
    %v2282 = vpop.f32.mrf.mxu0
    %v2283 = vadd.f32 %v2194, %v2282
    %v2284 = vpop.f32.mrf.mxu0
    %v2285 = vadd.f32 %v2196, %v2284
    %2286 = vmatmul.bf16.gmra.mxu0 %v1675
    %v2287 = vpop.f32.mrf.mxu0
    %v2288 = vadd.f32 %v2199, %v2287
    %v2289 = vpop.f32.mrf.mxu0
    %v2290 = vadd.f32 %v2201, %v2289
    %2291 = vmatmul.bf16.gmra.mxu0 %v1678
    %v2292 = vpop.f32.mrf.mxu0
    %v2293 = vadd.f32 %v2204, %v2292
    %v2294 = vpop.f32.mrf.mxu0
    %v2295 = vadd.f32 %v2206, %v2294
    %2296 = vmatmul.bf16.gmra.mxu0 %v1681
    %v2297 = vpop.f32.mrf.mxu0
    %v2298 = vadd.f32 %v2209, %v2297
    %v2299 = vpop.f32.mrf.mxu0
    %v2300 = vadd.f32 %v2211, %v2299
    %2301 = vmatmul.bf16.gmra.mxu0 %v1684
    %v2302 = vpop.f32.mrf.mxu0
    %v2303 = vadd.f32 %v2214, %v2302
    %v2304 = vpop.f32.mrf.mxu0
    %v2305 = vadd.f32 %v2216, %v2304
    %2306 = vmatmul.bf16.gmra.mxu0 %v1687
    %v2307 = vpop.f32.mrf.mxu0
    %v2308 = vadd.f32 %v2219, %v2307
    %v2309 = vpop.f32.mrf.mxu0
    %v2310 = vadd.f32 %v2221, %v2309
    %2311 = vdwg.mxu0
    %2312 = vmatpush.bf16.msra.mxu0 %v1277
    %2313 = vmatpush.bf16.msra.mxu0 %v1273
    %2314 = vmatpush.bf16.msra.mxu0 %v1269
    %2315 = vmatpush.bf16.msra.mxu0 %v1265
    %2316 = vmatpush.bf16.msra.mxu0 %v1261
    %2317 = vmatpush.bf16.msra.mxu0 %v1257
    %2318 = vmatpush.bf16.msra.mxu0 %v1253
    %2319 = vmatpush.bf16.msra.mxu0 %v1249
    %2320 = vmatmul.bf16.gmra.mxu0 %v342
    %v2321 = vpop.f32.mrf.mxu0
    %v2322 = vadd.f32 %v653, %v2321
    %v2323 = vpop.f32.mrf.mxu0
    %v2324 = vadd.f32 %v653, %v2323
    %2325 = vmatmul.bf16.gmra.mxu0 %v349
    %v2326 = vpop.f32.mrf.mxu0
    %v2327 = vadd.f32 %v653, %v2326
    %v2328 = vpop.f32.mrf.mxu0
    %v2329 = vadd.f32 %v653, %v2328
    %2330 = vmatmul.bf16.gmra.mxu0 %v356
    %v2331 = vpop.f32.mrf.mxu0
    %v2332 = vadd.f32 %v653, %v2331
    %v2333 = vpop.f32.mrf.mxu0
    %v2334 = vadd.f32 %v653, %v2333
    %2335 = vmatmul.bf16.gmra.mxu0 %v363
    %v2336 = vpop.f32.mrf.mxu0
    %v2337 = vadd.f32 %v653, %v2336
    %v2338 = vpop.f32.mrf.mxu0
    %v2339 = vadd.f32 %v653, %v2338
    %2340 = vmatmul.bf16.gmra.mxu0 %v370
    %v2341 = vpop.f32.mrf.mxu0
    %v2342 = vadd.f32 %v653, %v2341
    %v2343 = vpop.f32.mrf.mxu0
    %v2344 = vadd.f32 %v653, %v2343
    %2345 = vmatmul.bf16.gmra.mxu0 %v377
    %v2346 = vpop.f32.mrf.mxu0
    %v2347 = vadd.f32 %v653, %v2346
    %v2348 = vpop.f32.mrf.mxu0
    %v2349 = vadd.f32 %v653, %v2348
    %2350 = vmatmul.bf16.gmra.mxu0 %v384
    %v2351 = vpop.f32.mrf.mxu0
    %v2352 = vadd.f32 %v653, %v2351
    %v2353 = vpop.f32.mrf.mxu0
    %v2354 = vadd.f32 %v653, %v2353
    %2355 = vmatmul.bf16.gmra.mxu0 %v391
    %v2356 = vpop.f32.mrf.mxu0
    %v2357 = vadd.f32 %v653, %v2356
    %v2358 = vpop.f32.mrf.mxu0
    %v2359 = vadd.f32 %v653, %v2358
    %2360 = vmatmul.bf16.gmra.mxu0 %v398
    %v2361 = vpop.f32.mrf.mxu0
    %v2362 = vadd.f32 %v653, %v2361
    %v2363 = vpop.f32.mrf.mxu0
    %v2364 = vadd.f32 %v653, %v2363
    %2365 = vmatmul.bf16.gmra.mxu0 %v405
    %v2366 = vpop.f32.mrf.mxu0
    %v2367 = vadd.f32 %v653, %v2366
    %v2368 = vpop.f32.mrf.mxu0
    %v2369 = vadd.f32 %v653, %v2368
    %2370 = vmatmul.bf16.gmra.mxu0 %v412
    %v2371 = vpop.f32.mrf.mxu0
    %v2372 = vadd.f32 %v653, %v2371
    %v2373 = vpop.f32.mrf.mxu0
    %v2374 = vadd.f32 %v653, %v2373
    %2375 = vmatmul.bf16.gmra.mxu0 %v419
    %v2376 = vpop.f32.mrf.mxu0
    %v2377 = vadd.f32 %v653, %v2376
    %v2378 = vpop.f32.mrf.mxu0
    %v2379 = vadd.f32 %v653, %v2378
    %2380 = vmatmul.bf16.gmra.mxu0 %v426
    %v2381 = vpop.f32.mrf.mxu0
    %v2382 = vadd.f32 %v653, %v2381
    %v2383 = vpop.f32.mrf.mxu0
    %v2384 = vadd.f32 %v653, %v2383
    %2385 = vmatmul.bf16.gmra.mxu0 %v433
    %v2386 = vpop.f32.mrf.mxu0
    %v2387 = vadd.f32 %v653, %v2386
    %v2388 = vpop.f32.mrf.mxu0
    %v2389 = vadd.f32 %v653, %v2388
    %2390 = vmatmul.bf16.gmra.mxu0 %v440
    %v2391 = vpop.f32.mrf.mxu0
    %v2392 = vadd.f32 %v653, %v2391
    %v2393 = vpop.f32.mrf.mxu0
    %v2394 = vadd.f32 %v653, %v2393
    %2395 = vmatmul.bf16.gmra.mxu0 %v447
    %v2396 = vpop.f32.mrf.mxu0
    %v2397 = vadd.f32 %v653, %v2396
    %v2398 = vpop.f32.mrf.mxu0
    %v2399 = vadd.f32 %v653, %v2398
    %2400 = vdwg.mxu0
    %2401 = vmatpush.bf16.msra.mxu0 %v1309
    %2402 = vmatpush.bf16.msra.mxu0 %v1305
    %2403 = vmatpush.bf16.msra.mxu0 %v1301
    %2404 = vmatpush.bf16.msra.mxu0 %v1297
    %2405 = vmatpush.bf16.msra.mxu0 %v1293
    %2406 = vmatpush.bf16.msra.mxu0 %v1289
    %2407 = vmatpush.bf16.msra.mxu0 %v1285
    %2408 = vmatpush.bf16.msra.mxu0 %v1281
    %2409 = vmatmul.bf16.gmra.mxu0 %v343
    %v2410 = vpop.f32.mrf.mxu0
    %v2411 = vadd.f32 %v2322, %v2410
    %v2412 = vpop.f32.mrf.mxu0
    %v2413 = vadd.f32 %v2324, %v2412
    %2414 = vmatmul.bf16.gmra.mxu0 %v350
    %v2415 = vpop.f32.mrf.mxu0
    %v2416 = vadd.f32 %v2327, %v2415
    %v2417 = vpop.f32.mrf.mxu0
    %v2418 = vadd.f32 %v2329, %v2417
    %2419 = vmatmul.bf16.gmra.mxu0 %v357
    %v2420 = vpop.f32.mrf.mxu0
    %v2421 = vadd.f32 %v2332, %v2420
    %v2422 = vpop.f32.mrf.mxu0
    %v2423 = vadd.f32 %v2334, %v2422
    %2424 = vmatmul.bf16.gmra.mxu0 %v364
    %v2425 = vpop.f32.mrf.mxu0
    %v2426 = vadd.f32 %v2337, %v2425
    %v2427 = vpop.f32.mrf.mxu0
    %v2428 = vadd.f32 %v2339, %v2427
    %2429 = vmatmul.bf16.gmra.mxu0 %v371
    %v2430 = vpop.f32.mrf.mxu0
    %v2431 = vadd.f32 %v2342, %v2430
    %v2432 = vpop.f32.mrf.mxu0
    %v2433 = vadd.f32 %v2344, %v2432
    %2434 = vmatmul.bf16.gmra.mxu0 %v378
    %v2435 = vpop.f32.mrf.mxu0
    %v2436 = vadd.f32 %v2347, %v2435
    %v2437 = vpop.f32.mrf.mxu0
    %v2438 = vadd.f32 %v2349, %v2437
    %2439 = vmatmul.bf16.gmra.mxu0 %v385
    %v2440 = vpop.f32.mrf.mxu0
    %v2441 = vadd.f32 %v2352, %v2440
    %v2442 = vpop.f32.mrf.mxu0
    %v2443 = vadd.f32 %v2354, %v2442
    %2444 = vmatmul.bf16.gmra.mxu0 %v392
    %v2445 = vpop.f32.mrf.mxu0
    %v2446 = vadd.f32 %v2357, %v2445
    %v2447 = vpop.f32.mrf.mxu0
    %v2448 = vadd.f32 %v2359, %v2447
    %2449 = vmatmul.bf16.gmra.mxu0 %v399
    %v2450 = vpop.f32.mrf.mxu0
    %v2451 = vadd.f32 %v2362, %v2450
    %v2452 = vpop.f32.mrf.mxu0
    %v2453 = vadd.f32 %v2364, %v2452
    %2454 = vmatmul.bf16.gmra.mxu0 %v406
    %v2455 = vpop.f32.mrf.mxu0
    %v2456 = vadd.f32 %v2367, %v2455
    %v2457 = vpop.f32.mrf.mxu0
    %v2458 = vadd.f32 %v2369, %v2457
    %2459 = vmatmul.bf16.gmra.mxu0 %v413
    %v2460 = vpop.f32.mrf.mxu0
    %v2461 = vadd.f32 %v2372, %v2460
    %v2462 = vpop.f32.mrf.mxu0
    %v2463 = vadd.f32 %v2374, %v2462
    %2464 = vmatmul.bf16.gmra.mxu0 %v420
    %v2465 = vpop.f32.mrf.mxu0
    %v2466 = vadd.f32 %v2377, %v2465
    %v2467 = vpop.f32.mrf.mxu0
    %v2468 = vadd.f32 %v2379, %v2467
    %2469 = vmatmul.bf16.gmra.mxu0 %v427
    %v2470 = vpop.f32.mrf.mxu0
    %v2471 = vadd.f32 %v2382, %v2470
    %v2472 = vpop.f32.mrf.mxu0
    %v2473 = vadd.f32 %v2384, %v2472
    %2474 = vmatmul.bf16.gmra.mxu0 %v434
    %v2475 = vpop.f32.mrf.mxu0
    %v2476 = vadd.f32 %v2387, %v2475
    %v2477 = vpop.f32.mrf.mxu0
    %v2478 = vadd.f32 %v2389, %v2477
    %2479 = vmatmul.bf16.gmra.mxu0 %v441
    %v2480 = vpop.f32.mrf.mxu0
    %v2481 = vadd.f32 %v2392, %v2480
    %v2482 = vpop.f32.mrf.mxu0
    %v2483 = vadd.f32 %v2394, %v2482
    %2484 = vmatmul.bf16.gmra.mxu0 %v448
    %v2485 = vpop.f32.mrf.mxu0
    %v2486 = vadd.f32 %v2397, %v2485
    %v2487 = vpop.f32.mrf.mxu0
    %v2488 = vadd.f32 %v2399, %v2487
    %2489 = vdwg.mxu0
    %2490 = vmatpush.bf16.msra.mxu0 %v1341
    %2491 = vmatpush.bf16.msra.mxu0 %v1337
    %2492 = vmatpush.bf16.msra.mxu0 %v1333
    %2493 = vmatpush.bf16.msra.mxu0 %v1329
    %2494 = vmatpush.bf16.msra.mxu0 %v1325
    %2495 = vmatpush.bf16.msra.mxu0 %v1321
    %2496 = vmatpush.bf16.msra.mxu0 %v1317
    %2497 = vmatpush.bf16.msra.mxu0 %v1313
    %2498 = vmatmul.bf16.gmra.mxu0 %v344
    %v2499 = vpop.f32.mrf.mxu0
    %v2500 = vadd.f32 %v2411, %v2499
    %v2501 = vpop.f32.mrf.mxu0
    %v2502 = vadd.f32 %v2413, %v2501
    %2503 = vmatmul.bf16.gmra.mxu0 %v351
    %v2504 = vpop.f32.mrf.mxu0
    %v2505 = vadd.f32 %v2416, %v2504
    %v2506 = vpop.f32.mrf.mxu0
    %v2507 = vadd.f32 %v2418, %v2506
    %2508 = vmatmul.bf16.gmra.mxu0 %v358
    %v2509 = vpop.f32.mrf.mxu0
    %v2510 = vadd.f32 %v2421, %v2509
    %v2511 = vpop.f32.mrf.mxu0
    %v2512 = vadd.f32 %v2423, %v2511
    %2513 = vmatmul.bf16.gmra.mxu0 %v365
    %v2514 = vpop.f32.mrf.mxu0
    %v2515 = vadd.f32 %v2426, %v2514
    %v2516 = vpop.f32.mrf.mxu0
    %v2517 = vadd.f32 %v2428, %v2516
    %2518 = vmatmul.bf16.gmra.mxu0 %v372
    %v2519 = vpop.f32.mrf.mxu0
    %v2520 = vadd.f32 %v2431, %v2519
    %v2521 = vpop.f32.mrf.mxu0
    %v2522 = vadd.f32 %v2433, %v2521
    %2523 = vmatmul.bf16.gmra.mxu0 %v379
    %v2524 = vpop.f32.mrf.mxu0
    %v2525 = vadd.f32 %v2436, %v2524
    %v2526 = vpop.f32.mrf.mxu0
    %v2527 = vadd.f32 %v2438, %v2526
    %2528 = vmatmul.bf16.gmra.mxu0 %v386
    %v2529 = vpop.f32.mrf.mxu0
    %v2530 = vadd.f32 %v2441, %v2529
    %v2531 = vpop.f32.mrf.mxu0
    %v2532 = vadd.f32 %v2443, %v2531
    %2533 = vmatmul.bf16.gmra.mxu0 %v393
    %v2534 = vpop.f32.mrf.mxu0
    %v2535 = vadd.f32 %v2446, %v2534
    %v2536 = vpop.f32.mrf.mxu0
    %v2537 = vadd.f32 %v2448, %v2536
    %2538 = vmatmul.bf16.gmra.mxu0 %v400
    %v2539 = vpop.f32.mrf.mxu0
    %v2540 = vadd.f32 %v2451, %v2539
    %v2541 = vpop.f32.mrf.mxu0
    %v2542 = vadd.f32 %v2453, %v2541
    %2543 = vmatmul.bf16.gmra.mxu0 %v407
    %v2544 = vpop.f32.mrf.mxu0
    %v2545 = vadd.f32 %v2456, %v2544
    %v2546 = vpop.f32.mrf.mxu0
    %v2547 = vadd.f32 %v2458, %v2546
    %2548 = vmatmul.bf16.gmra.mxu0 %v414
    %v2549 = vpop.f32.mrf.mxu0
    %v2550 = vadd.f32 %v2461, %v2549
    %v2551 = vpop.f32.mrf.mxu0
    %v2552 = vadd.f32 %v2463, %v2551
    %2553 = vmatmul.bf16.gmra.mxu0 %v421
    %v2554 = vpop.f32.mrf.mxu0
    %v2555 = vadd.f32 %v2466, %v2554
    %v2556 = vpop.f32.mrf.mxu0
    %v2557 = vadd.f32 %v2468, %v2556
    %2558 = vmatmul.bf16.gmra.mxu0 %v428
    %v2559 = vpop.f32.mrf.mxu0
    %v2560 = vadd.f32 %v2471, %v2559
    %v2561 = vpop.f32.mrf.mxu0
    %v2562 = vadd.f32 %v2473, %v2561
    %2563 = vmatmul.bf16.gmra.mxu0 %v435
    %v2564 = vpop.f32.mrf.mxu0
    %v2565 = vadd.f32 %v2476, %v2564
    %v2566 = vpop.f32.mrf.mxu0
    %v2567 = vadd.f32 %v2478, %v2566
    %2568 = vmatmul.bf16.gmra.mxu0 %v442
    %v2569 = vpop.f32.mrf.mxu0
    %v2570 = vadd.f32 %v2481, %v2569
    %v2571 = vpop.f32.mrf.mxu0
    %v2572 = vadd.f32 %v2483, %v2571
    %2573 = vmatmul.bf16.gmra.mxu0 %v449
    %v2574 = vpop.f32.mrf.mxu0
    %v2575 = vadd.f32 %v2486, %v2574
    %v2576 = vpop.f32.mrf.mxu0
    %v2577 = vadd.f32 %v2488, %v2576
    %2578 = vdwg.mxu0
    %2579 = vmatpush.bf16.msra.mxu0 %v1373
    %2580 = vmatpush.bf16.msra.mxu0 %v1369
    %2581 = vmatpush.bf16.msra.mxu0 %v1365
    %2582 = vmatpush.bf16.msra.mxu0 %v1361
    %2583 = vmatpush.bf16.msra.mxu0 %v1357
    %2584 = vmatpush.bf16.msra.mxu0 %v1353
    %2585 = vmatpush.bf16.msra.mxu0 %v1349
    %2586 = vmatpush.bf16.msra.mxu0 %v1345
    %2587 = vmatmul.bf16.gmra.mxu0 %v345
    %v2588 = vpop.f32.mrf.mxu0
    %v2589 = vadd.f32 %v2500, %v2588
    %v2590 = vpop.f32.mrf.mxu0
    %v2591 = vadd.f32 %v2502, %v2590
    %2592 = vmatmul.bf16.gmra.mxu0 %v352
    %v2593 = vpop.f32.mrf.mxu0
    %v2594 = vadd.f32 %v2505, %v2593
    %v2595 = vpop.f32.mrf.mxu0
    %v2596 = vadd.f32 %v2507, %v2595
    %2597 = vmatmul.bf16.gmra.mxu0 %v359
    %v2598 = vpop.f32.mrf.mxu0
    %v2599 = vadd.f32 %v2510, %v2598
    %v2600 = vpop.f32.mrf.mxu0
    %v2601 = vadd.f32 %v2512, %v2600
    %2602 = vmatmul.bf16.gmra.mxu0 %v366
    %v2603 = vpop.f32.mrf.mxu0
    %v2604 = vadd.f32 %v2515, %v2603
    %v2605 = vpop.f32.mrf.mxu0
    %v2606 = vadd.f32 %v2517, %v2605
    %2607 = vmatmul.bf16.gmra.mxu0 %v373
    %v2608 = vpop.f32.mrf.mxu0
    %v2609 = vadd.f32 %v2520, %v2608
    %v2610 = vpop.f32.mrf.mxu0
    %v2611 = vadd.f32 %v2522, %v2610
    %2612 = vmatmul.bf16.gmra.mxu0 %v380
    %v2613 = vpop.f32.mrf.mxu0
    %v2614 = vadd.f32 %v2525, %v2613
    %v2615 = vpop.f32.mrf.mxu0
    %v2616 = vadd.f32 %v2527, %v2615
    %2617 = vmatmul.bf16.gmra.mxu0 %v387
    %v2618 = vpop.f32.mrf.mxu0
    %v2619 = vadd.f32 %v2530, %v2618
    %v2620 = vpop.f32.mrf.mxu0
    %v2621 = vadd.f32 %v2532, %v2620
    %2622 = vmatmul.bf16.gmra.mxu0 %v394
    %v2623 = vpop.f32.mrf.mxu0
    %v2624 = vadd.f32 %v2535, %v2623
    %v2625 = vpop.f32.mrf.mxu0
    %v2626 = vadd.f32 %v2537, %v2625
    %2627 = vmatmul.bf16.gmra.mxu0 %v401
    %v2628 = vpop.f32.mrf.mxu0
    %v2629 = vadd.f32 %v2540, %v2628
    %v2630 = vpop.f32.mrf.mxu0
    %v2631 = vadd.f32 %v2542, %v2630
    %2632 = vmatmul.bf16.gmra.mxu0 %v408
    %v2633 = vpop.f32.mrf.mxu0
    %v2634 = vadd.f32 %v2545, %v2633
    %v2635 = vpop.f32.mrf.mxu0
    %v2636 = vadd.f32 %v2547, %v2635
    %2637 = vmatmul.bf16.gmra.mxu0 %v415
    %v2638 = vpop.f32.mrf.mxu0
    %v2639 = vadd.f32 %v2550, %v2638
    %v2640 = vpop.f32.mrf.mxu0
    %v2641 = vadd.f32 %v2552, %v2640
    %2642 = vmatmul.bf16.gmra.mxu0 %v422
    %v2643 = vpop.f32.mrf.mxu0
    %v2644 = vadd.f32 %v2555, %v2643
    %v2645 = vpop.f32.mrf.mxu0
    %v2646 = vadd.f32 %v2557, %v2645
    %2647 = vmatmul.bf16.gmra.mxu0 %v429
    %v2648 = vpop.f32.mrf.mxu0
    %v2649 = vadd.f32 %v2560, %v2648
    %v2650 = vpop.f32.mrf.mxu0
    %v2651 = vadd.f32 %v2562, %v2650
    %2652 = vmatmul.bf16.gmra.mxu0 %v436
    %v2653 = vpop.f32.mrf.mxu0
    %v2654 = vadd.f32 %v2565, %v2653
    %v2655 = vpop.f32.mrf.mxu0
    %v2656 = vadd.f32 %v2567, %v2655
    %2657 = vmatmul.bf16.gmra.mxu0 %v443
    %v2658 = vpop.f32.mrf.mxu0
    %v2659 = vadd.f32 %v2570, %v2658
    %v2660 = vpop.f32.mrf.mxu0
    %v2661 = vadd.f32 %v2572, %v2660
    %2662 = vmatmul.bf16.gmra.mxu0 %v450
    %v2663 = vpop.f32.mrf.mxu0
    %v2664 = vadd.f32 %v2575, %v2663
    %v2665 = vpop.f32.mrf.mxu0
    %v2666 = vadd.f32 %v2577, %v2665
    %2667 = vdwg.mxu0
    %2668 = vmatpush.bf16.msra.mxu0 %v1405
    %2669 = vmatpush.bf16.msra.mxu0 %v1401
    %2670 = vmatpush.bf16.msra.mxu0 %v1397
    %2671 = vmatpush.bf16.msra.mxu0 %v1393
    %2672 = vmatpush.bf16.msra.mxu0 %v1389
    %2673 = vmatpush.bf16.msra.mxu0 %v1385
    %2674 = vmatpush.bf16.msra.mxu0 %v1381
    %2675 = vmatpush.bf16.msra.mxu0 %v1377
    %2676 = vmatmul.bf16.gmra.mxu0 %v346
    %v2677 = vpop.f32.mrf.mxu0
    %v2678 = vadd.f32 %v2589, %v2677
    %v2679 = vpop.f32.mrf.mxu0
    %v2680 = vadd.f32 %v2591, %v2679
    %2681 = vmatmul.bf16.gmra.mxu0 %v353
    %v2682 = vpop.f32.mrf.mxu0
    %v2683 = vadd.f32 %v2594, %v2682
    %v2684 = vpop.f32.mrf.mxu0
    %v2685 = vadd.f32 %v2596, %v2684
    %2686 = vmatmul.bf16.gmra.mxu0 %v360
    %v2687 = vpop.f32.mrf.mxu0
    %v2688 = vadd.f32 %v2599, %v2687
    %v2689 = vpop.f32.mrf.mxu0
    %v2690 = vadd.f32 %v2601, %v2689
    %2691 = vmatmul.bf16.gmra.mxu0 %v367
    %v2692 = vpop.f32.mrf.mxu0
    %v2693 = vadd.f32 %v2604, %v2692
    %v2694 = vpop.f32.mrf.mxu0
    %v2695 = vadd.f32 %v2606, %v2694
    %2696 = vmatmul.bf16.gmra.mxu0 %v374
    %v2697 = vpop.f32.mrf.mxu0
    %v2698 = vadd.f32 %v2609, %v2697
    %v2699 = vpop.f32.mrf.mxu0
    %v2700 = vadd.f32 %v2611, %v2699
    %2701 = vmatmul.bf16.gmra.mxu0 %v381
    %v2702 = vpop.f32.mrf.mxu0
    %v2703 = vadd.f32 %v2614, %v2702
    %v2704 = vpop.f32.mrf.mxu0
    %v2705 = vadd.f32 %v2616, %v2704
    %2706 = vmatmul.bf16.gmra.mxu0 %v388
    %v2707 = vpop.f32.mrf.mxu0
    %v2708 = vadd.f32 %v2619, %v2707
    %v2709 = vpop.f32.mrf.mxu0
    %v2710 = vadd.f32 %v2621, %v2709
    %2711 = vmatmul.bf16.gmra.mxu0 %v395
    %v2712 = vpop.f32.mrf.mxu0
    %v2713 = vadd.f32 %v2624, %v2712
    %v2714 = vpop.f32.mrf.mxu0
    %v2715 = vadd.f32 %v2626, %v2714
    %2716 = vmatmul.bf16.gmra.mxu0 %v402
    %v2717 = vpop.f32.mrf.mxu0
    %v2718 = vadd.f32 %v2629, %v2717
    %v2719 = vpop.f32.mrf.mxu0
    %v2720 = vadd.f32 %v2631, %v2719
    %2721 = vmatmul.bf16.gmra.mxu0 %v409
    %v2722 = vpop.f32.mrf.mxu0
    %v2723 = vadd.f32 %v2634, %v2722
    %v2724 = vpop.f32.mrf.mxu0
    %v2725 = vadd.f32 %v2636, %v2724
    %2726 = vmatmul.bf16.gmra.mxu0 %v416
    %v2727 = vpop.f32.mrf.mxu0
    %v2728 = vadd.f32 %v2639, %v2727
    %v2729 = vpop.f32.mrf.mxu0
    %v2730 = vadd.f32 %v2641, %v2729
    %2731 = vmatmul.bf16.gmra.mxu0 %v423
    %v2732 = vpop.f32.mrf.mxu0
    %v2733 = vadd.f32 %v2644, %v2732
    %v2734 = vpop.f32.mrf.mxu0
    %v2735 = vadd.f32 %v2646, %v2734
    %2736 = vmatmul.bf16.gmra.mxu0 %v430
    %v2737 = vpop.f32.mrf.mxu0
    %v2738 = vadd.f32 %v2649, %v2737
    %v2739 = vpop.f32.mrf.mxu0
    %v2740 = vadd.f32 %v2651, %v2739
    %2741 = vmatmul.bf16.gmra.mxu0 %v437
    %v2742 = vpop.f32.mrf.mxu0
    %v2743 = vadd.f32 %v2654, %v2742
    %v2744 = vpop.f32.mrf.mxu0
    %v2745 = vadd.f32 %v2656, %v2744
    %2746 = vmatmul.bf16.gmra.mxu0 %v444
    %v2747 = vpop.f32.mrf.mxu0
    %v2748 = vadd.f32 %v2659, %v2747
    %v2749 = vpop.f32.mrf.mxu0
    %v2750 = vadd.f32 %v2661, %v2749
    %2751 = vmatmul.bf16.gmra.mxu0 %v451
    %v2752 = vpop.f32.mrf.mxu0
    %v2753 = vadd.f32 %v2664, %v2752
    %v2754 = vpop.f32.mrf.mxu0
    %v2755 = vadd.f32 %v2666, %v2754
    %2756 = vdwg.mxu0
    %2757 = vmatpush.bf16.msra.mxu0 %v1437
    %2758 = vmatpush.bf16.msra.mxu0 %v1433
    %2759 = vmatpush.bf16.msra.mxu0 %v1429
    %2760 = vmatpush.bf16.msra.mxu0 %v1425
    %2761 = vmatpush.bf16.msra.mxu0 %v1421
    %2762 = vmatpush.bf16.msra.mxu0 %v1417
    %2763 = vmatpush.bf16.msra.mxu0 %v1413
    %2764 = vmatpush.bf16.msra.mxu0 %v1409
    %2765 = vmatmul.bf16.gmra.mxu0 %v347
    %v2766 = vpop.f32.mrf.mxu0
    %v2767 = vadd.f32 %v2678, %v2766
    %v2768 = vpop.f32.mrf.mxu0
    %v2769 = vadd.f32 %v2680, %v2768
    %2770 = vmatmul.bf16.gmra.mxu0 %v354
    %v2771 = vpop.f32.mrf.mxu0
    %v2772 = vadd.f32 %v2683, %v2771
    %v2773 = vpop.f32.mrf.mxu0
    %v2774 = vadd.f32 %v2685, %v2773
    %2775 = vmatmul.bf16.gmra.mxu0 %v361
    %v2776 = vpop.f32.mrf.mxu0
    %v2777 = vadd.f32 %v2688, %v2776
    %v2778 = vpop.f32.mrf.mxu0
    %v2779 = vadd.f32 %v2690, %v2778
    %2780 = vmatmul.bf16.gmra.mxu0 %v368
    %v2781 = vpop.f32.mrf.mxu0
    %v2782 = vadd.f32 %v2693, %v2781
    %v2783 = vpop.f32.mrf.mxu0
    %v2784 = vadd.f32 %v2695, %v2783
    %2785 = vmatmul.bf16.gmra.mxu0 %v375
    %v2786 = vpop.f32.mrf.mxu0
    %v2787 = vadd.f32 %v2698, %v2786
    %v2788 = vpop.f32.mrf.mxu0
    %v2789 = vadd.f32 %v2700, %v2788
    %2790 = vmatmul.bf16.gmra.mxu0 %v382
    %v2791 = vpop.f32.mrf.mxu0
    %v2792 = vadd.f32 %v2703, %v2791
    %v2793 = vpop.f32.mrf.mxu0
    %v2794 = vadd.f32 %v2705, %v2793
    %2795 = vmatmul.bf16.gmra.mxu0 %v389
    %v2796 = vpop.f32.mrf.mxu0
    %v2797 = vadd.f32 %v2708, %v2796
    %v2798 = vpop.f32.mrf.mxu0
    %v2799 = vadd.f32 %v2710, %v2798
    %2800 = vmatmul.bf16.gmra.mxu0 %v396
    %v2801 = vpop.f32.mrf.mxu0
    %v2802 = vadd.f32 %v2713, %v2801
    %v2803 = vpop.f32.mrf.mxu0
    %v2804 = vadd.f32 %v2715, %v2803
    %2805 = vmatmul.bf16.gmra.mxu0 %v403
    %v2806 = vpop.f32.mrf.mxu0
    %v2807 = vadd.f32 %v2718, %v2806
    %v2808 = vpop.f32.mrf.mxu0
    %v2809 = vadd.f32 %v2720, %v2808
    %2810 = vmatmul.bf16.gmra.mxu0 %v410
    %v2811 = vpop.f32.mrf.mxu0
    %v2812 = vadd.f32 %v2723, %v2811
    %v2813 = vpop.f32.mrf.mxu0
    %v2814 = vadd.f32 %v2725, %v2813
    %2815 = vmatmul.bf16.gmra.mxu0 %v417
    %v2816 = vpop.f32.mrf.mxu0
    %v2817 = vadd.f32 %v2728, %v2816
    %v2818 = vpop.f32.mrf.mxu0
    %v2819 = vadd.f32 %v2730, %v2818
    %2820 = vmatmul.bf16.gmra.mxu0 %v424
    %v2821 = vpop.f32.mrf.mxu0
    %v2822 = vadd.f32 %v2733, %v2821
    %v2823 = vpop.f32.mrf.mxu0
    %v2824 = vadd.f32 %v2735, %v2823
    %2825 = vmatmul.bf16.gmra.mxu0 %v431
    %v2826 = vpop.f32.mrf.mxu0
    %v2827 = vadd.f32 %v2738, %v2826
    %v2828 = vpop.f32.mrf.mxu0
    %v2829 = vadd.f32 %v2740, %v2828
    %2830 = vmatmul.bf16.gmra.mxu0 %v438
    %v2831 = vpop.f32.mrf.mxu0
    %v2832 = vadd.f32 %v2743, %v2831
    %v2833 = vpop.f32.mrf.mxu0
    %v2834 = vadd.f32 %v2745, %v2833
    %2835 = vmatmul.bf16.gmra.mxu0 %v445
    %v2836 = vpop.f32.mrf.mxu0
    %v2837 = vadd.f32 %v2748, %v2836
    %v2838 = vpop.f32.mrf.mxu0
    %v2839 = vadd.f32 %v2750, %v2838
    %2840 = vmatmul.bf16.gmra.mxu0 %v452
    %v2841 = vpop.f32.mrf.mxu0
    %v2842 = vadd.f32 %v2753, %v2841
    %v2843 = vpop.f32.mrf.mxu0
    %v2844 = vadd.f32 %v2755, %v2843
    %2845 = vdwg.mxu0
    %2846 = vmatpush.bf16.msra.mxu0 0
    %2847 = vmatpush.bf16.msra.mxu0 0
    %2848 = vmatpush.bf16.msra.mxu0 0
    %2849 = vmatpush.bf16.msra.mxu0 0
    %2850 = vmatpush.bf16.msra.mxu0 0
    %2851 = vmatpush.bf16.msra.mxu0 0
    %2852 = vmatpush.bf16.msra.mxu0 0
    %2853 = vmatpush.bf16.msra.mxu0 %v1441
    %2854 = vmatmul.bf16.gmra.mxu0 %v1642
    %v2855 = vpop.f32.mrf.mxu0
    %v2856 = vadd.f32 %v2767, %v2855
    %v2857 = vpop.f32.mrf.mxu0
    %v2858 = vadd.f32 %v2769, %v2857
    %2859 = vmatmul.bf16.gmra.mxu0 %v1645
    %v2860 = vpop.f32.mrf.mxu0
    %v2861 = vadd.f32 %v2772, %v2860
    %v2862 = vpop.f32.mrf.mxu0
    %v2863 = vadd.f32 %v2774, %v2862
    %2864 = vmatmul.bf16.gmra.mxu0 %v1648
    %v2865 = vpop.f32.mrf.mxu0
    %v2866 = vadd.f32 %v2777, %v2865
    %v2867 = vpop.f32.mrf.mxu0
    %v2868 = vadd.f32 %v2779, %v2867
    %2869 = vmatmul.bf16.gmra.mxu0 %v1651
    %v2870 = vpop.f32.mrf.mxu0
    %v2871 = vadd.f32 %v2782, %v2870
    %v2872 = vpop.f32.mrf.mxu0
    %v2873 = vadd.f32 %v2784, %v2872
    %2874 = vmatmul.bf16.gmra.mxu0 %v1654
    %v2875 = vpop.f32.mrf.mxu0
    %v2876 = vadd.f32 %v2787, %v2875
    %v2877 = vpop.f32.mrf.mxu0
    %v2878 = vadd.f32 %v2789, %v2877
    %2879 = vmatmul.bf16.gmra.mxu0 %v1657
    %v2880 = vpop.f32.mrf.mxu0
    %v2881 = vadd.f32 %v2792, %v2880
    %v2882 = vpop.f32.mrf.mxu0
    %v2883 = vadd.f32 %v2794, %v2882
    %2884 = vmatmul.bf16.gmra.mxu0 %v1660
    %v2885 = vpop.f32.mrf.mxu0
    %v2886 = vadd.f32 %v2797, %v2885
    %v2887 = vpop.f32.mrf.mxu0
    %v2888 = vadd.f32 %v2799, %v2887
    %2889 = vmatmul.bf16.gmra.mxu0 %v1663
    %v2890 = vpop.f32.mrf.mxu0
    %v2891 = vadd.f32 %v2802, %v2890
    %v2892 = vpop.f32.mrf.mxu0
    %v2893 = vadd.f32 %v2804, %v2892
    %2894 = vmatmul.bf16.gmra.mxu0 %v1666
    %v2895 = vpop.f32.mrf.mxu0
    %v2896 = vadd.f32 %v2807, %v2895
    %v2897 = vpop.f32.mrf.mxu0
    %v2898 = vadd.f32 %v2809, %v2897
    %2899 = vmatmul.bf16.gmra.mxu0 %v1669
    %v2900 = vpop.f32.mrf.mxu0
    %v2901 = vadd.f32 %v2812, %v2900
    %v2902 = vpop.f32.mrf.mxu0
    %v2903 = vadd.f32 %v2814, %v2902
    %2904 = vmatmul.bf16.gmra.mxu0 %v1672
    %v2905 = vpop.f32.mrf.mxu0
    %v2906 = vadd.f32 %v2817, %v2905
    %v2907 = vpop.f32.mrf.mxu0
    %v2908 = vadd.f32 %v2819, %v2907
    %2909 = vmatmul.bf16.gmra.mxu0 %v1675
    %v2910 = vpop.f32.mrf.mxu0
    %v2911 = vadd.f32 %v2822, %v2910
    %v2912 = vpop.f32.mrf.mxu0
    %v2913 = vadd.f32 %v2824, %v2912
    %2914 = vmatmul.bf16.gmra.mxu0 %v1678
    %v2915 = vpop.f32.mrf.mxu0
    %v2916 = vadd.f32 %v2827, %v2915
    %v2917 = vpop.f32.mrf.mxu0
    %v2918 = vadd.f32 %v2829, %v2917
    %2919 = vmatmul.bf16.gmra.mxu0 %v1681
    %v2920 = vpop.f32.mrf.mxu0
    %v2921 = vadd.f32 %v2832, %v2920
    %v2922 = vpop.f32.mrf.mxu0
    %v2923 = vadd.f32 %v2834, %v2922
    %2924 = vmatmul.bf16.gmra.mxu0 %v1684
    %v2925 = vpop.f32.mrf.mxu0
    %v2926 = vadd.f32 %v2837, %v2925
    %v2927 = vpop.f32.mrf.mxu0
    %v2928 = vadd.f32 %v2839, %v2927
    %2929 = vmatmul.bf16.gmra.mxu0 %v1687
    %v2930 = vpop.f32.mrf.mxu0
    %v2931 = vadd.f32 %v2842, %v2930
    %v2932 = vpop.f32.mrf.mxu0
    %v2933 = vadd.f32 %v2844, %v2932
    %2934 = vdwg.mxu0
    %2935 = vmatpush.bf16.msra.mxu0 %v1278
    %2936 = vmatpush.bf16.msra.mxu0 %v1274
    %2937 = vmatpush.bf16.msra.mxu0 %v1270
    %2938 = vmatpush.bf16.msra.mxu0 %v1266
    %2939 = vmatpush.bf16.msra.mxu0 %v1262
    %2940 = vmatpush.bf16.msra.mxu0 %v1258
    %2941 = vmatpush.bf16.msra.mxu0 %v1254
    %2942 = vmatpush.bf16.msra.mxu0 %v1250
    %2943 = vmatmul.bf16.gmra.mxu0 %v342
    %v2944 = vpop.f32.mrf.mxu0
    %v2945 = vadd.f32 %v654, %v2944
    %v2946 = vpop.f32.mrf.mxu0
    %v2947 = vadd.f32 %v654, %v2946
    %2948 = vmatmul.bf16.gmra.mxu0 %v349
    %v2949 = vpop.f32.mrf.mxu0
    %v2950 = vadd.f32 %v654, %v2949
    %v2951 = vpop.f32.mrf.mxu0
    %v2952 = vadd.f32 %v654, %v2951
    %2953 = vmatmul.bf16.gmra.mxu0 %v356
    %v2954 = vpop.f32.mrf.mxu0
    %v2955 = vadd.f32 %v654, %v2954
    %v2956 = vpop.f32.mrf.mxu0
    %v2957 = vadd.f32 %v654, %v2956
    %2958 = vmatmul.bf16.gmra.mxu0 %v363
    %v2959 = vpop.f32.mrf.mxu0
    %v2960 = vadd.f32 %v654, %v2959
    %v2961 = vpop.f32.mrf.mxu0
    %v2962 = vadd.f32 %v654, %v2961
    %2963 = vmatmul.bf16.gmra.mxu0 %v370
    %v2964 = vpop.f32.mrf.mxu0
    %v2965 = vadd.f32 %v654, %v2964
    %v2966 = vpop.f32.mrf.mxu0
    %v2967 = vadd.f32 %v654, %v2966
    %2968 = vmatmul.bf16.gmra.mxu0 %v377
    %v2969 = vpop.f32.mrf.mxu0
    %v2970 = vadd.f32 %v654, %v2969
    %v2971 = vpop.f32.mrf.mxu0
    %v2972 = vadd.f32 %v654, %v2971
    %2973 = vmatmul.bf16.gmra.mxu0 %v384
    %v2974 = vpop.f32.mrf.mxu0
    %v2975 = vadd.f32 %v654, %v2974
    %v2976 = vpop.f32.mrf.mxu0
    %v2977 = vadd.f32 %v654, %v2976
    %2978 = vmatmul.bf16.gmra.mxu0 %v391
    %v2979 = vpop.f32.mrf.mxu0
    %v2980 = vadd.f32 %v654, %v2979
    %v2981 = vpop.f32.mrf.mxu0
    %v2982 = vadd.f32 %v654, %v2981
    %2983 = vmatmul.bf16.gmra.mxu0 %v398
    %v2984 = vpop.f32.mrf.mxu0
    %v2985 = vadd.f32 %v654, %v2984
    %v2986 = vpop.f32.mrf.mxu0
    %v2987 = vadd.f32 %v654, %v2986
    %2988 = vmatmul.bf16.gmra.mxu0 %v405
    %v2989 = vpop.f32.mrf.mxu0
    %v2990 = vadd.f32 %v654, %v2989
    %v2991 = vpop.f32.mrf.mxu0
    %v2992 = vadd.f32 %v654, %v2991
    %2993 = vmatmul.bf16.gmra.mxu0 %v412
    %v2994 = vpop.f32.mrf.mxu0
    %v2995 = vadd.f32 %v654, %v2994
    %v2996 = vpop.f32.mrf.mxu0
    %v2997 = vadd.f32 %v654, %v2996
    %2998 = vmatmul.bf16.gmra.mxu0 %v419
    %v2999 = vpop.f32.mrf.mxu0
    %v3000 = vadd.f32 %v654, %v2999
    %v3001 = vpop.f32.mrf.mxu0
    %v3002 = vadd.f32 %v654, %v3001
    %3003 = vmatmul.bf16.gmra.mxu0 %v426
    %v3004 = vpop.f32.mrf.mxu0
    %v3005 = vadd.f32 %v654, %v3004
    %v3006 = vpop.f32.mrf.mxu0
    %v3007 = vadd.f32 %v654, %v3006
    %3008 = vmatmul.bf16.gmra.mxu0 %v433
    %v3009 = vpop.f32.mrf.mxu0
    %v3010 = vadd.f32 %v654, %v3009
    %v3011 = vpop.f32.mrf.mxu0
    %v3012 = vadd.f32 %v654, %v3011
    %3013 = vmatmul.bf16.gmra.mxu0 %v440
    %v3014 = vpop.f32.mrf.mxu0
    %v3015 = vadd.f32 %v654, %v3014
    %v3016 = vpop.f32.mrf.mxu0
    %v3017 = vadd.f32 %v654, %v3016
    %3018 = vmatmul.bf16.gmra.mxu0 %v447
    %v3019 = vpop.f32.mrf.mxu0
    %v3020 = vadd.f32 %v654, %v3019
    %v3021 = vpop.f32.mrf.mxu0
    %v3022 = vadd.f32 %v654, %v3021
    %3023 = vdwg.mxu0
    %3024 = vmatpush.bf16.msra.mxu0 %v1310
    %3025 = vmatpush.bf16.msra.mxu0 %v1306
    %3026 = vmatpush.bf16.msra.mxu0 %v1302
    %3027 = vmatpush.bf16.msra.mxu0 %v1298
    %3028 = vmatpush.bf16.msra.mxu0 %v1294
    %3029 = vmatpush.bf16.msra.mxu0 %v1290
    %3030 = vmatpush.bf16.msra.mxu0 %v1286
    %3031 = vmatpush.bf16.msra.mxu0 %v1282
    %3032 = vmatmul.bf16.gmra.mxu0 %v343
    %v3033 = vpop.f32.mrf.mxu0
    %v3034 = vadd.f32 %v2945, %v3033
    %v3035 = vpop.f32.mrf.mxu0
    %v3036 = vadd.f32 %v2947, %v3035
    %3037 = vmatmul.bf16.gmra.mxu0 %v350
    %v3038 = vpop.f32.mrf.mxu0
    %v3039 = vadd.f32 %v2950, %v3038
    %v3040 = vpop.f32.mrf.mxu0
    %v3041 = vadd.f32 %v2952, %v3040
    %3042 = vmatmul.bf16.gmra.mxu0 %v357
    %v3043 = vpop.f32.mrf.mxu0
    %v3044 = vadd.f32 %v2955, %v3043
    %v3045 = vpop.f32.mrf.mxu0
    %v3046 = vadd.f32 %v2957, %v3045
    %3047 = vmatmul.bf16.gmra.mxu0 %v364
    %v3048 = vpop.f32.mrf.mxu0
    %v3049 = vadd.f32 %v2960, %v3048
    %v3050 = vpop.f32.mrf.mxu0
    %v3051 = vadd.f32 %v2962, %v3050
    %3052 = vmatmul.bf16.gmra.mxu0 %v371
    %v3053 = vpop.f32.mrf.mxu0
    %v3054 = vadd.f32 %v2965, %v3053
    %v3055 = vpop.f32.mrf.mxu0
    %v3056 = vadd.f32 %v2967, %v3055
    %3057 = vmatmul.bf16.gmra.mxu0 %v378
    %v3058 = vpop.f32.mrf.mxu0
    %v3059 = vadd.f32 %v2970, %v3058
    %v3060 = vpop.f32.mrf.mxu0
    %v3061 = vadd.f32 %v2972, %v3060
    %3062 = vmatmul.bf16.gmra.mxu0 %v385
    %v3063 = vpop.f32.mrf.mxu0
    %v3064 = vadd.f32 %v2975, %v3063
    %v3065 = vpop.f32.mrf.mxu0
    %v3066 = vadd.f32 %v2977, %v3065
    %3067 = vmatmul.bf16.gmra.mxu0 %v392
    %v3068 = vpop.f32.mrf.mxu0
    %v3069 = vadd.f32 %v2980, %v3068
    %v3070 = vpop.f32.mrf.mxu0
    %v3071 = vadd.f32 %v2982, %v3070
    %3072 = vmatmul.bf16.gmra.mxu0 %v399
    %v3073 = vpop.f32.mrf.mxu0
    %v3074 = vadd.f32 %v2985, %v3073
    %v3075 = vpop.f32.mrf.mxu0
    %v3076 = vadd.f32 %v2987, %v3075
    %3077 = vmatmul.bf16.gmra.mxu0 %v406
    %v3078 = vpop.f32.mrf.mxu0
    %v3079 = vadd.f32 %v2990, %v3078
    %v3080 = vpop.f32.mrf.mxu0
    %v3081 = vadd.f32 %v2992, %v3080
    %3082 = vmatmul.bf16.gmra.mxu0 %v413
    %v3083 = vpop.f32.mrf.mxu0
    %v3084 = vadd.f32 %v2995, %v3083
    %v3085 = vpop.f32.mrf.mxu0
    %v3086 = vadd.f32 %v2997, %v3085
    %3087 = vmatmul.bf16.gmra.mxu0 %v420
    %v3088 = vpop.f32.mrf.mxu0
    %v3089 = vadd.f32 %v3000, %v3088
    %v3090 = vpop.f32.mrf.mxu0
    %v3091 = vadd.f32 %v3002, %v3090
    %3092 = vmatmul.bf16.gmra.mxu0 %v427
    %v3093 = vpop.f32.mrf.mxu0
    %v3094 = vadd.f32 %v3005, %v3093
    %v3095 = vpop.f32.mrf.mxu0
    %v3096 = vadd.f32 %v3007, %v3095
    %3097 = vmatmul.bf16.gmra.mxu0 %v434
    %v3098 = vpop.f32.mrf.mxu0
    %v3099 = vadd.f32 %v3010, %v3098
    %v3100 = vpop.f32.mrf.mxu0
    %v3101 = vadd.f32 %v3012, %v3100
    %3102 = vmatmul.bf16.gmra.mxu0 %v441
    %v3103 = vpop.f32.mrf.mxu0
    %v3104 = vadd.f32 %v3015, %v3103
    %v3105 = vpop.f32.mrf.mxu0
    %v3106 = vadd.f32 %v3017, %v3105
    %3107 = vmatmul.bf16.gmra.mxu0 %v448
    %v3108 = vpop.f32.mrf.mxu0
    %v3109 = vadd.f32 %v3020, %v3108
    %v3110 = vpop.f32.mrf.mxu0
    %v3111 = vadd.f32 %v3022, %v3110
    %3112 = vdwg.mxu0
    %3113 = vmatpush.bf16.msra.mxu0 %v1342
    %3114 = vmatpush.bf16.msra.mxu0 %v1338
    %3115 = vmatpush.bf16.msra.mxu0 %v1334
    %3116 = vmatpush.bf16.msra.mxu0 %v1330
    %3117 = vmatpush.bf16.msra.mxu0 %v1326
    %3118 = vmatpush.bf16.msra.mxu0 %v1322
    %3119 = vmatpush.bf16.msra.mxu0 %v1318
    %3120 = vmatpush.bf16.msra.mxu0 %v1314
    %3121 = vmatmul.bf16.gmra.mxu0 %v344
    %v3122 = vpop.f32.mrf.mxu0
    %v3123 = vadd.f32 %v3034, %v3122
    %v3124 = vpop.f32.mrf.mxu0
    %v3125 = vadd.f32 %v3036, %v3124
    %3126 = vmatmul.bf16.gmra.mxu0 %v351
    %v3127 = vpop.f32.mrf.mxu0
    %v3128 = vadd.f32 %v3039, %v3127
    %v3129 = vpop.f32.mrf.mxu0
    %v3130 = vadd.f32 %v3041, %v3129
    %3131 = vmatmul.bf16.gmra.mxu0 %v358
    %v3132 = vpop.f32.mrf.mxu0
    %v3133 = vadd.f32 %v3044, %v3132
    %v3134 = vpop.f32.mrf.mxu0
    %v3135 = vadd.f32 %v3046, %v3134
    %3136 = vmatmul.bf16.gmra.mxu0 %v365
    %v3137 = vpop.f32.mrf.mxu0
    %v3138 = vadd.f32 %v3049, %v3137
    %v3139 = vpop.f32.mrf.mxu0
    %v3140 = vadd.f32 %v3051, %v3139
    %3141 = vmatmul.bf16.gmra.mxu0 %v372
    %v3142 = vpop.f32.mrf.mxu0
    %v3143 = vadd.f32 %v3054, %v3142
    %v3144 = vpop.f32.mrf.mxu0
    %v3145 = vadd.f32 %v3056, %v3144
    %3146 = vmatmul.bf16.gmra.mxu0 %v379
    %v3147 = vpop.f32.mrf.mxu0
    %v3148 = vadd.f32 %v3059, %v3147
    %v3149 = vpop.f32.mrf.mxu0
    %v3150 = vadd.f32 %v3061, %v3149
    %3151 = vmatmul.bf16.gmra.mxu0 %v386
    %v3152 = vpop.f32.mrf.mxu0
    %v3153 = vadd.f32 %v3064, %v3152
    %v3154 = vpop.f32.mrf.mxu0
    %v3155 = vadd.f32 %v3066, %v3154
    %3156 = vmatmul.bf16.gmra.mxu0 %v393
    %v3157 = vpop.f32.mrf.mxu0
    %v3158 = vadd.f32 %v3069, %v3157
    %v3159 = vpop.f32.mrf.mxu0
    %v3160 = vadd.f32 %v3071, %v3159
    %3161 = vmatmul.bf16.gmra.mxu0 %v400
    %v3162 = vpop.f32.mrf.mxu0
    %v3163 = vadd.f32 %v3074, %v3162
    %v3164 = vpop.f32.mrf.mxu0
    %v3165 = vadd.f32 %v3076, %v3164
    %3166 = vmatmul.bf16.gmra.mxu0 %v407
    %v3167 = vpop.f32.mrf.mxu0
    %v3168 = vadd.f32 %v3079, %v3167
    %v3169 = vpop.f32.mrf.mxu0
    %v3170 = vadd.f32 %v3081, %v3169
    %3171 = vmatmul.bf16.gmra.mxu0 %v414
    %v3172 = vpop.f32.mrf.mxu0
    %v3173 = vadd.f32 %v3084, %v3172
    %v3174 = vpop.f32.mrf.mxu0
    %v3175 = vadd.f32 %v3086, %v3174
    %3176 = vmatmul.bf16.gmra.mxu0 %v421
    %v3177 = vpop.f32.mrf.mxu0
    %v3178 = vadd.f32 %v3089, %v3177
    %v3179 = vpop.f32.mrf.mxu0
    %v3180 = vadd.f32 %v3091, %v3179
    %3181 = vmatmul.bf16.gmra.mxu0 %v428
    %v3182 = vpop.f32.mrf.mxu0
    %v3183 = vadd.f32 %v3094, %v3182
    %v3184 = vpop.f32.mrf.mxu0
    %v3185 = vadd.f32 %v3096, %v3184
    %3186 = vmatmul.bf16.gmra.mxu0 %v435
    %v3187 = vpop.f32.mrf.mxu0
    %v3188 = vadd.f32 %v3099, %v3187
    %v3189 = vpop.f32.mrf.mxu0
    %v3190 = vadd.f32 %v3101, %v3189
    %3191 = vmatmul.bf16.gmra.mxu0 %v442
    %v3192 = vpop.f32.mrf.mxu0
    %v3193 = vadd.f32 %v3104, %v3192
    %v3194 = vpop.f32.mrf.mxu0
    %v3195 = vadd.f32 %v3106, %v3194
    %3196 = vmatmul.bf16.gmra.mxu0 %v449
    %v3197 = vpop.f32.mrf.mxu0
    %v3198 = vadd.f32 %v3109, %v3197
    %v3199 = vpop.f32.mrf.mxu0
    %v3200 = vadd.f32 %v3111, %v3199
    %3201 = vdwg.mxu0
    %3202 = vmatpush.bf16.msra.mxu0 %v1374
    %3203 = vmatpush.bf16.msra.mxu0 %v1370
    %3204 = vmatpush.bf16.msra.mxu0 %v1366
    %3205 = vmatpush.bf16.msra.mxu0 %v1362
    %3206 = vmatpush.bf16.msra.mxu0 %v1358
    %3207 = vmatpush.bf16.msra.mxu0 %v1354
    %3208 = vmatpush.bf16.msra.mxu0 %v1350
    %3209 = vmatpush.bf16.msra.mxu0 %v1346
    %3210 = vmatmul.bf16.gmra.mxu0 %v345
    %v3211 = vpop.f32.mrf.mxu0
    %v3212 = vadd.f32 %v3123, %v3211
    %v3213 = vpop.f32.mrf.mxu0
    %v3214 = vadd.f32 %v3125, %v3213
    %3215 = vmatmul.bf16.gmra.mxu0 %v352
    %v3216 = vpop.f32.mrf.mxu0
    %v3217 = vadd.f32 %v3128, %v3216
    %v3218 = vpop.f32.mrf.mxu0
    %v3219 = vadd.f32 %v3130, %v3218
    %3220 = vmatmul.bf16.gmra.mxu0 %v359
    %v3221 = vpop.f32.mrf.mxu0
    %v3222 = vadd.f32 %v3133, %v3221
    %v3223 = vpop.f32.mrf.mxu0
    %v3224 = vadd.f32 %v3135, %v3223
    %3225 = vmatmul.bf16.gmra.mxu0 %v366
    %v3226 = vpop.f32.mrf.mxu0
    %v3227 = vadd.f32 %v3138, %v3226
    %v3228 = vpop.f32.mrf.mxu0
    %v3229 = vadd.f32 %v3140, %v3228
    %3230 = vmatmul.bf16.gmra.mxu0 %v373
    %v3231 = vpop.f32.mrf.mxu0
    %v3232 = vadd.f32 %v3143, %v3231
    %v3233 = vpop.f32.mrf.mxu0
    %v3234 = vadd.f32 %v3145, %v3233
    %3235 = vmatmul.bf16.gmra.mxu0 %v380
    %v3236 = vpop.f32.mrf.mxu0
    %v3237 = vadd.f32 %v3148, %v3236
    %v3238 = vpop.f32.mrf.mxu0
    %v3239 = vadd.f32 %v3150, %v3238
    %3240 = vmatmul.bf16.gmra.mxu0 %v387
    %v3241 = vpop.f32.mrf.mxu0
    %v3242 = vadd.f32 %v3153, %v3241
    %v3243 = vpop.f32.mrf.mxu0
    %v3244 = vadd.f32 %v3155, %v3243
    %3245 = vmatmul.bf16.gmra.mxu0 %v394
    %v3246 = vpop.f32.mrf.mxu0
    %v3247 = vadd.f32 %v3158, %v3246
    %v3248 = vpop.f32.mrf.mxu0
    %v3249 = vadd.f32 %v3160, %v3248
    %3250 = vmatmul.bf16.gmra.mxu0 %v401
    %v3251 = vpop.f32.mrf.mxu0
    %v3252 = vadd.f32 %v3163, %v3251
    %v3253 = vpop.f32.mrf.mxu0
    %v3254 = vadd.f32 %v3165, %v3253
    %3255 = vmatmul.bf16.gmra.mxu0 %v408
    %v3256 = vpop.f32.mrf.mxu0
    %v3257 = vadd.f32 %v3168, %v3256
    %v3258 = vpop.f32.mrf.mxu0
    %v3259 = vadd.f32 %v3170, %v3258
    %3260 = vmatmul.bf16.gmra.mxu0 %v415
    %v3261 = vpop.f32.mrf.mxu0
    %v3262 = vadd.f32 %v3173, %v3261
    %v3263 = vpop.f32.mrf.mxu0
    %v3264 = vadd.f32 %v3175, %v3263
    %3265 = vmatmul.bf16.gmra.mxu0 %v422
    %v3266 = vpop.f32.mrf.mxu0
    %v3267 = vadd.f32 %v3178, %v3266
    %v3268 = vpop.f32.mrf.mxu0
    %v3269 = vadd.f32 %v3180, %v3268
    %3270 = vmatmul.bf16.gmra.mxu0 %v429
    %v3271 = vpop.f32.mrf.mxu0
    %v3272 = vadd.f32 %v3183, %v3271
    %v3273 = vpop.f32.mrf.mxu0
    %v3274 = vadd.f32 %v3185, %v3273
    %3275 = vmatmul.bf16.gmra.mxu0 %v436
    %v3276 = vpop.f32.mrf.mxu0
    %v3277 = vadd.f32 %v3188, %v3276
    %v3278 = vpop.f32.mrf.mxu0
    %v3279 = vadd.f32 %v3190, %v3278
    %3280 = vmatmul.bf16.gmra.mxu0 %v443
    %v3281 = vpop.f32.mrf.mxu0
    %v3282 = vadd.f32 %v3193, %v3281
    %v3283 = vpop.f32.mrf.mxu0
    %v3284 = vadd.f32 %v3195, %v3283
    %3285 = vmatmul.bf16.gmra.mxu0 %v450
    %v3286 = vpop.f32.mrf.mxu0
    %v3287 = vadd.f32 %v3198, %v3286
    %v3288 = vpop.f32.mrf.mxu0
    %v3289 = vadd.f32 %v3200, %v3288
    %3290 = vdwg.mxu0
    %3291 = vmatpush.bf16.msra.mxu0 %v1406
    %3292 = vmatpush.bf16.msra.mxu0 %v1402
    %3293 = vmatpush.bf16.msra.mxu0 %v1398
    %3294 = vmatpush.bf16.msra.mxu0 %v1394
    %3295 = vmatpush.bf16.msra.mxu0 %v1390
    %3296 = vmatpush.bf16.msra.mxu0 %v1386
    %3297 = vmatpush.bf16.msra.mxu0 %v1382
    %3298 = vmatpush.bf16.msra.mxu0 %v1378
    %3299 = vmatmul.bf16.gmra.mxu0 %v346
    %v3300 = vpop.f32.mrf.mxu0
    %v3301 = vadd.f32 %v3212, %v3300
    %v3302 = vpop.f32.mrf.mxu0
    %v3303 = vadd.f32 %v3214, %v3302
    %3304 = vmatmul.bf16.gmra.mxu0 %v353
    %v3305 = vpop.f32.mrf.mxu0
    %v3306 = vadd.f32 %v3217, %v3305
    %v3307 = vpop.f32.mrf.mxu0
    %v3308 = vadd.f32 %v3219, %v3307
    %3309 = vmatmul.bf16.gmra.mxu0 %v360
    %v3310 = vpop.f32.mrf.mxu0
    %v3311 = vadd.f32 %v3222, %v3310
    %v3312 = vpop.f32.mrf.mxu0
    %v3313 = vadd.f32 %v3224, %v3312
    %3314 = vmatmul.bf16.gmra.mxu0 %v367
    %v3315 = vpop.f32.mrf.mxu0
    %v3316 = vadd.f32 %v3227, %v3315
    %v3317 = vpop.f32.mrf.mxu0
    %v3318 = vadd.f32 %v3229, %v3317
    %3319 = vmatmul.bf16.gmra.mxu0 %v374
    %v3320 = vpop.f32.mrf.mxu0
    %v3321 = vadd.f32 %v3232, %v3320
    %v3322 = vpop.f32.mrf.mxu0
    %v3323 = vadd.f32 %v3234, %v3322
    %3324 = vmatmul.bf16.gmra.mxu0 %v381
    %v3325 = vpop.f32.mrf.mxu0
    %v3326 = vadd.f32 %v3237, %v3325
    %v3327 = vpop.f32.mrf.mxu0
    %v3328 = vadd.f32 %v3239, %v3327
    %3329 = vmatmul.bf16.gmra.mxu0 %v388
    %v3330 = vpop.f32.mrf.mxu0
    %v3331 = vadd.f32 %v3242, %v3330
    %v3332 = vpop.f32.mrf.mxu0
    %v3333 = vadd.f32 %v3244, %v3332
    %3334 = vmatmul.bf16.gmra.mxu0 %v395
    %v3335 = vpop.f32.mrf.mxu0
    %v3336 = vadd.f32 %v3247, %v3335
    %v3337 = vpop.f32.mrf.mxu0
    %v3338 = vadd.f32 %v3249, %v3337
    %3339 = vmatmul.bf16.gmra.mxu0 %v402
    %v3340 = vpop.f32.mrf.mxu0
    %v3341 = vadd.f32 %v3252, %v3340
    %v3342 = vpop.f32.mrf.mxu0
    %v3343 = vadd.f32 %v3254, %v3342
    %3344 = vmatmul.bf16.gmra.mxu0 %v409
    %v3345 = vpop.f32.mrf.mxu0
    %v3346 = vadd.f32 %v3257, %v3345
    %v3347 = vpop.f32.mrf.mxu0
    %v3348 = vadd.f32 %v3259, %v3347
    %3349 = vmatmul.bf16.gmra.mxu0 %v416
    %v3350 = vpop.f32.mrf.mxu0
    %v3351 = vadd.f32 %v3262, %v3350
    %v3352 = vpop.f32.mrf.mxu0
    %v3353 = vadd.f32 %v3264, %v3352
    %3354 = vmatmul.bf16.gmra.mxu0 %v423
    %v3355 = vpop.f32.mrf.mxu0
    %v3356 = vadd.f32 %v3267, %v3355
    %v3357 = vpop.f32.mrf.mxu0
    %v3358 = vadd.f32 %v3269, %v3357
    %3359 = vmatmul.bf16.gmra.mxu0 %v430
    %v3360 = vpop.f32.mrf.mxu0
    %v3361 = vadd.f32 %v3272, %v3360
    %v3362 = vpop.f32.mrf.mxu0
    %v3363 = vadd.f32 %v3274, %v3362
    %3364 = vmatmul.bf16.gmra.mxu0 %v437
    %v3365 = vpop.f32.mrf.mxu0
    %v3366 = vadd.f32 %v3277, %v3365
    %v3367 = vpop.f32.mrf.mxu0
    %v3368 = vadd.f32 %v3279, %v3367
    %3369 = vmatmul.bf16.gmra.mxu0 %v444
    %v3370 = vpop.f32.mrf.mxu0
    %v3371 = vadd.f32 %v3282, %v3370
    %v3372 = vpop.f32.mrf.mxu0
    %v3373 = vadd.f32 %v3284, %v3372
    %3374 = vmatmul.bf16.gmra.mxu0 %v451
    %v3375 = vpop.f32.mrf.mxu0
    %v3376 = vadd.f32 %v3287, %v3375
    %v3377 = vpop.f32.mrf.mxu0
    %v3378 = vadd.f32 %v3289, %v3377
    %3379 = vdwg.mxu0
    %3380 = vmatpush.bf16.msra.mxu0 %v1438
    %3381 = vmatpush.bf16.msra.mxu0 %v1434
    %3382 = vmatpush.bf16.msra.mxu0 %v1430
    %3383 = vmatpush.bf16.msra.mxu0 %v1426
    %3384 = vmatpush.bf16.msra.mxu0 %v1422
    %3385 = vmatpush.bf16.msra.mxu0 %v1418
    %3386 = vmatpush.bf16.msra.mxu0 %v1414
    %3387 = vmatpush.bf16.msra.mxu0 %v1410
    %3388 = vmatmul.bf16.gmra.mxu0 %v347
    %v3389 = vpop.f32.mrf.mxu0
    %v3390 = vadd.f32 %v3301, %v3389
    %v3391 = vpop.f32.mrf.mxu0
    %v3392 = vadd.f32 %v3303, %v3391
    %3393 = vmatmul.bf16.gmra.mxu0 %v354
    %v3394 = vpop.f32.mrf.mxu0
    %v3395 = vadd.f32 %v3306, %v3394
    %v3396 = vpop.f32.mrf.mxu0
    %v3397 = vadd.f32 %v3308, %v3396
    %3398 = vmatmul.bf16.gmra.mxu0 %v361
    %v3399 = vpop.f32.mrf.mxu0
    %v3400 = vadd.f32 %v3311, %v3399
    %v3401 = vpop.f32.mrf.mxu0
    %v3402 = vadd.f32 %v3313, %v3401
    %3403 = vmatmul.bf16.gmra.mxu0 %v368
    %v3404 = vpop.f32.mrf.mxu0
    %v3405 = vadd.f32 %v3316, %v3404
    %v3406 = vpop.f32.mrf.mxu0
    %v3407 = vadd.f32 %v3318, %v3406
    %3408 = vmatmul.bf16.gmra.mxu0 %v375
    %v3409 = vpop.f32.mrf.mxu0
    %v3410 = vadd.f32 %v3321, %v3409
    %v3411 = vpop.f32.mrf.mxu0
    %v3412 = vadd.f32 %v3323, %v3411
    %3413 = vmatmul.bf16.gmra.mxu0 %v382
    %v3414 = vpop.f32.mrf.mxu0
    %v3415 = vadd.f32 %v3326, %v3414
    %v3416 = vpop.f32.mrf.mxu0
    %v3417 = vadd.f32 %v3328, %v3416
    %3418 = vmatmul.bf16.gmra.mxu0 %v389
    %v3419 = vpop.f32.mrf.mxu0
    %v3420 = vadd.f32 %v3331, %v3419
    %v3421 = vpop.f32.mrf.mxu0
    %v3422 = vadd.f32 %v3333, %v3421
    %3423 = vmatmul.bf16.gmra.mxu0 %v396
    %v3424 = vpop.f32.mrf.mxu0
    %v3425 = vadd.f32 %v3336, %v3424
    %v3426 = vpop.f32.mrf.mxu0
    %v3427 = vadd.f32 %v3338, %v3426
    %3428 = vmatmul.bf16.gmra.mxu0 %v403
    %v3429 = vpop.f32.mrf.mxu0
    %v3430 = vadd.f32 %v3341, %v3429
    %v3431 = vpop.f32.mrf.mxu0
    %v3432 = vadd.f32 %v3343, %v3431
    %3433 = vmatmul.bf16.gmra.mxu0 %v410
    %v3434 = vpop.f32.mrf.mxu0
    %v3435 = vadd.f32 %v3346, %v3434
    %v3436 = vpop.f32.mrf.mxu0
    %v3437 = vadd.f32 %v3348, %v3436
    %3438 = vmatmul.bf16.gmra.mxu0 %v417
    %v3439 = vpop.f32.mrf.mxu0
    %v3440 = vadd.f32 %v3351, %v3439
    %v3441 = vpop.f32.mrf.mxu0
    %v3442 = vadd.f32 %v3353, %v3441
    %3443 = vmatmul.bf16.gmra.mxu0 %v424
    %v3444 = vpop.f32.mrf.mxu0
    %v3445 = vadd.f32 %v3356, %v3444
    %v3446 = vpop.f32.mrf.mxu0
    %v3447 = vadd.f32 %v3358, %v3446
    %3448 = vmatmul.bf16.gmra.mxu0 %v431
    %v3449 = vpop.f32.mrf.mxu0
    %v3450 = vadd.f32 %v3361, %v3449
    %v3451 = vpop.f32.mrf.mxu0
    %v3452 = vadd.f32 %v3363, %v3451
    %3453 = vmatmul.bf16.gmra.mxu0 %v438
    %v3454 = vpop.f32.mrf.mxu0
    %v3455 = vadd.f32 %v3366, %v3454
    %v3456 = vpop.f32.mrf.mxu0
    %v3457 = vadd.f32 %v3368, %v3456
    %3458 = vmatmul.bf16.gmra.mxu0 %v445
    %v3459 = vpop.f32.mrf.mxu0
    %v3460 = vadd.f32 %v3371, %v3459
    %v3461 = vpop.f32.mrf.mxu0
    %v3462 = vadd.f32 %v3373, %v3461
    %3463 = vmatmul.bf16.gmra.mxu0 %v452
    %v3464 = vpop.f32.mrf.mxu0
    %v3465 = vadd.f32 %v3376, %v3464
    %v3466 = vpop.f32.mrf.mxu0
    %v3467 = vadd.f32 %v3378, %v3466
    %3468 = vdwg.mxu0
    %3469 = vmatpush.bf16.msra.mxu0 0
    %3470 = vmatpush.bf16.msra.mxu0 0
    %3471 = vmatpush.bf16.msra.mxu0 0
    %3472 = vmatpush.bf16.msra.mxu0 0
    %3473 = vmatpush.bf16.msra.mxu0 0
    %3474 = vmatpush.bf16.msra.mxu0 0
    %3475 = vmatpush.bf16.msra.mxu0 0
    %3476 = vmatpush.bf16.msra.mxu0 %v1442
    %3477 = vmatmul.bf16.gmra.mxu0 %v1642
    %v3478 = vpop.f32.mrf.mxu0
    %v3479 = vadd.f32 %v3390, %v3478
    %v3480 = vpop.f32.mrf.mxu0
    %v3481 = vadd.f32 %v3392, %v3480
    %3482 = vmatmul.bf16.gmra.mxu0 %v1645
    %v3483 = vpop.f32.mrf.mxu0
    %v3484 = vadd.f32 %v3395, %v3483
    %v3485 = vpop.f32.mrf.mxu0
    %v3486 = vadd.f32 %v3397, %v3485
    %3487 = vmatmul.bf16.gmra.mxu0 %v1648
    %v3488 = vpop.f32.mrf.mxu0
    %v3489 = vadd.f32 %v3400, %v3488
    %v3490 = vpop.f32.mrf.mxu0
    %v3491 = vadd.f32 %v3402, %v3490
    %3492 = vmatmul.bf16.gmra.mxu0 %v1651
    %v3493 = vpop.f32.mrf.mxu0
    %v3494 = vadd.f32 %v3405, %v3493
    %v3495 = vpop.f32.mrf.mxu0
    %v3496 = vadd.f32 %v3407, %v3495
    %3497 = vmatmul.bf16.gmra.mxu0 %v1654
    %v3498 = vpop.f32.mrf.mxu0
    %v3499 = vadd.f32 %v3410, %v3498
    %v3500 = vpop.f32.mrf.mxu0
    %v3501 = vadd.f32 %v3412, %v3500
    %3502 = vmatmul.bf16.gmra.mxu0 %v1657
    %v3503 = vpop.f32.mrf.mxu0
    %v3504 = vadd.f32 %v3415, %v3503
    %v3505 = vpop.f32.mrf.mxu0
    %v3506 = vadd.f32 %v3417, %v3505
    %3507 = vmatmul.bf16.gmra.mxu0 %v1660
    %v3508 = vpop.f32.mrf.mxu0
    %v3509 = vadd.f32 %v3420, %v3508
    %v3510 = vpop.f32.mrf.mxu0
    %v3511 = vadd.f32 %v3422, %v3510
    %3512 = vmatmul.bf16.gmra.mxu0 %v1663
    %v3513 = vpop.f32.mrf.mxu0
    %v3514 = vadd.f32 %v3425, %v3513
    %v3515 = vpop.f32.mrf.mxu0
    %v3516 = vadd.f32 %v3427, %v3515
    %3517 = vmatmul.bf16.gmra.mxu0 %v1666
    %v3518 = vpop.f32.mrf.mxu0
    %v3519 = vadd.f32 %v3430, %v3518
    %v3520 = vpop.f32.mrf.mxu0
    %v3521 = vadd.f32 %v3432, %v3520
    %3522 = vmatmul.bf16.gmra.mxu0 %v1669
    %v3523 = vpop.f32.mrf.mxu0
    %v3524 = vadd.f32 %v3435, %v3523
    %v3525 = vpop.f32.mrf.mxu0
    %v3526 = vadd.f32 %v3437, %v3525
    %3527 = vmatmul.bf16.gmra.mxu0 %v1672
    %v3528 = vpop.f32.mrf.mxu0
    %v3529 = vadd.f32 %v3440, %v3528
    %v3530 = vpop.f32.mrf.mxu0
    %v3531 = vadd.f32 %v3442, %v3530
    %3532 = vmatmul.bf16.gmra.mxu0 %v1675
    %v3533 = vpop.f32.mrf.mxu0
    %v3534 = vadd.f32 %v3445, %v3533
    %v3535 = vpop.f32.mrf.mxu0
    %v3536 = vadd.f32 %v3447, %v3535
    %3537 = vmatmul.bf16.gmra.mxu0 %v1678
    %v3538 = vpop.f32.mrf.mxu0
    %v3539 = vadd.f32 %v3450, %v3538
    %v3540 = vpop.f32.mrf.mxu0
    %v3541 = vadd.f32 %v3452, %v3540
    %3542 = vmatmul.bf16.gmra.mxu0 %v1681
    %v3543 = vpop.f32.mrf.mxu0
    %v3544 = vadd.f32 %v3455, %v3543
    %v3545 = vpop.f32.mrf.mxu0
    %v3546 = vadd.f32 %v3457, %v3545
    %3547 = vmatmul.bf16.gmra.mxu0 %v1684
    %v3548 = vpop.f32.mrf.mxu0
    %v3549 = vadd.f32 %v3460, %v3548
    %v3550 = vpop.f32.mrf.mxu0
    %v3551 = vadd.f32 %v3462, %v3550
    %3552 = vmatmul.bf16.gmra.mxu0 %v1687
    %v3553 = vpop.f32.mrf.mxu0
    %v3554 = vadd.f32 %v3465, %v3553
    %v3555 = vpop.f32.mrf.mxu0
    %v3556 = vadd.f32 %v3467, %v3555
    %3557 = vdwg.mxu0
    %3558 = vmatpush.bf16.msra.mxu0 %v1279
    %3559 = vmatpush.bf16.msra.mxu0 %v1275
    %3560 = vmatpush.bf16.msra.mxu0 %v1271
    %3561 = vmatpush.bf16.msra.mxu0 %v1267
    %3562 = vmatpush.bf16.msra.mxu0 %v1263
    %3563 = vmatpush.bf16.msra.mxu0 %v1259
    %3564 = vmatpush.bf16.msra.mxu0 %v1255
    %3565 = vmatpush.bf16.msra.mxu0 %v1251
    %3566 = vmatmul.bf16.gmra.mxu0 %v342
    %v3567 = vpop.f32.mrf.mxu0
    %v3568 = vadd.f32 %v655, %v3567
    %v3569 = vpop.f32.mrf.mxu0
    %v3570 = vadd.f32 %v655, %v3569
    %3571 = vmatmul.bf16.gmra.mxu0 %v349
    %v3572 = vpop.f32.mrf.mxu0
    %v3573 = vadd.f32 %v655, %v3572
    %v3574 = vpop.f32.mrf.mxu0
    %v3575 = vadd.f32 %v655, %v3574
    %3576 = vmatmul.bf16.gmra.mxu0 %v356
    %v3577 = vpop.f32.mrf.mxu0
    %v3578 = vadd.f32 %v655, %v3577
    %v3579 = vpop.f32.mrf.mxu0
    %v3580 = vadd.f32 %v655, %v3579
    %3581 = vmatmul.bf16.gmra.mxu0 %v363
    %v3582 = vpop.f32.mrf.mxu0
    %v3583 = vadd.f32 %v655, %v3582
    %v3584 = vpop.f32.mrf.mxu0
    %v3585 = vadd.f32 %v655, %v3584
    %3586 = vmatmul.bf16.gmra.mxu0 %v370
    %v3587 = vpop.f32.mrf.mxu0
    %v3588 = vadd.f32 %v655, %v3587
    %v3589 = vpop.f32.mrf.mxu0
    %v3590 = vadd.f32 %v655, %v3589
    %3591 = vmatmul.bf16.gmra.mxu0 %v377
    %v3592 = vpop.f32.mrf.mxu0
    %v3593 = vadd.f32 %v655, %v3592
    %v3594 = vpop.f32.mrf.mxu0
    %v3595 = vadd.f32 %v655, %v3594
    %3596 = vmatmul.bf16.gmra.mxu0 %v384
    %v3597 = vpop.f32.mrf.mxu0
    %v3598 = vadd.f32 %v655, %v3597
    %v3599 = vpop.f32.mrf.mxu0
    %v3600 = vadd.f32 %v655, %v3599
    %3601 = vmatmul.bf16.gmra.mxu0 %v391
    %v3602 = vpop.f32.mrf.mxu0
    %v3603 = vadd.f32 %v655, %v3602
    %v3604 = vpop.f32.mrf.mxu0
    %v3605 = vadd.f32 %v655, %v3604
    %3606 = vmatmul.bf16.gmra.mxu0 %v398
    %v3607 = vpop.f32.mrf.mxu0
    %v3608 = vadd.f32 %v655, %v3607
    %v3609 = vpop.f32.mrf.mxu0
    %v3610 = vadd.f32 %v655, %v3609
    %3611 = vmatmul.bf16.gmra.mxu0 %v405
    %v3612 = vpop.f32.mrf.mxu0
    %v3613 = vadd.f32 %v655, %v3612
    %v3614 = vpop.f32.mrf.mxu0
    %v3615 = vadd.f32 %v655, %v3614
    %3616 = vmatmul.bf16.gmra.mxu0 %v412
    %v3617 = vpop.f32.mrf.mxu0
    %v3618 = vadd.f32 %v655, %v3617
    %v3619 = vpop.f32.mrf.mxu0
    %v3620 = vadd.f32 %v655, %v3619
    %3621 = vmatmul.bf16.gmra.mxu0 %v419
    %v3622 = vpop.f32.mrf.mxu0
    %v3623 = vadd.f32 %v655, %v3622
    %v3624 = vpop.f32.mrf.mxu0
    %v3625 = vadd.f32 %v655, %v3624
    %3626 = vmatmul.bf16.gmra.mxu0 %v426
    %v3627 = vpop.f32.mrf.mxu0
    %v3628 = vadd.f32 %v655, %v3627
    %v3629 = vpop.f32.mrf.mxu0
    %v3630 = vadd.f32 %v655, %v3629
    %3631 = vmatmul.bf16.gmra.mxu0 %v433
    %v3632 = vpop.f32.mrf.mxu0
    %v3633 = vadd.f32 %v655, %v3632
    %v3634 = vpop.f32.mrf.mxu0
    %v3635 = vadd.f32 %v655, %v3634
    %3636 = vmatmul.bf16.gmra.mxu0 %v440
    %v3637 = vpop.f32.mrf.mxu0
    %v3638 = vadd.f32 %v655, %v3637
    %v3639 = vpop.f32.mrf.mxu0
    %v3640 = vadd.f32 %v655, %v3639
    %3641 = vmatmul.bf16.gmra.mxu0 %v447
    %v3642 = vpop.f32.mrf.mxu0
    %v3643 = vadd.f32 %v655, %v3642
    %v3644 = vpop.f32.mrf.mxu0
    %v3645 = vadd.f32 %v655, %v3644
    %3646 = vdwg.mxu0
    %3647 = vmatpush.bf16.msra.mxu0 %v1311
    %3648 = vmatpush.bf16.msra.mxu0 %v1307
    %3649 = vmatpush.bf16.msra.mxu0 %v1303
    %3650 = vmatpush.bf16.msra.mxu0 %v1299
    %3651 = vmatpush.bf16.msra.mxu0 %v1295
    %3652 = vmatpush.bf16.msra.mxu0 %v1291
    %3653 = vmatpush.bf16.msra.mxu0 %v1287
    %3654 = vmatpush.bf16.msra.mxu0 %v1283
    %3655 = vmatmul.bf16.gmra.mxu0 %v343
    %v3656 = vpop.f32.mrf.mxu0
    %v3657 = vadd.f32 %v3568, %v3656
    %v3658 = vpop.f32.mrf.mxu0
    %v3659 = vadd.f32 %v3570, %v3658
    %3660 = vmatmul.bf16.gmra.mxu0 %v350
    %v3661 = vpop.f32.mrf.mxu0
    %v3662 = vadd.f32 %v3573, %v3661
    %v3663 = vpop.f32.mrf.mxu0
    %v3664 = vadd.f32 %v3575, %v3663
    %3665 = vmatmul.bf16.gmra.mxu0 %v357
    %v3666 = vpop.f32.mrf.mxu0
    %v3667 = vadd.f32 %v3578, %v3666
    %v3668 = vpop.f32.mrf.mxu0
    %v3669 = vadd.f32 %v3580, %v3668
    %3670 = vmatmul.bf16.gmra.mxu0 %v364
    %v3671 = vpop.f32.mrf.mxu0
    %v3672 = vadd.f32 %v3583, %v3671
    %v3673 = vpop.f32.mrf.mxu0
    %v3674 = vadd.f32 %v3585, %v3673
    %3675 = vmatmul.bf16.gmra.mxu0 %v371
    %v3676 = vpop.f32.mrf.mxu0
    %v3677 = vadd.f32 %v3588, %v3676
    %v3678 = vpop.f32.mrf.mxu0
    %v3679 = vadd.f32 %v3590, %v3678
    %3680 = vmatmul.bf16.gmra.mxu0 %v378
    %v3681 = vpop.f32.mrf.mxu0
    %v3682 = vadd.f32 %v3593, %v3681
    %v3683 = vpop.f32.mrf.mxu0
    %v3684 = vadd.f32 %v3595, %v3683
    %3685 = vmatmul.bf16.gmra.mxu0 %v385
    %v3686 = vpop.f32.mrf.mxu0
    %v3687 = vadd.f32 %v3598, %v3686
    %v3688 = vpop.f32.mrf.mxu0
    %v3689 = vadd.f32 %v3600, %v3688
    %3690 = vmatmul.bf16.gmra.mxu0 %v392
    %v3691 = vpop.f32.mrf.mxu0
    %v3692 = vadd.f32 %v3603, %v3691
    %v3693 = vpop.f32.mrf.mxu0
    %v3694 = vadd.f32 %v3605, %v3693
    %3695 = vmatmul.bf16.gmra.mxu0 %v399
    %v3696 = vpop.f32.mrf.mxu0
    %v3697 = vadd.f32 %v3608, %v3696
    %v3698 = vpop.f32.mrf.mxu0
    %v3699 = vadd.f32 %v3610, %v3698
    %3700 = vmatmul.bf16.gmra.mxu0 %v406
    %v3701 = vpop.f32.mrf.mxu0
    %v3702 = vadd.f32 %v3613, %v3701
    %v3703 = vpop.f32.mrf.mxu0
    %v3704 = vadd.f32 %v3615, %v3703
    %3705 = vmatmul.bf16.gmra.mxu0 %v413
    %v3706 = vpop.f32.mrf.mxu0
    %v3707 = vadd.f32 %v3618, %v3706
    %v3708 = vpop.f32.mrf.mxu0
    %v3709 = vadd.f32 %v3620, %v3708
    %3710 = vmatmul.bf16.gmra.mxu0 %v420
    %v3711 = vpop.f32.mrf.mxu0
    %v3712 = vadd.f32 %v3623, %v3711
    %v3713 = vpop.f32.mrf.mxu0
    %v3714 = vadd.f32 %v3625, %v3713
    %3715 = vmatmul.bf16.gmra.mxu0 %v427
    %v3716 = vpop.f32.mrf.mxu0
    %v3717 = vadd.f32 %v3628, %v3716
    %v3718 = vpop.f32.mrf.mxu0
    %v3719 = vadd.f32 %v3630, %v3718
    %3720 = vmatmul.bf16.gmra.mxu0 %v434
    %v3721 = vpop.f32.mrf.mxu0
    %v3722 = vadd.f32 %v3633, %v3721
    %v3723 = vpop.f32.mrf.mxu0
    %v3724 = vadd.f32 %v3635, %v3723
    %3725 = vmatmul.bf16.gmra.mxu0 %v441
    %v3726 = vpop.f32.mrf.mxu0
    %v3727 = vadd.f32 %v3638, %v3726
    %v3728 = vpop.f32.mrf.mxu0
    %v3729 = vadd.f32 %v3640, %v3728
    %3730 = vmatmul.bf16.gmra.mxu0 %v448
    %v3731 = vpop.f32.mrf.mxu0
    %v3732 = vadd.f32 %v3643, %v3731
    %v3733 = vpop.f32.mrf.mxu0
    %v3734 = vadd.f32 %v3645, %v3733
    %3735 = vdwg.mxu0
    %3736 = vmatpush.bf16.msra.mxu0 %v1343
    %3737 = vmatpush.bf16.msra.mxu0 %v1339
    %3738 = vmatpush.bf16.msra.mxu0 %v1335
    %3739 = vmatpush.bf16.msra.mxu0 %v1331
    %3740 = vmatpush.bf16.msra.mxu0 %v1327
    %3741 = vmatpush.bf16.msra.mxu0 %v1323
    %3742 = vmatpush.bf16.msra.mxu0 %v1319
    %3743 = vmatpush.bf16.msra.mxu0 %v1315
    %3744 = vmatmul.bf16.gmra.mxu0 %v344
    %v3745 = vpop.f32.mrf.mxu0
    %v3746 = vadd.f32 %v3657, %v3745
    %v3747 = vpop.f32.mrf.mxu0
    %v3748 = vadd.f32 %v3659, %v3747
    %3749 = vmatmul.bf16.gmra.mxu0 %v351
    %v3750 = vpop.f32.mrf.mxu0
    %v3751 = vadd.f32 %v3662, %v3750
    %v3752 = vpop.f32.mrf.mxu0
    %v3753 = vadd.f32 %v3664, %v3752
    %3754 = vmatmul.bf16.gmra.mxu0 %v358
    %v3755 = vpop.f32.mrf.mxu0
    %v3756 = vadd.f32 %v3667, %v3755
    %v3757 = vpop.f32.mrf.mxu0
    %v3758 = vadd.f32 %v3669, %v3757
    %3759 = vmatmul.bf16.gmra.mxu0 %v365
    %v3760 = vpop.f32.mrf.mxu0
    %v3761 = vadd.f32 %v3672, %v3760
    %v3762 = vpop.f32.mrf.mxu0
    %v3763 = vadd.f32 %v3674, %v3762
    %3764 = vmatmul.bf16.gmra.mxu0 %v372
    %v3765 = vpop.f32.mrf.mxu0
    %v3766 = vadd.f32 %v3677, %v3765
    %v3767 = vpop.f32.mrf.mxu0
    %v3768 = vadd.f32 %v3679, %v3767
    %3769 = vmatmul.bf16.gmra.mxu0 %v379
    %v3770 = vpop.f32.mrf.mxu0
    %v3771 = vadd.f32 %v3682, %v3770
    %v3772 = vpop.f32.mrf.mxu0
    %v3773 = vadd.f32 %v3684, %v3772
    %3774 = vmatmul.bf16.gmra.mxu0 %v386
    %v3775 = vpop.f32.mrf.mxu0
    %v3776 = vadd.f32 %v3687, %v3775
    %v3777 = vpop.f32.mrf.mxu0
    %v3778 = vadd.f32 %v3689, %v3777
    %3779 = vmatmul.bf16.gmra.mxu0 %v393
    %v3780 = vpop.f32.mrf.mxu0
    %v3781 = vadd.f32 %v3692, %v3780
    %v3782 = vpop.f32.mrf.mxu0
    %v3783 = vadd.f32 %v3694, %v3782
    %3784 = vmatmul.bf16.gmra.mxu0 %v400
    %v3785 = vpop.f32.mrf.mxu0
    %v3786 = vadd.f32 %v3697, %v3785
    %v3787 = vpop.f32.mrf.mxu0
    %v3788 = vadd.f32 %v3699, %v3787
    %3789 = vmatmul.bf16.gmra.mxu0 %v407
    %v3790 = vpop.f32.mrf.mxu0
    %v3791 = vadd.f32 %v3702, %v3790
    %v3792 = vpop.f32.mrf.mxu0
    %v3793 = vadd.f32 %v3704, %v3792
    %3794 = vmatmul.bf16.gmra.mxu0 %v414
    %v3795 = vpop.f32.mrf.mxu0
    %v3796 = vadd.f32 %v3707, %v3795
    %v3797 = vpop.f32.mrf.mxu0
    %v3798 = vadd.f32 %v3709, %v3797
    %3799 = vmatmul.bf16.gmra.mxu0 %v421
    %v3800 = vpop.f32.mrf.mxu0
    %v3801 = vadd.f32 %v3712, %v3800
    %v3802 = vpop.f32.mrf.mxu0
    %v3803 = vadd.f32 %v3714, %v3802
    %3804 = vmatmul.bf16.gmra.mxu0 %v428
    %v3805 = vpop.f32.mrf.mxu0
    %v3806 = vadd.f32 %v3717, %v3805
    %v3807 = vpop.f32.mrf.mxu0
    %v3808 = vadd.f32 %v3719, %v3807
    %3809 = vmatmul.bf16.gmra.mxu0 %v435
    %v3810 = vpop.f32.mrf.mxu0
    %v3811 = vadd.f32 %v3722, %v3810
    %v3812 = vpop.f32.mrf.mxu0
    %v3813 = vadd.f32 %v3724, %v3812
    %3814 = vmatmul.bf16.gmra.mxu0 %v442
    %v3815 = vpop.f32.mrf.mxu0
    %v3816 = vadd.f32 %v3727, %v3815
    %v3817 = vpop.f32.mrf.mxu0
    %v3818 = vadd.f32 %v3729, %v3817
    %3819 = vmatmul.bf16.gmra.mxu0 %v449
    %v3820 = vpop.f32.mrf.mxu0
    %v3821 = vadd.f32 %v3732, %v3820
    %v3822 = vpop.f32.mrf.mxu0
    %v3823 = vadd.f32 %v3734, %v3822
    %3824 = vdwg.mxu0
    %3825 = vmatpush.bf16.msra.mxu0 %v1375
    %3826 = vmatpush.bf16.msra.mxu0 %v1371
    %3827 = vmatpush.bf16.msra.mxu0 %v1367
    %3828 = vmatpush.bf16.msra.mxu0 %v1363
    %3829 = vmatpush.bf16.msra.mxu0 %v1359
    %3830 = vmatpush.bf16.msra.mxu0 %v1355
    %3831 = vmatpush.bf16.msra.mxu0 %v1351
    %3832 = vmatpush.bf16.msra.mxu0 %v1347
    %3833 = vmatmul.bf16.gmra.mxu0 %v345
    %v3834 = vpop.f32.mrf.mxu0
    %v3835 = vadd.f32 %v3746, %v3834
    %v3836 = vpop.f32.mrf.mxu0
    %v3837 = vadd.f32 %v3748, %v3836
    %3838 = vmatmul.bf16.gmra.mxu0 %v352
    %v3839 = vpop.f32.mrf.mxu0
    %v3840 = vadd.f32 %v3751, %v3839
    %v3841 = vpop.f32.mrf.mxu0
    %v3842 = vadd.f32 %v3753, %v3841
    %3843 = vmatmul.bf16.gmra.mxu0 %v359
    %v3844 = vpop.f32.mrf.mxu0
    %v3845 = vadd.f32 %v3756, %v3844
    %v3846 = vpop.f32.mrf.mxu0
    %v3847 = vadd.f32 %v3758, %v3846
    %3848 = vmatmul.bf16.gmra.mxu0 %v366
    %v3849 = vpop.f32.mrf.mxu0
    %v3850 = vadd.f32 %v3761, %v3849
    %v3851 = vpop.f32.mrf.mxu0
    %v3852 = vadd.f32 %v3763, %v3851
    %3853 = vmatmul.bf16.gmra.mxu0 %v373
    %v3854 = vpop.f32.mrf.mxu0
    %v3855 = vadd.f32 %v3766, %v3854
    %v3856 = vpop.f32.mrf.mxu0
    %v3857 = vadd.f32 %v3768, %v3856
    %3858 = vmatmul.bf16.gmra.mxu0 %v380
    %v3859 = vpop.f32.mrf.mxu0
    %v3860 = vadd.f32 %v3771, %v3859
    %v3861 = vpop.f32.mrf.mxu0
    %v3862 = vadd.f32 %v3773, %v3861
    %3863 = vmatmul.bf16.gmra.mxu0 %v387
    %v3864 = vpop.f32.mrf.mxu0
    %v3865 = vadd.f32 %v3776, %v3864
    %v3866 = vpop.f32.mrf.mxu0
    %v3867 = vadd.f32 %v3778, %v3866
    %3868 = vmatmul.bf16.gmra.mxu0 %v394
    %v3869 = vpop.f32.mrf.mxu0
    %v3870 = vadd.f32 %v3781, %v3869
    %v3871 = vpop.f32.mrf.mxu0
    %v3872 = vadd.f32 %v3783, %v3871
    %3873 = vmatmul.bf16.gmra.mxu0 %v401
    %v3874 = vpop.f32.mrf.mxu0
    %v3875 = vadd.f32 %v3786, %v3874
    %v3876 = vpop.f32.mrf.mxu0
    %v3877 = vadd.f32 %v3788, %v3876
    %3878 = vmatmul.bf16.gmra.mxu0 %v408
    %v3879 = vpop.f32.mrf.mxu0
    %v3880 = vadd.f32 %v3791, %v3879
    %v3881 = vpop.f32.mrf.mxu0
    %v3882 = vadd.f32 %v3793, %v3881
    %3883 = vmatmul.bf16.gmra.mxu0 %v415
    %v3884 = vpop.f32.mrf.mxu0
    %v3885 = vadd.f32 %v3796, %v3884
    %v3886 = vpop.f32.mrf.mxu0
    %v3887 = vadd.f32 %v3798, %v3886
    %3888 = vmatmul.bf16.gmra.mxu0 %v422
    %v3889 = vpop.f32.mrf.mxu0
    %v3890 = vadd.f32 %v3801, %v3889
    %v3891 = vpop.f32.mrf.mxu0
    %v3892 = vadd.f32 %v3803, %v3891
    %3893 = vmatmul.bf16.gmra.mxu0 %v429
    %v3894 = vpop.f32.mrf.mxu0
    %v3895 = vadd.f32 %v3806, %v3894
    %v3896 = vpop.f32.mrf.mxu0
    %v3897 = vadd.f32 %v3808, %v3896
    %3898 = vmatmul.bf16.gmra.mxu0 %v436
    %v3899 = vpop.f32.mrf.mxu0
    %v3900 = vadd.f32 %v3811, %v3899
    %v3901 = vpop.f32.mrf.mxu0
    %v3902 = vadd.f32 %v3813, %v3901
    %3903 = vmatmul.bf16.gmra.mxu0 %v443
    %v3904 = vpop.f32.mrf.mxu0
    %v3905 = vadd.f32 %v3816, %v3904
    %v3906 = vpop.f32.mrf.mxu0
    %v3907 = vadd.f32 %v3818, %v3906
    %3908 = vmatmul.bf16.gmra.mxu0 %v450
    %v3909 = vpop.f32.mrf.mxu0
    %v3910 = vadd.f32 %v3821, %v3909
    %v3911 = vpop.f32.mrf.mxu0
    %v3912 = vadd.f32 %v3823, %v3911
    %3913 = vdwg.mxu0
    %3914 = vmatpush.bf16.msra.mxu0 %v1407
    %3915 = vmatpush.bf16.msra.mxu0 %v1403
    %3916 = vmatpush.bf16.msra.mxu0 %v1399
    %3917 = vmatpush.bf16.msra.mxu0 %v1395
    %3918 = vmatpush.bf16.msra.mxu0 %v1391
    %3919 = vmatpush.bf16.msra.mxu0 %v1387
    %3920 = vmatpush.bf16.msra.mxu0 %v1383
    %3921 = vmatpush.bf16.msra.mxu0 %v1379
    %3922 = vmatmul.bf16.gmra.mxu0 %v346
    %v3923 = vpop.f32.mrf.mxu0
    %v3924 = vadd.f32 %v3835, %v3923
    %v3925 = vpop.f32.mrf.mxu0
    %v3926 = vadd.f32 %v3837, %v3925
    %3927 = vmatmul.bf16.gmra.mxu0 %v353
    %v3928 = vpop.f32.mrf.mxu0
    %v3929 = vadd.f32 %v3840, %v3928
    %v3930 = vpop.f32.mrf.mxu0
    %v3931 = vadd.f32 %v3842, %v3930
    %3932 = vmatmul.bf16.gmra.mxu0 %v360
    %v3933 = vpop.f32.mrf.mxu0
    %v3934 = vadd.f32 %v3845, %v3933
    %v3935 = vpop.f32.mrf.mxu0
    %v3936 = vadd.f32 %v3847, %v3935
    %3937 = vmatmul.bf16.gmra.mxu0 %v367
    %v3938 = vpop.f32.mrf.mxu0
    %v3939 = vadd.f32 %v3850, %v3938
    %v3940 = vpop.f32.mrf.mxu0
    %v3941 = vadd.f32 %v3852, %v3940
    %3942 = vmatmul.bf16.gmra.mxu0 %v374
    %v3943 = vpop.f32.mrf.mxu0
    %v3944 = vadd.f32 %v3855, %v3943
    %v3945 = vpop.f32.mrf.mxu0
    %v3946 = vadd.f32 %v3857, %v3945
    %3947 = vmatmul.bf16.gmra.mxu0 %v381
    %v3948 = vpop.f32.mrf.mxu0
    %v3949 = vadd.f32 %v3860, %v3948
    %v3950 = vpop.f32.mrf.mxu0
    %v3951 = vadd.f32 %v3862, %v3950
    %3952 = vmatmul.bf16.gmra.mxu0 %v388
    %v3953 = vpop.f32.mrf.mxu0
    %v3954 = vadd.f32 %v3865, %v3953
    %v3955 = vpop.f32.mrf.mxu0
    %v3956 = vadd.f32 %v3867, %v3955
    %3957 = vmatmul.bf16.gmra.mxu0 %v395
    %v3958 = vpop.f32.mrf.mxu0
    %v3959 = vadd.f32 %v3870, %v3958
    %v3960 = vpop.f32.mrf.mxu0
    %v3961 = vadd.f32 %v3872, %v3960
    %3962 = vmatmul.bf16.gmra.mxu0 %v402
    %v3963 = vpop.f32.mrf.mxu0
    %v3964 = vadd.f32 %v3875, %v3963
    %v3965 = vpop.f32.mrf.mxu0
    %v3966 = vadd.f32 %v3877, %v3965
    %3967 = vmatmul.bf16.gmra.mxu0 %v409
    %v3968 = vpop.f32.mrf.mxu0
    %v3969 = vadd.f32 %v3880, %v3968
    %v3970 = vpop.f32.mrf.mxu0
    %v3971 = vadd.f32 %v3882, %v3970
    %3972 = vmatmul.bf16.gmra.mxu0 %v416
    %v3973 = vpop.f32.mrf.mxu0
    %v3974 = vadd.f32 %v3885, %v3973
    %v3975 = vpop.f32.mrf.mxu0
    %v3976 = vadd.f32 %v3887, %v3975
    %3977 = vmatmul.bf16.gmra.mxu0 %v423
    %v3978 = vpop.f32.mrf.mxu0
    %v3979 = vadd.f32 %v3890, %v3978
    %v3980 = vpop.f32.mrf.mxu0
    %v3981 = vadd.f32 %v3892, %v3980
    %3982 = vmatmul.bf16.gmra.mxu0 %v430
    %v3983 = vpop.f32.mrf.mxu0
    %v3984 = vadd.f32 %v3895, %v3983
    %v3985 = vpop.f32.mrf.mxu0
    %v3986 = vadd.f32 %v3897, %v3985
    %3987 = vmatmul.bf16.gmra.mxu0 %v437
    %v3988 = vpop.f32.mrf.mxu0
    %v3989 = vadd.f32 %v3900, %v3988
    %v3990 = vpop.f32.mrf.mxu0
    %v3991 = vadd.f32 %v3902, %v3990
    %3992 = vmatmul.bf16.gmra.mxu0 %v444
    %v3993 = vpop.f32.mrf.mxu0
    %v3994 = vadd.f32 %v3905, %v3993
    %v3995 = vpop.f32.mrf.mxu0
    %v3996 = vadd.f32 %v3907, %v3995
    %3997 = vmatmul.bf16.gmra.mxu0 %v451
    %v3998 = vpop.f32.mrf.mxu0
    %v3999 = vadd.f32 %v3910, %v3998
    %v4000 = vpop.f32.mrf.mxu0
    %v4001 = vadd.f32 %v3912, %v4000
    %4002 = vdwg.mxu0
    %4003 = vmatpush.bf16.msra.mxu0 %v1439
    %4004 = vmatpush.bf16.msra.mxu0 %v1435
    %4005 = vmatpush.bf16.msra.mxu0 %v1431
    %4006 = vmatpush.bf16.msra.mxu0 %v1427
    %4007 = vmatpush.bf16.msra.mxu0 %v1423
    %4008 = vmatpush.bf16.msra.mxu0 %v1419
    %4009 = vmatpush.bf16.msra.mxu0 %v1415
    %4010 = vmatpush.bf16.msra.mxu0 %v1411
    %4011 = vmatmul.bf16.gmra.mxu0 %v347
    %v4012 = vpop.f32.mrf.mxu0
    %v4013 = vadd.f32 %v3924, %v4012
    %v4014 = vpop.f32.mrf.mxu0
    %v4015 = vadd.f32 %v3926, %v4014
    %4016 = vmatmul.bf16.gmra.mxu0 %v354
    %v4017 = vpop.f32.mrf.mxu0
    %v4018 = vadd.f32 %v3929, %v4017
    %v4019 = vpop.f32.mrf.mxu0
    %v4020 = vadd.f32 %v3931, %v4019
    %4021 = vmatmul.bf16.gmra.mxu0 %v361
    %v4022 = vpop.f32.mrf.mxu0
    %v4023 = vadd.f32 %v3934, %v4022
    %v4024 = vpop.f32.mrf.mxu0
    %v4025 = vadd.f32 %v3936, %v4024
    %4026 = vmatmul.bf16.gmra.mxu0 %v368
    %v4027 = vpop.f32.mrf.mxu0
    %v4028 = vadd.f32 %v3939, %v4027
    %v4029 = vpop.f32.mrf.mxu0
    %v4030 = vadd.f32 %v3941, %v4029
    %4031 = vmatmul.bf16.gmra.mxu0 %v375
    %v4032 = vpop.f32.mrf.mxu0
    %v4033 = vadd.f32 %v3944, %v4032
    %v4034 = vpop.f32.mrf.mxu0
    %v4035 = vadd.f32 %v3946, %v4034
    %4036 = vmatmul.bf16.gmra.mxu0 %v382
    %v4037 = vpop.f32.mrf.mxu0
    %v4038 = vadd.f32 %v3949, %v4037
    %v4039 = vpop.f32.mrf.mxu0
    %v4040 = vadd.f32 %v3951, %v4039
    %4041 = vmatmul.bf16.gmra.mxu0 %v389
    %v4042 = vpop.f32.mrf.mxu0
    %v4043 = vadd.f32 %v3954, %v4042
    %v4044 = vpop.f32.mrf.mxu0
    %v4045 = vadd.f32 %v3956, %v4044
    %4046 = vmatmul.bf16.gmra.mxu0 %v396
    %v4047 = vpop.f32.mrf.mxu0
    %v4048 = vadd.f32 %v3959, %v4047
    %v4049 = vpop.f32.mrf.mxu0
    %v4050 = vadd.f32 %v3961, %v4049
    %4051 = vmatmul.bf16.gmra.mxu0 %v403
    %v4052 = vpop.f32.mrf.mxu0
    %v4053 = vadd.f32 %v3964, %v4052
    %v4054 = vpop.f32.mrf.mxu0
    %v4055 = vadd.f32 %v3966, %v4054
    %4056 = vmatmul.bf16.gmra.mxu0 %v410
    %v4057 = vpop.f32.mrf.mxu0
    %v4058 = vadd.f32 %v3969, %v4057
    %v4059 = vpop.f32.mrf.mxu0
    %v4060 = vadd.f32 %v3971, %v4059
    %4061 = vmatmul.bf16.gmra.mxu0 %v417
    %v4062 = vpop.f32.mrf.mxu0
    %v4063 = vadd.f32 %v3974, %v4062
    %v4064 = vpop.f32.mrf.mxu0
    %v4065 = vadd.f32 %v3976, %v4064
    %4066 = vmatmul.bf16.gmra.mxu0 %v424
    %v4067 = vpop.f32.mrf.mxu0
    %v4068 = vadd.f32 %v3979, %v4067
    %v4069 = vpop.f32.mrf.mxu0
    %v4070 = vadd.f32 %v3981, %v4069
    %4071 = vmatmul.bf16.gmra.mxu0 %v431
    %v4072 = vpop.f32.mrf.mxu0
    %v4073 = vadd.f32 %v3984, %v4072
    %v4074 = vpop.f32.mrf.mxu0
    %v4075 = vadd.f32 %v3986, %v4074
    %4076 = vmatmul.bf16.gmra.mxu0 %v438
    %v4077 = vpop.f32.mrf.mxu0
    %v4078 = vadd.f32 %v3989, %v4077
    %v4079 = vpop.f32.mrf.mxu0
    %v4080 = vadd.f32 %v3991, %v4079
    %4081 = vmatmul.bf16.gmra.mxu0 %v445
    %v4082 = vpop.f32.mrf.mxu0
    %v4083 = vadd.f32 %v3994, %v4082
    %v4084 = vpop.f32.mrf.mxu0
    %v4085 = vadd.f32 %v3996, %v4084
    %4086 = vmatmul.bf16.gmra.mxu0 %v452
    %v4087 = vpop.f32.mrf.mxu0
    %v4088 = vadd.f32 %v3999, %v4087
    %v4089 = vpop.f32.mrf.mxu0
    %v4090 = vadd.f32 %v4001, %v4089
    %4091 = vdwg.mxu0
    %4092 = vmatpush.bf16.msra.mxu0 0
    %4093 = vmatpush.bf16.msra.mxu0 0
    %4094 = vmatpush.bf16.msra.mxu0 0
    %4095 = vmatpush.bf16.msra.mxu0 0
    %4096 = vmatpush.bf16.msra.mxu0 0
    %4097 = vmatpush.bf16.msra.mxu0 0
    %4098 = vmatpush.bf16.msra.mxu0 0
    %4099 = vmatpush.bf16.msra.mxu0 %v1443
    %4100 = vmatmul.bf16.gmra.mxu0 %v1642
    %v4101 = vpop.f32.mrf.mxu0
    %v4102 = vadd.f32 %v4013, %v4101
    %v4103 = vpop.f32.mrf.mxu0
    %v4104 = vadd.f32 %v4015, %v4103
    %4105 = vmatmul.bf16.gmra.mxu0 %v1645
    %v4106 = vpop.f32.mrf.mxu0
    %v4107 = vadd.f32 %v4018, %v4106
    %v4108 = vpop.f32.mrf.mxu0
    %v4109 = vadd.f32 %v4020, %v4108
    %4110 = vmatmul.bf16.gmra.mxu0 %v1648
    %v4111 = vpop.f32.mrf.mxu0
    %v4112 = vadd.f32 %v4023, %v4111
    %v4113 = vpop.f32.mrf.mxu0
    %v4114 = vadd.f32 %v4025, %v4113
    %4115 = vmatmul.bf16.gmra.mxu0 %v1651
    %v4116 = vpop.f32.mrf.mxu0
    %v4117 = vadd.f32 %v4028, %v4116
    %v4118 = vpop.f32.mrf.mxu0
    %v4119 = vadd.f32 %v4030, %v4118
    %4120 = vmatmul.bf16.gmra.mxu0 %v1654
    %v4121 = vpop.f32.mrf.mxu0
    %v4122 = vadd.f32 %v4033, %v4121
    %v4123 = vpop.f32.mrf.mxu0
    %v4124 = vadd.f32 %v4035, %v4123
    %4125 = vmatmul.bf16.gmra.mxu0 %v1657
    %v4126 = vpop.f32.mrf.mxu0
    %v4127 = vadd.f32 %v4038, %v4126
    %v4128 = vpop.f32.mrf.mxu0
    %v4129 = vadd.f32 %v4040, %v4128
    %4130 = vmatmul.bf16.gmra.mxu0 %v1660
    %v4131 = vpop.f32.mrf.mxu0
    %v4132 = vadd.f32 %v4043, %v4131
    %v4133 = vpop.f32.mrf.mxu0
    %v4134 = vadd.f32 %v4045, %v4133
    %4135 = vmatmul.bf16.gmra.mxu0 %v1663
    %v4136 = vpop.f32.mrf.mxu0
    %v4137 = vadd.f32 %v4048, %v4136
    %v4138 = vpop.f32.mrf.mxu0
    %v4139 = vadd.f32 %v4050, %v4138
    %4140 = vmatmul.bf16.gmra.mxu0 %v1666
    %v4141 = vpop.f32.mrf.mxu0
    %v4142 = vadd.f32 %v4053, %v4141
    %v4143 = vpop.f32.mrf.mxu0
    %v4144 = vadd.f32 %v4055, %v4143
    %4145 = vmatmul.bf16.gmra.mxu0 %v1669
    %v4146 = vpop.f32.mrf.mxu0
    %v4147 = vadd.f32 %v4058, %v4146
    %v4148 = vpop.f32.mrf.mxu0
    %v4149 = vadd.f32 %v4060, %v4148
    %4150 = vmatmul.bf16.gmra.mxu0 %v1672
    %v4151 = vpop.f32.mrf.mxu0
    %v4152 = vadd.f32 %v4063, %v4151
    %v4153 = vpop.f32.mrf.mxu0
    %v4154 = vadd.f32 %v4065, %v4153
    %4155 = vmatmul.bf16.gmra.mxu0 %v1675
    %v4156 = vpop.f32.mrf.mxu0
    %v4157 = vadd.f32 %v4068, %v4156
    %v4158 = vpop.f32.mrf.mxu0
    %v4159 = vadd.f32 %v4070, %v4158
    %4160 = vmatmul.bf16.gmra.mxu0 %v1678
    %v4161 = vpop.f32.mrf.mxu0
    %v4162 = vadd.f32 %v4073, %v4161
    %v4163 = vpop.f32.mrf.mxu0
    %v4164 = vadd.f32 %v4075, %v4163
    %4165 = vmatmul.bf16.gmra.mxu0 %v1681
    %v4166 = vpop.f32.mrf.mxu0
    %v4167 = vadd.f32 %v4078, %v4166
    %v4168 = vpop.f32.mrf.mxu0
    %v4169 = vadd.f32 %v4080, %v4168
    %4170 = vmatmul.bf16.gmra.mxu0 %v1684
    %v4171 = vpop.f32.mrf.mxu0
    %v4172 = vadd.f32 %v4083, %v4171
    %v4173 = vpop.f32.mrf.mxu0
    %v4174 = vadd.f32 %v4085, %v4173
    %4175 = vmatmul.bf16.gmra.mxu0 %v1687
    %v4176 = vpop.f32.mrf.mxu0
    %v4177 = vadd.f32 %v4088, %v4176
    %v4178 = vpop.f32.mrf.mxu0
    %v4179 = vadd.f32 %v4090, %v4178
    %4180 = vdwg.mxu0
    %v4181 = vmax.f32 %v2233, 0.0
    %v4182 = vmax.f32 %v2856, 0.0
    %v4183 = vmax.f32 %v3479, 0.0
    %v4184 = vmax.f32 %v4102, 0.0
    %v4185 = vmax.f32 %v2235, 0.0
    %v4186 = vmax.f32 %v2858, 0.0
    %v4187 = vmax.f32 %v3481, 0.0
    %v4188 = vmax.f32 %v4104, 0.0
    %v4189 = vmax.f32 %v2238, 0.0
    %v4190 = vmax.f32 %v2861, 0.0
    %v4191 = vmax.f32 %v3484, 0.0
    %v4192 = vmax.f32 %v4107, 0.0
    %v4193 = vmax.f32 %v2240, 0.0
    %v4194 = vmax.f32 %v2863, 0.0
    %v4195 = vmax.f32 %v3486, 0.0
    %v4196 = vmax.f32 %v4109, 0.0
    %v4197 = vmax.f32 %v2243, 0.0
    %v4198 = vmax.f32 %v2866, 0.0
    %v4199 = vmax.f32 %v3489, 0.0
    %v4200 = vmax.f32 %v4112, 0.0
    %v4201 = vmax.f32 %v2245, 0.0
    %v4202 = vmax.f32 %v2868, 0.0
    %v4203 = vmax.f32 %v3491, 0.0
    %v4204 = vmax.f32 %v4114, 0.0
    %v4205 = vmax.f32 %v2248, 0.0
    %v4206 = vmax.f32 %v2871, 0.0
    %v4207 = vmax.f32 %v3494, 0.0
    %v4208 = vmax.f32 %v4117, 0.0
    %v4209 = vmax.f32 %v2250, 0.0
    %v4210 = vmax.f32 %v2873, 0.0
    %v4211 = vmax.f32 %v3496, 0.0
    %v4212 = vmax.f32 %v4119, 0.0
    %v4213 = vmax.f32 %v2253, 0.0
    %v4214 = vmax.f32 %v2876, 0.0
    %v4215 = vmax.f32 %v3499, 0.0
    %v4216 = vmax.f32 %v4122, 0.0
    %v4217 = vmax.f32 %v2255, 0.0
    %v4218 = vmax.f32 %v2878, 0.0
    %v4219 = vmax.f32 %v3501, 0.0
    %v4220 = vmax.f32 %v4124, 0.0
    %v4221 = vmax.f32 %v2258, 0.0
    %v4222 = vmax.f32 %v2881, 0.0
    %v4223 = vmax.f32 %v3504, 0.0
    %v4224 = vmax.f32 %v4127, 0.0
    %v4225 = vmax.f32 %v2260, 0.0
    %v4226 = vmax.f32 %v2883, 0.0
    %v4227 = vmax.f32 %v3506, 0.0
    %v4228 = vmax.f32 %v4129, 0.0
    %v4229 = vmax.f32 %v2263, 0.0
    %v4230 = vmax.f32 %v2886, 0.0
    %v4231 = vmax.f32 %v3509, 0.0
    %v4232 = vmax.f32 %v4132, 0.0
    %v4233 = vmax.f32 %v2265, 0.0
    %v4234 = vmax.f32 %v2888, 0.0
    %v4235 = vmax.f32 %v3511, 0.0
    %v4236 = vmax.f32 %v4134, 0.0
    %v4237 = vmax.f32 %v2268, 0.0
    %v4238 = vmax.f32 %v2891, 0.0
    %v4239 = vmax.f32 %v3514, 0.0
    %v4240 = vmax.f32 %v4137, 0.0
    %v4241 = vmax.f32 %v2270, 0.0
    %v4242 = vmax.f32 %v2893, 0.0
    %v4243 = vmax.f32 %v3516, 0.0
    %v4244 = vmax.f32 %v4139, 0.0
    %v4245 = vmax.f32 %v2273, 0.0
    %v4246 = vmax.f32 %v2896, 0.0
    %v4247 = vmax.f32 %v3519, 0.0
    %v4248 = vmax.f32 %v4142, 0.0
    %v4249 = vmax.f32 %v2275, 0.0
    %v4250 = vmax.f32 %v2898, 0.0
    %v4251 = vmax.f32 %v3521, 0.0
    %v4252 = vmax.f32 %v4144, 0.0
    %v4253 = vmax.f32 %v2278, 0.0
    %v4254 = vmax.f32 %v2901, 0.0
    %v4255 = vmax.f32 %v3524, 0.0
    %v4256 = vmax.f32 %v4147, 0.0
    %v4257 = vmax.f32 %v2280, 0.0
    %v4258 = vmax.f32 %v2903, 0.0
    %v4259 = vmax.f32 %v3526, 0.0
    %v4260 = vmax.f32 %v4149, 0.0
    %v4261 = vmax.f32 %v2283, 0.0
    %v4262 = vmax.f32 %v2906, 0.0
    %v4263 = vmax.f32 %v3529, 0.0
    %v4264 = vmax.f32 %v4152, 0.0
    %v4265 = vmax.f32 %v2285, 0.0
    %v4266 = vmax.f32 %v2908, 0.0
    %v4267 = vmax.f32 %v3531, 0.0
    %v4268 = vmax.f32 %v4154, 0.0
    %v4269 = vmax.f32 %v2288, 0.0
    %v4270 = vmax.f32 %v2911, 0.0
    %v4271 = vmax.f32 %v3534, 0.0
    %v4272 = vmax.f32 %v4157, 0.0
    %v4273 = vmax.f32 %v2290, 0.0
    %v4274 = vmax.f32 %v2913, 0.0
    %v4275 = vmax.f32 %v3536, 0.0
    %v4276 = vmax.f32 %v4159, 0.0
    %v4277 = vmax.f32 %v2293, 0.0
    %v4278 = vmax.f32 %v2916, 0.0
    %v4279 = vmax.f32 %v3539, 0.0
    %v4280 = vmax.f32 %v4162, 0.0
    %v4281 = vmax.f32 %v2295, 0.0
    %v4282 = vmax.f32 %v2918, 0.0
    %v4283 = vmax.f32 %v3541, 0.0
    %v4284 = vmax.f32 %v4164, 0.0
    %v4285 = vmax.f32 %v2298, 0.0
    %v4286 = vmax.f32 %v2921, 0.0
    %v4287 = vmax.f32 %v3544, 0.0
    %v4288 = vmax.f32 %v4167, 0.0
    %v4289 = vmax.f32 %v2300, 0.0
    %v4290 = vmax.f32 %v2923, 0.0
    %v4291 = vmax.f32 %v3546, 0.0
    %v4292 = vmax.f32 %v4169, 0.0
    %v4293 = vmax.f32 %v2303, 0.0
    %v4294 = vmax.f32 %v2926, 0.0
    %v4295 = vmax.f32 %v3549, 0.0
    %v4296 = vmax.f32 %v4172, 0.0
    %v4297 = vmax.f32 %v2305, 0.0
    %v4298 = vmax.f32 %v2928, 0.0
    %v4299 = vmax.f32 %v3551, 0.0
    %v4300 = vmax.f32 %v4174, 0.0
    %v4301 = vmax.f32 %v2308, 0.0
    %v4302 = vmax.f32 %v2931, 0.0
    %v4303 = vmax.f32 %v3554, 0.0
    %v4304 = vmax.f32 %v4177, 0.0
    %v4305 = vmax.f32 %v2310, 0.0
    %v4306 = vmax.f32 %v2933, 0.0
    %v4307 = vmax.f32 %v3556, 0.0
    %v4308 = vmax.f32 %v4179, 0.0
    %v4309 = vpack.c.bf16 %v4185, %v4181
    %v4310 = vpack.c.bf16 %v4186, %v4182
    %v4311 = vpack.c.bf16 %v4187, %v4183
    %v4312 = vpack.c.bf16 %v4188, %v4184
    %v4313 = vpack.c.bf16 %v4193, %v4189
    %v4314 = vpack.c.bf16 %v4194, %v4190
    %v4315 = vpack.c.bf16 %v4195, %v4191
    %v4316 = vpack.c.bf16 %v4196, %v4192
    %v4317 = vpack.c.bf16 %v4201, %v4197
    %v4318 = vpack.c.bf16 %v4202, %v4198
    %v4319 = vpack.c.bf16 %v4203, %v4199
    %v4320 = vpack.c.bf16 %v4204, %v4200
    %v4321 = vpack.c.bf16 %v4209, %v4205
    %v4322 = vpack.c.bf16 %v4210, %v4206
    %v4323 = vpack.c.bf16 %v4211, %v4207
    %v4324 = vpack.c.bf16 %v4212, %v4208
    %v4325 = vpack.c.bf16 %v4217, %v4213
    %v4326 = vpack.c.bf16 %v4218, %v4214
    %v4327 = vpack.c.bf16 %v4219, %v4215
    %v4328 = vpack.c.bf16 %v4220, %v4216
    %v4329 = vpack.c.bf16 %v4225, %v4221
    %v4330 = vpack.c.bf16 %v4226, %v4222
    %v4331 = vpack.c.bf16 %v4227, %v4223
    %v4332 = vpack.c.bf16 %v4228, %v4224
    %v4333 = vpack.c.bf16 %v4233, %v4229
    %v4334 = vpack.c.bf16 %v4234, %v4230
    %v4335 = vpack.c.bf16 %v4235, %v4231
    %v4336 = vpack.c.bf16 %v4236, %v4232
    %v4337 = vpack.c.bf16 %v4241, %v4237
    %v4338 = vpack.c.bf16 %v4242, %v4238
    %v4339 = vpack.c.bf16 %v4243, %v4239
    %v4340 = vpack.c.bf16 %v4244, %v4240
    %v4341 = vpack.c.bf16 %v4249, %v4245
    %v4342 = vpack.c.bf16 %v4250, %v4246
    %v4343 = vpack.c.bf16 %v4251, %v4247
    %v4344 = vpack.c.bf16 %v4252, %v4248
    %v4345 = vpack.c.bf16 %v4257, %v4253
    %v4346 = vpack.c.bf16 %v4258, %v4254
    %v4347 = vpack.c.bf16 %v4259, %v4255
    %v4348 = vpack.c.bf16 %v4260, %v4256
    %v4349 = vpack.c.bf16 %v4265, %v4261
    %v4350 = vpack.c.bf16 %v4266, %v4262
    %v4351 = vpack.c.bf16 %v4267, %v4263
    %v4352 = vpack.c.bf16 %v4268, %v4264
    %v4353 = vpack.c.bf16 %v4273, %v4269
    %v4354 = vpack.c.bf16 %v4274, %v4270
    %v4355 = vpack.c.bf16 %v4275, %v4271
    %v4356 = vpack.c.bf16 %v4276, %v4272
    %v4357 = vpack.c.bf16 %v4281, %v4277
    %v4358 = vpack.c.bf16 %v4282, %v4278
    %v4359 = vpack.c.bf16 %v4283, %v4279
    %v4360 = vpack.c.bf16 %v4284, %v4280
    %v4361 = vpack.c.bf16 %v4289, %v4285
    %v4362 = vpack.c.bf16 %v4290, %v4286
    %v4363 = vpack.c.bf16 %v4291, %v4287
    %v4364 = vpack.c.bf16 %v4292, %v4288
    %v4365 = vpack.c.bf16 %v4297, %v4293
    %v4366 = vpack.c.bf16 %v4298, %v4294
    %v4367 = vpack.c.bf16 %v4299, %v4295
    %v4368 = vpack.c.bf16 %v4300, %v4296
    %v4369 = vpack.c.bf16 %v4305, %v4301
    %v4370 = vpack.c.bf16 %v4306, %v4302
    %v4371 = vpack.c.bf16 %v4307, %v4303
    %v4372 = vpack.c.bf16 %v4308, %v4304
    %v4373 = vld [vmem:[#allocation8] sm:$0xff]
    %v4374 = vld [vmem:[#allocation8 + $0x8] sm:$0xff]
    %v4375 = vld [vmem:[#allocation8 + $0x10] sm:$0xff]
    %v4376 = vld [vmem:[#allocation8 + $0x18] sm:$0xff]
    %v4377 = vld [vmem:[#allocation8 + $0x20] sm:$0xff]
    %v4378 = vld [vmem:[#allocation8 + $0x28] sm:$0xff]
    %v4379 = vld [vmem:[#allocation8 + $0x30] sm:$0xff]
    %v4380 = vld [vmem:[#allocation8 + $0x38] sm:$0xff]
    %v4381 = vld [vmem:[#allocation8 + $0x40] sm:$0xff]
    %v4382 = vld [vmem:[#allocation8 + $0x48] sm:$0xff]
    %v4383 = vld [vmem:[#allocation8 + $0x50] sm:$0xff]
    %v4384 = vld [vmem:[#allocation8 + $0x58] sm:$0xff]
    %v4385 = vld [vmem:[#allocation8 + $0x60] sm:$0xff]
    %v4386 = vld [vmem:[#allocation8 + $0x68] sm:$0xff]
    %v4387 = vld [vmem:[#allocation8 + $0x70] sm:$0xff]
    %v4388 = vld [vmem:[#allocation8 + $0x78] sm:$0xff]
    %v4389 = vld [vmem:[#allocation8 + $0x80] sm:$0xff]
    %v4390 = vld [vmem:[#allocation8 + $0x88] sm:$0xff]
    %v4391 = vld [vmem:[#allocation8 + $0x90] sm:$0xff]
    %v4392 = vld [vmem:[#allocation8 + $0x98] sm:$0xff]
    %v4393 = vld [vmem:[#allocation8 + $0xa0] sm:$0xff]
    %v4394 = vld [vmem:[#allocation8 + $0xa8] sm:$0xff]
    %v4395 = vld [vmem:[#allocation8 + $0xb0] sm:$0xff]
    %v4396 = vld [vmem:[#allocation8 + $0xb8] sm:$0xff]
    %v4397 = vld [vmem:[#allocation8 + $0xc0] sm:$0xff]
    %v4398 = vld [vmem:[#allocation8 + $0xc8] sm:$0xff]
    %v4399 = vld [vmem:[#allocation8 + $0xd0] sm:$0xff]
    %v4400 = vld [vmem:[#allocation8 + $0xd8] sm:$0xff]
    %v4401 = vld [vmem:[#allocation8 + $0xe0] sm:$0xff]
    %v4402 = vld [vmem:[#allocation8 + $0xe8] sm:$0xff]
    %v4403 = vld [vmem:[#allocation8 + $0xf0] sm:$0xff]
    %v4404 = vld [vmem:[#allocation8 + $0xf8] sm:$0xff]
    %v4405 = vld [vmem:[#allocation8 + $0x100] sm:$0xff]
    %v4406 = vld [vmem:[#allocation8 + $0x108] sm:$0xff]
    %v4407 = vld [vmem:[#allocation8 + $0x110] sm:$0xff]
    %v4408 = vld [vmem:[#allocation8 + $0x118] sm:$0xff]
    %v4409 = vld [vmem:[#allocation8 + $0x120] sm:$0xff]
    %v4410 = vld [vmem:[#allocation8 + $0x128] sm:$0xff]
    %v4411 = vld [vmem:[#allocation8 + $0x130] sm:$0xff]
    %v4412 = vld [vmem:[#allocation8 + $0x138] sm:$0xff]
    %v4413 = vld [vmem:[#allocation8 + $0x140] sm:$0xff]
    %v4414 = vld [vmem:[#allocation8 + $0x148] sm:$0xff]
    %v4415 = vld [vmem:[#allocation8 + $0x150] sm:$0xff]
    %v4416 = vld [vmem:[#allocation8 + $0x158] sm:$0xff]
    %v4417 = vld [vmem:[#allocation8 + $0x160] sm:$0xff]
    %v4418 = vld [vmem:[#allocation8 + $0x168] sm:$0xff]
    %v4419 = vld [vmem:[#allocation8 + $0x170] sm:$0xff]
    %v4420 = vld [vmem:[#allocation8 + $0x178] sm:$0xff]
    %v4421 = vld [vmem:[#allocation8 + $0x180] sm:$0xff]
    %v4422 = vld [vmem:[#allocation8 + $0x188] sm:$0xff]
    %v4423 = vld [vmem:[#allocation8 + $0x190] sm:$0xff]
    %v4424 = vld [vmem:[#allocation8 + $0x198] sm:$0xff]
    %v4425 = vld [vmem:[#allocation8 + $0x1a0] sm:$0xff]
    %v4426 = vld [vmem:[#allocation8 + $0x1a8] sm:$0xff]
    %v4427 = vld [vmem:[#allocation8 + $0x1b0] sm:$0xff]
    %v4428 = vld [vmem:[#allocation8 + $0x1b8] sm:$0xff]
    %v4429 = vld [vmem:[#allocation8 + $0x1c0] sm:$0xff]
    %v4430 = vld [vmem:[#allocation8 + $0x1c8] sm:$0xff]
    %v4431 = vld [vmem:[#allocation8 + $0x1d0] sm:$0xff]
    %v4432 = vld [vmem:[#allocation8 + $0x1d8] sm:$0xff]
    %v4433 = vld [vmem:[#allocation8 + $0x1e0] sm:$0xff]
    %v4434 = vld [vmem:[#allocation8 + $0x1e8] sm:$0xff]
    %v4435 = vld [vmem:[#allocation8 + $0x1f0] sm:$0xff]
    %v4436 = vld [vmem:[#allocation8 + $0x1f8] sm:$0xff]
    %v4437 = vld [vmem:[#allocation8 + $0x200] sm:$0xff]
    %v4438 = vld [vmem:[#allocation8 + $0x208] sm:$0xff]
    %v4439 = vld [vmem:[#allocation8 + $0x210] sm:$0xff]
    %v4440 = vld [vmem:[#allocation8 + $0x218] sm:$0xff]
    %v4441 = vld [vmem:[#allocation8 + $0x220] sm:$0xff]
    %v4442 = vld [vmem:[#allocation8 + $0x228] sm:$0xff]
    %v4443 = vld [vmem:[#allocation8 + $0x230] sm:$0xff]
    %v4444 = vld [vmem:[#allocation8 + $0x238] sm:$0xff]
    %v4445 = vld [vmem:[#allocation8 + $0x240] sm:$0xff]
    %v4446 = vld [vmem:[#allocation8 + $0x248] sm:$0xff]
    %v4447 = vld [vmem:[#allocation8 + $0x250] sm:$0xff]
    %v4448 = vld [vmem:[#allocation8 + $0x258] sm:$0xff]
    %v4449 = vld [vmem:[#allocation8 + $0x260] sm:$0xff]
    %v4450 = vld [vmem:[#allocation8 + $0x268] sm:$0xff]
    %v4451 = vld [vmem:[#allocation8 + $0x270] sm:$0xff]
    %v4452 = vld [vmem:[#allocation8 + $0x278] sm:$0xff]
    %v4453 = vld [vmem:[#allocation8 + $0x280] sm:$0xff]
    %v4454 = vld [vmem:[#allocation8 + $0x288] sm:$0xff]
    %v4455 = vld [vmem:[#allocation8 + $0x290] sm:$0xff]
    %v4456 = vld [vmem:[#allocation8 + $0x298] sm:$0xff]
    %v4457 = vld [vmem:[#allocation8 + $0x2a0] sm:$0xff]
    %v4458 = vld [vmem:[#allocation8 + $0x2a8] sm:$0xff]
    %v4459 = vld [vmem:[#allocation8 + $0x2b0] sm:$0xff]
    %v4460 = vld [vmem:[#allocation8 + $0x2b8] sm:$0xff]
    %v4461 = vld [vmem:[#allocation8 + $0x2c0] sm:$0xff]
    %v4462 = vld [vmem:[#allocation8 + $0x2c8] sm:$0xff]
    %v4463 = vld [vmem:[#allocation8 + $0x2d0] sm:$0xff]
    %v4464 = vld [vmem:[#allocation8 + $0x2d8] sm:$0xff]
    %v4465 = vld [vmem:[#allocation8 + $0x2e0] sm:$0xff]
    %v4466 = vld [vmem:[#allocation8 + $0x2e8] sm:$0xff]
    %v4467 = vld [vmem:[#allocation8 + $0x2f0] sm:$0xff]
    %v4468 = vld [vmem:[#allocation8 + $0x2f8] sm:$0xff]
    %v4469 = vld [vmem:[#allocation8 + $0x300] sm:$0xff]
    %v4470 = vld [vmem:[#allocation8 + $0x308] sm:$0xff]
    %v4471 = vld [vmem:[#allocation8 + $0x310] sm:$0xff]
    %v4472 = vld [vmem:[#allocation8 + $0x318] sm:$0xff]
    %v4473 = vld [vmem:[#allocation8 + $0x320] sm:$0xff]
    %v4474 = vld [vmem:[#allocation8 + $0x328] sm:$0xff]
    %v4475 = vld [vmem:[#allocation8 + $0x330] sm:$0xff]
    %v4476 = vld [vmem:[#allocation8 + $0x338] sm:$0xff]
    %v4477 = vld [vmem:[#allocation8 + $0x340] sm:$0xff]
    %v4478 = vld [vmem:[#allocation8 + $0x348] sm:$0xff]
    %v4479 = vld [vmem:[#allocation8 + $0x350] sm:$0xff]
    %v4480 = vld [vmem:[#allocation8 + $0x358] sm:$0xff]
    %v4481 = vld [vmem:[#allocation8 + $0x360] sm:$0xff]
    %v4482 = vld [vmem:[#allocation8 + $0x368] sm:$0xff]
    %v4483 = vld [vmem:[#allocation8 + $0x370] sm:$0xff]
    %v4484 = vld [vmem:[#allocation8 + $0x378] sm:$0xff]
    %v4485 = vld [vmem:[#allocation8 + $0x380] sm:$0xff]
    %v4486 = vld [vmem:[#allocation8 + $0x388] sm:$0xff]
    %v4487 = vld [vmem:[#allocation8 + $0x390] sm:$0xff]
    %v4488 = vld [vmem:[#allocation8 + $0x398] sm:$0xff]
    %v4489 = vld [vmem:[#allocation8 + $0x3a0] sm:$0xff]
    %v4490 = vld [vmem:[#allocation8 + $0x3a8] sm:$0xff]
    %v4491 = vld [vmem:[#allocation8 + $0x3b0] sm:$0xff]
    %v4492 = vld [vmem:[#allocation8 + $0x3b8] sm:$0xff]
    %v4493 = vld [vmem:[#allocation8 + $0x3c0] sm:$0xff]
    %v4494 = vld [vmem:[#allocation8 + $0x3c8] sm:$0xff]
    %v4495 = vld [vmem:[#allocation8 + $0x3d0] sm:$0xff]
    %v4496 = vld [vmem:[#allocation8 + $0x3d8] sm:$0xff]
    %v4497 = vld [vmem:[#allocation8 + $0x3e0] sm:$0xff]
    %v4498 = vld [vmem:[#allocation8 + $0x3e8] sm:$0xff]
    %v4499 = vld [vmem:[#allocation8 + $0x3f0] sm:$0xff]
    %v4500 = vld [vmem:[#allocation8 + $0x3f8] sm:$0xff]
    %v4501 = vld [vmem:[#allocation10] sm:$0xf]
    %v4503 = vperm.slane %v4501, 0
    %v4504 = vperm.slane %v4501, 1
    %v4505 = vperm.slane %v4501, 2
    %v4506 = vperm.slane %v4501, 3
    %v4639 = vunpack.c.l.b16 %v4373
    %v4640 = vunpack.c.h.b16 %v4373
    %v4641 = vunpack.c.l.b16 %v4374
    %v4642 = vunpack.c.h.b16 %v4374
    %v4643 = vunpack.c.l.b16 %v4375
    %v4644 = vunpack.c.h.b16 %v4375
    %v4645 = vunpack.c.l.b16 %v4376
    %v4646 = vunpack.c.h.b16 %v4376
    %v4647 = vunpack.c.l.b16 %v4377
    %v4648 = vunpack.c.h.b16 %v4377
    %v4649 = vunpack.c.l.b16 %v4378
    %v4650 = vunpack.c.h.b16 %v4378
    %v4651 = vunpack.c.l.b16 %v4379
    %v4652 = vunpack.c.h.b16 %v4379
    %v4653 = vunpack.c.l.b16 %v4380
    %v4654 = vunpack.c.h.b16 %v4380
    %v4655 = vunpack.c.l.b16 %v4381
    %v4656 = vunpack.c.h.b16 %v4381
    %v4657 = vunpack.c.l.b16 %v4382
    %v4658 = vunpack.c.h.b16 %v4382
    %v4659 = vunpack.c.l.b16 %v4383
    %v4660 = vunpack.c.h.b16 %v4383
    %v4661 = vunpack.c.l.b16 %v4384
    %v4662 = vunpack.c.h.b16 %v4384
    %v4663 = vunpack.c.l.b16 %v4385
    %v4664 = vunpack.c.h.b16 %v4385
    %v4665 = vunpack.c.l.b16 %v4386
    %v4666 = vunpack.c.h.b16 %v4386
    %v4667 = vunpack.c.l.b16 %v4387
    %v4668 = vunpack.c.h.b16 %v4387
    %v4669 = vunpack.c.l.b16 %v4388
    %v4670 = vunpack.c.h.b16 %v4388
    %v4671 = vunpack.c.l.b16 %v4389
    %v4672 = vunpack.c.h.b16 %v4389
    %v4673 = vunpack.c.l.b16 %v4390
    %v4674 = vunpack.c.h.b16 %v4390
    %v4675 = vunpack.c.l.b16 %v4391
    %v4676 = vunpack.c.h.b16 %v4391
    %v4677 = vunpack.c.l.b16 %v4392
    %v4678 = vunpack.c.h.b16 %v4392
    %v4679 = vunpack.c.l.b16 %v4393
    %v4680 = vunpack.c.h.b16 %v4393
    %v4681 = vunpack.c.l.b16 %v4394
    %v4682 = vunpack.c.h.b16 %v4394
    %v4683 = vunpack.c.l.b16 %v4395
    %v4684 = vunpack.c.h.b16 %v4395
    %v4685 = vunpack.c.l.b16 %v4396
    %v4686 = vunpack.c.h.b16 %v4396
    %v4687 = vunpack.c.l.b16 %v4397
    %v4688 = vunpack.c.h.b16 %v4397
    %v4689 = vunpack.c.l.b16 %v4398
    %v4690 = vunpack.c.h.b16 %v4398
    %v4691 = vunpack.c.l.b16 %v4399
    %v4692 = vunpack.c.h.b16 %v4399
    %v4693 = vunpack.c.l.b16 %v4400
    %v4694 = vunpack.c.h.b16 %v4400
    %v4695 = vunpack.c.l.b16 %v4401
    %v4696 = vunpack.c.h.b16 %v4401
    %v4697 = vunpack.c.l.b16 %v4402
    %v4698 = vunpack.c.h.b16 %v4402
    %v4699 = vunpack.c.l.b16 %v4403
    %v4700 = vunpack.c.h.b16 %v4403
    %v4701 = vunpack.c.l.b16 %v4404
    %v4702 = vunpack.c.h.b16 %v4404
    %v4703 = vunpack.c.l.b16 %v4405
    %v4704 = vunpack.c.h.b16 %v4405
    %v4705 = vunpack.c.l.b16 %v4406
    %v4706 = vunpack.c.h.b16 %v4406
    %v4707 = vunpack.c.l.b16 %v4407
    %v4708 = vunpack.c.h.b16 %v4407
    %v4709 = vunpack.c.l.b16 %v4408
    %v4710 = vunpack.c.h.b16 %v4408
    %v4711 = vunpack.c.l.b16 %v4409
    %v4712 = vunpack.c.h.b16 %v4409
    %v4713 = vunpack.c.l.b16 %v4410
    %v4714 = vunpack.c.h.b16 %v4410
    %v4715 = vunpack.c.l.b16 %v4411
    %v4716 = vunpack.c.h.b16 %v4411
    %v4717 = vunpack.c.l.b16 %v4412
    %v4718 = vunpack.c.h.b16 %v4412
    %v4719 = vunpack.c.l.b16 %v4413
    %v4720 = vunpack.c.h.b16 %v4413
    %v4721 = vunpack.c.l.b16 %v4414
    %v4722 = vunpack.c.h.b16 %v4414
    %v4723 = vunpack.c.l.b16 %v4415
    %v4724 = vunpack.c.h.b16 %v4415
    %v4725 = vunpack.c.l.b16 %v4416
    %v4726 = vunpack.c.h.b16 %v4416
    %v4727 = vunpack.c.l.b16 %v4417
    %v4728 = vunpack.c.h.b16 %v4417
    %v4729 = vunpack.c.l.b16 %v4418
    %v4730 = vunpack.c.h.b16 %v4418
    %v4731 = vunpack.c.l.b16 %v4419
    %v4732 = vunpack.c.h.b16 %v4419
    %v4733 = vunpack.c.l.b16 %v4420
    %v4734 = vunpack.c.h.b16 %v4420
    %v4735 = vunpack.c.l.b16 %v4421
    %v4736 = vunpack.c.h.b16 %v4421
    %v4737 = vunpack.c.l.b16 %v4422
    %v4738 = vunpack.c.h.b16 %v4422
    %v4739 = vunpack.c.l.b16 %v4423
    %v4740 = vunpack.c.h.b16 %v4423
    %v4741 = vunpack.c.l.b16 %v4424
    %v4742 = vunpack.c.h.b16 %v4424
    %v4743 = vunpack.c.l.b16 %v4425
    %v4744 = vunpack.c.h.b16 %v4425
    %v4745 = vunpack.c.l.b16 %v4426
    %v4746 = vunpack.c.h.b16 %v4426
    %v4747 = vunpack.c.l.b16 %v4427
    %v4748 = vunpack.c.h.b16 %v4427
    %v4749 = vunpack.c.l.b16 %v4428
    %v4750 = vunpack.c.h.b16 %v4428
    %v4751 = vunpack.c.l.b16 %v4429
    %v4752 = vunpack.c.h.b16 %v4429
    %v4753 = vunpack.c.l.b16 %v4430
    %v4754 = vunpack.c.h.b16 %v4430
    %v4755 = vunpack.c.l.b16 %v4431
    %v4756 = vunpack.c.h.b16 %v4431
    %v4757 = vunpack.c.l.b16 %v4432
    %v4758 = vunpack.c.h.b16 %v4432
    %v4759 = vunpack.c.l.b16 %v4433
    %v4760 = vunpack.c.h.b16 %v4433
    %v4761 = vunpack.c.l.b16 %v4434
    %v4762 = vunpack.c.h.b16 %v4434
    %v4763 = vunpack.c.l.b16 %v4435
    %v4764 = vunpack.c.h.b16 %v4435
    %v4765 = vunpack.c.l.b16 %v4436
    %v4766 = vunpack.c.h.b16 %v4436
    %v4767 = vunpack.c.l.b16 %v4437
    %v4768 = vunpack.c.h.b16 %v4437
    %v4769 = vunpack.c.l.b16 %v4438
    %v4770 = vunpack.c.h.b16 %v4438
    %v4771 = vunpack.c.l.b16 %v4439
    %v4772 = vunpack.c.h.b16 %v4439
    %v4773 = vunpack.c.l.b16 %v4440
    %v4774 = vunpack.c.h.b16 %v4440
    %v4775 = vunpack.c.l.b16 %v4441
    %v4776 = vunpack.c.h.b16 %v4441
    %v4777 = vunpack.c.l.b16 %v4442
    %v4778 = vunpack.c.h.b16 %v4442
    %v4779 = vunpack.c.l.b16 %v4443
    %v4780 = vunpack.c.h.b16 %v4443
    %v4781 = vunpack.c.l.b16 %v4444
    %v4782 = vunpack.c.h.b16 %v4444
    %v4783 = vunpack.c.l.b16 %v4445
    %v4784 = vunpack.c.h.b16 %v4445
    %v4785 = vunpack.c.l.b16 %v4446
    %v4786 = vunpack.c.h.b16 %v4446
    %v4787 = vunpack.c.l.b16 %v4447
    %v4788 = vunpack.c.h.b16 %v4447
    %v4789 = vunpack.c.l.b16 %v4448
    %v4790 = vunpack.c.h.b16 %v4448
    %v4791 = vunpack.c.l.b16 %v4449
    %v4792 = vunpack.c.h.b16 %v4449
    %v4793 = vunpack.c.l.b16 %v4450
    %v4794 = vunpack.c.h.b16 %v4450
    %v4795 = vunpack.c.l.b16 %v4451
    %v4796 = vunpack.c.h.b16 %v4451
    %v4797 = vunpack.c.l.b16 %v4452
    %v4798 = vunpack.c.h.b16 %v4452
    %v4799 = vunpack.c.l.b16 %v4453
    %v4800 = vunpack.c.h.b16 %v4453
    %v4801 = vunpack.c.l.b16 %v4454
    %v4802 = vunpack.c.h.b16 %v4454
    %v4803 = vunpack.c.l.b16 %v4455
    %v4804 = vunpack.c.h.b16 %v4455
    %v4805 = vunpack.c.l.b16 %v4456
    %v4806 = vunpack.c.h.b16 %v4456
    %v4807 = vunpack.c.l.b16 %v4457
    %v4808 = vunpack.c.h.b16 %v4457
    %v4809 = vunpack.c.l.b16 %v4458
    %v4810 = vunpack.c.h.b16 %v4458
    %v4811 = vunpack.c.l.b16 %v4459
    %v4812 = vunpack.c.h.b16 %v4459
    %v4813 = vunpack.c.l.b16 %v4460
    %v4814 = vunpack.c.h.b16 %v4460
    %v4815 = vunpack.c.l.b16 %v4461
    %v4816 = vunpack.c.h.b16 %v4461
    %v4817 = vunpack.c.l.b16 %v4462
    %v4818 = vunpack.c.h.b16 %v4462
    %v4819 = vunpack.c.l.b16 %v4463
    %v4820 = vunpack.c.h.b16 %v4463
    %v4821 = vunpack.c.l.b16 %v4464
    %v4822 = vunpack.c.h.b16 %v4464
    %v4823 = vunpack.c.l.b16 %v4465
    %v4824 = vunpack.c.h.b16 %v4465
    %v4825 = vunpack.c.l.b16 %v4466
    %v4826 = vunpack.c.h.b16 %v4466
    %v4827 = vunpack.c.l.b16 %v4467
    %v4828 = vunpack.c.h.b16 %v4467
    %v4829 = vunpack.c.l.b16 %v4468
    %v4830 = vunpack.c.h.b16 %v4468
    %v4831 = vunpack.c.l.b16 %v4469
    %v4832 = vunpack.c.h.b16 %v4469
    %v4833 = vunpack.c.l.b16 %v4470
    %v4834 = vunpack.c.h.b16 %v4470
    %v4835 = vunpack.c.l.b16 %v4471
    %v4836 = vunpack.c.h.b16 %v4471
    %v4837 = vunpack.c.l.b16 %v4472
    %v4838 = vunpack.c.h.b16 %v4472
    %v4839 = vunpack.c.l.b16 %v4473
    %v4840 = vunpack.c.h.b16 %v4473
    %v4841 = vunpack.c.l.b16 %v4474
    %v4842 = vunpack.c.h.b16 %v4474
    %v4843 = vunpack.c.l.b16 %v4475
    %v4844 = vunpack.c.h.b16 %v4475
    %v4845 = vunpack.c.l.b16 %v4476
    %v4846 = vunpack.c.h.b16 %v4476
    %v4847 = vunpack.c.l.b16 %v4477
    %v4848 = vunpack.c.h.b16 %v4477
    %v4849 = vunpack.c.l.b16 %v4478
    %v4850 = vunpack.c.h.b16 %v4478
    %v4851 = vunpack.c.l.b16 %v4479
    %v4852 = vunpack.c.h.b16 %v4479
    %v4853 = vunpack.c.l.b16 %v4480
    %v4854 = vunpack.c.h.b16 %v4480
    %v4855 = vunpack.c.l.b16 %v4481
    %v4856 = vunpack.c.h.b16 %v4481
    %v4857 = vunpack.c.l.b16 %v4482
    %v4858 = vunpack.c.h.b16 %v4482
    %v4859 = vunpack.c.l.b16 %v4483
    %v4860 = vunpack.c.h.b16 %v4483
    %v4861 = vunpack.c.l.b16 %v4484
    %v4862 = vunpack.c.h.b16 %v4484
    %v4863 = vunpack.c.l.b16 %v4485
    %v4864 = vunpack.c.h.b16 %v4485
    %v4865 = vunpack.c.l.b16 %v4486
    %v4866 = vunpack.c.h.b16 %v4486
    %v4867 = vunpack.c.l.b16 %v4487
    %v4868 = vunpack.c.h.b16 %v4487
    %v4869 = vunpack.c.l.b16 %v4488
    %v4870 = vunpack.c.h.b16 %v4488
    %v4871 = vunpack.c.l.b16 %v4489
    %v4872 = vunpack.c.h.b16 %v4489
    %v4873 = vunpack.c.l.b16 %v4490
    %v4874 = vunpack.c.h.b16 %v4490
    %v4875 = vunpack.c.l.b16 %v4491
    %v4876 = vunpack.c.h.b16 %v4491
    %v4877 = vunpack.c.l.b16 %v4492
    %v4878 = vunpack.c.h.b16 %v4492
    %v4879 = vunpack.c.l.b16 %v4493
    %v4880 = vunpack.c.h.b16 %v4493
    %v4881 = vunpack.c.l.b16 %v4494
    %v4882 = vunpack.c.h.b16 %v4494
    %v4883 = vunpack.c.l.b16 %v4495
    %v4884 = vunpack.c.h.b16 %v4495
    %v4885 = vunpack.c.l.b16 %v4496
    %v4886 = vunpack.c.h.b16 %v4496
    %v4887 = vunpack.c.l.b16 %v4497
    %v4888 = vunpack.c.h.b16 %v4497
    %v4889 = vunpack.c.l.b16 %v4498
    %v4890 = vunpack.c.h.b16 %v4498
    %v4891 = vunpack.c.l.b16 %v4499
    %v4892 = vunpack.c.h.b16 %v4499
    %v4893 = vunpack.c.l.b16 %v4500
    %v4894 = vunpack.c.h.b16 %v4500
    %v4895 = vpack.c.b16 %v4643, %v4639
    %v4896 = vpack.c.b16 %v4644, %v4640
    %v4897 = vpack.c.b16 %v4645, %v4641
    %v4898 = vpack.c.b16 %v4646, %v4642
    %v4899 = vpack.c.b16 %v4651, %v4647
    %v4900 = vpack.c.b16 %v4652, %v4648
    %v4901 = vpack.c.b16 %v4653, %v4649
    %v4902 = vpack.c.b16 %v4654, %v4650
    %v4903 = vpack.c.b16 %v4659, %v4655
    %v4904 = vpack.c.b16 %v4660, %v4656
    %v4905 = vpack.c.b16 %v4661, %v4657
    %v4906 = vpack.c.b16 %v4662, %v4658
    %v4907 = vpack.c.b16 %v4667, %v4663
    %v4908 = vpack.c.b16 %v4668, %v4664
    %v4909 = vpack.c.b16 %v4669, %v4665
    %v4910 = vpack.c.b16 %v4670, %v4666
    %v4911 = vpack.c.b16 %v4675, %v4671
    %v4912 = vpack.c.b16 %v4676, %v4672
    %v4913 = vpack.c.b16 %v4677, %v4673
    %v4914 = vpack.c.b16 %v4678, %v4674
    %v4915 = vpack.c.b16 %v4683, %v4679
    %v4916 = vpack.c.b16 %v4684, %v4680
    %v4917 = vpack.c.b16 %v4685, %v4681
    %v4918 = vpack.c.b16 %v4686, %v4682
    %v4919 = vpack.c.b16 %v4691, %v4687
    %v4920 = vpack.c.b16 %v4692, %v4688
    %v4921 = vpack.c.b16 %v4693, %v4689
    %v4922 = vpack.c.b16 %v4694, %v4690
    %v4923 = vpack.c.b16 %v4699, %v4695
    %v4924 = vpack.c.b16 %v4700, %v4696
    %v4925 = vpack.c.b16 %v4701, %v4697
    %v4926 = vpack.c.b16 %v4702, %v4698
    %v4927 = vpack.c.b16 %v4707, %v4703
    %v4928 = vpack.c.b16 %v4708, %v4704
    %v4929 = vpack.c.b16 %v4709, %v4705
    %v4930 = vpack.c.b16 %v4710, %v4706
    %v4931 = vpack.c.b16 %v4715, %v4711
    %v4932 = vpack.c.b16 %v4716, %v4712
    %v4933 = vpack.c.b16 %v4717, %v4713
    %v4934 = vpack.c.b16 %v4718, %v4714
    %v4935 = vpack.c.b16 %v4723, %v4719
    %v4936 = vpack.c.b16 %v4724, %v4720
    %v4937 = vpack.c.b16 %v4725, %v4721
    %v4938 = vpack.c.b16 %v4726, %v4722
    %v4939 = vpack.c.b16 %v4731, %v4727
    %v4940 = vpack.c.b16 %v4732, %v4728
    %v4941 = vpack.c.b16 %v4733, %v4729
    %v4942 = vpack.c.b16 %v4734, %v4730
    %v4943 = vpack.c.b16 %v4739, %v4735
    %v4944 = vpack.c.b16 %v4740, %v4736
    %v4945 = vpack.c.b16 %v4741, %v4737
    %v4946 = vpack.c.b16 %v4742, %v4738
    %v4947 = vpack.c.b16 %v4747, %v4743
    %v4948 = vpack.c.b16 %v4748, %v4744
    %v4949 = vpack.c.b16 %v4749, %v4745
    %v4950 = vpack.c.b16 %v4750, %v4746
    %v4951 = vpack.c.b16 %v4755, %v4751
    %v4952 = vpack.c.b16 %v4756, %v4752
    %v4953 = vpack.c.b16 %v4757, %v4753
    %v4954 = vpack.c.b16 %v4758, %v4754
    %v4955 = vpack.c.b16 %v4763, %v4759
    %v4956 = vpack.c.b16 %v4764, %v4760
    %v4957 = vpack.c.b16 %v4765, %v4761
    %v4958 = vpack.c.b16 %v4766, %v4762
    %v4959 = vpack.c.b16 %v4771, %v4767
    %v4960 = vpack.c.b16 %v4772, %v4768
    %v4961 = vpack.c.b16 %v4773, %v4769
    %v4962 = vpack.c.b16 %v4774, %v4770
    %v4963 = vpack.c.b16 %v4779, %v4775
    %v4964 = vpack.c.b16 %v4780, %v4776
    %v4965 = vpack.c.b16 %v4781, %v4777
    %v4966 = vpack.c.b16 %v4782, %v4778
    %v4967 = vpack.c.b16 %v4787, %v4783
    %v4968 = vpack.c.b16 %v4788, %v4784
    %v4969 = vpack.c.b16 %v4789, %v4785
    %v4970 = vpack.c.b16 %v4790, %v4786
    %v4971 = vpack.c.b16 %v4795, %v4791
    %v4972 = vpack.c.b16 %v4796, %v4792
    %v4973 = vpack.c.b16 %v4797, %v4793
    %v4974 = vpack.c.b16 %v4798, %v4794
    %v4975 = vpack.c.b16 %v4803, %v4799
    %v4976 = vpack.c.b16 %v4804, %v4800
    %v4977 = vpack.c.b16 %v4805, %v4801
    %v4978 = vpack.c.b16 %v4806, %v4802
    %v4979 = vpack.c.b16 %v4811, %v4807
    %v4980 = vpack.c.b16 %v4812, %v4808
    %v4981 = vpack.c.b16 %v4813, %v4809
    %v4982 = vpack.c.b16 %v4814, %v4810
    %v4983 = vpack.c.b16 %v4819, %v4815
    %v4984 = vpack.c.b16 %v4820, %v4816
    %v4985 = vpack.c.b16 %v4821, %v4817
    %v4986 = vpack.c.b16 %v4822, %v4818
    %v4987 = vpack.c.b16 %v4827, %v4823
    %v4988 = vpack.c.b16 %v4828, %v4824
    %v4989 = vpack.c.b16 %v4829, %v4825
    %v4990 = vpack.c.b16 %v4830, %v4826
    %v4991 = vpack.c.b16 %v4835, %v4831
    %v4992 = vpack.c.b16 %v4836, %v4832
    %v4993 = vpack.c.b16 %v4837, %v4833
    %v4994 = vpack.c.b16 %v4838, %v4834
    %v4995 = vpack.c.b16 %v4843, %v4839
    %v4996 = vpack.c.b16 %v4844, %v4840
    %v4997 = vpack.c.b16 %v4845, %v4841
    %v4998 = vpack.c.b16 %v4846, %v4842
    %v4999 = vpack.c.b16 %v4851, %v4847
    %v5000 = vpack.c.b16 %v4852, %v4848
    %v5001 = vpack.c.b16 %v4853, %v4849
    %v5002 = vpack.c.b16 %v4854, %v4850
    %v5003 = vpack.c.b16 %v4859, %v4855
    %v5004 = vpack.c.b16 %v4860, %v4856
    %v5005 = vpack.c.b16 %v4861, %v4857
    %v5006 = vpack.c.b16 %v4862, %v4858
    %v5007 = vpack.c.b16 %v4867, %v4863
    %v5008 = vpack.c.b16 %v4868, %v4864
    %v5009 = vpack.c.b16 %v4869, %v4865
    %v5010 = vpack.c.b16 %v4870, %v4866
    %v5011 = vpack.c.b16 %v4875, %v4871
    %v5012 = vpack.c.b16 %v4876, %v4872
    %v5013 = vpack.c.b16 %v4877, %v4873
    %v5014 = vpack.c.b16 %v4878, %v4874
    %v5015 = vpack.c.b16 %v4883, %v4879
    %v5016 = vpack.c.b16 %v4884, %v4880
    %v5017 = vpack.c.b16 %v4885, %v4881
    %v5018 = vpack.c.b16 %v4886, %v4882
    %v5019 = vpack.c.b16 %v4891, %v4887
    %v5020 = vpack.c.b16 %v4892, %v4888
    %v5021 = vpack.c.b16 %v4893, %v4889
    %v5022 = vpack.c.b16 %v4894, %v4890
    %5151 = vmatpush.bf16.msra.mxu0 %v4923
    %5152 = vmatpush.bf16.msra.mxu0 %v4919
    %5153 = vmatpush.bf16.msra.mxu0 %v4915
    %5154 = vmatpush.bf16.msra.mxu0 %v4911
    %5155 = vmatpush.bf16.msra.mxu0 %v4907
    %5156 = vmatpush.bf16.msra.mxu0 %v4903
    %5157 = vmatpush.bf16.msra.mxu0 %v4899
    %5158 = vmatpush.bf16.msra.mxu0 %v4895
    %5159 = vmatmul.bf16.gmra.mxu0 %v4309
    %v5160 = vpop.f32.mrf.mxu0
    %v5161 = vadd.f32 %v4503, %v5160
    %v5162 = vpop.f32.mrf.mxu0
    %v5163 = vadd.f32 %v4503, %v5162
    %5164 = vmatmul.bf16.gmra.mxu0 %v4313
    %v5165 = vpop.f32.mrf.mxu0
    %v5166 = vadd.f32 %v4503, %v5165
    %v5167 = vpop.f32.mrf.mxu0
    %v5168 = vadd.f32 %v4503, %v5167
    %5169 = vmatmul.bf16.gmra.mxu0 %v4317
    %v5170 = vpop.f32.mrf.mxu0
    %v5171 = vadd.f32 %v4503, %v5170
    %v5172 = vpop.f32.mrf.mxu0
    %v5173 = vadd.f32 %v4503, %v5172
    %5174 = vmatmul.bf16.gmra.mxu0 %v4321
    %v5175 = vpop.f32.mrf.mxu0
    %v5176 = vadd.f32 %v4503, %v5175
    %v5177 = vpop.f32.mrf.mxu0
    %v5178 = vadd.f32 %v4503, %v5177
    %5179 = vmatmul.bf16.gmra.mxu0 %v4325
    %v5180 = vpop.f32.mrf.mxu0
    %v5181 = vadd.f32 %v4503, %v5180
    %v5182 = vpop.f32.mrf.mxu0
    %v5183 = vadd.f32 %v4503, %v5182
    %5184 = vmatmul.bf16.gmra.mxu0 %v4329
    %v5185 = vpop.f32.mrf.mxu0
    %v5186 = vadd.f32 %v4503, %v5185
    %v5187 = vpop.f32.mrf.mxu0
    %v5188 = vadd.f32 %v4503, %v5187
    %5189 = vmatmul.bf16.gmra.mxu0 %v4333
    %v5190 = vpop.f32.mrf.mxu0
    %v5191 = vadd.f32 %v4503, %v5190
    %v5192 = vpop.f32.mrf.mxu0
    %v5193 = vadd.f32 %v4503, %v5192
    %5194 = vmatmul.bf16.gmra.mxu0 %v4337
    %v5195 = vpop.f32.mrf.mxu0
    %v5196 = vadd.f32 %v4503, %v5195
    %v5197 = vpop.f32.mrf.mxu0
    %v5198 = vadd.f32 %v4503, %v5197
    %5199 = vmatmul.bf16.gmra.mxu0 %v4341
    %v5200 = vpop.f32.mrf.mxu0
    %v5201 = vadd.f32 %v4503, %v5200
    %v5202 = vpop.f32.mrf.mxu0
    %v5203 = vadd.f32 %v4503, %v5202
    %5204 = vmatmul.bf16.gmra.mxu0 %v4345
    %v5205 = vpop.f32.mrf.mxu0
    %v5206 = vadd.f32 %v4503, %v5205
    %v5207 = vpop.f32.mrf.mxu0
    %v5208 = vadd.f32 %v4503, %v5207
    %5209 = vmatmul.bf16.gmra.mxu0 %v4349
    %v5210 = vpop.f32.mrf.mxu0
    %v5211 = vadd.f32 %v4503, %v5210
    %v5212 = vpop.f32.mrf.mxu0
    %v5213 = vadd.f32 %v4503, %v5212
    %5214 = vmatmul.bf16.gmra.mxu0 %v4353
    %v5215 = vpop.f32.mrf.mxu0
    %v5216 = vadd.f32 %v4503, %v5215
    %v5217 = vpop.f32.mrf.mxu0
    %v5218 = vadd.f32 %v4503, %v5217
    %5219 = vmatmul.bf16.gmra.mxu0 %v4357
    %v5220 = vpop.f32.mrf.mxu0
    %v5221 = vadd.f32 %v4503, %v5220
    %v5222 = vpop.f32.mrf.mxu0
    %v5223 = vadd.f32 %v4503, %v5222
    %5224 = vmatmul.bf16.gmra.mxu0 %v4361
    %v5225 = vpop.f32.mrf.mxu0
    %v5226 = vadd.f32 %v4503, %v5225
    %v5227 = vpop.f32.mrf.mxu0
    %v5228 = vadd.f32 %v4503, %v5227
    %5229 = vmatmul.bf16.gmra.mxu0 %v4365
    %v5230 = vpop.f32.mrf.mxu0
    %v5231 = vadd.f32 %v4503, %v5230
    %v5232 = vpop.f32.mrf.mxu0
    %v5233 = vadd.f32 %v4503, %v5232
    %5234 = vmatmul.bf16.gmra.mxu0 %v4369
    %v5235 = vpop.f32.mrf.mxu0
    %v5236 = vadd.f32 %v4503, %v5235
    %v5237 = vpop.f32.mrf.mxu0
    %v5238 = vadd.f32 %v4503, %v5237
    %5239 = vdwg.mxu0
    %5240 = vmatpush.bf16.msra.mxu0 %v4955
    %5241 = vmatpush.bf16.msra.mxu0 %v4951
    %5242 = vmatpush.bf16.msra.mxu0 %v4947
    %5243 = vmatpush.bf16.msra.mxu0 %v4943
    %5244 = vmatpush.bf16.msra.mxu0 %v4939
    %5245 = vmatpush.bf16.msra.mxu0 %v4935
    %5246 = vmatpush.bf16.msra.mxu0 %v4931
    %5247 = vmatpush.bf16.msra.mxu0 %v4927
    %5248 = vmatmul.bf16.gmra.mxu0 %v4310
    %v5249 = vpop.f32.mrf.mxu0
    %v5250 = vadd.f32 %v5161, %v5249
    %v5251 = vpop.f32.mrf.mxu0
    %v5252 = vadd.f32 %v5163, %v5251
    %5253 = vmatmul.bf16.gmra.mxu0 %v4314
    %v5254 = vpop.f32.mrf.mxu0
    %v5255 = vadd.f32 %v5166, %v5254
    %v5256 = vpop.f32.mrf.mxu0
    %v5257 = vadd.f32 %v5168, %v5256
    %5258 = vmatmul.bf16.gmra.mxu0 %v4318
    %v5259 = vpop.f32.mrf.mxu0
    %v5260 = vadd.f32 %v5171, %v5259
    %v5261 = vpop.f32.mrf.mxu0
    %v5262 = vadd.f32 %v5173, %v5261
    %5263 = vmatmul.bf16.gmra.mxu0 %v4322
    %v5264 = vpop.f32.mrf.mxu0
    %v5265 = vadd.f32 %v5176, %v5264
    %v5266 = vpop.f32.mrf.mxu0
    %v5267 = vadd.f32 %v5178, %v5266
    %5268 = vmatmul.bf16.gmra.mxu0 %v4326
    %v5269 = vpop.f32.mrf.mxu0
    %v5270 = vadd.f32 %v5181, %v5269
    %v5271 = vpop.f32.mrf.mxu0
    %v5272 = vadd.f32 %v5183, %v5271
    %5273 = vmatmul.bf16.gmra.mxu0 %v4330
    %v5274 = vpop.f32.mrf.mxu0
    %v5275 = vadd.f32 %v5186, %v5274
    %v5276 = vpop.f32.mrf.mxu0
    %v5277 = vadd.f32 %v5188, %v5276
    %5278 = vmatmul.bf16.gmra.mxu0 %v4334
    %v5279 = vpop.f32.mrf.mxu0
    %v5280 = vadd.f32 %v5191, %v5279
    %v5281 = vpop.f32.mrf.mxu0
    %v5282 = vadd.f32 %v5193, %v5281
    %5283 = vmatmul.bf16.gmra.mxu0 %v4338
    %v5284 = vpop.f32.mrf.mxu0
    %v5285 = vadd.f32 %v5196, %v5284
    %v5286 = vpop.f32.mrf.mxu0
    %v5287 = vadd.f32 %v5198, %v5286
    %5288 = vmatmul.bf16.gmra.mxu0 %v4342
    %v5289 = vpop.f32.mrf.mxu0
    %v5290 = vadd.f32 %v5201, %v5289
    %v5291 = vpop.f32.mrf.mxu0
    %v5292 = vadd.f32 %v5203, %v5291
    %5293 = vmatmul.bf16.gmra.mxu0 %v4346
    %v5294 = vpop.f32.mrf.mxu0
    %v5295 = vadd.f32 %v5206, %v5294
    %v5296 = vpop.f32.mrf.mxu0
    %v5297 = vadd.f32 %v5208, %v5296
    %5298 = vmatmul.bf16.gmra.mxu0 %v4350
    %v5299 = vpop.f32.mrf.mxu0
    %v5300 = vadd.f32 %v5211, %v5299
    %v5301 = vpop.f32.mrf.mxu0
    %v5302 = vadd.f32 %v5213, %v5301
    %5303 = vmatmul.bf16.gmra.mxu0 %v4354
    %v5304 = vpop.f32.mrf.mxu0
    %v5305 = vadd.f32 %v5216, %v5304
    %v5306 = vpop.f32.mrf.mxu0
    %v5307 = vadd.f32 %v5218, %v5306
    %5308 = vmatmul.bf16.gmra.mxu0 %v4358
    %v5309 = vpop.f32.mrf.mxu0
    %v5310 = vadd.f32 %v5221, %v5309
    %v5311 = vpop.f32.mrf.mxu0
    %v5312 = vadd.f32 %v5223, %v5311
    %5313 = vmatmul.bf16.gmra.mxu0 %v4362
    %v5314 = vpop.f32.mrf.mxu0
    %v5315 = vadd.f32 %v5226, %v5314
    %v5316 = vpop.f32.mrf.mxu0
    %v5317 = vadd.f32 %v5228, %v5316
    %5318 = vmatmul.bf16.gmra.mxu0 %v4366
    %v5319 = vpop.f32.mrf.mxu0
    %v5320 = vadd.f32 %v5231, %v5319
    %v5321 = vpop.f32.mrf.mxu0
    %v5322 = vadd.f32 %v5233, %v5321
    %5323 = vmatmul.bf16.gmra.mxu0 %v4370
    %v5324 = vpop.f32.mrf.mxu0
    %v5325 = vadd.f32 %v5236, %v5324
    %v5326 = vpop.f32.mrf.mxu0
    %v5327 = vadd.f32 %v5238, %v5326
    %5328 = vdwg.mxu0
    %5329 = vmatpush.bf16.msra.mxu0 %v4987
    %5330 = vmatpush.bf16.msra.mxu0 %v4983
    %5331 = vmatpush.bf16.msra.mxu0 %v4979
    %5332 = vmatpush.bf16.msra.mxu0 %v4975
    %5333 = vmatpush.bf16.msra.mxu0 %v4971
    %5334 = vmatpush.bf16.msra.mxu0 %v4967
    %5335 = vmatpush.bf16.msra.mxu0 %v4963
    %5336 = vmatpush.bf16.msra.mxu0 %v4959
    %5337 = vmatmul.bf16.gmra.mxu0 %v4311
    %v5338 = vpop.f32.mrf.mxu0
    %v5339 = vadd.f32 %v5250, %v5338
    %v5340 = vpop.f32.mrf.mxu0
    %v5341 = vadd.f32 %v5252, %v5340
    %5342 = vmatmul.bf16.gmra.mxu0 %v4315
    %v5343 = vpop.f32.mrf.mxu0
    %v5344 = vadd.f32 %v5255, %v5343
    %v5345 = vpop.f32.mrf.mxu0
    %v5346 = vadd.f32 %v5257, %v5345
    %5347 = vmatmul.bf16.gmra.mxu0 %v4319
    %v5348 = vpop.f32.mrf.mxu0
    %v5349 = vadd.f32 %v5260, %v5348
    %v5350 = vpop.f32.mrf.mxu0
    %v5351 = vadd.f32 %v5262, %v5350
    %5352 = vmatmul.bf16.gmra.mxu0 %v4323
    %v5353 = vpop.f32.mrf.mxu0
    %v5354 = vadd.f32 %v5265, %v5353
    %v5355 = vpop.f32.mrf.mxu0
    %v5356 = vadd.f32 %v5267, %v5355
    %5357 = vmatmul.bf16.gmra.mxu0 %v4327
    %v5358 = vpop.f32.mrf.mxu0
    %v5359 = vadd.f32 %v5270, %v5358
    %v5360 = vpop.f32.mrf.mxu0
    %v5361 = vadd.f32 %v5272, %v5360
    %5362 = vmatmul.bf16.gmra.mxu0 %v4331
    %v5363 = vpop.f32.mrf.mxu0
    %v5364 = vadd.f32 %v5275, %v5363
    %v5365 = vpop.f32.mrf.mxu0
    %v5366 = vadd.f32 %v5277, %v5365
    %5367 = vmatmul.bf16.gmra.mxu0 %v4335
    %v5368 = vpop.f32.mrf.mxu0
    %v5369 = vadd.f32 %v5280, %v5368
    %v5370 = vpop.f32.mrf.mxu0
    %v5371 = vadd.f32 %v5282, %v5370
    %5372 = vmatmul.bf16.gmra.mxu0 %v4339
    %v5373 = vpop.f32.mrf.mxu0
    %v5374 = vadd.f32 %v5285, %v5373
    %v5375 = vpop.f32.mrf.mxu0
    %v5376 = vadd.f32 %v5287, %v5375
    %5377 = vmatmul.bf16.gmra.mxu0 %v4343
    %v5378 = vpop.f32.mrf.mxu0
    %v5379 = vadd.f32 %v5290, %v5378
    %v5380 = vpop.f32.mrf.mxu0
    %v5381 = vadd.f32 %v5292, %v5380
    %5382 = vmatmul.bf16.gmra.mxu0 %v4347
    %v5383 = vpop.f32.mrf.mxu0
    %v5384 = vadd.f32 %v5295, %v5383
    %v5385 = vpop.f32.mrf.mxu0
    %v5386 = vadd.f32 %v5297, %v5385
    %5387 = vmatmul.bf16.gmra.mxu0 %v4351
    %v5388 = vpop.f32.mrf.mxu0
    %v5389 = vadd.f32 %v5300, %v5388
    %v5390 = vpop.f32.mrf.mxu0
    %v5391 = vadd.f32 %v5302, %v5390
    %5392 = vmatmul.bf16.gmra.mxu0 %v4355
    %v5393 = vpop.f32.mrf.mxu0
    %v5394 = vadd.f32 %v5305, %v5393
    %v5395 = vpop.f32.mrf.mxu0
    %v5396 = vadd.f32 %v5307, %v5395
    %5397 = vmatmul.bf16.gmra.mxu0 %v4359
    %v5398 = vpop.f32.mrf.mxu0
    %v5399 = vadd.f32 %v5310, %v5398
    %v5400 = vpop.f32.mrf.mxu0
    %v5401 = vadd.f32 %v5312, %v5400
    %5402 = vmatmul.bf16.gmra.mxu0 %v4363
    %v5403 = vpop.f32.mrf.mxu0
    %v5404 = vadd.f32 %v5315, %v5403
    %v5405 = vpop.f32.mrf.mxu0
    %v5406 = vadd.f32 %v5317, %v5405
    %5407 = vmatmul.bf16.gmra.mxu0 %v4367
    %v5408 = vpop.f32.mrf.mxu0
    %v5409 = vadd.f32 %v5320, %v5408
    %v5410 = vpop.f32.mrf.mxu0
    %v5411 = vadd.f32 %v5322, %v5410
    %5412 = vmatmul.bf16.gmra.mxu0 %v4371
    %v5413 = vpop.f32.mrf.mxu0
    %v5414 = vadd.f32 %v5325, %v5413
    %v5415 = vpop.f32.mrf.mxu0
    %v5416 = vadd.f32 %v5327, %v5415
    %5417 = vdwg.mxu0
    %5418 = vmatpush.bf16.msra.mxu0 %v5019
    %5419 = vmatpush.bf16.msra.mxu0 %v5015
    %5420 = vmatpush.bf16.msra.mxu0 %v5011
    %5421 = vmatpush.bf16.msra.mxu0 %v5007
    %5422 = vmatpush.bf16.msra.mxu0 %v5003
    %5423 = vmatpush.bf16.msra.mxu0 %v4999
    %5424 = vmatpush.bf16.msra.mxu0 %v4995
    %5425 = vmatpush.bf16.msra.mxu0 %v4991
    %5426 = vmatmul.bf16.gmra.mxu0 %v4312
    %v5427 = vpop.f32.mrf.mxu0
    %v5428 = vadd.f32 %v5339, %v5427
    %v5429 = vpop.f32.mrf.mxu0
    %v5430 = vadd.f32 %v5341, %v5429
    %5431 = vmatmul.bf16.gmra.mxu0 %v4316
    %v5432 = vpop.f32.mrf.mxu0
    %v5433 = vadd.f32 %v5344, %v5432
    %v5434 = vpop.f32.mrf.mxu0
    %v5435 = vadd.f32 %v5346, %v5434
    %5436 = vmatmul.bf16.gmra.mxu0 %v4320
    %v5437 = vpop.f32.mrf.mxu0
    %v5438 = vadd.f32 %v5349, %v5437
    %v5439 = vpop.f32.mrf.mxu0
    %v5440 = vadd.f32 %v5351, %v5439
    %5441 = vmatmul.bf16.gmra.mxu0 %v4324
    %v5442 = vpop.f32.mrf.mxu0
    %v5443 = vadd.f32 %v5354, %v5442
    %v5444 = vpop.f32.mrf.mxu0
    %v5445 = vadd.f32 %v5356, %v5444
    %5446 = vmatmul.bf16.gmra.mxu0 %v4328
    %v5447 = vpop.f32.mrf.mxu0
    %v5448 = vadd.f32 %v5359, %v5447
    %v5449 = vpop.f32.mrf.mxu0
    %v5450 = vadd.f32 %v5361, %v5449
    %5451 = vmatmul.bf16.gmra.mxu0 %v4332
    %v5452 = vpop.f32.mrf.mxu0
    %v5453 = vadd.f32 %v5364, %v5452
    %v5454 = vpop.f32.mrf.mxu0
    %v5455 = vadd.f32 %v5366, %v5454
    %5456 = vmatmul.bf16.gmra.mxu0 %v4336
    %v5457 = vpop.f32.mrf.mxu0
    %v5458 = vadd.f32 %v5369, %v5457
    %v5459 = vpop.f32.mrf.mxu0
    %v5460 = vadd.f32 %v5371, %v5459
    %5461 = vmatmul.bf16.gmra.mxu0 %v4340
    %v5462 = vpop.f32.mrf.mxu0
    %v5463 = vadd.f32 %v5374, %v5462
    %v5464 = vpop.f32.mrf.mxu0
    %v5465 = vadd.f32 %v5376, %v5464
    %5466 = vmatmul.bf16.gmra.mxu0 %v4344
    %v5467 = vpop.f32.mrf.mxu0
    %v5468 = vadd.f32 %v5379, %v5467
    %v5469 = vpop.f32.mrf.mxu0
    %v5470 = vadd.f32 %v5381, %v5469
    %5471 = vmatmul.bf16.gmra.mxu0 %v4348
    %v5472 = vpop.f32.mrf.mxu0
    %v5473 = vadd.f32 %v5384, %v5472
    %v5474 = vpop.f32.mrf.mxu0
    %v5475 = vadd.f32 %v5386, %v5474
    %5476 = vmatmul.bf16.gmra.mxu0 %v4352
    %v5477 = vpop.f32.mrf.mxu0
    %v5478 = vadd.f32 %v5389, %v5477
    %v5479 = vpop.f32.mrf.mxu0
    %v5480 = vadd.f32 %v5391, %v5479
    %5481 = vmatmul.bf16.gmra.mxu0 %v4356
    %v5482 = vpop.f32.mrf.mxu0
    %v5483 = vadd.f32 %v5394, %v5482
    %v5484 = vpop.f32.mrf.mxu0
    %v5485 = vadd.f32 %v5396, %v5484
    %5486 = vmatmul.bf16.gmra.mxu0 %v4360
    %v5487 = vpop.f32.mrf.mxu0
    %v5488 = vadd.f32 %v5399, %v5487
    %v5489 = vpop.f32.mrf.mxu0
    %v5490 = vadd.f32 %v5401, %v5489
    %5491 = vmatmul.bf16.gmra.mxu0 %v4364
    %v5492 = vpop.f32.mrf.mxu0
    %v5493 = vadd.f32 %v5404, %v5492
    %v5494 = vpop.f32.mrf.mxu0
    %v5495 = vadd.f32 %v5406, %v5494
    %5496 = vmatmul.bf16.gmra.mxu0 %v4368
    %v5497 = vpop.f32.mrf.mxu0
    %v5498 = vadd.f32 %v5409, %v5497
    %v5499 = vpop.f32.mrf.mxu0
    %v5500 = vadd.f32 %v5411, %v5499
    %5501 = vmatmul.bf16.gmra.mxu0 %v4372
    %v5502 = vpop.f32.mrf.mxu0
    %v5503 = vadd.f32 %v5414, %v5502
    %v5504 = vpop.f32.mrf.mxu0
    %v5505 = vadd.f32 %v5416, %v5504
    %5506 = vdwg.mxu0
    %5507 = vmatpush.bf16.msra.mxu0 %v4924
    %5508 = vmatpush.bf16.msra.mxu0 %v4920
    %5509 = vmatpush.bf16.msra.mxu0 %v4916
    %5510 = vmatpush.bf16.msra.mxu0 %v4912
    %5511 = vmatpush.bf16.msra.mxu0 %v4908
    %5512 = vmatpush.bf16.msra.mxu0 %v4904
    %5513 = vmatpush.bf16.msra.mxu0 %v4900
    %5514 = vmatpush.bf16.msra.mxu0 %v4896
    %5515 = vmatmul.bf16.gmra.mxu0 %v4309
    %v5516 = vpop.f32.mrf.mxu0
    %v5517 = vadd.f32 %v4504, %v5516
    %v5518 = vpop.f32.mrf.mxu0
    %v5519 = vadd.f32 %v4504, %v5518
    %5520 = vmatmul.bf16.gmra.mxu0 %v4313
    %v5521 = vpop.f32.mrf.mxu0
    %v5522 = vadd.f32 %v4504, %v5521
    %v5523 = vpop.f32.mrf.mxu0
    %v5524 = vadd.f32 %v4504, %v5523
    %5525 = vmatmul.bf16.gmra.mxu0 %v4317
    %v5526 = vpop.f32.mrf.mxu0
    %v5527 = vadd.f32 %v4504, %v5526
    %v5528 = vpop.f32.mrf.mxu0
    %v5529 = vadd.f32 %v4504, %v5528
    %5530 = vmatmul.bf16.gmra.mxu0 %v4321
    %v5531 = vpop.f32.mrf.mxu0
    %v5532 = vadd.f32 %v4504, %v5531
    %v5533 = vpop.f32.mrf.mxu0
    %v5534 = vadd.f32 %v4504, %v5533
    %5535 = vmatmul.bf16.gmra.mxu0 %v4325
    %v5536 = vpop.f32.mrf.mxu0
    %v5537 = vadd.f32 %v4504, %v5536
    %v5538 = vpop.f32.mrf.mxu0
    %v5539 = vadd.f32 %v4504, %v5538
    %5540 = vmatmul.bf16.gmra.mxu0 %v4329
    %v5541 = vpop.f32.mrf.mxu0
    %v5542 = vadd.f32 %v4504, %v5541
    %v5543 = vpop.f32.mrf.mxu0
    %v5544 = vadd.f32 %v4504, %v5543
    %5545 = vmatmul.bf16.gmra.mxu0 %v4333
    %v5546 = vpop.f32.mrf.mxu0
    %v5547 = vadd.f32 %v4504, %v5546
    %v5548 = vpop.f32.mrf.mxu0
    %v5549 = vadd.f32 %v4504, %v5548
    %5550 = vmatmul.bf16.gmra.mxu0 %v4337
    %v5551 = vpop.f32.mrf.mxu0
    %v5552 = vadd.f32 %v4504, %v5551
    %v5553 = vpop.f32.mrf.mxu0
    %v5554 = vadd.f32 %v4504, %v5553
    %5555 = vmatmul.bf16.gmra.mxu0 %v4341
    %v5556 = vpop.f32.mrf.mxu0
    %v5557 = vadd.f32 %v4504, %v5556
    %v5558 = vpop.f32.mrf.mxu0
    %v5559 = vadd.f32 %v4504, %v5558
    %5560 = vmatmul.bf16.gmra.mxu0 %v4345
    %v5561 = vpop.f32.mrf.mxu0
    %v5562 = vadd.f32 %v4504, %v5561
    %v5563 = vpop.f32.mrf.mxu0
    %v5564 = vadd.f32 %v4504, %v5563
    %5565 = vmatmul.bf16.gmra.mxu0 %v4349
    %v5566 = vpop.f32.mrf.mxu0
    %v5567 = vadd.f32 %v4504, %v5566
    %v5568 = vpop.f32.mrf.mxu0
    %v5569 = vadd.f32 %v4504, %v5568
    %5570 = vmatmul.bf16.gmra.mxu0 %v4353
    %v5571 = vpop.f32.mrf.mxu0
    %v5572 = vadd.f32 %v4504, %v5571
    %v5573 = vpop.f32.mrf.mxu0
    %v5574 = vadd.f32 %v4504, %v5573
    %5575 = vmatmul.bf16.gmra.mxu0 %v4357
    %v5576 = vpop.f32.mrf.mxu0
    %v5577 = vadd.f32 %v4504, %v5576
    %v5578 = vpop.f32.mrf.mxu0
    %v5579 = vadd.f32 %v4504, %v5578
    %5580 = vmatmul.bf16.gmra.mxu0 %v4361
    %v5581 = vpop.f32.mrf.mxu0
    %v5582 = vadd.f32 %v4504, %v5581
    %v5583 = vpop.f32.mrf.mxu0
    %v5584 = vadd.f32 %v4504, %v5583
    %5585 = vmatmul.bf16.gmra.mxu0 %v4365
    %v5586 = vpop.f32.mrf.mxu0
    %v5587 = vadd.f32 %v4504, %v5586
    %v5588 = vpop.f32.mrf.mxu0
    %v5589 = vadd.f32 %v4504, %v5588
    %5590 = vmatmul.bf16.gmra.mxu0 %v4369
    %v5591 = vpop.f32.mrf.mxu0
    %v5592 = vadd.f32 %v4504, %v5591
    %v5593 = vpop.f32.mrf.mxu0
    %v5594 = vadd.f32 %v4504, %v5593
    %5595 = vdwg.mxu0
    %5596 = vmatpush.bf16.msra.mxu0 %v4956
    %5597 = vmatpush.bf16.msra.mxu0 %v4952
    %5598 = vmatpush.bf16.msra.mxu0 %v4948
    %5599 = vmatpush.bf16.msra.mxu0 %v4944
    %5600 = vmatpush.bf16.msra.mxu0 %v4940
    %5601 = vmatpush.bf16.msra.mxu0 %v4936
    %5602 = vmatpush.bf16.msra.mxu0 %v4932
    %5603 = vmatpush.bf16.msra.mxu0 %v4928
    %5604 = vmatmul.bf16.gmra.mxu0 %v4310
    %v5605 = vpop.f32.mrf.mxu0
    %v5606 = vadd.f32 %v5517, %v5605
    %v5607 = vpop.f32.mrf.mxu0
    %v5608 = vadd.f32 %v5519, %v5607
    %5609 = vmatmul.bf16.gmra.mxu0 %v4314
    %v5610 = vpop.f32.mrf.mxu0
    %v5611 = vadd.f32 %v5522, %v5610
    %v5612 = vpop.f32.mrf.mxu0
    %v5613 = vadd.f32 %v5524, %v5612
    %5614 = vmatmul.bf16.gmra.mxu0 %v4318
    %v5615 = vpop.f32.mrf.mxu0
    %v5616 = vadd.f32 %v5527, %v5615
    %v5617 = vpop.f32.mrf.mxu0
    %v5618 = vadd.f32 %v5529, %v5617
    %5619 = vmatmul.bf16.gmra.mxu0 %v4322
    %v5620 = vpop.f32.mrf.mxu0
    %v5621 = vadd.f32 %v5532, %v5620
    %v5622 = vpop.f32.mrf.mxu0
    %v5623 = vadd.f32 %v5534, %v5622
    %5624 = vmatmul.bf16.gmra.mxu0 %v4326
    %v5625 = vpop.f32.mrf.mxu0
    %v5626 = vadd.f32 %v5537, %v5625
    %v5627 = vpop.f32.mrf.mxu0
    %v5628 = vadd.f32 %v5539, %v5627
    %5629 = vmatmul.bf16.gmra.mxu0 %v4330
    %v5630 = vpop.f32.mrf.mxu0
    %v5631 = vadd.f32 %v5542, %v5630
    %v5632 = vpop.f32.mrf.mxu0
    %v5633 = vadd.f32 %v5544, %v5632
    %5634 = vmatmul.bf16.gmra.mxu0 %v4334
    %v5635 = vpop.f32.mrf.mxu0
    %v5636 = vadd.f32 %v5547, %v5635
    %v5637 = vpop.f32.mrf.mxu0
    %v5638 = vadd.f32 %v5549, %v5637
    %5639 = vmatmul.bf16.gmra.mxu0 %v4338
    %v5640 = vpop.f32.mrf.mxu0
    %v5641 = vadd.f32 %v5552, %v5640
    %v5642 = vpop.f32.mrf.mxu0
    %v5643 = vadd.f32 %v5554, %v5642
    %5644 = vmatmul.bf16.gmra.mxu0 %v4342
    %v5645 = vpop.f32.mrf.mxu0
    %v5646 = vadd.f32 %v5557, %v5645
    %v5647 = vpop.f32.mrf.mxu0
    %v5648 = vadd.f32 %v5559, %v5647
    %5649 = vmatmul.bf16.gmra.mxu0 %v4346
    %v5650 = vpop.f32.mrf.mxu0
    %v5651 = vadd.f32 %v5562, %v5650
    %v5652 = vpop.f32.mrf.mxu0
    %v5653 = vadd.f32 %v5564, %v5652
    %5654 = vmatmul.bf16.gmra.mxu0 %v4350
    %v5655 = vpop.f32.mrf.mxu0
    %v5656 = vadd.f32 %v5567, %v5655
    %v5657 = vpop.f32.mrf.mxu0
    %v5658 = vadd.f32 %v5569, %v5657
    %5659 = vmatmul.bf16.gmra.mxu0 %v4354
    %v5660 = vpop.f32.mrf.mxu0
    %v5661 = vadd.f32 %v5572, %v5660
    %v5662 = vpop.f32.mrf.mxu0
    %v5663 = vadd.f32 %v5574, %v5662
    %5664 = vmatmul.bf16.gmra.mxu0 %v4358
    %v5665 = vpop.f32.mrf.mxu0
    %v5666 = vadd.f32 %v5577, %v5665
    %v5667 = vpop.f32.mrf.mxu0
    %v5668 = vadd.f32 %v5579, %v5667
    %5669 = vmatmul.bf16.gmra.mxu0 %v4362
    %v5670 = vpop.f32.mrf.mxu0
    %v5671 = vadd.f32 %v5582, %v5670
    %v5672 = vpop.f32.mrf.mxu0
    %v5673 = vadd.f32 %v5584, %v5672
    %5674 = vmatmul.bf16.gmra.mxu0 %v4366
    %v5675 = vpop.f32.mrf.mxu0
    %v5676 = vadd.f32 %v5587, %v5675
    %v5677 = vpop.f32.mrf.mxu0
    %v5678 = vadd.f32 %v5589, %v5677
    %5679 = vmatmul.bf16.gmra.mxu0 %v4370
    %v5680 = vpop.f32.mrf.mxu0
    %v5681 = vadd.f32 %v5592, %v5680
    %v5682 = vpop.f32.mrf.mxu0
    %v5683 = vadd.f32 %v5594, %v5682
    %5684 = vdwg.mxu0
    %5685 = vmatpush.bf16.msra.mxu0 %v4988
    %5686 = vmatpush.bf16.msra.mxu0 %v4984
    %5687 = vmatpush.bf16.msra.mxu0 %v4980
    %5688 = vmatpush.bf16.msra.mxu0 %v4976
    %5689 = vmatpush.bf16.msra.mxu0 %v4972
    %5690 = vmatpush.bf16.msra.mxu0 %v4968
    %5691 = vmatpush.bf16.msra.mxu0 %v4964
    %5692 = vmatpush.bf16.msra.mxu0 %v4960
    %5693 = vmatmul.bf16.gmra.mxu0 %v4311
    %v5694 = vpop.f32.mrf.mxu0
    %v5695 = vadd.f32 %v5606, %v5694
    %v5696 = vpop.f32.mrf.mxu0
    %v5697 = vadd.f32 %v5608, %v5696
    %5698 = vmatmul.bf16.gmra.mxu0 %v4315
    %v5699 = vpop.f32.mrf.mxu0
    %v5700 = vadd.f32 %v5611, %v5699
    %v5701 = vpop.f32.mrf.mxu0
    %v5702 = vadd.f32 %v5613, %v5701
    %5703 = vmatmul.bf16.gmra.mxu0 %v4319
    %v5704 = vpop.f32.mrf.mxu0
    %v5705 = vadd.f32 %v5616, %v5704
    %v5706 = vpop.f32.mrf.mxu0
    %v5707 = vadd.f32 %v5618, %v5706
    %5708 = vmatmul.bf16.gmra.mxu0 %v4323
    %v5709 = vpop.f32.mrf.mxu0
    %v5710 = vadd.f32 %v5621, %v5709
    %v5711 = vpop.f32.mrf.mxu0
    %v5712 = vadd.f32 %v5623, %v5711
    %5713 = vmatmul.bf16.gmra.mxu0 %v4327
    %v5714 = vpop.f32.mrf.mxu0
    %v5715 = vadd.f32 %v5626, %v5714
    %v5716 = vpop.f32.mrf.mxu0
    %v5717 = vadd.f32 %v5628, %v5716
    %5718 = vmatmul.bf16.gmra.mxu0 %v4331
    %v5719 = vpop.f32.mrf.mxu0
    %v5720 = vadd.f32 %v5631, %v5719
    %v5721 = vpop.f32.mrf.mxu0
    %v5722 = vadd.f32 %v5633, %v5721
    %5723 = vmatmul.bf16.gmra.mxu0 %v4335
    %v5724 = vpop.f32.mrf.mxu0
    %v5725 = vadd.f32 %v5636, %v5724
    %v5726 = vpop.f32.mrf.mxu0
    %v5727 = vadd.f32 %v5638, %v5726
    %5728 = vmatmul.bf16.gmra.mxu0 %v4339
    %v5729 = vpop.f32.mrf.mxu0
    %v5730 = vadd.f32 %v5641, %v5729
    %v5731 = vpop.f32.mrf.mxu0
    %v5732 = vadd.f32 %v5643, %v5731
    %5733 = vmatmul.bf16.gmra.mxu0 %v4343
    %v5734 = vpop.f32.mrf.mxu0
    %v5735 = vadd.f32 %v5646, %v5734
    %v5736 = vpop.f32.mrf.mxu0
    %v5737 = vadd.f32 %v5648, %v5736
    %5738 = vmatmul.bf16.gmra.mxu0 %v4347
    %v5739 = vpop.f32.mrf.mxu0
    %v5740 = vadd.f32 %v5651, %v5739
    %v5741 = vpop.f32.mrf.mxu0
    %v5742 = vadd.f32 %v5653, %v5741
    %5743 = vmatmul.bf16.gmra.mxu0 %v4351
    %v5744 = vpop.f32.mrf.mxu0
    %v5745 = vadd.f32 %v5656, %v5744
    %v5746 = vpop.f32.mrf.mxu0
    %v5747 = vadd.f32 %v5658, %v5746
    %5748 = vmatmul.bf16.gmra.mxu0 %v4355
    %v5749 = vpop.f32.mrf.mxu0
    %v5750 = vadd.f32 %v5661, %v5749
    %v5751 = vpop.f32.mrf.mxu0
    %v5752 = vadd.f32 %v5663, %v5751
    %5753 = vmatmul.bf16.gmra.mxu0 %v4359
    %v5754 = vpop.f32.mrf.mxu0
    %v5755 = vadd.f32 %v5666, %v5754
    %v5756 = vpop.f32.mrf.mxu0
    %v5757 = vadd.f32 %v5668, %v5756
    %5758 = vmatmul.bf16.gmra.mxu0 %v4363
    %v5759 = vpop.f32.mrf.mxu0
    %v5760 = vadd.f32 %v5671, %v5759
    %v5761 = vpop.f32.mrf.mxu0
    %v5762 = vadd.f32 %v5673, %v5761
    %5763 = vmatmul.bf16.gmra.mxu0 %v4367
    %v5764 = vpop.f32.mrf.mxu0
    %v5765 = vadd.f32 %v5676, %v5764
    %v5766 = vpop.f32.mrf.mxu0
    %v5767 = vadd.f32 %v5678, %v5766
    %5768 = vmatmul.bf16.gmra.mxu0 %v4371
    %v5769 = vpop.f32.mrf.mxu0
    %v5770 = vadd.f32 %v5681, %v5769
    %v5771 = vpop.f32.mrf.mxu0
    %v5772 = vadd.f32 %v5683, %v5771
    %5773 = vdwg.mxu0
    %5774 = vmatpush.bf16.msra.mxu0 %v5020
    %5775 = vmatpush.bf16.msra.mxu0 %v5016
    %5776 = vmatpush.bf16.msra.mxu0 %v5012
    %5777 = vmatpush.bf16.msra.mxu0 %v5008
    %5778 = vmatpush.bf16.msra.mxu0 %v5004
    %5779 = vmatpush.bf16.msra.mxu0 %v5000
    %5780 = vmatpush.bf16.msra.mxu0 %v4996
    %5781 = vmatpush.bf16.msra.mxu0 %v4992
    %5782 = vmatmul.bf16.gmra.mxu0 %v4312
    %v5783 = vpop.f32.mrf.mxu0
    %v5784 = vadd.f32 %v5695, %v5783
    %v5785 = vpop.f32.mrf.mxu0
    %v5786 = vadd.f32 %v5697, %v5785
    %5787 = vmatmul.bf16.gmra.mxu0 %v4316
    %v5788 = vpop.f32.mrf.mxu0
    %v5789 = vadd.f32 %v5700, %v5788
    %v5790 = vpop.f32.mrf.mxu0
    %v5791 = vadd.f32 %v5702, %v5790
    %5792 = vmatmul.bf16.gmra.mxu0 %v4320
    %v5793 = vpop.f32.mrf.mxu0
    %v5794 = vadd.f32 %v5705, %v5793
    %v5795 = vpop.f32.mrf.mxu0
    %v5796 = vadd.f32 %v5707, %v5795
    %5797 = vmatmul.bf16.gmra.mxu0 %v4324
    %v5798 = vpop.f32.mrf.mxu0
    %v5799 = vadd.f32 %v5710, %v5798
    %v5800 = vpop.f32.mrf.mxu0
    %v5801 = vadd.f32 %v5712, %v5800
    %5802 = vmatmul.bf16.gmra.mxu0 %v4328
    %v5803 = vpop.f32.mrf.mxu0
    %v5804 = vadd.f32 %v5715, %v5803
    %v5805 = vpop.f32.mrf.mxu0
    %v5806 = vadd.f32 %v5717, %v5805
    %5807 = vmatmul.bf16.gmra.mxu0 %v4332
    %v5808 = vpop.f32.mrf.mxu0
    %v5809 = vadd.f32 %v5720, %v5808
    %v5810 = vpop.f32.mrf.mxu0
    %v5811 = vadd.f32 %v5722, %v5810
    %5812 = vmatmul.bf16.gmra.mxu0 %v4336
    %v5813 = vpop.f32.mrf.mxu0
    %v5814 = vadd.f32 %v5725, %v5813
    %v5815 = vpop.f32.mrf.mxu0
    %v5816 = vadd.f32 %v5727, %v5815
    %5817 = vmatmul.bf16.gmra.mxu0 %v4340
    %v5818 = vpop.f32.mrf.mxu0
    %v5819 = vadd.f32 %v5730, %v5818
    %v5820 = vpop.f32.mrf.mxu0
    %v5821 = vadd.f32 %v5732, %v5820
    %5822 = vmatmul.bf16.gmra.mxu0 %v4344
    %v5823 = vpop.f32.mrf.mxu0
    %v5824 = vadd.f32 %v5735, %v5823
    %v5825 = vpop.f32.mrf.mxu0
    %v5826 = vadd.f32 %v5737, %v5825
    %5827 = vmatmul.bf16.gmra.mxu0 %v4348
    %v5828 = vpop.f32.mrf.mxu0
    %v5829 = vadd.f32 %v5740, %v5828
    %v5830 = vpop.f32.mrf.mxu0
    %v5831 = vadd.f32 %v5742, %v5830
    %5832 = vmatmul.bf16.gmra.mxu0 %v4352
    %v5833 = vpop.f32.mrf.mxu0
    %v5834 = vadd.f32 %v5745, %v5833
    %v5835 = vpop.f32.mrf.mxu0
    %v5836 = vadd.f32 %v5747, %v5835
    %5837 = vmatmul.bf16.gmra.mxu0 %v4356
    %v5838 = vpop.f32.mrf.mxu0
    %v5839 = vadd.f32 %v5750, %v5838
    %v5840 = vpop.f32.mrf.mxu0
    %v5841 = vadd.f32 %v5752, %v5840
    %5842 = vmatmul.bf16.gmra.mxu0 %v4360
    %v5843 = vpop.f32.mrf.mxu0
    %v5844 = vadd.f32 %v5755, %v5843
    %v5845 = vpop.f32.mrf.mxu0
    %v5846 = vadd.f32 %v5757, %v5845
    %5847 = vmatmul.bf16.gmra.mxu0 %v4364
    %v5848 = vpop.f32.mrf.mxu0
    %v5849 = vadd.f32 %v5760, %v5848
    %v5850 = vpop.f32.mrf.mxu0
    %v5851 = vadd.f32 %v5762, %v5850
    %5852 = vmatmul.bf16.gmra.mxu0 %v4368
    %v5853 = vpop.f32.mrf.mxu0
    %v5854 = vadd.f32 %v5765, %v5853
    %v5855 = vpop.f32.mrf.mxu0
    %v5856 = vadd.f32 %v5767, %v5855
    %5857 = vmatmul.bf16.gmra.mxu0 %v4372
    %v5858 = vpop.f32.mrf.mxu0
    %v5859 = vadd.f32 %v5770, %v5858
    %v5860 = vpop.f32.mrf.mxu0
    %v5861 = vadd.f32 %v5772, %v5860
    %5862 = vdwg.mxu0
    %5863 = vmatpush.bf16.msra.mxu0 %v4925
    %5864 = vmatpush.bf16.msra.mxu0 %v4921
    %5865 = vmatpush.bf16.msra.mxu0 %v4917
    %5866 = vmatpush.bf16.msra.mxu0 %v4913
    %5867 = vmatpush.bf16.msra.mxu0 %v4909
    %5868 = vmatpush.bf16.msra.mxu0 %v4905
    %5869 = vmatpush.bf16.msra.mxu0 %v4901
    %5870 = vmatpush.bf16.msra.mxu0 %v4897
    %5871 = vmatmul.bf16.gmra.mxu0 %v4309
    %v5872 = vpop.f32.mrf.mxu0
    %v5873 = vadd.f32 %v4505, %v5872
    %v5874 = vpop.f32.mrf.mxu0
    %v5875 = vadd.f32 %v4505, %v5874
    %5876 = vmatmul.bf16.gmra.mxu0 %v4313
    %v5877 = vpop.f32.mrf.mxu0
    %v5878 = vadd.f32 %v4505, %v5877
    %v5879 = vpop.f32.mrf.mxu0
    %v5880 = vadd.f32 %v4505, %v5879
    %5881 = vmatmul.bf16.gmra.mxu0 %v4317
    %v5882 = vpop.f32.mrf.mxu0
    %v5883 = vadd.f32 %v4505, %v5882
    %v5884 = vpop.f32.mrf.mxu0
    %v5885 = vadd.f32 %v4505, %v5884
    %5886 = vmatmul.bf16.gmra.mxu0 %v4321
    %v5887 = vpop.f32.mrf.mxu0
    %v5888 = vadd.f32 %v4505, %v5887
    %v5889 = vpop.f32.mrf.mxu0
    %v5890 = vadd.f32 %v4505, %v5889
    %5891 = vmatmul.bf16.gmra.mxu0 %v4325
    %v5892 = vpop.f32.mrf.mxu0
    %v5893 = vadd.f32 %v4505, %v5892
    %v5894 = vpop.f32.mrf.mxu0
    %v5895 = vadd.f32 %v4505, %v5894
    %5896 = vmatmul.bf16.gmra.mxu0 %v4329
    %v5897 = vpop.f32.mrf.mxu0
    %v5898 = vadd.f32 %v4505, %v5897
    %v5899 = vpop.f32.mrf.mxu0
    %v5900 = vadd.f32 %v4505, %v5899
    %5901 = vmatmul.bf16.gmra.mxu0 %v4333
    %v5902 = vpop.f32.mrf.mxu0
    %v5903 = vadd.f32 %v4505, %v5902
    %v5904 = vpop.f32.mrf.mxu0
    %v5905 = vadd.f32 %v4505, %v5904
    %5906 = vmatmul.bf16.gmra.mxu0 %v4337
    %v5907 = vpop.f32.mrf.mxu0
    %v5908 = vadd.f32 %v4505, %v5907
    %v5909 = vpop.f32.mrf.mxu0
    %v5910 = vadd.f32 %v4505, %v5909
    %5911 = vmatmul.bf16.gmra.mxu0 %v4341
    %v5912 = vpop.f32.mrf.mxu0
    %v5913 = vadd.f32 %v4505, %v5912
    %v5914 = vpop.f32.mrf.mxu0
    %v5915 = vadd.f32 %v4505, %v5914
    %5916 = vmatmul.bf16.gmra.mxu0 %v4345
    %v5917 = vpop.f32.mrf.mxu0
    %v5918 = vadd.f32 %v4505, %v5917
    %v5919 = vpop.f32.mrf.mxu0
    %v5920 = vadd.f32 %v4505, %v5919
    %5921 = vmatmul.bf16.gmra.mxu0 %v4349
    %v5922 = vpop.f32.mrf.mxu0
    %v5923 = vadd.f32 %v4505, %v5922
    %v5924 = vpop.f32.mrf.mxu0
    %v5925 = vadd.f32 %v4505, %v5924
    %5926 = vmatmul.bf16.gmra.mxu0 %v4353
    %v5927 = vpop.f32.mrf.mxu0
    %v5928 = vadd.f32 %v4505, %v5927
    %v5929 = vpop.f32.mrf.mxu0
    %v5930 = vadd.f32 %v4505, %v5929
    %5931 = vmatmul.bf16.gmra.mxu0 %v4357
    %v5932 = vpop.f32.mrf.mxu0
    %v5933 = vadd.f32 %v4505, %v5932
    %v5934 = vpop.f32.mrf.mxu0
    %v5935 = vadd.f32 %v4505, %v5934
    %5936 = vmatmul.bf16.gmra.mxu0 %v4361
    %v5937 = vpop.f32.mrf.mxu0
    %v5938 = vadd.f32 %v4505, %v5937
    %v5939 = vpop.f32.mrf.mxu0
    %v5940 = vadd.f32 %v4505, %v5939
    %5941 = vmatmul.bf16.gmra.mxu0 %v4365
    %v5942 = vpop.f32.mrf.mxu0
    %v5943 = vadd.f32 %v4505, %v5942
    %v5944 = vpop.f32.mrf.mxu0
    %v5945 = vadd.f32 %v4505, %v5944
    %5946 = vmatmul.bf16.gmra.mxu0 %v4369
    %v5947 = vpop.f32.mrf.mxu0
    %v5948 = vadd.f32 %v4505, %v5947
    %v5949 = vpop.f32.mrf.mxu0
    %v5950 = vadd.f32 %v4505, %v5949
    %5951 = vdwg.mxu0
    %5952 = vmatpush.bf16.msra.mxu0 %v4957
    %5953 = vmatpush.bf16.msra.mxu0 %v4953
    %5954 = vmatpush.bf16.msra.mxu0 %v4949
    %5955 = vmatpush.bf16.msra.mxu0 %v4945
    %5956 = vmatpush.bf16.msra.mxu0 %v4941
    %5957 = vmatpush.bf16.msra.mxu0 %v4937
    %5958 = vmatpush.bf16.msra.mxu0 %v4933
    %5959 = vmatpush.bf16.msra.mxu0 %v4929
    %5960 = vmatmul.bf16.gmra.mxu0 %v4310
    %v5961 = vpop.f32.mrf.mxu0
    %v5962 = vadd.f32 %v5873, %v5961
    %v5963 = vpop.f32.mrf.mxu0
    %v5964 = vadd.f32 %v5875, %v5963
    %5965 = vmatmul.bf16.gmra.mxu0 %v4314
    %v5966 = vpop.f32.mrf.mxu0
    %v5967 = vadd.f32 %v5878, %v5966
    %v5968 = vpop.f32.mrf.mxu0
    %v5969 = vadd.f32 %v5880, %v5968
    %5970 = vmatmul.bf16.gmra.mxu0 %v4318
    %v5971 = vpop.f32.mrf.mxu0
    %v5972 = vadd.f32 %v5883, %v5971
    %v5973 = vpop.f32.mrf.mxu0
    %v5974 = vadd.f32 %v5885, %v5973
    %5975 = vmatmul.bf16.gmra.mxu0 %v4322
    %v5976 = vpop.f32.mrf.mxu0
    %v5977 = vadd.f32 %v5888, %v5976
    %v5978 = vpop.f32.mrf.mxu0
    %v5979 = vadd.f32 %v5890, %v5978
    %5980 = vmatmul.bf16.gmra.mxu0 %v4326
    %v5981 = vpop.f32.mrf.mxu0
    %v5982 = vadd.f32 %v5893, %v5981
    %v5983 = vpop.f32.mrf.mxu0
    %v5984 = vadd.f32 %v5895, %v5983
    %5985 = vmatmul.bf16.gmra.mxu0 %v4330
    %v5986 = vpop.f32.mrf.mxu0
    %v5987 = vadd.f32 %v5898, %v5986
    %v5988 = vpop.f32.mrf.mxu0
    %v5989 = vadd.f32 %v5900, %v5988
    %5990 = vmatmul.bf16.gmra.mxu0 %v4334
    %v5991 = vpop.f32.mrf.mxu0
    %v5992 = vadd.f32 %v5903, %v5991
    %v5993 = vpop.f32.mrf.mxu0
    %v5994 = vadd.f32 %v5905, %v5993
    %5995 = vmatmul.bf16.gmra.mxu0 %v4338
    %v5996 = vpop.f32.mrf.mxu0
    %v5997 = vadd.f32 %v5908, %v5996
    %v5998 = vpop.f32.mrf.mxu0
    %v5999 = vadd.f32 %v5910, %v5998
    %6000 = vmatmul.bf16.gmra.mxu0 %v4342
    %v6001 = vpop.f32.mrf.mxu0
    %v6002 = vadd.f32 %v5913, %v6001
    %v6003 = vpop.f32.mrf.mxu0
    %v6004 = vadd.f32 %v5915, %v6003
    %6005 = vmatmul.bf16.gmra.mxu0 %v4346
    %v6006 = vpop.f32.mrf.mxu0
    %v6007 = vadd.f32 %v5918, %v6006
    %v6008 = vpop.f32.mrf.mxu0
    %v6009 = vadd.f32 %v5920, %v6008
    %6010 = vmatmul.bf16.gmra.mxu0 %v4350
    %v6011 = vpop.f32.mrf.mxu0
    %v6012 = vadd.f32 %v5923, %v6011
    %v6013 = vpop.f32.mrf.mxu0
    %v6014 = vadd.f32 %v5925, %v6013
    %6015 = vmatmul.bf16.gmra.mxu0 %v4354
    %v6016 = vpop.f32.mrf.mxu0
    %v6017 = vadd.f32 %v5928, %v6016
    %v6018 = vpop.f32.mrf.mxu0
    %v6019 = vadd.f32 %v5930, %v6018
    %6020 = vmatmul.bf16.gmra.mxu0 %v4358
    %v6021 = vpop.f32.mrf.mxu0
    %v6022 = vadd.f32 %v5933, %v6021
    %v6023 = vpop.f32.mrf.mxu0
    %v6024 = vadd.f32 %v5935, %v6023
    %6025 = vmatmul.bf16.gmra.mxu0 %v4362
    %v6026 = vpop.f32.mrf.mxu0
    %v6027 = vadd.f32 %v5938, %v6026
    %v6028 = vpop.f32.mrf.mxu0
    %v6029 = vadd.f32 %v5940, %v6028
    %6030 = vmatmul.bf16.gmra.mxu0 %v4366
    %v6031 = vpop.f32.mrf.mxu0
    %v6032 = vadd.f32 %v5943, %v6031
    %v6033 = vpop.f32.mrf.mxu0
    %v6034 = vadd.f32 %v5945, %v6033
    %6035 = vmatmul.bf16.gmra.mxu0 %v4370
    %v6036 = vpop.f32.mrf.mxu0
    %v6037 = vadd.f32 %v5948, %v6036
    %v6038 = vpop.f32.mrf.mxu0
    %v6039 = vadd.f32 %v5950, %v6038
    %6040 = vdwg.mxu0
    %6041 = vmatpush.bf16.msra.mxu0 %v4989
    %6042 = vmatpush.bf16.msra.mxu0 %v4985
    %6043 = vmatpush.bf16.msra.mxu0 %v4981
    %6044 = vmatpush.bf16.msra.mxu0 %v4977
    %6045 = vmatpush.bf16.msra.mxu0 %v4973
    %6046 = vmatpush.bf16.msra.mxu0 %v4969
    %6047 = vmatpush.bf16.msra.mxu0 %v4965
    %6048 = vmatpush.bf16.msra.mxu0 %v4961
    %6049 = vmatmul.bf16.gmra.mxu0 %v4311
    %v6050 = vpop.f32.mrf.mxu0
    %v6051 = vadd.f32 %v5962, %v6050
    %v6052 = vpop.f32.mrf.mxu0
    %v6053 = vadd.f32 %v5964, %v6052
    %6054 = vmatmul.bf16.gmra.mxu0 %v4315
    %v6055 = vpop.f32.mrf.mxu0
    %v6056 = vadd.f32 %v5967, %v6055
    %v6057 = vpop.f32.mrf.mxu0
    %v6058 = vadd.f32 %v5969, %v6057
    %6059 = vmatmul.bf16.gmra.mxu0 %v4319
    %v6060 = vpop.f32.mrf.mxu0
    %v6061 = vadd.f32 %v5972, %v6060
    %v6062 = vpop.f32.mrf.mxu0
    %v6063 = vadd.f32 %v5974, %v6062
    %6064 = vmatmul.bf16.gmra.mxu0 %v4323
    %v6065 = vpop.f32.mrf.mxu0
    %v6066 = vadd.f32 %v5977, %v6065
    %v6067 = vpop.f32.mrf.mxu0
    %v6068 = vadd.f32 %v5979, %v6067
    %6069 = vmatmul.bf16.gmra.mxu0 %v4327
    %v6070 = vpop.f32.mrf.mxu0
    %v6071 = vadd.f32 %v5982, %v6070
    %v6072 = vpop.f32.mrf.mxu0
    %v6073 = vadd.f32 %v5984, %v6072
    %6074 = vmatmul.bf16.gmra.mxu0 %v4331
    %v6075 = vpop.f32.mrf.mxu0
    %v6076 = vadd.f32 %v5987, %v6075
    %v6077 = vpop.f32.mrf.mxu0
    %v6078 = vadd.f32 %v5989, %v6077
    %6079 = vmatmul.bf16.gmra.mxu0 %v4335
    %v6080 = vpop.f32.mrf.mxu0
    %v6081 = vadd.f32 %v5992, %v6080
    %v6082 = vpop.f32.mrf.mxu0
    %v6083 = vadd.f32 %v5994, %v6082
    %6084 = vmatmul.bf16.gmra.mxu0 %v4339
    %v6085 = vpop.f32.mrf.mxu0
    %v6086 = vadd.f32 %v5997, %v6085
    %v6087 = vpop.f32.mrf.mxu0
    %v6088 = vadd.f32 %v5999, %v6087
    %6089 = vmatmul.bf16.gmra.mxu0 %v4343
    %v6090 = vpop.f32.mrf.mxu0
    %v6091 = vadd.f32 %v6002, %v6090
    %v6092 = vpop.f32.mrf.mxu0
    %v6093 = vadd.f32 %v6004, %v6092
    %6094 = vmatmul.bf16.gmra.mxu0 %v4347
    %v6095 = vpop.f32.mrf.mxu0
    %v6096 = vadd.f32 %v6007, %v6095
    %v6097 = vpop.f32.mrf.mxu0
    %v6098 = vadd.f32 %v6009, %v6097
    %6099 = vmatmul.bf16.gmra.mxu0 %v4351
    %v6100 = vpop.f32.mrf.mxu0
    %v6101 = vadd.f32 %v6012, %v6100
    %v6102 = vpop.f32.mrf.mxu0
    %v6103 = vadd.f32 %v6014, %v6102
    %6104 = vmatmul.bf16.gmra.mxu0 %v4355
    %v6105 = vpop.f32.mrf.mxu0
    %v6106 = vadd.f32 %v6017, %v6105
    %v6107 = vpop.f32.mrf.mxu0
    %v6108 = vadd.f32 %v6019, %v6107
    %6109 = vmatmul.bf16.gmra.mxu0 %v4359
    %v6110 = vpop.f32.mrf.mxu0
    %v6111 = vadd.f32 %v6022, %v6110
    %v6112 = vpop.f32.mrf.mxu0
    %v6113 = vadd.f32 %v6024, %v6112
    %6114 = vmatmul.bf16.gmra.mxu0 %v4363
    %v6115 = vpop.f32.mrf.mxu0
    %v6116 = vadd.f32 %v6027, %v6115
    %v6117 = vpop.f32.mrf.mxu0
    %v6118 = vadd.f32 %v6029, %v6117
    %6119 = vmatmul.bf16.gmra.mxu0 %v4367
    %v6120 = vpop.f32.mrf.mxu0
    %v6121 = vadd.f32 %v6032, %v6120
    %v6122 = vpop.f32.mrf.mxu0
    %v6123 = vadd.f32 %v6034, %v6122
    %6124 = vmatmul.bf16.gmra.mxu0 %v4371
    %v6125 = vpop.f32.mrf.mxu0
    %v6126 = vadd.f32 %v6037, %v6125
    %v6127 = vpop.f32.mrf.mxu0
    %v6128 = vadd.f32 %v6039, %v6127
    %6129 = vdwg.mxu0
    %6130 = vmatpush.bf16.msra.mxu0 %v5021
    %6131 = vmatpush.bf16.msra.mxu0 %v5017
    %6132 = vmatpush.bf16.msra.mxu0 %v5013
    %6133 = vmatpush.bf16.msra.mxu0 %v5009
    %6134 = vmatpush.bf16.msra.mxu0 %v5005
    %6135 = vmatpush.bf16.msra.mxu0 %v5001
    %6136 = vmatpush.bf16.msra.mxu0 %v4997
    %6137 = vmatpush.bf16.msra.mxu0 %v4993
    %6138 = vmatmul.bf16.gmra.mxu0 %v4312
    %v6139 = vpop.f32.mrf.mxu0
    %v6140 = vadd.f32 %v6051, %v6139
    %v6141 = vpop.f32.mrf.mxu0
    %v6142 = vadd.f32 %v6053, %v6141
    %6143 = vmatmul.bf16.gmra.mxu0 %v4316
    %v6144 = vpop.f32.mrf.mxu0
    %v6145 = vadd.f32 %v6056, %v6144
    %v6146 = vpop.f32.mrf.mxu0
    %v6147 = vadd.f32 %v6058, %v6146
    %6148 = vmatmul.bf16.gmra.mxu0 %v4320
    %v6149 = vpop.f32.mrf.mxu0
    %v6150 = vadd.f32 %v6061, %v6149
    %v6151 = vpop.f32.mrf.mxu0
    %v6152 = vadd.f32 %v6063, %v6151
    %6153 = vmatmul.bf16.gmra.mxu0 %v4324
    %v6154 = vpop.f32.mrf.mxu0
    %v6155 = vadd.f32 %v6066, %v6154
    %v6156 = vpop.f32.mrf.mxu0
    %v6157 = vadd.f32 %v6068, %v6156
    %6158 = vmatmul.bf16.gmra.mxu0 %v4328
    %v6159 = vpop.f32.mrf.mxu0
    %v6160 = vadd.f32 %v6071, %v6159
    %v6161 = vpop.f32.mrf.mxu0
    %v6162 = vadd.f32 %v6073, %v6161
    %6163 = vmatmul.bf16.gmra.mxu0 %v4332
    %v6164 = vpop.f32.mrf.mxu0
    %v6165 = vadd.f32 %v6076, %v6164
    %v6166 = vpop.f32.mrf.mxu0
    %v6167 = vadd.f32 %v6078, %v6166
    %6168 = vmatmul.bf16.gmra.mxu0 %v4336
    %v6169 = vpop.f32.mrf.mxu0
    %v6170 = vadd.f32 %v6081, %v6169
    %v6171 = vpop.f32.mrf.mxu0
    %v6172 = vadd.f32 %v6083, %v6171
    %6173 = vmatmul.bf16.gmra.mxu0 %v4340
    %v6174 = vpop.f32.mrf.mxu0
    %v6175 = vadd.f32 %v6086, %v6174
    %v6176 = vpop.f32.mrf.mxu0
    %v6177 = vadd.f32 %v6088, %v6176
    %6178 = vmatmul.bf16.gmra.mxu0 %v4344
    %v6179 = vpop.f32.mrf.mxu0
    %v6180 = vadd.f32 %v6091, %v6179
    %v6181 = vpop.f32.mrf.mxu0
    %v6182 = vadd.f32 %v6093, %v6181
    %6183 = vmatmul.bf16.gmra.mxu0 %v4348
    %v6184 = vpop.f32.mrf.mxu0
    %v6185 = vadd.f32 %v6096, %v6184
    %v6186 = vpop.f32.mrf.mxu0
    %v6187 = vadd.f32 %v6098, %v6186
    %6188 = vmatmul.bf16.gmra.mxu0 %v4352
    %v6189 = vpop.f32.mrf.mxu0
    %v6190 = vadd.f32 %v6101, %v6189
    %v6191 = vpop.f32.mrf.mxu0
    %v6192 = vadd.f32 %v6103, %v6191
    %6193 = vmatmul.bf16.gmra.mxu0 %v4356
    %v6194 = vpop.f32.mrf.mxu0
    %v6195 = vadd.f32 %v6106, %v6194
    %v6196 = vpop.f32.mrf.mxu0
    %v6197 = vadd.f32 %v6108, %v6196
    %6198 = vmatmul.bf16.gmra.mxu0 %v4360
    %v6199 = vpop.f32.mrf.mxu0
    %v6200 = vadd.f32 %v6111, %v6199
    %v6201 = vpop.f32.mrf.mxu0
    %v6202 = vadd.f32 %v6113, %v6201
    %6203 = vmatmul.bf16.gmra.mxu0 %v4364
    %v6204 = vpop.f32.mrf.mxu0
    %v6205 = vadd.f32 %v6116, %v6204
    %v6206 = vpop.f32.mrf.mxu0
    %v6207 = vadd.f32 %v6118, %v6206
    %6208 = vmatmul.bf16.gmra.mxu0 %v4368
    %v6209 = vpop.f32.mrf.mxu0
    %v6210 = vadd.f32 %v6121, %v6209
    %v6211 = vpop.f32.mrf.mxu0
    %v6212 = vadd.f32 %v6123, %v6211
    %6213 = vmatmul.bf16.gmra.mxu0 %v4372
    %v6214 = vpop.f32.mrf.mxu0
    %v6215 = vadd.f32 %v6126, %v6214
    %v6216 = vpop.f32.mrf.mxu0
    %v6217 = vadd.f32 %v6128, %v6216
    %6218 = vdwg.mxu0
    %6219 = vmatpush.bf16.msra.mxu0 %v4926
    %6220 = vmatpush.bf16.msra.mxu0 %v4922
    %6221 = vmatpush.bf16.msra.mxu0 %v4918
    %6222 = vmatpush.bf16.msra.mxu0 %v4914
    %6223 = vmatpush.bf16.msra.mxu0 %v4910
    %6224 = vmatpush.bf16.msra.mxu0 %v4906
    %6225 = vmatpush.bf16.msra.mxu0 %v4902
    %6226 = vmatpush.bf16.msra.mxu0 %v4898
    %6227 = vmatmul.bf16.gmra.mxu0 %v4309
    %v6228 = vpop.f32.mrf.mxu0
    %v6229 = vadd.f32 %v4506, %v6228
    %v6230 = vpop.f32.mrf.mxu0
    %v6231 = vadd.f32 %v4506, %v6230
    %6232 = vmatmul.bf16.gmra.mxu0 %v4313
    %v6233 = vpop.f32.mrf.mxu0
    %v6234 = vadd.f32 %v4506, %v6233
    %v6235 = vpop.f32.mrf.mxu0
    %v6236 = vadd.f32 %v4506, %v6235
    %6237 = vmatmul.bf16.gmra.mxu0 %v4317
    %v6238 = vpop.f32.mrf.mxu0
    %v6239 = vadd.f32 %v4506, %v6238
    %v6240 = vpop.f32.mrf.mxu0
    %v6241 = vadd.f32 %v4506, %v6240
    %6242 = vmatmul.bf16.gmra.mxu0 %v4321
    %v6243 = vpop.f32.mrf.mxu0
    %v6244 = vadd.f32 %v4506, %v6243
    %v6245 = vpop.f32.mrf.mxu0
    %v6246 = vadd.f32 %v4506, %v6245
    %6247 = vmatmul.bf16.gmra.mxu0 %v4325
    %v6248 = vpop.f32.mrf.mxu0
    %v6249 = vadd.f32 %v4506, %v6248
    %v6250 = vpop.f32.mrf.mxu0
    %v6251 = vadd.f32 %v4506, %v6250
    %6252 = vmatmul.bf16.gmra.mxu0 %v4329
    %v6253 = vpop.f32.mrf.mxu0
    %v6254 = vadd.f32 %v4506, %v6253
    %v6255 = vpop.f32.mrf.mxu0
    %v6256 = vadd.f32 %v4506, %v6255
    %6257 = vmatmul.bf16.gmra.mxu0 %v4333
    %v6258 = vpop.f32.mrf.mxu0
    %v6259 = vadd.f32 %v4506, %v6258
    %v6260 = vpop.f32.mrf.mxu0
    %v6261 = vadd.f32 %v4506, %v6260
    %6262 = vmatmul.bf16.gmra.mxu0 %v4337
    %v6263 = vpop.f32.mrf.mxu0
    %v6264 = vadd.f32 %v4506, %v6263
    %v6265 = vpop.f32.mrf.mxu0
    %v6266 = vadd.f32 %v4506, %v6265
    %6267 = vmatmul.bf16.gmra.mxu0 %v4341
    %v6268 = vpop.f32.mrf.mxu0
    %v6269 = vadd.f32 %v4506, %v6268
    %v6270 = vpop.f32.mrf.mxu0
    %v6271 = vadd.f32 %v4506, %v6270
    %6272 = vmatmul.bf16.gmra.mxu0 %v4345
    %v6273 = vpop.f32.mrf.mxu0
    %v6274 = vadd.f32 %v4506, %v6273
    %v6275 = vpop.f32.mrf.mxu0
    %v6276 = vadd.f32 %v4506, %v6275
    %6277 = vmatmul.bf16.gmra.mxu0 %v4349
    %v6278 = vpop.f32.mrf.mxu0
    %v6279 = vadd.f32 %v4506, %v6278
    %v6280 = vpop.f32.mrf.mxu0
    %v6281 = vadd.f32 %v4506, %v6280
    %6282 = vmatmul.bf16.gmra.mxu0 %v4353
    %v6283 = vpop.f32.mrf.mxu0
    %v6284 = vadd.f32 %v4506, %v6283
    %v6285 = vpop.f32.mrf.mxu0
    %v6286 = vadd.f32 %v4506, %v6285
    %6287 = vmatmul.bf16.gmra.mxu0 %v4357
    %v6288 = vpop.f32.mrf.mxu0
    %v6289 = vadd.f32 %v4506, %v6288
    %v6290 = vpop.f32.mrf.mxu0
    %v6291 = vadd.f32 %v4506, %v6290
    %6292 = vmatmul.bf16.gmra.mxu0 %v4361
    %v6293 = vpop.f32.mrf.mxu0
    %v6294 = vadd.f32 %v4506, %v6293
    %v6295 = vpop.f32.mrf.mxu0
    %v6296 = vadd.f32 %v4506, %v6295
    %6297 = vmatmul.bf16.gmra.mxu0 %v4365
    %v6298 = vpop.f32.mrf.mxu0
    %v6299 = vadd.f32 %v4506, %v6298
    %v6300 = vpop.f32.mrf.mxu0
    %v6301 = vadd.f32 %v4506, %v6300
    %6302 = vmatmul.bf16.gmra.mxu0 %v4369
    %v6303 = vpop.f32.mrf.mxu0
    %v6304 = vadd.f32 %v4506, %v6303
    %v6305 = vpop.f32.mrf.mxu0
    %v6306 = vadd.f32 %v4506, %v6305
    %6307 = vdwg.mxu0
    %6308 = vmatpush.bf16.msra.mxu0 %v4958
    %6309 = vmatpush.bf16.msra.mxu0 %v4954
    %6310 = vmatpush.bf16.msra.mxu0 %v4950
    %6311 = vmatpush.bf16.msra.mxu0 %v4946
    %6312 = vmatpush.bf16.msra.mxu0 %v4942
    %6313 = vmatpush.bf16.msra.mxu0 %v4938
    %6314 = vmatpush.bf16.msra.mxu0 %v4934
    %6315 = vmatpush.bf16.msra.mxu0 %v4930
    %6316 = vmatmul.bf16.gmra.mxu0 %v4310
    %v6317 = vpop.f32.mrf.mxu0
    %v6318 = vadd.f32 %v6229, %v6317
    %v6319 = vpop.f32.mrf.mxu0
    %v6320 = vadd.f32 %v6231, %v6319
    %6321 = vmatmul.bf16.gmra.mxu0 %v4314
    %v6322 = vpop.f32.mrf.mxu0
    %v6323 = vadd.f32 %v6234, %v6322
    %v6324 = vpop.f32.mrf.mxu0
    %v6325 = vadd.f32 %v6236, %v6324
    %6326 = vmatmul.bf16.gmra.mxu0 %v4318
    %v6327 = vpop.f32.mrf.mxu0
    %v6328 = vadd.f32 %v6239, %v6327
    %v6329 = vpop.f32.mrf.mxu0
    %v6330 = vadd.f32 %v6241, %v6329
    %6331 = vmatmul.bf16.gmra.mxu0 %v4322
    %v6332 = vpop.f32.mrf.mxu0
    %v6333 = vadd.f32 %v6244, %v6332
    %v6334 = vpop.f32.mrf.mxu0
    %v6335 = vadd.f32 %v6246, %v6334
    %6336 = vmatmul.bf16.gmra.mxu0 %v4326
    %v6337 = vpop.f32.mrf.mxu0
    %v6338 = vadd.f32 %v6249, %v6337
    %v6339 = vpop.f32.mrf.mxu0
    %v6340 = vadd.f32 %v6251, %v6339
    %6341 = vmatmul.bf16.gmra.mxu0 %v4330
    %v6342 = vpop.f32.mrf.mxu0
    %v6343 = vadd.f32 %v6254, %v6342
    %v6344 = vpop.f32.mrf.mxu0
    %v6345 = vadd.f32 %v6256, %v6344
    %6346 = vmatmul.bf16.gmra.mxu0 %v4334
    %v6347 = vpop.f32.mrf.mxu0
    %v6348 = vadd.f32 %v6259, %v6347
    %v6349 = vpop.f32.mrf.mxu0
    %v6350 = vadd.f32 %v6261, %v6349
    %6351 = vmatmul.bf16.gmra.mxu0 %v4338
    %v6352 = vpop.f32.mrf.mxu0
    %v6353 = vadd.f32 %v6264, %v6352
    %v6354 = vpop.f32.mrf.mxu0
    %v6355 = vadd.f32 %v6266, %v6354
    %6356 = vmatmul.bf16.gmra.mxu0 %v4342
    %v6357 = vpop.f32.mrf.mxu0
    %v6358 = vadd.f32 %v6269, %v6357
    %v6359 = vpop.f32.mrf.mxu0
    %v6360 = vadd.f32 %v6271, %v6359
    %6361 = vmatmul.bf16.gmra.mxu0 %v4346
    %v6362 = vpop.f32.mrf.mxu0
    %v6363 = vadd.f32 %v6274, %v6362
    %v6364 = vpop.f32.mrf.mxu0
    %v6365 = vadd.f32 %v6276, %v6364
    %6366 = vmatmul.bf16.gmra.mxu0 %v4350
    %v6367 = vpop.f32.mrf.mxu0
    %v6368 = vadd.f32 %v6279, %v6367
    %v6369 = vpop.f32.mrf.mxu0
    %v6370 = vadd.f32 %v6281, %v6369
    %6371 = vmatmul.bf16.gmra.mxu0 %v4354
    %v6372 = vpop.f32.mrf.mxu0
    %v6373 = vadd.f32 %v6284, %v6372
    %v6374 = vpop.f32.mrf.mxu0
    %v6375 = vadd.f32 %v6286, %v6374
    %6376 = vmatmul.bf16.gmra.mxu0 %v4358
    %v6377 = vpop.f32.mrf.mxu0
    %v6378 = vadd.f32 %v6289, %v6377
    %v6379 = vpop.f32.mrf.mxu0
    %v6380 = vadd.f32 %v6291, %v6379
    %6381 = vmatmul.bf16.gmra.mxu0 %v4362
    %v6382 = vpop.f32.mrf.mxu0
    %v6383 = vadd.f32 %v6294, %v6382
    %v6384 = vpop.f32.mrf.mxu0
    %v6385 = vadd.f32 %v6296, %v6384
    %6386 = vmatmul.bf16.gmra.mxu0 %v4366
    %v6387 = vpop.f32.mrf.mxu0
    %v6388 = vadd.f32 %v6299, %v6387
    %v6389 = vpop.f32.mrf.mxu0
    %v6390 = vadd.f32 %v6301, %v6389
    %6391 = vmatmul.bf16.gmra.mxu0 %v4370
    %v6392 = vpop.f32.mrf.mxu0
    %v6393 = vadd.f32 %v6304, %v6392
    %v6394 = vpop.f32.mrf.mxu0
    %v6395 = vadd.f32 %v6306, %v6394
    %6396 = vdwg.mxu0
    %6397 = vmatpush.bf16.msra.mxu0 %v4990
    %6398 = vmatpush.bf16.msra.mxu0 %v4986
    %6399 = vmatpush.bf16.msra.mxu0 %v4982
    %6400 = vmatpush.bf16.msra.mxu0 %v4978
    %6401 = vmatpush.bf16.msra.mxu0 %v4974
    %6402 = vmatpush.bf16.msra.mxu0 %v4970
    %6403 = vmatpush.bf16.msra.mxu0 %v4966
    %6404 = vmatpush.bf16.msra.mxu0 %v4962
    %6405 = vmatmul.bf16.gmra.mxu0 %v4311
    %v6406 = vpop.f32.mrf.mxu0
    %v6407 = vadd.f32 %v6318, %v6406
    %v6408 = vpop.f32.mrf.mxu0
    %v6409 = vadd.f32 %v6320, %v6408
    %6410 = vmatmul.bf16.gmra.mxu0 %v4315
    %v6411 = vpop.f32.mrf.mxu0
    %v6412 = vadd.f32 %v6323, %v6411
    %v6413 = vpop.f32.mrf.mxu0
    %v6414 = vadd.f32 %v6325, %v6413
    %6415 = vmatmul.bf16.gmra.mxu0 %v4319
    %v6416 = vpop.f32.mrf.mxu0
    %v6417 = vadd.f32 %v6328, %v6416
    %v6418 = vpop.f32.mrf.mxu0
    %v6419 = vadd.f32 %v6330, %v6418
    %6420 = vmatmul.bf16.gmra.mxu0 %v4323
    %v6421 = vpop.f32.mrf.mxu0
    %v6422 = vadd.f32 %v6333, %v6421
    %v6423 = vpop.f32.mrf.mxu0
    %v6424 = vadd.f32 %v6335, %v6423
    %6425 = vmatmul.bf16.gmra.mxu0 %v4327
    %v6426 = vpop.f32.mrf.mxu0
    %v6427 = vadd.f32 %v6338, %v6426
    %v6428 = vpop.f32.mrf.mxu0
    %v6429 = vadd.f32 %v6340, %v6428
    %6430 = vmatmul.bf16.gmra.mxu0 %v4331
    %v6431 = vpop.f32.mrf.mxu0
    %v6432 = vadd.f32 %v6343, %v6431
    %v6433 = vpop.f32.mrf.mxu0
    %v6434 = vadd.f32 %v6345, %v6433
    %6435 = vmatmul.bf16.gmra.mxu0 %v4335
    %v6436 = vpop.f32.mrf.mxu0
    %v6437 = vadd.f32 %v6348, %v6436
    %v6438 = vpop.f32.mrf.mxu0
    %v6439 = vadd.f32 %v6350, %v6438
    %6440 = vmatmul.bf16.gmra.mxu0 %v4339
    %v6441 = vpop.f32.mrf.mxu0
    %v6442 = vadd.f32 %v6353, %v6441
    %v6443 = vpop.f32.mrf.mxu0
    %v6444 = vadd.f32 %v6355, %v6443
    %6445 = vmatmul.bf16.gmra.mxu0 %v4343
    %v6446 = vpop.f32.mrf.mxu0
    %v6447 = vadd.f32 %v6358, %v6446
    %v6448 = vpop.f32.mrf.mxu0
    %v6449 = vadd.f32 %v6360, %v6448
    %6450 = vmatmul.bf16.gmra.mxu0 %v4347
    %v6451 = vpop.f32.mrf.mxu0
    %v6452 = vadd.f32 %v6363, %v6451
    %v6453 = vpop.f32.mrf.mxu0
    %v6454 = vadd.f32 %v6365, %v6453
    %6455 = vmatmul.bf16.gmra.mxu0 %v4351
    %v6456 = vpop.f32.mrf.mxu0
    %v6457 = vadd.f32 %v6368, %v6456
    %v6458 = vpop.f32.mrf.mxu0
    %v6459 = vadd.f32 %v6370, %v6458
    %6460 = vmatmul.bf16.gmra.mxu0 %v4355
    %v6461 = vpop.f32.mrf.mxu0
    %v6462 = vadd.f32 %v6373, %v6461
    %v6463 = vpop.f32.mrf.mxu0
    %v6464 = vadd.f32 %v6375, %v6463
    %6465 = vmatmul.bf16.gmra.mxu0 %v4359
    %v6466 = vpop.f32.mrf.mxu0
    %v6467 = vadd.f32 %v6378, %v6466
    %v6468 = vpop.f32.mrf.mxu0
    %v6469 = vadd.f32 %v6380, %v6468
    %6470 = vmatmul.bf16.gmra.mxu0 %v4363
    %v6471 = vpop.f32.mrf.mxu0
    %v6472 = vadd.f32 %v6383, %v6471
    %v6473 = vpop.f32.mrf.mxu0
    %v6474 = vadd.f32 %v6385, %v6473
    %6475 = vmatmul.bf16.gmra.mxu0 %v4367
    %v6476 = vpop.f32.mrf.mxu0
    %v6477 = vadd.f32 %v6388, %v6476
    %v6478 = vpop.f32.mrf.mxu0
    %v6479 = vadd.f32 %v6390, %v6478
    %6480 = vmatmul.bf16.gmra.mxu0 %v4371
    %v6481 = vpop.f32.mrf.mxu0
    %v6482 = vadd.f32 %v6393, %v6481
    %v6483 = vpop.f32.mrf.mxu0
    %v6484 = vadd.f32 %v6395, %v6483
    %6485 = vdwg.mxu0
    %6486 = vmatpush.bf16.msra.mxu0 %v5022
    %6487 = vmatpush.bf16.msra.mxu0 %v5018
    %6488 = vmatpush.bf16.msra.mxu0 %v5014
    %6489 = vmatpush.bf16.msra.mxu0 %v5010
    %6490 = vmatpush.bf16.msra.mxu0 %v5006
    %6491 = vmatpush.bf16.msra.mxu0 %v5002
    %6492 = vmatpush.bf16.msra.mxu0 %v4998
    %6493 = vmatpush.bf16.msra.mxu0 %v4994
    %6494 = vmatmul.bf16.gmra.mxu0 %v4312
    %v6495 = vpop.f32.mrf.mxu0
    %v6496 = vadd.f32 %v6407, %v6495
    %v6497 = vpop.f32.mrf.mxu0
    %v6498 = vadd.f32 %v6409, %v6497
    %6499 = vmatmul.bf16.gmra.mxu0 %v4316
    %v6500 = vpop.f32.mrf.mxu0
    %v6501 = vadd.f32 %v6412, %v6500
    %v6502 = vpop.f32.mrf.mxu0
    %v6503 = vadd.f32 %v6414, %v6502
    %6504 = vmatmul.bf16.gmra.mxu0 %v4320
    %v6505 = vpop.f32.mrf.mxu0
    %v6506 = vadd.f32 %v6417, %v6505
    %v6507 = vpop.f32.mrf.mxu0
    %v6508 = vadd.f32 %v6419, %v6507
    %6509 = vmatmul.bf16.gmra.mxu0 %v4324
    %v6510 = vpop.f32.mrf.mxu0
    %v6511 = vadd.f32 %v6422, %v6510
    %v6512 = vpop.f32.mrf.mxu0
    %v6513 = vadd.f32 %v6424, %v6512
    %6514 = vmatmul.bf16.gmra.mxu0 %v4328
    %v6515 = vpop.f32.mrf.mxu0
    %v6516 = vadd.f32 %v6427, %v6515
    %v6517 = vpop.f32.mrf.mxu0
    %v6518 = vadd.f32 %v6429, %v6517
    %6519 = vmatmul.bf16.gmra.mxu0 %v4332
    %v6520 = vpop.f32.mrf.mxu0
    %v6521 = vadd.f32 %v6432, %v6520
    %v6522 = vpop.f32.mrf.mxu0
    %v6523 = vadd.f32 %v6434, %v6522
    %6524 = vmatmul.bf16.gmra.mxu0 %v4336
    %v6525 = vpop.f32.mrf.mxu0
    %v6526 = vadd.f32 %v6437, %v6525
    %v6527 = vpop.f32.mrf.mxu0
    %v6528 = vadd.f32 %v6439, %v6527
    %6529 = vmatmul.bf16.gmra.mxu0 %v4340
    %v6530 = vpop.f32.mrf.mxu0
    %v6531 = vadd.f32 %v6442, %v6530
    %v6532 = vpop.f32.mrf.mxu0
    %v6533 = vadd.f32 %v6444, %v6532
    %6534 = vmatmul.bf16.gmra.mxu0 %v4344
    %v6535 = vpop.f32.mrf.mxu0
    %v6536 = vadd.f32 %v6447, %v6535
    %v6537 = vpop.f32.mrf.mxu0
    %v6538 = vadd.f32 %v6449, %v6537
    %6539 = vmatmul.bf16.gmra.mxu0 %v4348
    %v6540 = vpop.f32.mrf.mxu0
    %v6541 = vadd.f32 %v6452, %v6540
    %v6542 = vpop.f32.mrf.mxu0
    %v6543 = vadd.f32 %v6454, %v6542
    %6544 = vmatmul.bf16.gmra.mxu0 %v4352
    %v6545 = vpop.f32.mrf.mxu0
    %v6546 = vadd.f32 %v6457, %v6545
    %v6547 = vpop.f32.mrf.mxu0
    %v6548 = vadd.f32 %v6459, %v6547
    %6549 = vmatmul.bf16.gmra.mxu0 %v4356
    %v6550 = vpop.f32.mrf.mxu0
    %v6551 = vadd.f32 %v6462, %v6550
    %v6552 = vpop.f32.mrf.mxu0
    %v6553 = vadd.f32 %v6464, %v6552
    %6554 = vmatmul.bf16.gmra.mxu0 %v4360
    %v6555 = vpop.f32.mrf.mxu0
    %v6556 = vadd.f32 %v6467, %v6555
    %v6557 = vpop.f32.mrf.mxu0
    %v6558 = vadd.f32 %v6469, %v6557
    %6559 = vmatmul.bf16.gmra.mxu0 %v4364
    %v6560 = vpop.f32.mrf.mxu0
    %v6561 = vadd.f32 %v6472, %v6560
    %v6562 = vpop.f32.mrf.mxu0
    %v6563 = vadd.f32 %v6474, %v6562
    %6564 = vmatmul.bf16.gmra.mxu0 %v4368
    %v6565 = vpop.f32.mrf.mxu0
    %v6566 = vadd.f32 %v6477, %v6565
    %v6567 = vpop.f32.mrf.mxu0
    %v6568 = vadd.f32 %v6479, %v6567
    %6569 = vmatmul.bf16.gmra.mxu0 %v4372
    %v6570 = vpop.f32.mrf.mxu0
    %v6571 = vadd.f32 %v6482, %v6570
    %v6572 = vpop.f32.mrf.mxu0
    %v6573 = vadd.f32 %v6484, %v6572
    %6574 = vdwg.mxu0
    %v6575 = vmax.f32 %v5428, 0.0
    %v6576 = vmax.f32 %v5784, 0.0
    %v6577 = vmax.f32 %v6140, 0.0
    %v6578 = vmax.f32 %v6496, 0.0
    %v6579 = vmax.f32 %v5430, 0.0
    %v6580 = vmax.f32 %v5786, 0.0
    %v6581 = vmax.f32 %v6142, 0.0
    %v6582 = vmax.f32 %v6498, 0.0
    %v6583 = vmax.f32 %v5433, 0.0
    %v6584 = vmax.f32 %v5789, 0.0
    %v6585 = vmax.f32 %v6145, 0.0
    %v6586 = vmax.f32 %v6501, 0.0
    %v6587 = vmax.f32 %v5435, 0.0
    %v6588 = vmax.f32 %v5791, 0.0
    %v6589 = vmax.f32 %v6147, 0.0
    %v6590 = vmax.f32 %v6503, 0.0
    %v6591 = vmax.f32 %v5438, 0.0
    %v6592 = vmax.f32 %v5794, 0.0
    %v6593 = vmax.f32 %v6150, 0.0
    %v6594 = vmax.f32 %v6506, 0.0
    %v6595 = vmax.f32 %v5440, 0.0
    %v6596 = vmax.f32 %v5796, 0.0
    %v6597 = vmax.f32 %v6152, 0.0
    %v6598 = vmax.f32 %v6508, 0.0
    %v6599 = vmax.f32 %v5443, 0.0
    %v6600 = vmax.f32 %v5799, 0.0
    %v6601 = vmax.f32 %v6155, 0.0
    %v6602 = vmax.f32 %v6511, 0.0
    %v6603 = vmax.f32 %v5445, 0.0
    %v6604 = vmax.f32 %v5801, 0.0
    %v6605 = vmax.f32 %v6157, 0.0
    %v6606 = vmax.f32 %v6513, 0.0
    %v6607 = vmax.f32 %v5448, 0.0
    %v6608 = vmax.f32 %v5804, 0.0
    %v6609 = vmax.f32 %v6160, 0.0
    %v6610 = vmax.f32 %v6516, 0.0
    %v6611 = vmax.f32 %v5450, 0.0
    %v6612 = vmax.f32 %v5806, 0.0
    %v6613 = vmax.f32 %v6162, 0.0
    %v6614 = vmax.f32 %v6518, 0.0
    %v6615 = vmax.f32 %v5453, 0.0
    %v6616 = vmax.f32 %v5809, 0.0
    %v6617 = vmax.f32 %v6165, 0.0
    %v6618 = vmax.f32 %v6521, 0.0
    %v6619 = vmax.f32 %v5455, 0.0
    %v6620 = vmax.f32 %v5811, 0.0
    %v6621 = vmax.f32 %v6167, 0.0
    %v6622 = vmax.f32 %v6523, 0.0
    %v6623 = vmax.f32 %v5458, 0.0
    %v6624 = vmax.f32 %v5814, 0.0
    %v6625 = vmax.f32 %v6170, 0.0
    %v6626 = vmax.f32 %v6526, 0.0
    %v6627 = vmax.f32 %v5460, 0.0
    %v6628 = vmax.f32 %v5816, 0.0
    %v6629 = vmax.f32 %v6172, 0.0
    %v6630 = vmax.f32 %v6528, 0.0
    %v6631 = vmax.f32 %v5463, 0.0
    %v6632 = vmax.f32 %v5819, 0.0
    %v6633 = vmax.f32 %v6175, 0.0
    %v6634 = vmax.f32 %v6531, 0.0
    %v6635 = vmax.f32 %v5465, 0.0
    %v6636 = vmax.f32 %v5821, 0.0
    %v6637 = vmax.f32 %v6177, 0.0
    %v6638 = vmax.f32 %v6533, 0.0
    %v6639 = vmax.f32 %v5468, 0.0
    %v6640 = vmax.f32 %v5824, 0.0
    %v6641 = vmax.f32 %v6180, 0.0
    %v6642 = vmax.f32 %v6536, 0.0
    %v6643 = vmax.f32 %v5470, 0.0
    %v6644 = vmax.f32 %v5826, 0.0
    %v6645 = vmax.f32 %v6182, 0.0
    %v6646 = vmax.f32 %v6538, 0.0
    %v6647 = vmax.f32 %v5473, 0.0
    %v6648 = vmax.f32 %v5829, 0.0
    %v6649 = vmax.f32 %v6185, 0.0
    %v6650 = vmax.f32 %v6541, 0.0
    %v6651 = vmax.f32 %v5475, 0.0
    %v6652 = vmax.f32 %v5831, 0.0
    %v6653 = vmax.f32 %v6187, 0.0
    %v6654 = vmax.f32 %v6543, 0.0
    %v6655 = vmax.f32 %v5478, 0.0
    %v6656 = vmax.f32 %v5834, 0.0
    %v6657 = vmax.f32 %v6190, 0.0
    %v6658 = vmax.f32 %v6546, 0.0
    %v6659 = vmax.f32 %v5480, 0.0
    %v6660 = vmax.f32 %v5836, 0.0
    %v6661 = vmax.f32 %v6192, 0.0
    %v6662 = vmax.f32 %v6548, 0.0
    %v6663 = vmax.f32 %v5483, 0.0
    %v6664 = vmax.f32 %v5839, 0.0
    %v6665 = vmax.f32 %v6195, 0.0
    %v6666 = vmax.f32 %v6551, 0.0
    %v6667 = vmax.f32 %v5485, 0.0
    %v6668 = vmax.f32 %v5841, 0.0
    %v6669 = vmax.f32 %v6197, 0.0
    %v6670 = vmax.f32 %v6553, 0.0
    %v6671 = vmax.f32 %v5488, 0.0
    %v6672 = vmax.f32 %v5844, 0.0
    %v6673 = vmax.f32 %v6200, 0.0
    %v6674 = vmax.f32 %v6556, 0.0
    %v6675 = vmax.f32 %v5490, 0.0
    %v6676 = vmax.f32 %v5846, 0.0
    %v6677 = vmax.f32 %v6202, 0.0
    %v6678 = vmax.f32 %v6558, 0.0
    %v6679 = vmax.f32 %v5493, 0.0
    %v6680 = vmax.f32 %v5849, 0.0
    %v6681 = vmax.f32 %v6205, 0.0
    %v6682 = vmax.f32 %v6561, 0.0
    %v6683 = vmax.f32 %v5495, 0.0
    %v6684 = vmax.f32 %v5851, 0.0
    %v6685 = vmax.f32 %v6207, 0.0
    %v6686 = vmax.f32 %v6563, 0.0
    %v6687 = vmax.f32 %v5498, 0.0
    %v6688 = vmax.f32 %v5854, 0.0
    %v6689 = vmax.f32 %v6210, 0.0
    %v6690 = vmax.f32 %v6566, 0.0
    %v6691 = vmax.f32 %v5500, 0.0
    %v6692 = vmax.f32 %v5856, 0.0
    %v6693 = vmax.f32 %v6212, 0.0
    %v6694 = vmax.f32 %v6568, 0.0
    %v6695 = vmax.f32 %v5503, 0.0
    %v6696 = vmax.f32 %v5859, 0.0
    %v6697 = vmax.f32 %v6215, 0.0
    %v6698 = vmax.f32 %v6571, 0.0
    %v6699 = vmax.f32 %v5505, 0.0
    %v6700 = vmax.f32 %v5861, 0.0
    %v6701 = vmax.f32 %v6217, 0.0
    %v6702 = vmax.f32 %v6573, 0.0
    %v6703 = vpack.c.bf16 %v6579, %v6575
    %v6704 = vpack.c.bf16 %v6580, %v6576
    %v6705 = vpack.c.bf16 %v6581, %v6577
    %v6706 = vpack.c.bf16 %v6582, %v6578
    %v6707 = vpack.c.bf16 %v6587, %v6583
    %v6708 = vpack.c.bf16 %v6588, %v6584
    %v6709 = vpack.c.bf16 %v6589, %v6585
    %v6710 = vpack.c.bf16 %v6590, %v6586
    %v6711 = vpack.c.bf16 %v6595, %v6591
    %v6712 = vpack.c.bf16 %v6596, %v6592
    %v6713 = vpack.c.bf16 %v6597, %v6593
    %v6714 = vpack.c.bf16 %v6598, %v6594
    %v6715 = vpack.c.bf16 %v6603, %v6599
    %v6716 = vpack.c.bf16 %v6604, %v6600
    %v6717 = vpack.c.bf16 %v6605, %v6601
    %v6718 = vpack.c.bf16 %v6606, %v6602
    %v6719 = vpack.c.bf16 %v6611, %v6607
    %v6720 = vpack.c.bf16 %v6612, %v6608
    %v6721 = vpack.c.bf16 %v6613, %v6609
    %v6722 = vpack.c.bf16 %v6614, %v6610
    %v6723 = vpack.c.bf16 %v6619, %v6615
    %v6724 = vpack.c.bf16 %v6620, %v6616
    %v6725 = vpack.c.bf16 %v6621, %v6617
    %v6726 = vpack.c.bf16 %v6622, %v6618
    %v6727 = vpack.c.bf16 %v6627, %v6623
    %v6728 = vpack.c.bf16 %v6628, %v6624
    %v6729 = vpack.c.bf16 %v6629, %v6625
    %v6730 = vpack.c.bf16 %v6630, %v6626
    %v6731 = vpack.c.bf16 %v6635, %v6631
    %v6732 = vpack.c.bf16 %v6636, %v6632
    %v6733 = vpack.c.bf16 %v6637, %v6633
    %v6734 = vpack.c.bf16 %v6638, %v6634
    %v6735 = vpack.c.bf16 %v6643, %v6639
    %v6736 = vpack.c.bf16 %v6644, %v6640
    %v6737 = vpack.c.bf16 %v6645, %v6641
    %v6738 = vpack.c.bf16 %v6646, %v6642
    %v6739 = vpack.c.bf16 %v6651, %v6647
    %v6740 = vpack.c.bf16 %v6652, %v6648
    %v6741 = vpack.c.bf16 %v6653, %v6649
    %v6742 = vpack.c.bf16 %v6654, %v6650
    %v6743 = vpack.c.bf16 %v6659, %v6655
    %v6744 = vpack.c.bf16 %v6660, %v6656
    %v6745 = vpack.c.bf16 %v6661, %v6657
    %v6746 = vpack.c.bf16 %v6662, %v6658
    %v6747 = vpack.c.bf16 %v6667, %v6663
    %v6748 = vpack.c.bf16 %v6668, %v6664
    %v6749 = vpack.c.bf16 %v6669, %v6665
    %v6750 = vpack.c.bf16 %v6670, %v6666
    %v6751 = vpack.c.bf16 %v6675, %v6671
    %v6752 = vpack.c.bf16 %v6676, %v6672
    %v6753 = vpack.c.bf16 %v6677, %v6673
    %v6754 = vpack.c.bf16 %v6678, %v6674
    %v6755 = vpack.c.bf16 %v6683, %v6679
    %v6756 = vpack.c.bf16 %v6684, %v6680
    %v6757 = vpack.c.bf16 %v6685, %v6681
    %v6758 = vpack.c.bf16 %v6686, %v6682
    %v6759 = vpack.c.bf16 %v6691, %v6687
    %v6760 = vpack.c.bf16 %v6692, %v6688
    %v6761 = vpack.c.bf16 %v6693, %v6689
    %v6762 = vpack.c.bf16 %v6694, %v6690
    %v6763 = vpack.c.bf16 %v6699, %v6695
    %v6764 = vpack.c.bf16 %v6700, %v6696
    %v6765 = vpack.c.bf16 %v6701, %v6697
    %v6766 = vpack.c.bf16 %v6702, %v6698
    %v6767 = vld [vmem:[#allocation11] sm:$0xf]
    %v6768 = vld [vmem:[#allocation11 + $0x4] sm:$0xf]
    %v6769 = vld [vmem:[#allocation11 + $0x8] sm:$0xf]
    %v6770 = vld [vmem:[#allocation11 + $0xc] sm:$0xf]
    %v6771 = vld [vmem:[#allocation11 + $0x10] sm:$0xf]
    %v6772 = vld [vmem:[#allocation11 + $0x14] sm:$0xf]
    %v6773 = vld [vmem:[#allocation11 + $0x18] sm:$0xf]
    %v6774 = vld [vmem:[#allocation11 + $0x1c] sm:$0xf]
    %v6775 = vld [vmem:[#allocation11 + $0x20] sm:$0xf]
    %v6776 = vld [vmem:[#allocation11 + $0x24] sm:$0xf]
    %v6777 = vld [vmem:[#allocation11 + $0x28] sm:$0xf]
    %v6778 = vld [vmem:[#allocation11 + $0x2c] sm:$0xf]
    %v6779 = vld [vmem:[#allocation11 + $0x30] sm:$0xf]
    %v6780 = vld [vmem:[#allocation11 + $0x34] sm:$0xf]
    %v6781 = vld [vmem:[#allocation11 + $0x38] sm:$0xf]
    %v6782 = vld [vmem:[#allocation11 + $0x3c] sm:$0xf]
    %v6783 = vld [vmem:[#allocation11 + $0x40] sm:$0xf]
    %v6784 = vld [vmem:[#allocation11 + $0x44] sm:$0xf]
    %v6785 = vld [vmem:[#allocation11 + $0x48] sm:$0xf]
    %v6786 = vld [vmem:[#allocation11 + $0x4c] sm:$0xf]
    %v6787 = vld [vmem:[#allocation11 + $0x50] sm:$0xf]
    %v6788 = vld [vmem:[#allocation11 + $0x54] sm:$0xf]
    %v6789 = vld [vmem:[#allocation11 + $0x58] sm:$0xf]
    %v6790 = vld [vmem:[#allocation11 + $0x5c] sm:$0xf]
    %v6791 = vld [vmem:[#allocation11 + $0x60] sm:$0xf]
    %v6792 = vld [vmem:[#allocation11 + $0x64] sm:$0xf]
    %v6793 = vld [vmem:[#allocation11 + $0x68] sm:$0xf]
    %v6794 = vld [vmem:[#allocation11 + $0x6c] sm:$0xf]
    %v6795 = vld [vmem:[#allocation11 + $0x70] sm:$0xf]
    %v6796 = vld [vmem:[#allocation11 + $0x74] sm:$0xf]
    %v6797 = vld [vmem:[#allocation11 + $0x78] sm:$0xf]
    %v6798 = vld [vmem:[#allocation11 + $0x7c] sm:$0xf]
    %v6799 = vld [vmem:[#allocation11 + $0x80] sm:$0xf]
    %v6800 = vld [vmem:[#allocation11 + $0x84] sm:$0xf]
    %v6801 = vld [vmem:[#allocation11 + $0x88] sm:$0xf]
    %v6802 = vld [vmem:[#allocation11 + $0x8c] sm:$0xf]
    %v6803 = vld [vmem:[#allocation11 + $0x90] sm:$0xf]
    %v6804 = vld [vmem:[#allocation11 + $0x94] sm:$0xf]
    %v6805 = vld [vmem:[#allocation11 + $0x98] sm:$0xf]
    %v6806 = vld [vmem:[#allocation11 + $0x9c] sm:$0xf]
    %v6807 = vld [vmem:[#allocation11 + $0xa0] sm:$0xf]
    %v6808 = vld [vmem:[#allocation11 + $0xa4] sm:$0xf]
    %v6809 = vld [vmem:[#allocation11 + $0xa8] sm:$0xf]
    %v6810 = vld [vmem:[#allocation11 + $0xac] sm:$0xf]
    %v6811 = vld [vmem:[#allocation11 + $0xb0] sm:$0xf]
    %v6812 = vld [vmem:[#allocation11 + $0xb4] sm:$0xf]
    %v6813 = vld [vmem:[#allocation11 + $0xb8] sm:$0xf]
    %v6814 = vld [vmem:[#allocation11 + $0xbc] sm:$0xf]
    %v6815 = vld [vmem:[#allocation11 + $0xc0] sm:$0xf]
    %v6816 = vld [vmem:[#allocation11 + $0xc4] sm:$0xf]
    %v6817 = vld [vmem:[#allocation11 + $0xc8] sm:$0xf]
    %v6818 = vld [vmem:[#allocation11 + $0xcc] sm:$0xf]
    %v6819 = vld [vmem:[#allocation11 + $0xd0] sm:$0xf]
    %v6820 = vld [vmem:[#allocation11 + $0xd4] sm:$0xf]
    %v6821 = vld [vmem:[#allocation11 + $0xd8] sm:$0xf]
    %v6822 = vld [vmem:[#allocation11 + $0xdc] sm:$0xf]
    %v6823 = vld [vmem:[#allocation11 + $0xe0] sm:$0xf]
    %v6824 = vld [vmem:[#allocation11 + $0xe4] sm:$0xf]
    %v6825 = vld [vmem:[#allocation11 + $0xe8] sm:$0xf]
    %v6826 = vld [vmem:[#allocation11 + $0xec] sm:$0xf]
    %v6827 = vld [vmem:[#allocation11 + $0xf0] sm:$0xf]
    %v6828 = vld [vmem:[#allocation11 + $0xf4] sm:$0xf]
    %v6829 = vld [vmem:[#allocation11 + $0xf8] sm:$0xf]
    %v6830 = vld [vmem:[#allocation11 + $0xfc] sm:$0xf]
    %v6831 = vld [vmem:[%s6] sm:$0x1]
    %v6833 = vperm.slane %v6831, 0
    %v6899 = vunpack.c.l.b16 %v6767
    %v6900 = vunpack.c.l.b16 %v6768
    %v6901 = vunpack.c.l.b16 %v6769
    %v6902 = vunpack.c.l.b16 %v6770
    %v6903 = vunpack.c.l.b16 %v6771
    %v6904 = vunpack.c.l.b16 %v6772
    %v6905 = vunpack.c.l.b16 %v6773
    %v6906 = vunpack.c.l.b16 %v6774
    %v6907 = vunpack.c.l.b16 %v6775
    %v6908 = vunpack.c.l.b16 %v6776
    %v6909 = vunpack.c.l.b16 %v6777
    %v6910 = vunpack.c.l.b16 %v6778
    %v6911 = vunpack.c.l.b16 %v6779
    %v6912 = vunpack.c.l.b16 %v6780
    %v6913 = vunpack.c.l.b16 %v6781
    %v6914 = vunpack.c.l.b16 %v6782
    %v6915 = vunpack.c.l.b16 %v6783
    %v6916 = vunpack.c.l.b16 %v6784
    %v6917 = vunpack.c.l.b16 %v6785
    %v6918 = vunpack.c.l.b16 %v6786
    %v6919 = vunpack.c.l.b16 %v6787
    %v6920 = vunpack.c.l.b16 %v6788
    %v6921 = vunpack.c.l.b16 %v6789
    %v6922 = vunpack.c.l.b16 %v6790
    %v6923 = vunpack.c.l.b16 %v6791
    %v6924 = vunpack.c.l.b16 %v6792
    %v6925 = vunpack.c.l.b16 %v6793
    %v6926 = vunpack.c.l.b16 %v6794
    %v6927 = vunpack.c.l.b16 %v6795
    %v6928 = vunpack.c.l.b16 %v6796
    %v6929 = vunpack.c.l.b16 %v6797
    %v6930 = vunpack.c.l.b16 %v6798
    %v6931 = vunpack.c.l.b16 %v6799
    %v6932 = vunpack.c.l.b16 %v6800
    %v6933 = vunpack.c.l.b16 %v6801
    %v6934 = vunpack.c.l.b16 %v6802
    %v6935 = vunpack.c.l.b16 %v6803
    %v6936 = vunpack.c.l.b16 %v6804
    %v6937 = vunpack.c.l.b16 %v6805
    %v6938 = vunpack.c.l.b16 %v6806
    %v6939 = vunpack.c.l.b16 %v6807
    %v6940 = vunpack.c.l.b16 %v6808
    %v6941 = vunpack.c.l.b16 %v6809
    %v6942 = vunpack.c.l.b16 %v6810
    %v6943 = vunpack.c.l.b16 %v6811
    %v6944 = vunpack.c.l.b16 %v6812
    %v6945 = vunpack.c.l.b16 %v6813
    %v6946 = vunpack.c.l.b16 %v6814
    %v6947 = vunpack.c.l.b16 %v6815
    %v6948 = vunpack.c.l.b16 %v6816
    %v6949 = vunpack.c.l.b16 %v6817
    %v6950 = vunpack.c.l.b16 %v6818
    %v6951 = vunpack.c.l.b16 %v6819
    %v6952 = vunpack.c.l.b16 %v6820
    %v6953 = vunpack.c.l.b16 %v6821
    %v6954 = vunpack.c.l.b16 %v6822
    %v6955 = vunpack.c.l.b16 %v6823
    %v6956 = vunpack.c.l.b16 %v6824
    %v6957 = vunpack.c.l.b16 %v6825
    %v6958 = vunpack.c.l.b16 %v6826
    %v6959 = vunpack.c.l.b16 %v6827
    %v6960 = vunpack.c.l.b16 %v6828
    %v6961 = vunpack.c.l.b16 %v6829
    %v6962 = vunpack.c.l.b16 %v6830
    %v6963 = vpack.c.b16 %v6900, %v6899
    %v6964 = vpack.c.b16 %v6902, %v6901
    %v6965 = vpack.c.b16 %v6904, %v6903
    %v6966 = vpack.c.b16 %v6906, %v6905
    %v6967 = vpack.c.b16 %v6908, %v6907
    %v6968 = vpack.c.b16 %v6910, %v6909
    %v6969 = vpack.c.b16 %v6912, %v6911
    %v6970 = vpack.c.b16 %v6914, %v6913
    %v6971 = vpack.c.b16 %v6916, %v6915
    %v6972 = vpack.c.b16 %v6918, %v6917
    %v6973 = vpack.c.b16 %v6920, %v6919
    %v6974 = vpack.c.b16 %v6922, %v6921
    %v6975 = vpack.c.b16 %v6924, %v6923
    %v6976 = vpack.c.b16 %v6926, %v6925
    %v6977 = vpack.c.b16 %v6928, %v6927
    %v6978 = vpack.c.b16 %v6930, %v6929
    %v6979 = vpack.c.b16 %v6932, %v6931
    %v6980 = vpack.c.b16 %v6934, %v6933
    %v6981 = vpack.c.b16 %v6936, %v6935
    %v6982 = vpack.c.b16 %v6938, %v6937
    %v6983 = vpack.c.b16 %v6940, %v6939
    %v6984 = vpack.c.b16 %v6942, %v6941
    %v6985 = vpack.c.b16 %v6944, %v6943
    %v6986 = vpack.c.b16 %v6946, %v6945
    %v6987 = vpack.c.b16 %v6948, %v6947
    %v6988 = vpack.c.b16 %v6950, %v6949
    %v6989 = vpack.c.b16 %v6952, %v6951
    %v6990 = vpack.c.b16 %v6954, %v6953
    %v6991 = vpack.c.b16 %v6956, %v6955
    %v6992 = vpack.c.b16 %v6958, %v6957
    %v6993 = vpack.c.b16 %v6960, %v6959
    %v6994 = vpack.c.b16 %v6962, %v6961
    %7027 = vmatpush.bf16.msra.mxu0 %v6970
    %7028 = vmatpush.bf16.msra.mxu0 %v6969
    %7029 = vmatpush.bf16.msra.mxu0 %v6968
    %7030 = vmatpush.bf16.msra.mxu0 %v6967
    %7031 = vmatpush.bf16.msra.mxu0 %v6966
    %7032 = vmatpush.bf16.msra.mxu0 %v6965
    %7033 = vmatpush.bf16.msra.mxu0 %v6964
    %7034 = vmatpush.bf16.msra.mxu0 %v6963
    %7035 = vmatmul.bf16.gmra.mxu0 %v6703
    %v7036 = vpop.f32.mrf.mxu0
    %v7037 = vadd.f32 %v6833, %v7036
    %v7038 = vpop.f32.mrf.mxu0
    %v7039 = vadd.f32 %v6833, %v7038
    %7040 = vmatmul.bf16.gmra.mxu0 %v6707
    %v7041 = vpop.f32.mrf.mxu0
    %v7042 = vadd.f32 %v6833, %v7041
    %v7043 = vpop.f32.mrf.mxu0
    %v7044 = vadd.f32 %v6833, %v7043
    %7045 = vmatmul.bf16.gmra.mxu0 %v6711
    %v7046 = vpop.f32.mrf.mxu0
    %v7047 = vadd.f32 %v6833, %v7046
    %v7048 = vpop.f32.mrf.mxu0
    %v7049 = vadd.f32 %v6833, %v7048
    %7050 = vmatmul.bf16.gmra.mxu0 %v6715
    %v7051 = vpop.f32.mrf.mxu0
    %v7052 = vadd.f32 %v6833, %v7051
    %v7053 = vpop.f32.mrf.mxu0
    %v7054 = vadd.f32 %v6833, %v7053
    %7055 = vmatmul.bf16.gmra.mxu0 %v6719
    %v7056 = vpop.f32.mrf.mxu0
    %v7057 = vadd.f32 %v6833, %v7056
    %v7058 = vpop.f32.mrf.mxu0
    %v7059 = vadd.f32 %v6833, %v7058
    %7060 = vmatmul.bf16.gmra.mxu0 %v6723
    %v7061 = vpop.f32.mrf.mxu0
    %v7062 = vadd.f32 %v6833, %v7061
    %v7063 = vpop.f32.mrf.mxu0
    %v7064 = vadd.f32 %v6833, %v7063
    %7065 = vmatmul.bf16.gmra.mxu0 %v6727
    %v7066 = vpop.f32.mrf.mxu0
    %v7067 = vadd.f32 %v6833, %v7066
    %v7068 = vpop.f32.mrf.mxu0
    %v7069 = vadd.f32 %v6833, %v7068
    %7070 = vmatmul.bf16.gmra.mxu0 %v6731
    %v7071 = vpop.f32.mrf.mxu0
    %v7072 = vadd.f32 %v6833, %v7071
    %v7073 = vpop.f32.mrf.mxu0
    %v7074 = vadd.f32 %v6833, %v7073
    %7075 = vmatmul.bf16.gmra.mxu0 %v6735
    %v7076 = vpop.f32.mrf.mxu0
    %v7077 = vadd.f32 %v6833, %v7076
    %v7078 = vpop.f32.mrf.mxu0
    %v7079 = vadd.f32 %v6833, %v7078
    %7080 = vmatmul.bf16.gmra.mxu0 %v6739
    %v7081 = vpop.f32.mrf.mxu0
    %v7082 = vadd.f32 %v6833, %v7081
    %v7083 = vpop.f32.mrf.mxu0
    %v7084 = vadd.f32 %v6833, %v7083
    %7085 = vmatmul.bf16.gmra.mxu0 %v6743
    %v7086 = vpop.f32.mrf.mxu0
    %v7087 = vadd.f32 %v6833, %v7086
    %v7088 = vpop.f32.mrf.mxu0
    %v7089 = vadd.f32 %v6833, %v7088
    %7090 = vmatmul.bf16.gmra.mxu0 %v6747
    %v7091 = vpop.f32.mrf.mxu0
    %v7092 = vadd.f32 %v6833, %v7091
    %v7093 = vpop.f32.mrf.mxu0
    %v7094 = vadd.f32 %v6833, %v7093
    %7095 = vmatmul.bf16.gmra.mxu0 %v6751
    %v7096 = vpop.f32.mrf.mxu0
    %v7097 = vadd.f32 %v6833, %v7096
    %v7098 = vpop.f32.mrf.mxu0
    %v7099 = vadd.f32 %v6833, %v7098
    %7100 = vmatmul.bf16.gmra.mxu0 %v6755
    %v7101 = vpop.f32.mrf.mxu0
    %v7102 = vadd.f32 %v6833, %v7101
    %v7103 = vpop.f32.mrf.mxu0
    %v7104 = vadd.f32 %v6833, %v7103
    %7105 = vmatmul.bf16.gmra.mxu0 %v6759
    %v7106 = vpop.f32.mrf.mxu0
    %v7107 = vadd.f32 %v6833, %v7106
    %v7108 = vpop.f32.mrf.mxu0
    %v7109 = vadd.f32 %v6833, %v7108
    %7110 = vmatmul.bf16.gmra.mxu0 %v6763
    %v7111 = vpop.f32.mrf.mxu0
    %v7112 = vadd.f32 %v6833, %v7111
    %v7113 = vpop.f32.mrf.mxu0
    %v7114 = vadd.f32 %v6833, %v7113
    %7115 = vdwg.mxu0
    %7116 = vmatpush.bf16.msra.mxu0 %v6978
    %7117 = vmatpush.bf16.msra.mxu0 %v6977
    %7118 = vmatpush.bf16.msra.mxu0 %v6976
    %7119 = vmatpush.bf16.msra.mxu0 %v6975
    %7120 = vmatpush.bf16.msra.mxu0 %v6974
    %7121 = vmatpush.bf16.msra.mxu0 %v6973
    %7122 = vmatpush.bf16.msra.mxu0 %v6972
    %7123 = vmatpush.bf16.msra.mxu0 %v6971
    %7124 = vmatmul.bf16.gmra.mxu0 %v6704
    %v7125 = vpop.f32.mrf.mxu0
    %v7126 = vadd.f32 %v7037, %v7125
    %v7127 = vpop.f32.mrf.mxu0
    %v7128 = vadd.f32 %v7039, %v7127
    %7129 = vmatmul.bf16.gmra.mxu0 %v6708
    %v7130 = vpop.f32.mrf.mxu0
    %v7131 = vadd.f32 %v7042, %v7130
    %v7132 = vpop.f32.mrf.mxu0
    %v7133 = vadd.f32 %v7044, %v7132
    %7134 = vmatmul.bf16.gmra.mxu0 %v6712
    %v7135 = vpop.f32.mrf.mxu0
    %v7136 = vadd.f32 %v7047, %v7135
    %v7137 = vpop.f32.mrf.mxu0
    %v7138 = vadd.f32 %v7049, %v7137
    %7139 = vmatmul.bf16.gmra.mxu0 %v6716
    %v7140 = vpop.f32.mrf.mxu0
    %v7141 = vadd.f32 %v7052, %v7140
    %v7142 = vpop.f32.mrf.mxu0
    %v7143 = vadd.f32 %v7054, %v7142
    %7144 = vmatmul.bf16.gmra.mxu0 %v6720
    %v7145 = vpop.f32.mrf.mxu0
    %v7146 = vadd.f32 %v7057, %v7145
    %v7147 = vpop.f32.mrf.mxu0
    %v7148 = vadd.f32 %v7059, %v7147
    %7149 = vmatmul.bf16.gmra.mxu0 %v6724
    %v7150 = vpop.f32.mrf.mxu0
    %v7151 = vadd.f32 %v7062, %v7150
    %v7152 = vpop.f32.mrf.mxu0
    %v7153 = vadd.f32 %v7064, %v7152
    %7154 = vmatmul.bf16.gmra.mxu0 %v6728
    %v7155 = vpop.f32.mrf.mxu0
    %v7156 = vadd.f32 %v7067, %v7155
    %v7157 = vpop.f32.mrf.mxu0
    %v7158 = vadd.f32 %v7069, %v7157
    %7159 = vmatmul.bf16.gmra.mxu0 %v6732
    %v7160 = vpop.f32.mrf.mxu0
    %v7161 = vadd.f32 %v7072, %v7160
    %v7162 = vpop.f32.mrf.mxu0
    %v7163 = vadd.f32 %v7074, %v7162
    %7164 = vmatmul.bf16.gmra.mxu0 %v6736
    %v7165 = vpop.f32.mrf.mxu0
    %v7166 = vadd.f32 %v7077, %v7165
    %v7167 = vpop.f32.mrf.mxu0
    %v7168 = vadd.f32 %v7079, %v7167
    %7169 = vmatmul.bf16.gmra.mxu0 %v6740
    %v7170 = vpop.f32.mrf.mxu0
    %v7171 = vadd.f32 %v7082, %v7170
    %v7172 = vpop.f32.mrf.mxu0
    %v7173 = vadd.f32 %v7084, %v7172
    %7174 = vmatmul.bf16.gmra.mxu0 %v6744
    %v7175 = vpop.f32.mrf.mxu0
    %v7176 = vadd.f32 %v7087, %v7175
    %v7177 = vpop.f32.mrf.mxu0
    %v7178 = vadd.f32 %v7089, %v7177
    %7179 = vmatmul.bf16.gmra.mxu0 %v6748
    %v7180 = vpop.f32.mrf.mxu0
    %v7181 = vadd.f32 %v7092, %v7180
    %v7182 = vpop.f32.mrf.mxu0
    %v7183 = vadd.f32 %v7094, %v7182
    %7184 = vmatmul.bf16.gmra.mxu0 %v6752
    %v7185 = vpop.f32.mrf.mxu0
    %v7186 = vadd.f32 %v7097, %v7185
    %v7187 = vpop.f32.mrf.mxu0
    %v7188 = vadd.f32 %v7099, %v7187
    %7189 = vmatmul.bf16.gmra.mxu0 %v6756
    %v7190 = vpop.f32.mrf.mxu0
    %v7191 = vadd.f32 %v7102, %v7190
    %v7192 = vpop.f32.mrf.mxu0
    %v7193 = vadd.f32 %v7104, %v7192
    %7194 = vmatmul.bf16.gmra.mxu0 %v6760
    %v7195 = vpop.f32.mrf.mxu0
    %v7196 = vadd.f32 %v7107, %v7195
    %v7197 = vpop.f32.mrf.mxu0
    %v7198 = vadd.f32 %v7109, %v7197
    %7199 = vmatmul.bf16.gmra.mxu0 %v6764
    %v7200 = vpop.f32.mrf.mxu0
    %v7201 = vadd.f32 %v7112, %v7200
    %v7202 = vpop.f32.mrf.mxu0
    %v7203 = vadd.f32 %v7114, %v7202
    %7204 = vdwg.mxu0
    %7205 = vmatpush.bf16.msra.mxu0 %v6986
    %7206 = vmatpush.bf16.msra.mxu0 %v6985
    %7207 = vmatpush.bf16.msra.mxu0 %v6984
    %7208 = vmatpush.bf16.msra.mxu0 %v6983
    %7209 = vmatpush.bf16.msra.mxu0 %v6982
    %7210 = vmatpush.bf16.msra.mxu0 %v6981
    %7211 = vmatpush.bf16.msra.mxu0 %v6980
    %7212 = vmatpush.bf16.msra.mxu0 %v6979
    %7213 = vmatmul.bf16.gmra.mxu0 %v6705
    %v7214 = vpop.f32.mrf.mxu0
    %v7215 = vadd.f32 %v7126, %v7214
    %v7216 = vpop.f32.mrf.mxu0
    %v7217 = vadd.f32 %v7128, %v7216
    %7218 = vmatmul.bf16.gmra.mxu0 %v6709
    %v7219 = vpop.f32.mrf.mxu0
    %v7220 = vadd.f32 %v7131, %v7219
    %v7221 = vpop.f32.mrf.mxu0
    %v7222 = vadd.f32 %v7133, %v7221
    %7223 = vmatmul.bf16.gmra.mxu0 %v6713
    %v7224 = vpop.f32.mrf.mxu0
    %v7225 = vadd.f32 %v7136, %v7224
    %v7226 = vpop.f32.mrf.mxu0
    %v7227 = vadd.f32 %v7138, %v7226
    %7228 = vmatmul.bf16.gmra.mxu0 %v6717
    %v7229 = vpop.f32.mrf.mxu0
    %v7230 = vadd.f32 %v7141, %v7229
    %v7231 = vpop.f32.mrf.mxu0
    %v7232 = vadd.f32 %v7143, %v7231
    %7233 = vmatmul.bf16.gmra.mxu0 %v6721
    %v7234 = vpop.f32.mrf.mxu0
    %v7235 = vadd.f32 %v7146, %v7234
    %v7236 = vpop.f32.mrf.mxu0
    %v7237 = vadd.f32 %v7148, %v7236
    %7238 = vmatmul.bf16.gmra.mxu0 %v6725
    %v7239 = vpop.f32.mrf.mxu0
    %v7240 = vadd.f32 %v7151, %v7239
    %v7241 = vpop.f32.mrf.mxu0
    %v7242 = vadd.f32 %v7153, %v7241
    %7243 = vmatmul.bf16.gmra.mxu0 %v6729
    %v7244 = vpop.f32.mrf.mxu0
    %v7245 = vadd.f32 %v7156, %v7244
    %v7246 = vpop.f32.mrf.mxu0
    %v7247 = vadd.f32 %v7158, %v7246
    %7248 = vmatmul.bf16.gmra.mxu0 %v6733
    %v7249 = vpop.f32.mrf.mxu0
    %v7250 = vadd.f32 %v7161, %v7249
    %v7251 = vpop.f32.mrf.mxu0
    %v7252 = vadd.f32 %v7163, %v7251
    %7253 = vmatmul.bf16.gmra.mxu0 %v6737
    %v7254 = vpop.f32.mrf.mxu0
    %v7255 = vadd.f32 %v7166, %v7254
    %v7256 = vpop.f32.mrf.mxu0
    %v7257 = vadd.f32 %v7168, %v7256
    %7258 = vmatmul.bf16.gmra.mxu0 %v6741
    %v7259 = vpop.f32.mrf.mxu0
    %v7260 = vadd.f32 %v7171, %v7259
    %v7261 = vpop.f32.mrf.mxu0
    %v7262 = vadd.f32 %v7173, %v7261
    %7263 = vmatmul.bf16.gmra.mxu0 %v6745
    %v7264 = vpop.f32.mrf.mxu0
    %v7265 = vadd.f32 %v7176, %v7264
    %v7266 = vpop.f32.mrf.mxu0
    %v7267 = vadd.f32 %v7178, %v7266
    %7268 = vmatmul.bf16.gmra.mxu0 %v6749
    %v7269 = vpop.f32.mrf.mxu0
    %v7270 = vadd.f32 %v7181, %v7269
    %v7271 = vpop.f32.mrf.mxu0
    %v7272 = vadd.f32 %v7183, %v7271
    %7273 = vmatmul.bf16.gmra.mxu0 %v6753
    %v7274 = vpop.f32.mrf.mxu0
    %v7275 = vadd.f32 %v7186, %v7274
    %v7276 = vpop.f32.mrf.mxu0
    %v7277 = vadd.f32 %v7188, %v7276
    %7278 = vmatmul.bf16.gmra.mxu0 %v6757
    %v7279 = vpop.f32.mrf.mxu0
    %v7280 = vadd.f32 %v7191, %v7279
    %v7281 = vpop.f32.mrf.mxu0
    %v7282 = vadd.f32 %v7193, %v7281
    %7283 = vmatmul.bf16.gmra.mxu0 %v6761
    %v7284 = vpop.f32.mrf.mxu0
    %v7285 = vadd.f32 %v7196, %v7284
    %v7286 = vpop.f32.mrf.mxu0
    %v7287 = vadd.f32 %v7198, %v7286
    %7288 = vmatmul.bf16.gmra.mxu0 %v6765
    %v7289 = vpop.f32.mrf.mxu0
    %v7290 = vadd.f32 %v7201, %v7289
    %v7291 = vpop.f32.mrf.mxu0
    %v7292 = vadd.f32 %v7203, %v7291
    %7293 = vdwg.mxu0
    %7294 = vmatpush.bf16.msra.mxu0 %v6994
    %7295 = vmatpush.bf16.msra.mxu0 %v6993
    %7296 = vmatpush.bf16.msra.mxu0 %v6992
    %7297 = vmatpush.bf16.msra.mxu0 %v6991
    %7298 = vmatpush.bf16.msra.mxu0 %v6990
    %7299 = vmatpush.bf16.msra.mxu0 %v6989
    %7300 = vmatpush.bf16.msra.mxu0 %v6988
    %7301 = vmatpush.bf16.msra.mxu0 %v6987
    %7302 = vmatmul.bf16.gmra.mxu0 %v6706
    %v7303 = vpop.f32.mrf.mxu0
    %v7304 = vadd.f32 %v7215, %v7303
    %v7305 = vpop.f32.mrf.mxu0
    %v7306 = vadd.f32 %v7217, %v7305
    %7307 = vmatmul.bf16.gmra.mxu0 %v6710
    %v7308 = vpop.f32.mrf.mxu0
    %v7309 = vadd.f32 %v7220, %v7308
    %v7310 = vpop.f32.mrf.mxu0
    %v7311 = vadd.f32 %v7222, %v7310
    %7312 = vmatmul.bf16.gmra.mxu0 %v6714
    %v7313 = vpop.f32.mrf.mxu0
    %v7314 = vadd.f32 %v7225, %v7313
    %v7315 = vpop.f32.mrf.mxu0
    %v7316 = vadd.f32 %v7227, %v7315
    %7317 = vmatmul.bf16.gmra.mxu0 %v6718
    %v7318 = vpop.f32.mrf.mxu0
    %v7319 = vadd.f32 %v7230, %v7318
    %v7320 = vpop.f32.mrf.mxu0
    %v7321 = vadd.f32 %v7232, %v7320
    %7322 = vmatmul.bf16.gmra.mxu0 %v6722
    %v7323 = vpop.f32.mrf.mxu0
    %v7324 = vadd.f32 %v7235, %v7323
    %v7325 = vpop.f32.mrf.mxu0
    %v7326 = vadd.f32 %v7237, %v7325
    %7327 = vmatmul.bf16.gmra.mxu0 %v6726
    %v7328 = vpop.f32.mrf.mxu0
    %v7329 = vadd.f32 %v7240, %v7328
    %v7330 = vpop.f32.mrf.mxu0
    %v7331 = vadd.f32 %v7242, %v7330
    %7332 = vmatmul.bf16.gmra.mxu0 %v6730
    %v7333 = vpop.f32.mrf.mxu0
    %v7334 = vadd.f32 %v7245, %v7333
    %v7335 = vpop.f32.mrf.mxu0
    %v7336 = vadd.f32 %v7247, %v7335
    %7337 = vmatmul.bf16.gmra.mxu0 %v6734
    %v7338 = vpop.f32.mrf.mxu0
    %v7339 = vadd.f32 %v7250, %v7338
    %v7340 = vpop.f32.mrf.mxu0
    %v7341 = vadd.f32 %v7252, %v7340
    %7342 = vmatmul.bf16.gmra.mxu0 %v6738
    %v7343 = vpop.f32.mrf.mxu0
    %v7344 = vadd.f32 %v7255, %v7343
    %v7345 = vpop.f32.mrf.mxu0
    %v7346 = vadd.f32 %v7257, %v7345
    %7347 = vmatmul.bf16.gmra.mxu0 %v6742
    %v7348 = vpop.f32.mrf.mxu0
    %v7349 = vadd.f32 %v7260, %v7348
    %v7350 = vpop.f32.mrf.mxu0
    %v7351 = vadd.f32 %v7262, %v7350
    %7352 = vmatmul.bf16.gmra.mxu0 %v6746
    %v7353 = vpop.f32.mrf.mxu0
    %v7354 = vadd.f32 %v7265, %v7353
    %v7355 = vpop.f32.mrf.mxu0
    %v7356 = vadd.f32 %v7267, %v7355
    %7357 = vmatmul.bf16.gmra.mxu0 %v6750
    %v7358 = vpop.f32.mrf.mxu0
    %v7359 = vadd.f32 %v7270, %v7358
    %v7360 = vpop.f32.mrf.mxu0
    %v7361 = vadd.f32 %v7272, %v7360
    %7362 = vmatmul.bf16.gmra.mxu0 %v6754
    %v7363 = vpop.f32.mrf.mxu0
    %v7364 = vadd.f32 %v7275, %v7363
    %v7365 = vpop.f32.mrf.mxu0
    %v7366 = vadd.f32 %v7277, %v7365
    %7367 = vmatmul.bf16.gmra.mxu0 %v6758
    %v7368 = vpop.f32.mrf.mxu0
    %v7369 = vadd.f32 %v7280, %v7368
    %v7370 = vpop.f32.mrf.mxu0
    %v7371 = vadd.f32 %v7282, %v7370
    %7372 = vmatmul.bf16.gmra.mxu0 %v6762
    %v7373 = vpop.f32.mrf.mxu0
    %v7374 = vadd.f32 %v7285, %v7373
    %v7375 = vpop.f32.mrf.mxu0
    %v7376 = vadd.f32 %v7287, %v7375
    %7377 = vmatmul.bf16.gmra.mxu0 %v6766
    %v7378 = vpop.f32.mrf.mxu0
    %v7379 = vadd.f32 %v7290, %v7378
    %v7380 = vpop.f32.mrf.mxu0
    %v7381 = vadd.f32 %v7292, %v7380
    %7382 = vdwg.mxu0
    %v7383 = vpack.c.bf16 %v7304, %v7304
    %v7384 = vpack.c.bf16 %v7306, %v7306
    %v7385 = vpack.c.bf16 %v7309, %v7309
    %v7386 = vpack.c.bf16 %v7311, %v7311
    %v7387 = vpack.c.bf16 %v7314, %v7314
    %v7388 = vpack.c.bf16 %v7316, %v7316
    %v7389 = vpack.c.bf16 %v7319, %v7319
    %v7390 = vpack.c.bf16 %v7321, %v7321
    %v7391 = vpack.c.bf16 %v7324, %v7324
    %v7392 = vpack.c.bf16 %v7326, %v7326
    %v7393 = vpack.c.bf16 %v7329, %v7329
    %v7394 = vpack.c.bf16 %v7331, %v7331
    %v7395 = vpack.c.bf16 %v7334, %v7334
    %v7396 = vpack.c.bf16 %v7336, %v7336
    %v7397 = vpack.c.bf16 %v7339, %v7339
    %v7398 = vpack.c.bf16 %v7341, %v7341
    %v7399 = vpack.c.bf16 %v7344, %v7344
    %v7400 = vpack.c.bf16 %v7346, %v7346
    %v7401 = vpack.c.bf16 %v7349, %v7349
    %v7402 = vpack.c.bf16 %v7351, %v7351
    %v7403 = vpack.c.bf16 %v7354, %v7354
    %v7404 = vpack.c.bf16 %v7356, %v7356
    %v7405 = vpack.c.bf16 %v7359, %v7359
    %v7406 = vpack.c.bf16 %v7361, %v7361
    %v7407 = vpack.c.bf16 %v7364, %v7364
    %v7408 = vpack.c.bf16 %v7366, %v7366
    %v7409 = vpack.c.bf16 %v7369, %v7369
    %v7410 = vpack.c.bf16 %v7371, %v7371
    %v7411 = vpack.c.bf16 %v7374, %v7374
    %v7412 = vpack.c.bf16 %v7376, %v7376
    %v7413 = vpack.c.bf16 %v7379, %v7379
    %v7414 = vpack.c.bf16 %v7381, %v7381
    %7415 = vst [vmem:[#allocation13] sm:$0xf] %v7383
    %7416 = vst [vmem:[#allocation13 + $0x4] sm:$0xf] %v7384
    %7417 = vst [vmem:[#allocation13 + $0x8] sm:$0xf] %v7385
    %7418 = vst [vmem:[#allocation13 + $0xc] sm:$0xf] %v7386
    %7419 = vst [vmem:[#allocation13 + $0x10] sm:$0xf] %v7387
    %7420 = vst [vmem:[#allocation13 + $0x14] sm:$0xf] %v7388
    %7421 = vst [vmem:[#allocation13 + $0x18] sm:$0xf] %v7389
    %7422 = vst [vmem:[#allocation13 + $0x1c] sm:$0xf] %v7390
    %7423 = vst [vmem:[#allocation13 + $0x20] sm:$0xf] %v7391
    %7424 = vst [vmem:[#allocation13 + $0x24] sm:$0xf] %v7392
    %7425 = vst [vmem:[#allocation13 + $0x28] sm:$0xf] %v7393
    %7426 = vst [vmem:[#allocation13 + $0x2c] sm:$0xf] %v7394
    %7427 = vst [vmem:[#allocation13 + $0x30] sm:$0xf] %v7395
    %7428 = vst [vmem:[#allocation13 + $0x34] sm:$0xf] %v7396
    %7429 = vst [vmem:[#allocation13 + $0x38] sm:$0xf] %v7397
    %7430 = vst [vmem:[#allocation13 + $0x3c] sm:$0xf] %v7398
    %7431 = vst [vmem:[#allocation13 + $0x40] sm:$0xf] %v7399
    %7432 = vst [vmem:[#allocation13 + $0x44] sm:$0xf] %v7400
    %7433 = vst [vmem:[#allocation13 + $0x48] sm:$0xf] %v7401
    %7434 = vst [vmem:[#allocation13 + $0x4c] sm:$0xf] %v7402
    %7435 = vst [vmem:[#allocation13 + $0x50] sm:$0xf] %v7403
    %7436 = vst [vmem:[#allocation13 + $0x54] sm:$0xf] %v7404
    %7437 = vst [vmem:[#allocation13 + $0x58] sm:$0xf] %v7405
    %7438 = vst [vmem:[#allocation13 + $0x5c] sm:$0xf] %v7406
    %7439 = vst [vmem:[#allocation13 + $0x60] sm:$0xf] %v7407
    %7440 = vst [vmem:[#allocation13 + $0x64] sm:$0xf] %v7408
    %7441 = vst [vmem:[#allocation13 + $0x68] sm:$0xf] %v7409
    %7442 = vst [vmem:[#allocation13 + $0x6c] sm:$0xf] %v7410
    %7443 = vst [vmem:[#allocation13 + $0x70] sm:$0xf] %v7411
    %7444 = vst [vmem:[#allocation13 + $0x74] sm:$0xf] %v7412
    %7445 = vst [vmem:[#allocation13 + $0x78] sm:$0xf] %v7413
    %7446 = vst [vmem:[#allocation13 + $0x7c] sm:$0xf] %v7414
    // Predicated region
    $region54: #{tpu_custom_call.1} parent=1 // pred_check
      _
    $region55: #{tpu_custom_call.1} parent=1 // pred_check_branch
      %7448 = sbr.rel (0) target = $region57
    $region56: #{tpu_custom_call.1} parent=1 // pred_region
      %7450 = vsyncadd [#allocation4], 1984
      %s7451 = sshll.u32 [#allocation13], 4
      %s7452 = int_to_ptr.vmem [resolvable:$true] %s7451
      %s7453 = sshll.u32 %s7, 4
      %s7454 = int_to_ptr.hbm [resolvable:$true] %s7453
      %7459 = dma.vmem_to_hbm [thread:$0]  %s7452, 64, %s7454, [#allocation4], 64, 64, 4
    $region57: #{tpu_custom_call.1} parent=1 // pred_fallthru
      _
    // Predicated region
    $region58: #{tpu_custom_call.1} parent=1 // pred_check
      _
    $region59: #{tpu_custom_call.1} parent=1 // pred_check_branch
      %7461 = sbr.rel (0) target = $region61
    $region60: #{tpu_custom_call.1} parent=1 // pred_region
      %7463 = dma.done [#allocation4], 2048
    $region61: #{tpu_custom_call.1} parent=1 // pred_fallthru
      _
    %7464 = vsyncpa [#allocation3], 1
    %7465 = vsyncpa [#allocation6], 1
    %7466 = vsyncpa [#allocation9], 1
    %7467 = vsyncpa [#allocation12], 1
    %7468 = vsyncpa [#allocation4], 1

</llo_original>
